<compile_context>
chip_gen: v7x
topology: tpu7x:2x2x1
jax: 0.10.0
libtpu: 0.0.40
codegen_flags: <defaults>
</compile_context>

<pallas_src>
import functools
import math

import jax
import jax.numpy as jnp
from jax.experimental import pallas as pl
from jax.experimental.pallas import tpu as pltpu

# ----------------------------- config ---------------------------------------
IMG_H, IMG_W = 16, 16
N_PTS = IMG_H * IMG_W                 # 256 points from the image
ENC_CH = 64                           # config['encoder_channels'][-1]
PN_HIDDEN = 64                        # pointnet per-point MLP hidden
DEC_HIDDEN = 32                       # config['decoder_hidden_dim']
NUM_JOINTS = 16                       # config['num_joints']
GAT_LAYERS = 2                        # config['gat_layers']
GAT_HEADS = 2                         # config['gat_heads']
SINKHORN_LAMBDA = 5.0                 # config['sinkhorn_lambda']
SINKHORN_ITERS = 5                    # config['sinkhorn_iterations']
JD = NUM_JOINTS * DEC_HIDDEN


# ----------------------------- fused kernel ----------------------------------
def cortex_synth_kernel(pts_ref, dp_ref, pn_w2_ref, enc_small_ref,
                        dec_w1b_ref, dec_wjb_ref, wqkv_ref, wcb_ref,
                        joints_ref, adj_ref, gfeat_ref, *, tb):
    """One grid step = `tb` batch elements end-to-end.

    pts_ref   : (5, tb*N_PTS)  rows [r, g, b, x, y], points lane-dense
    dp_ref    : (4,) SMEM      depth 1x1-conv [w_r, w_g, w_b, bias]
    pn_w2_ref : (ENC_CH, PN_HIDDEN) bf16  encoder layer-2 weight
    enc_small : (PN_HIDDEN, 5) columns [w1_x, w1_y, w1_d, b1, b2]
    dec_w1b   : (ENC_CH+1, DEC_HIDDEN)   rows [dec_w1 ; dec_b1]
    dec_wjb   : (DEC_HIDDEN+1, JD)       rows [dec_wj ; dec_bj]
    wqkv_ref  : (GAT_LAYERS, DEC_HIDDEN, 3*DEC_HIDDEN) stacked GAT q/k/v
    wcb_ref   : (DEC_HIDDEN+1, 3)        rows [wc ; bc]
    outputs   : joints (tb, J, 3), adj (tb, J, J), gfeat (tb, 1, ENC_CH)
    """
    # --- ImageProcessor: depth from RGB (scalar MACs, weights in SMEM) -------
    pts = pts_ref[...]                                   # (5, tb*N)
    r = pts[0:1, :]
    g = pts[1:2, :]
    b = pts[2:3, :]
    xs = pts[3:4, :]
    ys = pts[4:5, :]
    depth = dp_ref[0] * r + dp_ref[1] * g + dp_ref[2] * b + dp_ref[3]  # (1, tb*N)

    # --- PointNet encoder (channels on sublanes, points on lanes) ------------
    es = enc_small_ref[...]                              # (PN_HIDDEN, 5)
    h1 = jnp.maximum(es[:, 0:1] * xs + es[:, 1:2] * ys + es[:, 2:3] * depth
                     + es[:, 3:4], 0.0)                  # (PN_HIDDEN, tb*N)
    # layer 2: lane-dense bf16 MXU matmul with long N = tb*256
    h2 = jnp.dot(pn_w2_ref[...], h1.astype(jnp.bfloat16),
                 preferred_element_type=jnp.float32) + es[:, 4:5]
    h2 = jnp.maximum(h2, 0.0)                            # (ENC_CH, tb*N)

    # per-batch global max pool (segmented lane reduce, tile-aligned slices)
    g_rows = [jnp.swapaxes(
                  jnp.max(h2[:, i * N_PTS:(i + 1) * N_PTS], axis=1, keepdims=True),
                  0, 1)
              for i in range(tb)]
    gr = g_rows[0] if tb == 1 else jnp.concatenate(g_rows, axis=0)   # (tb, ENC_CH)
    gfeat_ref[...] = gr[:, None, :]                      # (tb, 1, ENC_CH)

    # --- Skeleton decoder MLP -------------------------------------------------
    dw1 = dec_w1b_ref[0:ENC_CH, :]                       # (ENC_CH, DEC_HIDDEN)
    db1 = dec_w1b_ref[ENC_CH:ENC_CH + 1, :]              # (1, DEC_HIDDEN)
    h = jnp.maximum(jnp.dot(gr, dw1, preferred_element_type=jnp.float32) + db1,
                    0.0)                                 # (tb, DEC_HIDDEN)

    dwj = dec_wjb_ref[0:DEC_HIDDEN, :]                   # (DEC_HIDDEN, JD)
    dbj = dec_wjb_ref[DEC_HIDDEN:DEC_HIDDEN + 1, :]      # (1, JD)
    jff = jnp.maximum(jnp.dot(h, dwj, preferred_element_type=jnp.float32) + dbj,
                      0.0)                               # (tb, JD)

    # (tb, J*D) -> (tb, J, D) joint-feature relayout, fully in registers
    x0 = jnp.concatenate(
        [jff[:, j * DEC_HIDDEN:(j + 1) * DEC_HIDDEN][:, None, :]
         for j in range(NUM_JOINTS)], axis=1)            # (tb, J, D)
    x0_2d = x0.reshape(tb * NUM_JOINTS, DEC_HIDDEN)

    # joint coordinate head (decoder output, pre-GAT — matches module flow)
    wc = wcb_ref[0:DEC_HIDDEN, :]                        # (DEC_HIDDEN, 3)
    bc = wcb_ref[DEC_HIDDEN:DEC_HIDDEN + 1, :]           # (1, 3)
    joints2 = jnp.dot(x0_2d, wc, preferred_element_type=jnp.float32) + bc
    joints = joints2.reshape(tb, NUM_JOINTS, 3)          # (tb, J, 3)
    joints_ref[...] = joints

    # --- CGCN: batched GAT layers + Sinkhorn adjacency ------------------------
    hd = DEC_HIDDEN // GAT_HEADS
    scale_h = 1.0 / math.sqrt(hd)
    X = x0                                               # (tb, J, D)
    for l in range(GAT_LAYERS):
        X2 = X.reshape(tb * NUM_JOINTS, DEC_HIDDEN)
        qkv2 = jnp.dot(X2, wqkv_ref[l],
                       preferred_element_type=jnp.float32)           # (tb*J, 3D)
        qkv = qkv2.reshape(tb, NUM_JOINTS, 3 * DEC_HIDDEN)
        heads = []
        for hh in range(GAT_HEADS):
            q = qkv[:, :, hh * hd:(hh + 1) * hd]
            k = qkv[:, :, DEC_HIDDEN + hh * hd:DEC_HIDDEN + (hh + 1) * hd]
            v = qkv[:, :, 2 * DEC_HIDDEN + hh * hd:2 * DEC_HIDDEN + (hh + 1) * hd]
            logits = jnp.einsum('bjh,bkh->bjk', q, k,
                                preferred_element_type=jnp.float32) * scale_h
            p = jnp.exp(logits - jnp.max(logits, axis=-1, keepdims=True))
            attn = p / jnp.sum(p, axis=-1, keepdims=True)
            heads.append(jnp.einsum('bjk,bkh->bjh', attn, v,
                                    preferred_element_type=jnp.float32))
        X = jnp.maximum(jnp.concatenate(heads, axis=-1), 0.0)         # (tb, J, D)

    # similarity + negative squared joint distance -> Sinkhorn normalization
    sim = jnp.einsum('bjd,bkd->bjk', X, X,
                     preferred_element_type=jnp.float32) * (1.0 / math.sqrt(DEC_HIDDEN))
    xx = jnp.sum(joints * joints, axis=-1, keepdims=True)             # (tb, J, 1)
    gram = jnp.einsum('bjc,bkc->bjk', joints, joints,
                      preferred_element_type=jnp.float32)
    d2 = xx + jnp.swapaxes(xx, 1, 2) - 2.0 * gram                     # (tb, J, J)

    S = sim - d2
    s_max = jnp.max(jnp.max(S, axis=2, keepdims=True), axis=1, keepdims=True)
    M = jnp.exp(SINKHORN_LAMBDA * (S - s_max))           # stable; constant cancels
    for _ in range(SINKHORN_ITERS):
        M = M / (jnp.sum(M, axis=2, keepdims=True) + 1e-8)            # row normalize
        M = M / (jnp.sum(M, axis=1, keepdims=True) + 1e-8)            # col normalize
    adj_ref[...] = M


# ----------------------------- wrapper ---------------------------------------
def _pick_batch_tile(batch, max_tile=16):
    """Batch elements per grid step.  Keeps >=2 grid steps (v7x has 2 TCs) and
    a VMEM footprint (~h1+h2 = 128KB * tile) safely under v5e's 16MiB default
    scoped limit; raise max_tile + vmem_limit_bytes together if needed."""
    if batch <= 1:
        return 1
    tb = max(1, min(max_tile, batch // 2))
    while batch % tb:
        tb -= 1
    return tb


def cortex_synth_forward(image, params, *, max_batch_tile=16):
    """image: (B, 3, H, W) float32 (PyTorch NCHW convention)."""
    B = image.shape[0]
    tb = _pick_batch_tile(B, max_batch_tile)
    n_steps = B // tb

    # channels-first, points lane-dense across the whole batch: (3, B*N);
    # append the constant normalized (x, y) grid as two extra rows -> (5, B*N).
    pix = jnp.transpose(image.reshape(B, 3, N_PTS), (1, 0, 2)).reshape(3, B * N_PTS)
    idx = jnp.arange(N_PTS, dtype=jnp.int32)
    xs = (idx % IMG_W).astype(jnp.float32) / float(IMG_W - 1)
    ys = (idx // IMG_W).astype(jnp.float32) / float(IMG_H - 1)
    xy = jnp.tile(jnp.stack([xs, ys], axis=0), (1, B))                 # (2, B*N)
    pts = jnp.concatenate([pix, xy], axis=0)                           # (5, B*N)

    # packed parameter blocks (few DMA streams, sliced inside the kernel)
    dp = jnp.concatenate([params["wd"].reshape(3), params["bd"].reshape(1)])   # (4,)
    enc_small = jnp.concatenate([params["pn_w1"], params["pn_b1"],
                                 params["pn_b2"]], axis=1)                     # (64, 5)
    pn_w2 = params["pn_w2"].astype(jnp.bfloat16)                               # (64, 64)
    dec_w1b = jnp.concatenate([params["dec_w1"], params["dec_b1"]], axis=0)    # (65, 32)
    dec_wjb = jnp.concatenate([params["dec_wj"], params["dec_bj"]], axis=0)    # (33, 512)
    wcb = jnp.concatenate([params["wc"], params["bc"]], axis=0)                # (33, 3)

    kernel = functools.partial(cortex_synth_kernel, tb=tb)
    pred_joints, pred_adj, gfeat = pl.pallas_call(
        kernel,
        out_shape=(jax.ShapeDtypeStruct((B, NUM_JOINTS, 3), jnp.float32),
                   jax.ShapeDtypeStruct((B, NUM_JOINTS, NUM_JOINTS), jnp.float32),
                   jax.ShapeDtypeStruct((B, 1, ENC_CH), jnp.float32)),
        grid=(n_steps,),
        in_specs=[
            pl.BlockSpec((5, tb * N_PTS), lambda i: (0, i)),                   # pixels+xy
            pl.BlockSpec(memory_space=pltpu.MemorySpace.SMEM),                 # depth conv
            pl.BlockSpec((ENC_CH, PN_HIDDEN), lambda i: (0, 0)),               # pn_w2 (bf16)
            pl.BlockSpec((PN_HIDDEN, 5), lambda i: (0, 0)),                    # enc small
            pl.BlockSpec((ENC_CH + 1, DEC_HIDDEN), lambda i: (0, 0)),          # dec_w1 | b1
            pl.BlockSpec((DEC_HIDDEN + 1, JD), lambda i: (0, 0)),              # dec_wj | bj
            pl.BlockSpec((GAT_LAYERS, DEC_HIDDEN, 3 * DEC_HIDDEN),
                         lambda i: (0, 0, 0)),                                 # wqkv
            pl.BlockSpec((DEC_HIDDEN + 1, 3), lambda i: (0, 0)),               # wc | bc
        ],
        out_specs=[
            pl.BlockSpec((tb, NUM_JOINTS, 3), lambda i: (i, 0, 0)),
            pl.BlockSpec((tb, NUM_JOINTS, NUM_JOINTS), lambda i: (i, 0, 0)),
            pl.BlockSpec((tb, 1, ENC_CH), lambda i: (i, 0, 0)),
        ],
        compiler_params=pltpu.CompilerParams(
            dimension_semantics=("parallel",)),
    )(pts, dp, pn_w2, enc_small, dec_w1b, dec_wjb, params["wqkv"], wcb)

    global_features = gfeat.reshape(B, ENC_CH)
    return pred_joints, pred_adj, global_features


# ----------------------------- params ----------------------------------------
def init_params(key):
    ks = jax.random.split(key, 8)

    def dense(k, shape, fan_in):
        return jax.random.normal(k, shape, jnp.float32) / math.sqrt(fan_in)

    return {
        # ImageProcessor (1x1 depth conv)
        "wd": dense(ks[0], (3,), 3),
        "bd": jnp.zeros((1,), jnp.float32),
        # PointNet encoder (channels-first)
        "pn_w1": dense(ks[1], (PN_HIDDEN, 3), 3),
        "pn_b1": jnp.zeros((PN_HIDDEN, 1), jnp.float32),
        "pn_w2": dense(ks[2], (ENC_CH, PN_HIDDEN), PN_HIDDEN),
        "pn_b2": jnp.zeros((ENC_CH, 1), jnp.float32),
        # Skeleton decoder
        "dec_w1": dense(ks[3], (ENC_CH, DEC_HIDDEN), ENC_CH),
        "dec_b1": jnp.zeros((1, DEC_HIDDEN), jnp.float32),
        "dec_wj": dense(ks[4], (DEC_HIDDEN, JD), DEC_HIDDEN),
        "dec_bj": jnp.zeros((1, JD), jnp.float32),
        # CGCN (GAT, stacked q/k/v) + joint head
        "wqkv": dense(ks[5], (GAT_LAYERS, DEC_HIDDEN, 3 * DEC_HIDDEN), DEC_HIDDEN),
        "wc": dense(ks[6], (DEC_HIDDEN, 3), DEC_HIDDEN),
        "bc": jnp.zeros((1, 3), jnp.float32),
    }


# ----------------------------- main ------------------------------------------
if __name__ == "__main__":
    root = jax.random.PRNGKey(0)
    k_img, k_par = jax.random.split(root)

    B = 8
    image = jax.random.normal(k_img, (B, 3, IMG_H, IMG_W), jnp.float32)
    params = init_params(k_par)

    fwd = jax.jit(lambda img: cortex_synth_forward(img, params))
    pred_joints, pred_adj, global_features = fwd(image)
    jax.block_until_ready((pred_joints, pred_adj, global_features))

    assert pred_joints.shape == (B, NUM_JOINTS, 3)
    assert pred_adj.shape == (B, NUM_JOINTS, NUM_JOINTS)
    assert global_features.shape == (B, ENC_CH)
    assert bool(jnp.isfinite(pred_joints).all())
    assert bool(jnp.isfinite(pred_adj).all())
    assert bool(jnp.isfinite(global_features).all())
    print("KERNEL_OK")
</pallas_src>

<mosaic_0001>
module attributes {stable_mosaic.version = 11 : i64} {
  func.func @cortex_synth_kernel(%arg0: i32, %arg1: memref<5x1024xf32, #tpu.memory_space<vmem>>, %arg2: memref<4xf32, #tpu.memory_space<smem>>, %arg3: memref<64x64xbf16, #tpu.memory_space<vmem>>, %arg4: memref<64x5xf32, #tpu.memory_space<vmem>>, %arg5: memref<65x32xf32, #tpu.memory_space<vmem>>, %arg6: memref<33x512xf32, #tpu.memory_space<vmem>>, %arg7: memref<2x32x96xf32, #tpu.memory_space<vmem>>, %arg8: memref<33x3xf32, #tpu.memory_space<vmem>>, %arg9: memref<4x16x3xf32, #tpu.memory_space<vmem>>, %arg10: memref<4x16x16xf32, #tpu.memory_space<vmem>>, %arg11: memref<4x1x64xf32, #tpu.memory_space<vmem>>) attributes {dimension_semantics = [#tpu.dimension_semantics<parallel>], iteration_bounds = array<i64: 2>, scalar_prefetch = 0 : i64, scratch_operands = 0 : i64, tpu.core_type = #tpu.core_type<tc>, window_params = [{transform_indices = @transform_0, window_bounds = array<i64: 5, 1024>}, {transform_indices = @transform_1, window_bounds = array<i64: 4>}, {pipeline_mode = #tpu.pipeline_mode<synchronous>, transform_indices = @transform_2, window_bounds = array<i64: 64, 64>}, {pipeline_mode = #tpu.pipeline_mode<synchronous>, transform_indices = @transform_3, window_bounds = array<i64: 64, 5>}, {pipeline_mode = #tpu.pipeline_mode<synchronous>, transform_indices = @transform_4, window_bounds = array<i64: 65, 32>}, {pipeline_mode = #tpu.pipeline_mode<synchronous>, transform_indices = @transform_5, window_bounds = array<i64: 33, 512>}, {pipeline_mode = #tpu.pipeline_mode<synchronous>, transform_indices = @transform_6, window_bounds = array<i64: 2, 32, 96>}, {pipeline_mode = #tpu.pipeline_mode<synchronous>, transform_indices = @transform_7, window_bounds = array<i64: 33, 3>}, {transform_indices = @transform_8, window_bounds = array<i64: 4, 16, 3>}, {transform_indices = @transform_9, window_bounds = array<i64: 4, 16, 16>}, {transform_indices = @transform_10, window_bounds = array<i64: 4, 1, 64>}]} {
    %c0 = arith.constant 0 : index
    %c0_0 = arith.constant 0 : index
    %0 = vector.load %arg1[%c0, %c0_0] : memref<5x1024xf32, #tpu.memory_space<vmem>>, vector<5x1024xf32>
    %1 = vector.extract_strided_slice %0 {offsets = [0, 0], sizes = [1, 1024], strides = [1, 1]} : vector<5x1024xf32> to vector<1x1024xf32>
    %2 = vector.extract_strided_slice %0 {offsets = [1, 0], sizes = [1, 1024], strides = [1, 1]} : vector<5x1024xf32> to vector<1x1024xf32>
    %3 = vector.extract_strided_slice %0 {offsets = [2, 0], sizes = [1, 1024], strides = [1, 1]} : vector<5x1024xf32> to vector<1x1024xf32>
    %4 = vector.extract_strided_slice %0 {offsets = [3, 0], sizes = [1, 1024], strides = [1, 1]} : vector<5x1024xf32> to vector<1x1024xf32>
    %5 = vector.extract_strided_slice %0 {offsets = [4, 0], sizes = [1, 1024], strides = [1, 1]} : vector<5x1024xf32> to vector<1x1024xf32>
    %c0_1 = arith.constant 0 : index
    %6 = memref.load %arg2[%c0_1] : memref<4xf32, #tpu.memory_space<smem>>
    %7 = vector.broadcast %6 : f32 to vector<1x1024xf32>
    %8 = arith.mulf %7, %1 : vector<1x1024xf32>
    %c1 = arith.constant 1 : index
    %9 = memref.load %arg2[%c1] : memref<4xf32, #tpu.memory_space<smem>>
    %10 = vector.broadcast %9 : f32 to vector<1x1024xf32>
    %11 = arith.mulf %10, %2 : vector<1x1024xf32>
    %12 = arith.addf %8, %11 : vector<1x1024xf32>
    %c2 = arith.constant 2 : index
    %13 = memref.load %arg2[%c2] : memref<4xf32, #tpu.memory_space<smem>>
    %14 = vector.broadcast %13 : f32 to vector<1x1024xf32>
    %15 = arith.mulf %14, %3 : vector<1x1024xf32>
    %16 = arith.addf %12, %15 : vector<1x1024xf32>
    %c3 = arith.constant 3 : index
    %17 = memref.load %arg2[%c3] : memref<4xf32, #tpu.memory_space<smem>>
    %18 = vector.broadcast %17 : f32 to vector<1x1024xf32>
    %19 = arith.addf %16, %18 : vector<1x1024xf32>
    %c0_2 = arith.constant 0 : index
    %c0_3 = arith.constant 0 : index
    %20 = vector.load %arg4[%c0_2, %c0_3] : memref<64x5xf32, #tpu.memory_space<vmem>>, vector<64x5xf32>
    %21 = vector.extract_strided_slice %20 {offsets = [0, 0], sizes = [64, 1], strides = [1, 1]} : vector<64x5xf32> to vector<64x1xf32>
    %22 = vector.broadcast %21 : vector<64x1xf32> to vector<64x1024xf32>
    %23 = vector.broadcast %4 : vector<1x1024xf32> to vector<64x1024xf32>
    %24 = arith.mulf %22, %23 : vector<64x1024xf32>
    %25 = vector.extract_strided_slice %20 {offsets = [0, 1], sizes = [64, 1], strides = [1, 1]} : vector<64x5xf32> to vector<64x1xf32>
    %26 = vector.broadcast %25 : vector<64x1xf32> to vector<64x1024xf32>
    %27 = vector.broadcast %5 : vector<1x1024xf32> to vector<64x1024xf32>
    %28 = arith.mulf %26, %27 : vector<64x1024xf32>
    %29 = arith.addf %24, %28 : vector<64x1024xf32>
    %30 = vector.extract_strided_slice %20 {offsets = [0, 2], sizes = [64, 1], strides = [1, 1]} : vector<64x5xf32> to vector<64x1xf32>
    %31 = vector.broadcast %30 : vector<64x1xf32> to vector<64x1024xf32>
    %32 = vector.broadcast %19 : vector<1x1024xf32> to vector<64x1024xf32>
    %33 = arith.mulf %31, %32 : vector<64x1024xf32>
    %34 = arith.addf %29, %33 : vector<64x1024xf32>
    %35 = vector.extract_strided_slice %20 {offsets = [0, 3], sizes = [64, 1], strides = [1, 1]} : vector<64x5xf32> to vector<64x1xf32>
    %36 = vector.broadcast %35 : vector<64x1xf32> to vector<64x1024xf32>
    %37 = arith.addf %34, %36 : vector<64x1024xf32>
    %cst = arith.constant 0.000000e+00 : f32
    %38 = vector.broadcast %cst : f32 to vector<64x1024xf32>
    %39 = arith.maximumf %37, %38 : vector<64x1024xf32>
    %c0_4 = arith.constant 0 : index
    %c0_5 = arith.constant 0 : index
    %40 = vector.load %arg3[%c0_4, %c0_5] : memref<64x64xbf16, #tpu.memory_space<vmem>>, vector<64x64xbf16>
    %41 = arith.truncf %39 : vector<64x1024xf32> to vector<64x1024xbf16>
    %cst_6 = arith.constant dense<0.000000e+00> : vector<64x1024xf32>
    %42 = tpu.matmul %40, %41, %cst_6 {dimension_numbers = #tpu.dot_dimension_numbers<[1], [0], [0], [1], [0, 0, 1, 1], [], []>} : vector<64x64xbf16>, vector<64x1024xbf16>, vector<64x1024xf32> -> vector<64x1024xf32>
    %43 = vector.extract_strided_slice %20 {offsets = [0, 4], sizes = [64, 1], strides = [1, 1]} : vector<64x5xf32> to vector<64x1xf32>
    %44 = vector.broadcast %43 : vector<64x1xf32> to vector<64x1024xf32>
    %45 = arith.addf %42, %44 : vector<64x1024xf32>
    %cst_7 = arith.constant 0.000000e+00 : f32
    %46 = vector.broadcast %cst_7 : f32 to vector<64x1024xf32>
    %47 = arith.maximumf %45, %46 : vector<64x1024xf32>
    %48 = vector.extract_strided_slice %47 {offsets = [0, 0], sizes = [64, 256], strides = [1, 1]} : vector<64x1024xf32> to vector<64x256xf32>
    %cst_8 = arith.constant dense<0xFF800000> : vector<64xf32>
    %49 = vector.multi_reduction <maximumf>, %48, %cst_8 [1] : vector<64x256xf32> to vector<64xf32>
    %50 = vector.shape_cast %49 : vector<64xf32> to vector<64x1xf32>
    %51 = tpu.transpose %50, [1, 0] : vector<64x1xf32> -> vector<1x64xf32>
    %52 = vector.extract_strided_slice %47 {offsets = [0, 256], sizes = [64, 256], strides = [1, 1]} : vector<64x1024xf32> to vector<64x256xf32>
    %cst_9 = arith.constant dense<0xFF800000> : vector<64xf32>
    %53 = vector.multi_reduction <maximumf>, %52, %cst_9 [1] : vector<64x256xf32> to vector<64xf32>
    %54 = vector.shape_cast %53 : vector<64xf32> to vector<64x1xf32>
    %55 = tpu.transpose %54, [1, 0] : vector<64x1xf32> -> vector<1x64xf32>
    %56 = vector.extract_strided_slice %47 {offsets = [0, 512], sizes = [64, 256], strides = [1, 1]} : vector<64x1024xf32> to vector<64x256xf32>
    %cst_10 = arith.constant dense<0xFF800000> : vector<64xf32>
    %57 = vector.multi_reduction <maximumf>, %56, %cst_10 [1] : vector<64x256xf32> to vector<64xf32>
    %58 = vector.shape_cast %57 : vector<64xf32> to vector<64x1xf32>
    %59 = tpu.transpose %58, [1, 0] : vector<64x1xf32> -> vector<1x64xf32>
    %60 = vector.extract_strided_slice %47 {offsets = [0, 768], sizes = [64, 256], strides = [1, 1]} : vector<64x1024xf32> to vector<64x256xf32>
    %cst_11 = arith.constant dense<0xFF800000> : vector<64xf32>
    %61 = vector.multi_reduction <maximumf>, %60, %cst_11 [1] : vector<64x256xf32> to vector<64xf32>
    %62 = vector.shape_cast %61 : vector<64xf32> to vector<64x1xf32>
    %63 = tpu.transpose %62, [1, 0] : vector<64x1xf32> -> vector<1x64xf32>
    %64 = tpu.concatenate %51, %55, %59, %63 in 0 : vector<1x64xf32>, vector<1x64xf32>, vector<1x64xf32>, vector<1x64xf32> -> vector<4x64xf32>
    %65 = vector.shape_cast %64 : vector<4x64xf32> to vector<4x1x64xf32>
    %c0_12 = arith.constant 0 : index
    %c0_13 = arith.constant 0 : index
    %c0_14 = arith.constant 0 : index
    %66 = vector.load %arg11[%c0_12, %c0_13, %c0_14] : memref<4x1x64xf32, #tpu.memory_space<vmem>>, vector<4x1x64xf32>
    tpu.vector_store %arg11[%c0_12, %c0_13, %c0_14], %65 {strides = array<i32>} : memref<4x1x64xf32, #tpu.memory_space<vmem>>, vector<4x1x64xf32>,
    %c0_15 = arith.constant 0 : index
    %c0_16 = arith.constant 0 : index
    %67 = vector.load %arg5[%c0_15, %c0_16] : memref<65x32xf32, #tpu.memory_space<vmem>>, vector<64x32xf32>
    %c64 = arith.constant 64 : index
    %c0_17 = arith.constant 0 : index
    %68 = vector.load %arg5[%c64, %c0_17] : memref<65x32xf32, #tpu.memory_space<vmem>>, vector<1x32xf32>
    %cst_18 = arith.constant dense<0.000000e+00> : vector<4x32xf32>
    %69 = tpu.matmul %64, %67, %cst_18 {dimension_numbers = #tpu.dot_dimension_numbers<[1], [0], [0], [1], [0, 0, 1, 1], [], []>} : vector<4x64xf32>, vector<64x32xf32>, vector<4x32xf32> -> vector<4x32xf32>
    %70 = vector.broadcast %68 : vector<1x32xf32> to vector<4x32xf32>
    %71 = arith.addf %69, %70 : vector<4x32xf32>
    %cst_19 = arith.constant 0.000000e+00 : f32
    %72 = vector.broadcast %cst_19 : f32 to vector<4x32xf32>
    %73 = arith.maximumf %71, %72 : vector<4x32xf32>
    %c0_20 = arith.constant 0 : index
    %c0_21 = arith.constant 0 : index
    %74 = vector.load %arg6[%c0_20, %c0_21] : memref<33x512xf32, #tpu.memory_space<vmem>>, vector<32x512xf32>
    %c32 = arith.constant 32 : index
    %c0_22 = arith.constant 0 : index
    %75 = vector.load %arg6[%c32, %c0_22] : memref<33x512xf32, #tpu.memory_space<vmem>>, vector<1x512xf32>
    %cst_23 = arith.constant dense<0.000000e+00> : vector<4x512xf32>
    %76 = tpu.matmul %73, %74, %cst_23 {dimension_numbers = #tpu.dot_dimension_numbers<[1], [0], [0], [1], [0, 0, 1, 1], [], []>} : vector<4x32xf32>, vector<32x512xf32>, vector<4x512xf32> -> vector<4x512xf32>
    %77 = vector.broadcast %75 : vector<1x512xf32> to vector<4x512xf32>
    %78 = arith.addf %76, %77 : vector<4x512xf32>
    %cst_24 = arith.constant 0.000000e+00 : f32
    %79 = vector.broadcast %cst_24 : f32 to vector<4x512xf32>
    %80 = arith.maximumf %78, %79 : vector<4x512xf32>
    %81 = vector.extract_strided_slice %80 {offsets = [0, 0], sizes = [4, 32], strides = [1, 1]} : vector<4x512xf32> to vector<4x32xf32>
    %82 = vector.shape_cast %81 : vector<4x32xf32> to vector<4x1x32xf32>
    %83 = vector.extract_strided_slice %80 {offsets = [0, 32], sizes = [4, 32], strides = [1, 1]} : vector<4x512xf32> to vector<4x32xf32>
    %84 = vector.shape_cast %83 : vector<4x32xf32> to vector<4x1x32xf32>
    %85 = vector.extract_strided_slice %80 {offsets = [0, 64], sizes = [4, 32], strides = [1, 1]} : vector<4x512xf32> to vector<4x32xf32>
    %86 = vector.shape_cast %85 : vector<4x32xf32> to vector<4x1x32xf32>
    %87 = vector.extract_strided_slice %80 {offsets = [0, 96], sizes = [4, 32], strides = [1, 1]} : vector<4x512xf32> to vector<4x32xf32>
    %88 = vector.shape_cast %87 : vector<4x32xf32> to vector<4x1x32xf32>
    %89 = vector.extract_strided_slice %80 {offsets = [0, 128], sizes = [4, 32], strides = [1, 1]} : vector<4x512xf32> to vector<4x32xf32>
    %90 = vector.shape_cast %89 : vector<4x32xf32> to vector<4x1x32xf32>
    %91 = vector.extract_strided_slice %80 {offsets = [0, 160], sizes = [4, 32], strides = [1, 1]} : vector<4x512xf32> to vector<4x32xf32>
    %92 = vector.shape_cast %91 : vector<4x32xf32> to vector<4x1x32xf32>
    %93 = vector.extract_strided_slice %80 {offsets = [0, 192], sizes = [4, 32], strides = [1, 1]} : vector<4x512xf32> to vector<4x32xf32>
    %94 = vector.shape_cast %93 : vector<4x32xf32> to vector<4x1x32xf32>
    %95 = vector.extract_strided_slice %80 {offsets = [0, 224], sizes = [4, 32], strides = [1, 1]} : vector<4x512xf32> to vector<4x32xf32>
    %96 = vector.shape_cast %95 : vector<4x32xf32> to vector<4x1x32xf32>
    %97 = vector.extract_strided_slice %80 {offsets = [0, 256], sizes = [4, 32], strides = [1, 1]} : vector<4x512xf32> to vector<4x32xf32>
    %98 = vector.shape_cast %97 : vector<4x32xf32> to vector<4x1x32xf32>
    %99 = vector.extract_strided_slice %80 {offsets = [0, 288], sizes = [4, 32], strides = [1, 1]} : vector<4x512xf32> to vector<4x32xf32>
    %100 = vector.shape_cast %99 : vector<4x32xf32> to vector<4x1x32xf32>
    %101 = vector.extract_strided_slice %80 {offsets = [0, 320], sizes = [4, 32], strides = [1, 1]} : vector<4x512xf32> to vector<4x32xf32>
    %102 = vector.shape_cast %101 : vector<4x32xf32> to vector<4x1x32xf32>
    %103 = vector.extract_strided_slice %80 {offsets = [0, 352], sizes = [4, 32], strides = [1, 1]} : vector<4x512xf32> to vector<4x32xf32>
    %104 = vector.shape_cast %103 : vector<4x32xf32> to vector<4x1x32xf32>
    %105 = vector.extract_strided_slice %80 {offsets = [0, 384], sizes = [4, 32], strides = [1, 1]} : vector<4x512xf32> to vector<4x32xf32>
    %106 = vector.shape_cast %105 : vector<4x32xf32> to vector<4x1x32xf32>
    %107 = vector.extract_strided_slice %80 {offsets = [0, 416], sizes = [4, 32], strides = [1, 1]} : vector<4x512xf32> to vector<4x32xf32>
    %108 = vector.shape_cast %107 : vector<4x32xf32> to vector<4x1x32xf32>
    %109 = vector.extract_strided_slice %80 {offsets = [0, 448], sizes = [4, 32], strides = [1, 1]} : vector<4x512xf32> to vector<4x32xf32>
    %110 = vector.shape_cast %109 : vector<4x32xf32> to vector<4x1x32xf32>
    %111 = vector.extract_strided_slice %80 {offsets = [0, 480], sizes = [4, 32], strides = [1, 1]} : vector<4x512xf32> to vector<4x32xf32>
    %112 = vector.shape_cast %111 : vector<4x32xf32> to vector<4x1x32xf32>
    %113 = tpu.concatenate %82, %84, %86, %88, %90, %92, %94, %96, %98, %100, %102, %104, %106, %108, %110, %112 in 1 : vector<4x1x32xf32>, vector<4x1x32xf32>, vector<4x1x32xf32>, vector<4x1x32xf32>, vector<4x1x32xf32>, vector<4x1x32xf32>, vector<4x1x32xf32>, vector<4x1x32xf32>, vector<4x1x32xf32>, vector<4x1x32xf32>, vector<4x1x32xf32>, vector<4x1x32xf32>, vector<4x1x32xf32>, vector<4x1x32xf32>, vector<4x1x32xf32>, vector<4x1x32xf32> -> vector<4x16x32xf32>
    %114 = vector.shape_cast %113 : vector<4x16x32xf32> to vector<64x32xf32>
    %c0_25 = arith.constant 0 : index
    %c0_26 = arith.constant 0 : index
    %115 = vector.load %arg8[%c0_25, %c0_26] : memref<33x3xf32, #tpu.memory_space<vmem>>, vector<32x3xf32>
    %c32_27 = arith.constant 32 : index
    %c0_28 = arith.constant 0 : index
    %116 = vector.load %arg8[%c32_27, %c0_28] : memref<33x3xf32, #tpu.memory_space<vmem>>, vector<1x3xf32>
    %cst_29 = arith.constant dense<0.000000e+00> : vector<64x3xf32>
    %117 = tpu.matmul %114, %115, %cst_29 {dimension_numbers = #tpu.dot_dimension_numbers<[1], [0], [0], [1], [0, 0, 1, 1], [], []>} : vector<64x32xf32>, vector<32x3xf32>, vector<64x3xf32> -> vector<64x3xf32>
    %118 = vector.broadcast %116 : vector<1x3xf32> to vector<64x3xf32>
    %119 = arith.addf %117, %118 : vector<64x3xf32>
    %120 = vector.shape_cast %119 : vector<64x3xf32> to vector<4x16x3xf32>
    %c0_30 = arith.constant 0 : index
    %c0_31 = arith.constant 0 : index
    %c0_32 = arith.constant 0 : index
    %121 = vector.load %arg9[%c0_30, %c0_31, %c0_32] : memref<4x16x3xf32, #tpu.memory_space<vmem>>, vector<4x16x3xf32>
    tpu.vector_store %arg9[%c0_30, %c0_31, %c0_32], %120 {strides = array<i32>} : memref<4x16x3xf32, #tpu.memory_space<vmem>>, vector<4x16x3xf32>,
    %122 = vector.shape_cast %113 : vector<4x16x32xf32> to vector<64x32xf32>
    %c0_33 = arith.constant 0 : index
    %c0_34 = arith.constant 0 : index
    %c0_35 = arith.constant 0 : index
    %123 = vector.load %arg7[%c0_33, %c0_34, %c0_35] : memref<2x32x96xf32, #tpu.memory_space<vmem>>, vector<1x32x96xf32>
    %124 = vector.shape_cast %123 : vector<1x32x96xf32> to vector<32x96xf32>
    %cst_36 = arith.constant dense<0.000000e+00> : vector<64x96xf32>
    %125 = tpu.matmul %122, %124, %cst_36 {dimension_numbers = #tpu.dot_dimension_numbers<[1], [0], [0], [1], [0, 0, 1, 1], [], []>} : vector<64x32xf32>, vector<32x96xf32>, vector<64x96xf32> -> vector<64x96xf32>
    %126 = vector.shape_cast %125 : vector<64x96xf32> to vector<4x16x96xf32>
    %127 = vector.extract_strided_slice %126 {offsets = [0, 0, 0], sizes = [4, 16, 16], strides = [1, 1, 1]} : vector<4x16x96xf32> to vector<4x16x16xf32>
    %128 = vector.extract_strided_slice %126 {offsets = [0, 0, 32], sizes = [4, 16, 16], strides = [1, 1, 1]} : vector<4x16x96xf32> to vector<4x16x16xf32>
    %129 = vector.extract_strided_slice %126 {offsets = [0, 0, 64], sizes = [4, 16, 16], strides = [1, 1, 1]} : vector<4x16x96xf32> to vector<4x16x16xf32>
    "tpu.trace_start"() <{level = 10 : i32, message = "bjh,bkh->bjk"}> : () -> ()
    %cst_37 = arith.constant dense<0.000000e+00> : vector<4x16x16xf32>
    %130 = tpu.matmul %127, %128, %cst_37 {dimension_numbers = #tpu.dot_dimension_numbers<[2], [2], [1], [1], [0, 0, 0, 1, 1, 1], [0], [0]>} : vector<4x16x16xf32>, vector<4x16x16xf32>, vector<4x16x16xf32> -> vector<4x16x16xf32>
    "tpu.trace_stop"() : () -> ()
    %cst_38 = arith.constant 2.500000e-01 : f32
    %131 = vector.broadcast %cst_38 : f32 to vector<4x16x16xf32>
    %132 = arith.mulf %130, %131 : vector<4x16x16xf32>
    %cst_39 = arith.constant dense<0xFF800000> : vector<4x16xf32>
    %133 = vector.multi_reduction <maximumf>, %132, %cst_39 [2] : vector<4x16x16xf32> to vector<4x16xf32>
    %134 = vector.shape_cast %133 : vector<4x16xf32> to vector<4x16x1xf32>
    %135 = vector.broadcast %134 : vector<4x16x1xf32> to vector<4x16x16xf32>
    %136 = arith.subf %132, %135 : vector<4x16x16xf32>
    %137 = math.exp %136 : vector<4x16x16xf32>
    %cst_40 = arith.constant dense<0.000000e+00> : vector<4x16xf32>
    %138 = vector.multi_reduction <add>, %137, %cst_40 [2] : vector<4x16x16xf32> to vector<4x16xf32>
    %139 = vector.shape_cast %138 : vector<4x16xf32> to vector<4x16x1xf32>
    %140 = vector.broadcast %139 : vector<4x16x1xf32> to vector<4x16x16xf32>
    %141 = arith.divf %137, %140 : vector<4x16x16xf32>
    "tpu.trace_start"() <{level = 10 : i32, message = "bjk,bkh->bjh"}> : () -> ()
    %cst_41 = arith.constant dense<0.000000e+00> : vector<4x16x16xf32>
    %142 = tpu.matmul %141, %129, %cst_41 {dimension_numbers = #tpu.dot_dimension_numbers<[2], [1], [1], [2], [0, 0, 0, 1, 1, 2], [0], [0]>} : vector<4x16x16xf32>, vector<4x16x16xf32>, vector<4x16x16xf32> -> vector<4x16x16xf32>
    "tpu.trace_stop"() : () -> ()
    %143 = vector.extract_strided_slice %126 {offsets = [0, 0, 16], sizes = [4, 16, 16], strides = [1, 1, 1]} : vector<4x16x96xf32> to vector<4x16x16xf32>
    %144 = vector.extract_strided_slice %126 {offsets = [0, 0, 48], sizes = [4, 16, 16], strides = [1, 1, 1]} : vector<4x16x96xf32> to vector<4x16x16xf32>
    %145 = vector.extract_strided_slice %126 {offsets = [0, 0, 80], sizes = [4, 16, 16], strides = [1, 1, 1]} : vector<4x16x96xf32> to vector<4x16x16xf32>
    "tpu.trace_start"() <{level = 10 : i32, message = "bjh,bkh->bjk"}> : () -> ()
    %cst_42 = arith.constant dense<0.000000e+00> : vector<4x16x16xf32>
    %146 = tpu.matmul %143, %144, %cst_42 {dimension_numbers = #tpu.dot_dimension_numbers<[2], [2], [1], [1], [0, 0, 0, 1, 1, 1], [0], [0]>} : vector<4x16x16xf32>, vector<4x16x16xf32>, vector<4x16x16xf32> -> vector<4x16x16xf32>
    "tpu.trace_stop"() : () -> ()
    %cst_43 = arith.constant 2.500000e-01 : f32
    %147 = vector.broadcast %cst_43 : f32 to vector<4x16x16xf32>
    %148 = arith.mulf %146, %147 : vector<4x16x16xf32>
    %cst_44 = arith.constant dense<0xFF800000> : vector<4x16xf32>
    %149 = vector.multi_reduction <maximumf>, %148, %cst_44 [2] : vector<4x16x16xf32> to vector<4x16xf32>
    %150 = vector.shape_cast %149 : vector<4x16xf32> to vector<4x16x1xf32>
    %151 = vector.broadcast %150 : vector<4x16x1xf32> to vector<4x16x16xf32>
    %152 = arith.subf %148, %151 : vector<4x16x16xf32>
    %153 = math.exp %152 : vector<4x16x16xf32>
    %cst_45 = arith.constant dense<0.000000e+00> : vector<4x16xf32>
    %154 = vector.multi_reduction <add>, %153, %cst_45 [2] : vector<4x16x16xf32> to vector<4x16xf32>
    %155 = vector.shape_cast %154 : vector<4x16xf32> to vector<4x16x1xf32>
    %156 = vector.broadcast %155 : vector<4x16x1xf32> to vector<4x16x16xf32>
    %157 = arith.divf %153, %156 : vector<4x16x16xf32>
    "tpu.trace_start"() <{level = 10 : i32, message = "bjk,bkh->bjh"}> : () -> ()
    %cst_46 = arith.constant dense<0.000000e+00> : vector<4x16x16xf32>
    %158 = tpu.matmul %157, %145, %cst_46 {dimension_numbers = #tpu.dot_dimension_numbers<[2], [1], [1], [2], [0, 0, 0, 1, 1, 2], [0], [0]>} : vector<4x16x16xf32>, vector<4x16x16xf32>, vector<4x16x16xf32> -> vector<4x16x16xf32>
    "tpu.trace_stop"() : () -> ()
    %159 = tpu.concatenate %142, %158 in 2 : vector<4x16x16xf32>, vector<4x16x16xf32> -> vector<4x16x32xf32>
    %cst_47 = arith.constant 0.000000e+00 : f32
    %160 = vector.broadcast %cst_47 : f32 to vector<4x16x32xf32>
    %161 = arith.maximumf %159, %160 : vector<4x16x32xf32>
    %162 = vector.shape_cast %161 : vector<4x16x32xf32> to vector<64x32xf32>
    %c1_48 = arith.constant 1 : index
    %c0_49 = arith.constant 0 : index
    %c0_50 = arith.constant 0 : index
    %163 = vector.load %arg7[%c1_48, %c0_49, %c0_50] : memref<2x32x96xf32, #tpu.memory_space<vmem>>, vector<1x32x96xf32>
    %164 = vector.shape_cast %163 : vector<1x32x96xf32> to vector<32x96xf32>
    %cst_51 = arith.constant dense<0.000000e+00> : vector<64x96xf32>
    %165 = tpu.matmul %162, %164, %cst_51 {dimension_numbers = #tpu.dot_dimension_numbers<[1], [0], [0], [1], [0, 0, 1, 1], [], []>} : vector<64x32xf32>, vector<32x96xf32>, vector<64x96xf32> -> vector<64x96xf32>
    %166 = vector.shape_cast %165 : vector<64x96xf32> to vector<4x16x96xf32>
    %167 = vector.extract_strided_slice %166 {offsets = [0, 0, 0], sizes = [4, 16, 16], strides = [1, 1, 1]} : vector<4x16x96xf32> to vector<4x16x16xf32>
    %168 = vector.extract_strided_slice %166 {offsets = [0, 0, 32], sizes = [4, 16, 16], strides = [1, 1, 1]} : vector<4x16x96xf32> to vector<4x16x16xf32>
    %169 = vector.extract_strided_slice %166 {offsets = [0, 0, 64], sizes = [4, 16, 16], strides = [1, 1, 1]} : vector<4x16x96xf32> to vector<4x16x16xf32>
    "tpu.trace_start"() <{level = 10 : i32, message = "bjh,bkh->bjk"}> : () -> ()
    %cst_52 = arith.constant dense<0.000000e+00> : vector<4x16x16xf32>
    %170 = tpu.matmul %167, %168, %cst_52 {dimension_numbers = #tpu.dot_dimension_numbers<[2], [2], [1], [1], [0, 0, 0, 1, 1, 1], [0], [0]>} : vector<4x16x16xf32>, vector<4x16x16xf32>, vector<4x16x16xf32> -> vector<4x16x16xf32>
    "tpu.trace_stop"() : () -> ()
    %cst_53 = arith.constant 2.500000e-01 : f32
    %171 = vector.broadcast %cst_53 : f32 to vector<4x16x16xf32>
    %172 = arith.mulf %170, %171 : vector<4x16x16xf32>
    %cst_54 = arith.constant dense<0xFF800000> : vector<4x16xf32>
    %173 = vector.multi_reduction <maximumf>, %172, %cst_54 [2] : vector<4x16x16xf32> to vector<4x16xf32>
    %174 = vector.shape_cast %173 : vector<4x16xf32> to vector<4x16x1xf32>
    %175 = vector.broadcast %174 : vector<4x16x1xf32> to vector<4x16x16xf32>
    %176 = arith.subf %172, %175 : vector<4x16x16xf32>
    %177 = math.exp %176 : vector<4x16x16xf32>
    %cst_55 = arith.constant dense<0.000000e+00> : vector<4x16xf32>
    %178 = vector.multi_reduction <add>, %177, %cst_55 [2] : vector<4x16x16xf32> to vector<4x16xf32>
    %179 = vector.shape_cast %178 : vector<4x16xf32> to vector<4x16x1xf32>
    %180 = vector.broadcast %179 : vector<4x16x1xf32> to vector<4x16x16xf32>
    %181 = arith.divf %177, %180 : vector<4x16x16xf32>
    "tpu.trace_start"() <{level = 10 : i32, message = "bjk,bkh->bjh"}> : () -> ()
    %cst_56 = arith.constant dense<0.000000e+00> : vector<4x16x16xf32>
    %182 = tpu.matmul %181, %169, %cst_56 {dimension_numbers = #tpu.dot_dimension_numbers<[2], [1], [1], [2], [0, 0, 0, 1, 1, 2], [0], [0]>} : vector<4x16x16xf32>, vector<4x16x16xf32>, vector<4x16x16xf32> -> vector<4x16x16xf32>
    "tpu.trace_stop"() : () -> ()
    %183 = vector.extract_strided_slice %166 {offsets = [0, 0, 16], sizes = [4, 16, 16], strides = [1, 1, 1]} : vector<4x16x96xf32> to vector<4x16x16xf32>
    %184 = vector.extract_strided_slice %166 {offsets = [0, 0, 48], sizes = [4, 16, 16], strides = [1, 1, 1]} : vector<4x16x96xf32> to vector<4x16x16xf32>
    %185 = vector.extract_strided_slice %166 {offsets = [0, 0, 80], sizes = [4, 16, 16], strides = [1, 1, 1]} : vector<4x16x96xf32> to vector<4x16x16xf32>
    "tpu.trace_start"() <{level = 10 : i32, message = "bjh,bkh->bjk"}> : () -> ()
    %cst_57 = arith.constant dense<0.000000e+00> : vector<4x16x16xf32>
    %186 = tpu.matmul %183, %184, %cst_57 {dimension_numbers = #tpu.dot_dimension_numbers<[2], [2], [1], [1], [0, 0, 0, 1, 1, 1], [0], [0]>} : vector<4x16x16xf32>, vector<4x16x16xf32>, vector<4x16x16xf32> -> vector<4x16x16xf32>
    "tpu.trace_stop"() : () -> ()
    %cst_58 = arith.constant 2.500000e-01 : f32
    %187 = vector.broadcast %cst_58 : f32 to vector<4x16x16xf32>
    %188 = arith.mulf %186, %187 : vector<4x16x16xf32>
    %cst_59 = arith.constant dense<0xFF800000> : vector<4x16xf32>
    %189 = vector.multi_reduction <maximumf>, %188, %cst_59 [2] : vector<4x16x16xf32> to vector<4x16xf32>
    %190 = vector.shape_cast %189 : vector<4x16xf32> to vector<4x16x1xf32>
    %191 = vector.broadcast %190 : vector<4x16x1xf32> to vector<4x16x16xf32>
    %192 = arith.subf %188, %191 : vector<4x16x16xf32>
    %193 = math.exp %192 : vector<4x16x16xf32>
    %cst_60 = arith.constant dense<0.000000e+00> : vector<4x16xf32>
    %194 = vector.multi_reduction <add>, %193, %cst_60 [2] : vector<4x16x16xf32> to vector<4x16xf32>
    %195 = vector.shape_cast %194 : vector<4x16xf32> to vector<4x16x1xf32>
    %196 = vector.broadcast %195 : vector<4x16x1xf32> to vector<4x16x16xf32>
    %197 = arith.divf %193, %196 : vector<4x16x16xf32>
    "tpu.trace_start"() <{level = 10 : i32, message = "bjk,bkh->bjh"}> : () -> ()
    %cst_61 = arith.constant dense<0.000000e+00> : vector<4x16x16xf32>
    %198 = tpu.matmul %197, %185, %cst_61 {dimension_numbers = #tpu.dot_dimension_numbers<[2], [1], [1], [2], [0, 0, 0, 1, 1, 2], [0], [0]>} : vector<4x16x16xf32>, vector<4x16x16xf32>, vector<4x16x16xf32> -> vector<4x16x16xf32>
    "tpu.trace_stop"() : () -> ()
    %199 = tpu.concatenate %182, %198 in 2 : vector<4x16x16xf32>, vector<4x16x16xf32> -> vector<4x16x32xf32>
    %cst_62 = arith.constant 0.000000e+00 : f32
    %200 = vector.broadcast %cst_62 : f32 to vector<4x16x32xf32>
    %201 = arith.maximumf %199, %200 : vector<4x16x32xf32>
    "tpu.trace_start"() <{level = 10 : i32, message = "bjd,bkd->bjk"}> : () -> ()
    %cst_63 = arith.constant dense<0.000000e+00> : vector<4x16x16xf32>
    %202 = tpu.matmul %201, %201, %cst_63 {dimension_numbers = #tpu.dot_dimension_numbers<[2], [2], [1], [1], [0, 0, 0, 1, 1, 1], [0], [0]>} : vector<4x16x32xf32>, vector<4x16x32xf32>, vector<4x16x16xf32> -> vector<4x16x16xf32>
    "tpu.trace_stop"() : () -> ()
    %cst_64 = arith.constant 0.176776692 : f32
    %203 = vector.broadcast %cst_64 : f32 to vector<4x16x16xf32>
    %204 = arith.mulf %202, %203 : vector<4x16x16xf32>
    %205 = arith.mulf %120, %120 : vector<4x16x3xf32>
    %cst_65 = arith.constant dense<0.000000e+00> : vector<4x16xf32>
    %206 = vector.multi_reduction <add>, %205, %cst_65 [2] : vector<4x16x3xf32> to vector<4x16xf32>
    %207 = vector.shape_cast %206 : vector<4x16xf32> to vector<4x16x1xf32>
    "tpu.trace_start"() <{level = 10 : i32, message = "bjc,bkc->bjk"}> : () -> ()
    %cst_66 = arith.constant dense<0.000000e+00> : vector<4x16x16xf32>
    %208 = tpu.matmul %120, %120, %cst_66 {dimension_numbers = #tpu.dot_dimension_numbers<[2], [2], [1], [1], [0, 0, 0, 1, 1, 1], [0], [0]>} : vector<4x16x3xf32>, vector<4x16x3xf32>, vector<4x16x16xf32> -> vector<4x16x16xf32>
    "tpu.trace_stop"() : () -> ()
    %209 = tpu.transpose %207, [0, 2, 1] : vector<4x16x1xf32> -> vector<4x1x16xf32>
    %210 = vector.broadcast %207 : vector<4x16x1xf32> to vector<4x16x16xf32>
    %211 = vector.broadcast %209 : vector<4x1x16xf32> to vector<4x16x16xf32>
    %212 = arith.addf %210, %211 : vector<4x16x16xf32>
    %cst_67 = arith.constant 2.000000e+00 : f32
    %213 = vector.broadcast %cst_67 : f32 to vector<4x16x16xf32>
    %214 = arith.mulf %213, %208 : vector<4x16x16xf32>
    %215 = arith.subf %212, %214 : vector<4x16x16xf32>
    %216 = arith.subf %204, %215 : vector<4x16x16xf32>
    %cst_68 = arith.constant dense<0xFF800000> : vector<4x16xf32>
    %217 = vector.multi_reduction <maximumf>, %216, %cst_68 [2] : vector<4x16x16xf32> to vector<4x16xf32>
    %218 = vector.shape_cast %217 : vector<4x16xf32> to vector<4x16x1xf32>
    %cst_69 = arith.constant dense<0xFF800000> : vector<4x1xf32>
    %219 = vector.multi_reduction <maximumf>, %218, %cst_69 [1] : vector<4x16x1xf32> to vector<4x1xf32>
    %220 = vector.shape_cast %219 : vector<4x1xf32> to vector<4x1x1xf32>
    %221 = vector.broadcast %220 : vector<4x1x1xf32> to vector<4x16x16xf32>
    %222 = arith.subf %216, %221 : vector<4x16x16xf32>
    %cst_70 = arith.constant 5.000000e+00 : f32
    %223 = vector.broadcast %cst_70 : f32 to vector<4x16x16xf32>
    %224 = arith.mulf %223, %222 : vector<4x16x16xf32>
    %225 = math.exp %224 : vector<4x16x16xf32>
    %cst_71 = arith.constant dense<0.000000e+00> : vector<4x16xf32>
    %226 = vector.multi_reduction <add>, %225, %cst_71 [2] : vector<4x16x16xf32> to vector<4x16xf32>
    %227 = vector.shape_cast %226 : vector<4x16xf32> to vector<4x16x1xf32>
    %cst_72 = arith.constant 9.99999993E-9 : f32
    %228 = vector.broadcast %cst_72 : f32 to vector<4x16x1xf32>
    %229 = arith.addf %227, %228 : vector<4x16x1xf32>
    %230 = vector.broadcast %229 : vector<4x16x1xf32> to vector<4x16x16xf32>
    %231 = arith.divf %225, %230 : vector<4x16x16xf32>
    %cst_73 = arith.constant dense<0.000000e+00> : vector<4x16xf32>
    %232 = vector.multi_reduction <add>, %231, %cst_73 [1] : vector<4x16x16xf32> to vector<4x16xf32>
    %233 = vector.shape_cast %232 : vector<4x16xf32> to vector<4x1x16xf32>
    %cst_74 = arith.constant 9.99999993E-9 : f32
    %234 = vector.broadcast %cst_74 : f32 to vector<4x1x16xf32>
    %235 = arith.addf %233, %234 : vector<4x1x16xf32>
    %236 = vector.broadcast %235 : vector<4x1x16xf32> to vector<4x16x16xf32>
    %237 = arith.divf %231, %236 : vector<4x16x16xf32>
    %cst_75 = arith.constant dense<0.000000e+00> : vector<4x16xf32>
    %238 = vector.multi_reduction <add>, %237, %cst_75 [2] : vector<4x16x16xf32> to vector<4x16xf32>
    %239 = vector.shape_cast %238 : vector<4x16xf32> to vector<4x16x1xf32>
    %cst_76 = arith.constant 9.99999993E-9 : f32
    %240 = vector.broadcast %cst_76 : f32 to vector<4x16x1xf32>
    %241 = arith.addf %239, %240 : vector<4x16x1xf32>
    %242 = vector.broadcast %241 : vector<4x16x1xf32> to vector<4x16x16xf32>
    %243 = arith.divf %237, %242 : vector<4x16x16xf32>
    %cst_77 = arith.constant dense<0.000000e+00> : vector<4x16xf32>
    %244 = vector.multi_reduction <add>, %243, %cst_77 [1] : vector<4x16x16xf32> to vector<4x16xf32>
    %245 = vector.shape_cast %244 : vector<4x16xf32> to vector<4x1x16xf32>
    %cst_78 = arith.constant 9.99999993E-9 : f32
    %246 = vector.broadcast %cst_78 : f32 to vector<4x1x16xf32>
    %247 = arith.addf %245, %246 : vector<4x1x16xf32>
    %248 = vector.broadcast %247 : vector<4x1x16xf32> to vector<4x16x16xf32>
    %249 = arith.divf %243, %248 : vector<4x16x16xf32>
    %cst_79 = arith.constant dense<0.000000e+00> : vector<4x16xf32>
    %250 = vector.multi_reduction <add>, %249, %cst_79 [2] : vector<4x16x16xf32> to vector<4x16xf32>
    %251 = vector.shape_cast %250 : vector<4x16xf32> to vector<4x16x1xf32>
    %cst_80 = arith.constant 9.99999993E-9 : f32
    %252 = vector.broadcast %cst_80 : f32 to vector<4x16x1xf32>
    %253 = arith.addf %251, %252 : vector<4x16x1xf32>
    %254 = vector.broadcast %253 : vector<4x16x1xf32> to vector<4x16x16xf32>
    %255 = arith.divf %249, %254 : vector<4x16x16xf32>
    %cst_81 = arith.constant dense<0.000000e+00> : vector<4x16xf32>
    %256 = vector.multi_reduction <add>, %255, %cst_81 [1] : vector<4x16x16xf32> to vector<4x16xf32>
    %257 = vector.shape_cast %256 : vector<4x16xf32> to vector<4x1x16xf32>
    %cst_82 = arith.constant 9.99999993E-9 : f32
    %258 = vector.broadcast %cst_82 : f32 to vector<4x1x16xf32>
    %259 = arith.addf %257, %258 : vector<4x1x16xf32>
    %260 = vector.broadcast %259 : vector<4x1x16xf32> to vector<4x16x16xf32>
    %261 = arith.divf %255, %260 : vector<4x16x16xf32>
    %cst_83 = arith.constant dense<0.000000e+00> : vector<4x16xf32>
    %262 = vector.multi_reduction <add>, %261, %cst_83 [2] : vector<4x16x16xf32> to vector<4x16xf32>
    %263 = vector.shape_cast %262 : vector<4x16xf32> to vector<4x16x1xf32>
    %cst_84 = arith.constant 9.99999993E-9 : f32
    %264 = vector.broadcast %cst_84 : f32 to vector<4x16x1xf32>
    %265 = arith.addf %263, %264 : vector<4x16x1xf32>
    %266 = vector.broadcast %265 : vector<4x16x1xf32> to vector<4x16x16xf32>
    %267 = arith.divf %261, %266 : vector<4x16x16xf32>
    %cst_85 = arith.constant dense<0.000000e+00> : vector<4x16xf32>
    %268 = vector.multi_reduction <add>, %267, %cst_85 [1] : vector<4x16x16xf32> to vector<4x16xf32>
    %269 = vector.shape_cast %268 : vector<4x16xf32> to vector<4x1x16xf32>
    %cst_86 = arith.constant 9.99999993E-9 : f32
    %270 = vector.broadcast %cst_86 : f32 to vector<4x1x16xf32>
    %271 = arith.addf %269, %270 : vector<4x1x16xf32>
    %272 = vector.broadcast %271 : vector<4x1x16xf32> to vector<4x16x16xf32>
    %273 = arith.divf %267, %272 : vector<4x16x16xf32>
    %cst_87 = arith.constant dense<0.000000e+00> : vector<4x16xf32>
    %274 = vector.multi_reduction <add>, %273, %cst_87 [2] : vector<4x16x16xf32> to vector<4x16xf32>
    %275 = vector.shape_cast %274 : vector<4x16xf32> to vector<4x16x1xf32>
    %cst_88 = arith.constant 9.99999993E-9 : f32
    %276 = vector.broadcast %cst_88 : f32 to vector<4x16x1xf32>
    %277 = arith.addf %275, %276 : vector<4x16x1xf32>
    %278 = vector.broadcast %277 : vector<4x16x1xf32> to vector<4x16x16xf32>
    %279 = arith.divf %273, %278 : vector<4x16x16xf32>
    %cst_89 = arith.constant dense<0.000000e+00> : vector<4x16xf32>
    %280 = vector.multi_reduction <add>, %279, %cst_89 [1] : vector<4x16x16xf32> to vector<4x16xf32>
    %281 = vector.shape_cast %280 : vector<4x16xf32> to vector<4x1x16xf32>
    %cst_90 = arith.constant 9.99999993E-9 : f32
    %282 = vector.broadcast %cst_90 : f32 to vector<4x1x16xf32>
    %283 = arith.addf %281, %282 : vector<4x1x16xf32>
    %284 = vector.broadcast %283 : vector<4x1x16xf32> to vector<4x16x16xf32>
    %285 = arith.divf %279, %284 : vector<4x16x16xf32>
    %c0_91 = arith.constant 0 : index
    %c0_92 = arith.constant 0 : index
    %c0_93 = arith.constant 0 : index
    %286 = vector.load %arg10[%c0_91, %c0_92, %c0_93] : memref<4x16x16xf32, #tpu.memory_space<vmem>>, vector<4x16x16xf32>
    tpu.vector_store %arg10[%c0_91, %c0_92, %c0_93], %285 {strides = array<i32>} : memref<4x16x16xf32, #tpu.memory_space<vmem>>, vector<4x16x16xf32>,
    return
  }
  func.func @transform_0(%arg0: i32) -> (i32, i32) {
    %c0_i32 = arith.constant 0 : i32
    %c0_i32_0 = arith.constant 0 : i32
    return %c0_i32, %arg0 : i32, i32
  }
  func.func @transform_1(%arg0: i32) -> i32 {
    %c0_i32 = arith.constant 0 : i32
    %c0_i32_0 = arith.constant 0 : i32
    return %c0_i32 : i32
  }
  func.func @transform_2(%arg0: i32) -> (i32, i32) {
    %c0_i32 = arith.constant 0 : i32
    %c0_i32_0 = arith.constant 0 : i32
    %c0_i32_1 = arith.constant 0 : i32
    return %c0_i32, %c0_i32_0 : i32, i32
  }
  func.func @transform_3(%arg0: i32) -> (i32, i32) {
    %c0_i32 = arith.constant 0 : i32
    %c0_i32_0 = arith.constant 0 : i32
    %c0_i32_1 = arith.constant 0 : i32
    return %c0_i32, %c0_i32_0 : i32, i32
  }
  func.func @transform_4(%arg0: i32) -> (i32, i32) {
    %c0_i32 = arith.constant 0 : i32
    %c0_i32_0 = arith.constant 0 : i32
    %c0_i32_1 = arith.constant 0 : i32
    return %c0_i32, %c0_i32_0 : i32, i32
  }
  func.func @transform_5(%arg0: i32) -> (i32, i32) {
    %c0_i32 = arith.constant 0 : i32
    %c0_i32_0 = arith.constant 0 : i32
    %c0_i32_1 = arith.constant 0 : i32
    return %c0_i32, %c0_i32_0 : i32, i32
  }
  func.func @transform_6(%arg0: i32) -> (i32, i32, i32) {
    %c0_i32 = arith.constant 0 : i32
    %c0_i32_0 = arith.constant 0 : i32
    %c0_i32_1 = arith.constant 0 : i32
    %c0_i32_2 = arith.constant 0 : i32
    return %c0_i32, %c0_i32_0, %c0_i32_1 : i32, i32, i32
  }
  func.func @transform_7(%arg0: i32) -> (i32, i32) {
    %c0_i32 = arith.constant 0 : i32
    %c0_i32_0 = arith.constant 0 : i32
    %c0_i32_1 = arith.constant 0 : i32
    return %c0_i32, %c0_i32_0 : i32, i32
  }
  func.func @transform_8(%arg0: i32) -> (i32, i32, i32) {
    %c0_i32 = arith.constant 0 : i32
    %c0_i32_0 = arith.constant 0 : i32
    %c0_i32_1 = arith.constant 0 : i32
    return %arg0, %c0_i32, %c0_i32_0 : i32, i32, i32
  }
  func.func @transform_9(%arg0: i32) -> (i32, i32, i32) {
    %c0_i32 = arith.constant 0 : i32
    %c0_i32_0 = arith.constant 0 : i32
    %c0_i32_1 = arith.constant 0 : i32
    return %arg0, %c0_i32, %c0_i32_0 : i32, i32, i32
  }
  func.func @transform_10(%arg0: i32) -> (i32, i32, i32) {
    %c0_i32 = arith.constant 0 : i32
    %c0_i32_0 = arith.constant 0 : i32
    %c0_i32_1 = arith.constant 0 : i32
    return %arg0, %c0_i32, %c0_i32_0 : i32, i32, i32
  }
}

</mosaic_0001>

<llo_original>
// kernel: _lambda_.1
$region0: #{_lambda_.1}
  #allocation0 [shape = 'u32[]', space=smem, size = 0x4, offset = 0x4, fixed_abs, tag = 'smem constant byte address 0x4 - core index']
  #allocation1 [shape = 'u32[144,128]{1,0:T(1,128)}', space=vmem, size = 0x12000, scoped, tag = 'internal scratch']
  %s0 = inlined_call_operand.vmem [shape: f32[5,2048], index: 0, kind: input, shape index: {}]
  %s1 = inlined_call_operand.vmem [shape: f32[4], index: 1, kind: input, shape index: {}]
  %s2 = inlined_call_operand.vmem [shape: bf16[64,64], index: 2, kind: input, shape index: {}]
  %s3 = inlined_call_operand.vmem [shape: f32[64,5], index: 3, kind: input, shape index: {}]
  %s4 = inlined_call_operand.vmem [shape: f32[65,32], index: 4, kind: input, shape index: {}]
  %s5 = inlined_call_operand.vmem [shape: f32[33,512], index: 5, kind: input, shape index: {}]
  %s6 = inlined_call_operand.vmem [shape: f32[2,32,96], index: 6, kind: input, shape index: {}]
  %s7 = inlined_call_operand.vmem [shape: f32[33,3], index: 7, kind: input, shape index: {}]
  %s8 = inlined_call_operand.vmem [shape: f32[8,16,3], index: 8, kind: output, shape index: {0}]
  %s9 = inlined_call_operand.hbm [shape: f32[8,16,16], index: 9, kind: output, shape index: {1}]
  %s10 = inlined_call_operand.hbm [shape: f32[8,1,64], index: 10, kind: output, shape index: {2}]
  %11 = xla_tuple %s8, %s9, %s10
  %s12 = sld [smem:[#allocation0]]
  $region85: #{_lambda_.1} parent=0
    _
  %s14 = ssub.s32 1, %s12
  %s15 = scalar_select 0, %s14, %s12
  $region1: #{_lambda_.1} parent=0
    #allocation2 [shape = 'u8[512]{0}', space=smem, size = 0x200, scoped, tag = 'input window, operand 1, single buffered']
    #allocation3 [shape = 's32[2]{0}', space=sflag, size = 0x8, scoped, tag = 'scoped memory for _lambda_.1']
    #allocation4 [shape = 's32[2]{0}', space=sflag, size = 0x8, scoped, tag = 'scoped memory for _lambda_.1']
    #allocation5 [shape = 'u8[65536]{0}', space=vmem, size = 0x10000, scoped, tag = 'output window, operand 1']
    #allocation6 [shape = 'u8[4096]{0}', space=vmem, size = 0x1000, scoped, tag = 'output window, operand 2']
    #allocation7 [shape = 's32[2]{0}', space=sflag, size = 0x8, scoped, tag = 'scoped memory for _lambda_.1']
    %16 = vsyncpa [#allocation4], 0
    %17 = vsyncpa [#allocation3], 0
    %s18 = scalar_lea.sflag [#allocation3], 1
    %19 = vsyncpa %s18, 0
    %20 = vsyncpa [#allocation7], 0
    %s21 = scalar_lea.sflag [#allocation7], 1
    %22 = vsyncpa %s21, 0
    loop: start=0, step=1, limit=4
    $region2: #{_lambda_.1} parent=1 // loop_pre_header
      _
    $region3: #{_lambda_.1} parent=1 // loop_header
      %s24 = sphi 0, %s28
      %p25 = scmp.ge.s32.totalorder %s24, 4
      %s34 = sphi 0, %s36
      %s37 = sphi 0, %s34
      %s38 = sphi 0, %s37
      %s54 = sphi 0, %s38
      %s58 = sphi 0, %s58
      %s60 = sphi 0, %s58
      %s61 = sphi 0, %s60
      %s75 = sphi 0, %s61
      %s79 = sphi 0, %s79
      %s81 = sphi 0, %s79
      %s82 = sphi 0, %s81
      %s96 = sphi 0, %s82
      %s100 = sphi 0, %s100
      %s102 = sphi 0, %s100
      %s103 = sphi 0, %s102
      %s117 = sphi 0, %s103
      %s121 = sphi 0, %s121
      %s123 = sphi 0, %s121
      %s124 = sphi 0, %s123
      %s138 = sphi 0, %s124
      %s142 = sphi 0, %s142
      %s144 = sphi 0, %s142
      %s145 = sphi 0, %s144
      %s159 = sphi 0, %s145
      %s163 = sphi 0, %s163
      %s165 = sphi 0, %s163
      %s166 = sphi 0, %s165
      %s180 = sphi 0, %s166
      %s184 = sphi 0, %s184
      %s186 = sphi 0, %s184
      %s187 = sphi 0, %s186
      %s201 = sphi 0, %s187
      %s207 = sphi 0, %s209
      %s210 = sphi 0, %s207
      %s211 = sphi 0, %s210
      %s227 = sphi 0, %s211
      %s233 = sphi 0, %s235
      %s236 = sphi 0, %s233
      %s237 = sphi 0, %s236
      %s253 = sphi 0, %s237
      %s259 = sphi 0, %s261
      %s262 = sphi 0, %s259
      %s263 = sphi 0, %s262
      %s279 = sphi 0, %s263
    $region4: #{_lambda_.1} parent=1 // loop_header_branch
      %27 = sbr.rel (%p25) target = $region8
    $region5: #{_lambda_.1} parent=1 // loop_body
      %s29 = ssub.s32 %s24, 1
      %s30 = ssub.s32 %s24, 2
      %s31 = sadd.s32 %s24, 1
      %s32 = ssub.s32 %s24, %s31
      %p33 = scmp.eq.s32.totalorder %s32, 0
      %s35 = sadd.s32 %s34, 1
      %s36 = scalar_select %p33, %s34, %s35
      %p39 = pneg %p33
      %p40 = scmp.eq.s32.totalorder %s24, 1
      %p41 = por %p39, %p40
      %p42 = scmp.ne.s32.totalorder %s34, %s37
      %p43 = scmp.eq.s32.totalorder %s24, 0
      %p44 = por %p42, %p43
      %p45 = scmp.ne.s32.totalorder %s34, %s37
      %p46 = scmp.eq.s32.totalorder %s29, 1
      %p47 = por %p45, %p46
      %p48 = scmp.ne.s32.totalorder %s37, %s38
      %p49 = scmp.eq.s32.totalorder %s29, 0
      %p50 = por %p48, %p49
      %p51 = scmp.ne.s32.totalorder %s37, %s38
      %p52 = scmp.eq.s32.totalorder %s30, 1
      %p53 = por %p51, %p52
      %p55 = scmp.ne.s32.totalorder %s38, %s54
      %p56 = scmp.eq.s32.totalorder %s30, 0
      %p57 = por %p55, %p56
      %s59 = sadd.s32 %s58, 1
      %p62 = scmp.eq.s32.totalorder %s24, 1
      %p63 = scmp.ne.s32.totalorder %s58, %s60
      %p64 = scmp.eq.s32.totalorder %s24, 0
      %p65 = por %p63, %p64
      %p66 = scmp.ne.s32.totalorder %s58, %s60
      %p67 = scmp.eq.s32.totalorder %s29, 1
      %p68 = por %p66, %p67
      %p69 = scmp.ne.s32.totalorder %s60, %s61
      %p70 = scmp.eq.s32.totalorder %s29, 0
      %p71 = por %p69, %p70
      %p72 = scmp.ne.s32.totalorder %s60, %s61
      %p73 = scmp.eq.s32.totalorder %s30, 1
      %p74 = por %p72, %p73
      %p76 = scmp.ne.s32.totalorder %s61, %s75
      %p77 = scmp.eq.s32.totalorder %s30, 0
      %p78 = por %p76, %p77
      %s80 = sadd.s32 %s79, 1
      %p83 = scmp.eq.s32.totalorder %s24, 1
      %p84 = scmp.ne.s32.totalorder %s79, %s81
      %p85 = scmp.eq.s32.totalorder %s24, 0
      %p86 = por %p84, %p85
      %p87 = scmp.ne.s32.totalorder %s79, %s81
      %p88 = scmp.eq.s32.totalorder %s29, 1
      %p89 = por %p87, %p88
      %p90 = scmp.ne.s32.totalorder %s81, %s82
      %p91 = scmp.eq.s32.totalorder %s29, 0
      %p92 = por %p90, %p91
      %p93 = scmp.ne.s32.totalorder %s81, %s82
      %p94 = scmp.eq.s32.totalorder %s30, 1
      %p95 = por %p93, %p94
      %p97 = scmp.ne.s32.totalorder %s82, %s96
      %p98 = scmp.eq.s32.totalorder %s30, 0
      %p99 = por %p97, %p98
      %s101 = sadd.s32 %s100, 1
      %p104 = scmp.eq.s32.totalorder %s24, 1
      %p105 = scmp.ne.s32.totalorder %s100, %s102
      %p106 = scmp.eq.s32.totalorder %s24, 0
      %p107 = por %p105, %p106
      %p108 = scmp.ne.s32.totalorder %s100, %s102
      %p109 = scmp.eq.s32.totalorder %s29, 1
      %p110 = por %p108, %p109
      %p111 = scmp.ne.s32.totalorder %s102, %s103
      %p112 = scmp.eq.s32.totalorder %s29, 0
      %p113 = por %p111, %p112
      %p114 = scmp.ne.s32.totalorder %s102, %s103
      %p115 = scmp.eq.s32.totalorder %s30, 1
      %p116 = por %p114, %p115
      %p118 = scmp.ne.s32.totalorder %s103, %s117
      %p119 = scmp.eq.s32.totalorder %s30, 0
      %p120 = por %p118, %p119
      %s122 = sadd.s32 %s121, 1
      %p125 = scmp.eq.s32.totalorder %s24, 1
      %p126 = scmp.ne.s32.totalorder %s121, %s123
      %p127 = scmp.eq.s32.totalorder %s24, 0
      %p128 = por %p126, %p127
      %p129 = scmp.ne.s32.totalorder %s121, %s123
      %p130 = scmp.eq.s32.totalorder %s29, 1
      %p131 = por %p129, %p130
      %p132 = scmp.ne.s32.totalorder %s123, %s124
      %p133 = scmp.eq.s32.totalorder %s29, 0
      %p134 = por %p132, %p133
      %p135 = scmp.ne.s32.totalorder %s123, %s124
      %p136 = scmp.eq.s32.totalorder %s30, 1
      %p137 = por %p135, %p136
      %p139 = scmp.ne.s32.totalorder %s124, %s138
      %p140 = scmp.eq.s32.totalorder %s30, 0
      %p141 = por %p139, %p140
      %s143 = sadd.s32 %s142, 1
      %p146 = scmp.eq.s32.totalorder %s24, 1
      %p147 = scmp.ne.s32.totalorder %s142, %s144
      %p148 = scmp.eq.s32.totalorder %s24, 0
      %p149 = por %p147, %p148
      %p150 = scmp.ne.s32.totalorder %s142, %s144
      %p151 = scmp.eq.s32.totalorder %s29, 1
      %p152 = por %p150, %p151
      %p153 = scmp.ne.s32.totalorder %s144, %s145
      %p154 = scmp.eq.s32.totalorder %s29, 0
      %p155 = por %p153, %p154
      %p156 = scmp.ne.s32.totalorder %s144, %s145
      %p157 = scmp.eq.s32.totalorder %s30, 1
      %p158 = por %p156, %p157
      %p160 = scmp.ne.s32.totalorder %s145, %s159
      %p161 = scmp.eq.s32.totalorder %s30, 0
      %p162 = por %p160, %p161
      %s164 = sadd.s32 %s163, 1
      %p167 = scmp.eq.s32.totalorder %s24, 1
      %p168 = scmp.ne.s32.totalorder %s163, %s165
      %p169 = scmp.eq.s32.totalorder %s24, 0
      %p170 = por %p168, %p169
      %p171 = scmp.ne.s32.totalorder %s163, %s165
      %p172 = scmp.eq.s32.totalorder %s29, 1
      %p173 = por %p171, %p172
      %p174 = scmp.ne.s32.totalorder %s165, %s166
      %p175 = scmp.eq.s32.totalorder %s29, 0
      %p176 = por %p174, %p175
      %p177 = scmp.ne.s32.totalorder %s165, %s166
      %p178 = scmp.eq.s32.totalorder %s30, 1
      %p179 = por %p177, %p178
      %p181 = scmp.ne.s32.totalorder %s166, %s180
      %p182 = scmp.eq.s32.totalorder %s30, 0
      %p183 = por %p181, %p182
      %s185 = sadd.s32 %s184, 1
      %p188 = scmp.eq.s32.totalorder %s24, 1
      %p189 = scmp.ne.s32.totalorder %s184, %s186
      %p190 = scmp.eq.s32.totalorder %s24, 0
      %p191 = por %p189, %p190
      %p192 = scmp.ne.s32.totalorder %s184, %s186
      %p193 = scmp.eq.s32.totalorder %s29, 1
      %p194 = por %p192, %p193
      %p195 = scmp.ne.s32.totalorder %s186, %s187
      %p196 = scmp.eq.s32.totalorder %s29, 0
      %p197 = por %p195, %p196
      %p198 = scmp.ne.s32.totalorder %s186, %s187
      %p199 = scmp.eq.s32.totalorder %s30, 1
      %p200 = por %p198, %p199
      %p202 = scmp.ne.s32.totalorder %s187, %s201
      %p203 = scmp.eq.s32.totalorder %s30, 0
      %p204 = por %p202, %p203
      %s205 = ssub.s32 %s24, %s31
      %p206 = scmp.eq.s32.totalorder %s205, 0
      %s208 = sadd.s32 %s207, 1
      %s209 = scalar_select %p206, %s207, %s208
      %p212 = pneg %p206
      %p213 = scmp.eq.s32.totalorder %s24, 1
      %p214 = por %p212, %p213
      %p215 = scmp.ne.s32.totalorder %s207, %s210
      %p216 = scmp.eq.s32.totalorder %s24, 0
      %p217 = por %p215, %p216
      %p218 = scmp.ne.s32.totalorder %s207, %s210
      %p219 = scmp.eq.s32.totalorder %s29, 1
      %p220 = por %p218, %p219
      %p221 = scmp.ne.s32.totalorder %s210, %s211
      %p222 = scmp.eq.s32.totalorder %s29, 0
      %p223 = por %p221, %p222
      %p224 = scmp.ne.s32.totalorder %s210, %s211
      %p225 = scmp.eq.s32.totalorder %s30, 1
      %p226 = por %p224, %p225
      %p228 = scmp.ne.s32.totalorder %s211, %s227
      %p229 = scmp.eq.s32.totalorder %s30, 0
      %p230 = por %p228, %p229
      %s231 = ssub.s32 %s24, %s31
      %p232 = scmp.eq.s32.totalorder %s231, 0
      %s234 = sadd.s32 %s233, 1
      %s235 = scalar_select %p232, %s233, %s234
      %p238 = pneg %p232
      %p239 = scmp.eq.s32.totalorder %s24, 1
      %p240 = por %p238, %p239
      %p241 = scmp.ne.s32.totalorder %s233, %s236
      %p242 = scmp.eq.s32.totalorder %s24, 0
      %p243 = por %p241, %p242
      %p244 = scmp.ne.s32.totalorder %s233, %s236
      %p245 = scmp.eq.s32.totalorder %s29, 1
      %p246 = por %p244, %p245
      %p247 = scmp.ne.s32.totalorder %s236, %s237
      %p248 = scmp.eq.s32.totalorder %s29, 0
      %p249 = por %p247, %p248
      %p250 = scmp.ne.s32.totalorder %s236, %s237
      %p251 = scmp.eq.s32.totalorder %s30, 1
      %p252 = por %p250, %p251
      %p254 = scmp.ne.s32.totalorder %s237, %s253
      %p255 = scmp.eq.s32.totalorder %s30, 0
      %p256 = por %p254, %p255
      %s257 = ssub.s32 %s24, %s31
      %p258 = scmp.eq.s32.totalorder %s257, 0
      %s260 = sadd.s32 %s259, 1
      %s261 = scalar_select %p258, %s259, %s260
      %p264 = pneg %p258
      %p265 = scmp.eq.s32.totalorder %s24, 1
      %p266 = por %p264, %p265
      %p267 = scmp.ne.s32.totalorder %s259, %s262
      %p268 = scmp.eq.s32.totalorder %s24, 0
      %p269 = por %p267, %p268
      %p270 = scmp.ne.s32.totalorder %s259, %s262
      %p271 = scmp.eq.s32.totalorder %s29, 1
      %p272 = por %p270, %p271
      %p273 = scmp.ne.s32.totalorder %s262, %s263
      %p274 = scmp.eq.s32.totalorder %s29, 0
      %p275 = por %p273, %p274
      %p276 = scmp.ne.s32.totalorder %s262, %s263
      %p277 = scmp.eq.s32.totalorder %s30, 1
      %p278 = por %p276, %p277
      %p280 = scmp.ne.s32.totalorder %s263, %s279
      %p281 = scmp.eq.s32.totalorder %s30, 0
      %p282 = por %p280, %p281
      %p283 = scmp.le.s32.totalorder 1, %s24
      %p284 = scmp.lt.s32.totalorder %s24, 3
      %p285 = pnand %p283, %p284
      %p286 = pneg %p285
      // Predicated region
      $region9: #{_lambda_.1} parent=5 // pred_check
        _
      $region10: #{_lambda_.1} parent=5 // pred_check_branch
        %288 = sbr.rel (%p285) target = $region12
      $region11: #{_lambda_.1} parent=5 // pred_region
        %s289 = ssub.s32 %s24, 1
        // Predicated region
        $region13: #{_lambda_.1} parent=11 // pred_check
          %p290 = pneg %p71
        $region14: #{_lambda_.1} parent=11 // pred_check_branch
          %292 = sbr.rel (%p290) target = $region16
        $region15: #{_lambda_.1} parent=11 // pred_region
          %s294 = ssub.s32 16, 16
          %295 = vsyncadd [#allocation4], %s294
          %s297 = sshll.u32 %s1, 4
          %s298 = int_to_ptr.vmem [resolvable:$true] %s297
          %300 = dma.vmem_to_smem %s298, 16, [#allocation2], [#allocation4]
        $region16: #{_lambda_.1} parent=11 // pred_fallthru
          _
        // Predicated region
        $region17: #{_lambda_.1} parent=11 // pred_check
          %p301 = pneg %p92
        $region18: #{_lambda_.1} parent=11 // pred_check_branch
          %303 = sbr.rel (%p301) target = $region20
        $region19: #{_lambda_.1} parent=11 // pred_region
          _
        $region20: #{_lambda_.1} parent=11 // pred_fallthru
          _
        // Predicated region
        $region21: #{_lambda_.1} parent=11 // pred_check
          %p304 = pneg %p113
        $region22: #{_lambda_.1} parent=11 // pred_check_branch
          %306 = sbr.rel (%p304) target = $region24
        $region23: #{_lambda_.1} parent=11 // pred_region
          _
        $region24: #{_lambda_.1} parent=11 // pred_fallthru
          _
        // Predicated region
        $region25: #{_lambda_.1} parent=11 // pred_check
          %p307 = pneg %p134
        $region26: #{_lambda_.1} parent=11 // pred_check_branch
          %309 = sbr.rel (%p307) target = $region28
        $region27: #{_lambda_.1} parent=11 // pred_region
          _
        $region28: #{_lambda_.1} parent=11 // pred_fallthru
          _
        // Predicated region
        $region29: #{_lambda_.1} parent=11 // pred_check
          %p310 = pneg %p155
        $region30: #{_lambda_.1} parent=11 // pred_check_branch
          %312 = sbr.rel (%p310) target = $region32
        $region31: #{_lambda_.1} parent=11 // pred_region
          _
        $region32: #{_lambda_.1} parent=11 // pred_fallthru
          _
        // Predicated region
        $region33: #{_lambda_.1} parent=11 // pred_check
          %p313 = pneg %p176
        $region34: #{_lambda_.1} parent=11 // pred_check_branch
          %315 = sbr.rel (%p313) target = $region36
        $region35: #{_lambda_.1} parent=11 // pred_region
          _
        $region36: #{_lambda_.1} parent=11 // pred_fallthru
          _
        // Predicated region
        $region37: #{_lambda_.1} parent=11 // pred_check
          %p316 = pneg %p197
        $region38: #{_lambda_.1} parent=11 // pred_check_branch
          %318 = sbr.rel (%p316) target = $region40
        $region39: #{_lambda_.1} parent=11 // pred_region
          _
        $region40: #{_lambda_.1} parent=11 // pred_fallthru
          _
      $region12: #{_lambda_.1} parent=5 // pred_fallthru
        _
      %p319 = scmp.lt.s32.totalorder %s24, 2
      // Predicated region
      $region41: #{_lambda_.1} parent=5 // pred_check
        %p320 = pneg %p319
      $region42: #{_lambda_.1} parent=5 // pred_check_branch
        %322 = sbr.rel (%p320) target = $region44
      $region43: #{_lambda_.1} parent=5 // pred_region
        // Predicated region
        $region45: #{_lambda_.1} parent=43 // pred_check
          %p323 = pneg %p44
        $region46: #{_lambda_.1} parent=43 // pred_check_branch
          %325 = sbr.rel (%p323) target = $region48
        $region47: #{_lambda_.1} parent=43 // pred_region
          %s326 = smul.u32 8, %s24
          %p327 = scmp.lt.s32.totalorder %s326, 15
          %s328 = scalar_select %p327, %s326, 15
          %s329 = smul.addr %s328, 8
          %s330 = scalar_lea.vmem %s0, %s329
          %s331 = smul.u32 8, %s24
        $region48: #{_lambda_.1} parent=43 // pred_fallthru
          _
      $region44: #{_lambda_.1} parent=5 // pred_fallthru
        _
      %p332 = scmp.le.s32.totalorder 1, %s24
      %p333 = scmp.lt.s32.totalorder %s24, 3
      %p334 = pnand %p332, %p333
      %p335 = pneg %p334
      // Predicated region
      $region49: #{_lambda_.1} parent=5 // pred_check
        _
      $region50: #{_lambda_.1} parent=5 // pred_check_branch
        %337 = sbr.rel (%p334) target = $region52
      $region51: #{_lambda_.1} parent=5 // pred_region
        %s338 = ssub.s32 %s24, 1
        // Predicated region
        $region53: #{_lambda_.1} parent=51 // pred_check
          %p339 = pneg %p71
        $region54: #{_lambda_.1} parent=51 // pred_check_branch
          %341 = sbr.rel (%p339) target = $region56
        $region55: #{_lambda_.1} parent=51 // pred_region
          %342 = dma.done [#allocation4], 16
        $region56: #{_lambda_.1} parent=51 // pred_fallthru
          _
        %343 = sfence
        %s344 = smul.u32 8, %s29
        %p345 = scmp.lt.s32.totalorder %s344, 15
        %s346 = scalar_select %p345, %s344, 15
        %s347 = smul.addr %s346, 8
        %s348 = scalar_lea.vmem %s0, %s347
        %p349 = pneg %p50
        %p350 = pneg %p47
        %p351 = pneg %p71
        %p352 = pneg %p68
        %p353 = pneg %p92
        %p354 = pneg %p89
        %p355 = pneg %p113
        %p356 = pneg %p110
        %p357 = pneg %p134
        %p358 = pneg %p131
        %p359 = pneg %p155
        %p360 = pneg %p152
        %p361 = pneg %p176
        %p362 = pneg %p173
        %p363 = pneg %p197
        %p364 = pneg %p194
        %p365 = pneg %p223
        %p366 = pneg %p220
        %s367 = smul.u32 4, %s29
        %p368 = scmp.lt.s32.totalorder %s367, 7
        %s369 = scalar_select %p368, %s367, 7
        %s370 = smul.addr %s369, 2
        %s371 = smul.addr %s370, 8
        %s372 = scalar_lea.vmem %s8, %s371
        %p373 = pneg %p249
        %p374 = pneg %p246
        %s375 = sand.u32 %s236, 1
        %s376 = scalar_lea.sflag [#allocation3], %s375
        %s377 = sand.u32 %s236, 1
        %s378 = smul.addr %s377, 64
        %s379 = scalar_lea.vmem [#allocation5], %s378
        %p380 = pneg %p275
        %p381 = pneg %p272
        %s382 = sand.u32 %s262, 1
        %s383 = scalar_lea.sflag [#allocation7], %s382
        %s384 = sand.u32 %s262, 1
        %s385 = smul.addr %s384, 4
        %s386 = scalar_lea.vmem [#allocation6], %s385
        %s387 = smul.u32 8, %s29
        %p388 = scmp.lt.s32.totalorder %s387, 15
        %s389 = scalar_select %p388, %s387, 15
        %s390 = smul.addr %s389, 8
        %s391 = scalar_lea.vmem %s0, %s390
        %s392 = smul.u32 8, %s29
        %s393 = smul.u32 4, %s29
        %p394 = scmp.lt.s32.totalorder %s393, 7
        %s395 = scalar_select %p394, %s393, 7
        %s396 = smul.addr %s395, 2
        %s397 = smul.addr %s396, 8
        %s398 = scalar_lea.vmem %s8, %s397
        %s399 = smul.u32 4, %s29
        %s400 = smul.u32 4, %s29
        %s401 = smul.u32 4, %s29
        %v403 = vld [vmem:[%s391] sm:$0x1f]
        %v404 = vld [vmem:[%s391 + $0x8] sm:$0x1f]
        %v405 = vld [vmem:[%s391 + $0x10] sm:$0x1f]
        %v406 = vld [vmem:[%s391 + $0x18] sm:$0x1f]
        %v407 = vld [vmem:[%s391 + $0x20] sm:$0x1f]
        %v408 = vld [vmem:[%s391 + $0x28] sm:$0x1f]
        %v409 = vld [vmem:[%s391 + $0x30] sm:$0x1f]
        %v410 = vld [vmem:[%s391 + $0x38] sm:$0x1f]
        %s411 = sld [smem:[#allocation2]]
        %v412 = vstv %s411
        %v413 = vmul.f32 %v412, %v403
        %v414 = vmul.f32 %v412, %v404
        %v415 = vmul.f32 %v412, %v405
        %v416 = vmul.f32 %v412, %v406
        %v417 = vmul.f32 %v412, %v407
        %v418 = vmul.f32 %v412, %v408
        %v419 = vmul.f32 %v412, %v409
        %v420 = vmul.f32 %v412, %v410
        %s421 = sld [smem:[#allocation2 + $0x1]]
        %v422 = vstv %s421
        %v423 = vmul.f32 %v422, %v403
        %v424 = vmul.f32 %v422, %v404
        %v425 = vmul.f32 %v422, %v405
        %v426 = vmul.f32 %v422, %v406
        %v427 = vmul.f32 %v422, %v407
        %v428 = vmul.f32 %v422, %v408
        %v429 = vmul.f32 %v422, %v409
        %v430 = vmul.f32 %v422, %v410
        %v439 = vrot.slane %v423, 1
        %v440 = vrot.slane %v424, 1
        %v441 = vrot.slane %v425, 1
        %v442 = vrot.slane %v426, 1
        %v443 = vrot.slane %v427, 1
        %v444 = vrot.slane %v428, 1
        %v445 = vrot.slane %v429, 1
        %v446 = vrot.slane %v430, 1
        %v455 = vadd.f32 %v413, %v439
        %v456 = vadd.f32 %v414, %v440
        %v457 = vadd.f32 %v415, %v441
        %v458 = vadd.f32 %v416, %v442
        %v459 = vadd.f32 %v417, %v443
        %v460 = vadd.f32 %v418, %v444
        %v461 = vadd.f32 %v419, %v445
        %v462 = vadd.f32 %v420, %v446
        %s463 = sld [smem:[#allocation2 + $0x2]]
        %v464 = vstv %s463
        %v465 = vmul.f32 %v464, %v403
        %v466 = vmul.f32 %v464, %v404
        %v467 = vmul.f32 %v464, %v405
        %v468 = vmul.f32 %v464, %v406
        %v469 = vmul.f32 %v464, %v407
        %v470 = vmul.f32 %v464, %v408
        %v471 = vmul.f32 %v464, %v409
        %v472 = vmul.f32 %v464, %v410
        %v481 = vrot.slane %v465, 2
        %v482 = vrot.slane %v466, 2
        %v483 = vrot.slane %v467, 2
        %v484 = vrot.slane %v468, 2
        %v485 = vrot.slane %v469, 2
        %v486 = vrot.slane %v470, 2
        %v487 = vrot.slane %v471, 2
        %v488 = vrot.slane %v472, 2
        %v497 = vadd.f32 %v455, %v481
        %v498 = vadd.f32 %v456, %v482
        %v499 = vadd.f32 %v457, %v483
        %v500 = vadd.f32 %v458, %v484
        %v501 = vadd.f32 %v459, %v485
        %v502 = vadd.f32 %v460, %v486
        %v503 = vadd.f32 %v461, %v487
        %v504 = vadd.f32 %v462, %v488
        %s505 = sld [smem:[#allocation2 + $0x3]]
        %v506 = vstv %s505
        %v507 = vadd.f32 %v497, %v506
        %v508 = vadd.f32 %v498, %v506
        %v509 = vadd.f32 %v499, %v506
        %v510 = vadd.f32 %v500, %v506
        %v511 = vadd.f32 %v501, %v506
        %v512 = vadd.f32 %v502, %v506
        %v513 = vadd.f32 %v503, %v506
        %v514 = vadd.f32 %v504, %v506
        %v515 = vld [vmem:[%s3] sm:$0xff]
        %v516 = vld [vmem:[%s3 + $0x8] sm:$0xff]
        %v517 = vld [vmem:[%s3 + $0x10] sm:$0xff]
        %v518 = vld [vmem:[%s3 + $0x18] sm:$0xff]
        %v519 = vld [vmem:[%s3 + $0x20] sm:$0xff]
        %v520 = vld [vmem:[%s3 + $0x28] sm:$0xff]
        %v521 = vld [vmem:[%s3 + $0x30] sm:$0xff]
        %v522 = vld [vmem:[%s3 + $0x38] sm:$0xff]
        %524 = vset.pattern.permute.xlu0 0
        %525 = vperm.xlu0 %524, %v515
        %v526 = vpop.permute.xlu0 %525
        %529 = vset.pattern.permute.xlu0 0
        %530 = vperm.xlu0 %529, %v516
        %v531 = vpop.permute.xlu0 %530
        %534 = vset.pattern.permute.xlu0 0
        %535 = vperm.xlu0 %534, %v517
        %v536 = vpop.permute.xlu0 %535
        %539 = vset.pattern.permute.xlu0 0
        %540 = vperm.xlu0 %539, %v518
        %v541 = vpop.permute.xlu0 %540
        %544 = vset.pattern.permute.xlu0 0
        %545 = vperm.xlu0 %544, %v519
        %v546 = vpop.permute.xlu0 %545
        %549 = vset.pattern.permute.xlu0 0
        %550 = vperm.xlu0 %549, %v520
        %v551 = vpop.permute.xlu0 %550
        %554 = vset.pattern.permute.xlu0 0
        %555 = vperm.xlu0 %554, %v521
        %v556 = vpop.permute.xlu0 %555
        %559 = vset.pattern.permute.xlu0 0
        %560 = vperm.xlu0 %559, %v522
        %v561 = vpop.permute.xlu0 %560
        %v563 = vlaneseq
        %v564 = vshrl.u32 %v563, 7
        %v565 = vsub.s32 3, %v564
        %v566 = vrot.slane %v403, %v565
        %v567 = vlaneseq
        %v568 = vshrl.u32 %v567, 7
        %v569 = vsub.s32 3, %v568
        %v570 = vrot.slane %v404, %v569
        %v571 = vlaneseq
        %v572 = vshrl.u32 %v571, 7
        %v573 = vsub.s32 3, %v572
        %v574 = vrot.slane %v405, %v573
        %v575 = vlaneseq
        %v576 = vshrl.u32 %v575, 7
        %v577 = vsub.s32 3, %v576
        %v578 = vrot.slane %v406, %v577
        %v579 = vlaneseq
        %v580 = vshrl.u32 %v579, 7
        %v581 = vsub.s32 3, %v580
        %v582 = vrot.slane %v407, %v581
        %v583 = vlaneseq
        %v584 = vshrl.u32 %v583, 7
        %v585 = vsub.s32 3, %v584
        %v586 = vrot.slane %v408, %v585
        %v587 = vlaneseq
        %v588 = vshrl.u32 %v587, 7
        %v589 = vsub.s32 3, %v588
        %v590 = vrot.slane %v409, %v589
        %v591 = vlaneseq
        %v592 = vshrl.u32 %v591, 7
        %v593 = vsub.s32 3, %v592
        %v594 = vrot.slane %v410, %v593
        %v595 = vmul.f32 %v526, %v566
        %v596 = vmul.f32 %v526, %v570
        %v597 = vmul.f32 %v526, %v574
        %v598 = vmul.f32 %v526, %v578
        %v599 = vmul.f32 %v526, %v582
        %v600 = vmul.f32 %v526, %v586
        %v601 = vmul.f32 %v526, %v590
        %v602 = vmul.f32 %v526, %v594
        %v603 = vmul.f32 %v531, %v566
        %v604 = vmul.f32 %v531, %v570
        %v605 = vmul.f32 %v531, %v574
        %v606 = vmul.f32 %v531, %v578
        %v607 = vmul.f32 %v531, %v582
        %v608 = vmul.f32 %v531, %v586
        %v609 = vmul.f32 %v531, %v590
        %v610 = vmul.f32 %v531, %v594
        %v611 = vmul.f32 %v536, %v566
        %v612 = vmul.f32 %v536, %v570
        %v613 = vmul.f32 %v536, %v574
        %v614 = vmul.f32 %v536, %v578
        %v615 = vmul.f32 %v536, %v582
        %v616 = vmul.f32 %v536, %v586
        %v617 = vmul.f32 %v536, %v590
        %v618 = vmul.f32 %v536, %v594
        %v619 = vmul.f32 %v541, %v566
        %v620 = vmul.f32 %v541, %v570
        %v621 = vmul.f32 %v541, %v574
        %v622 = vmul.f32 %v541, %v578
        %v623 = vmul.f32 %v541, %v582
        %v624 = vmul.f32 %v541, %v586
        %v625 = vmul.f32 %v541, %v590
        %v626 = vmul.f32 %v541, %v594
        %v627 = vmul.f32 %v546, %v566
        %v628 = vmul.f32 %v546, %v570
        %v629 = vmul.f32 %v546, %v574
        %v630 = vmul.f32 %v546, %v578
        %v631 = vmul.f32 %v546, %v582
        %v632 = vmul.f32 %v546, %v586
        %v633 = vmul.f32 %v546, %v590
        %v634 = vmul.f32 %v546, %v594
        %v635 = vmul.f32 %v551, %v566
        %v636 = vmul.f32 %v551, %v570
        %v637 = vmul.f32 %v551, %v574
        %v638 = vmul.f32 %v551, %v578
        %v639 = vmul.f32 %v551, %v582
        %v640 = vmul.f32 %v551, %v586
        %v641 = vmul.f32 %v551, %v590
        %v642 = vmul.f32 %v551, %v594
        %v643 = vmul.f32 %v556, %v566
        %v644 = vmul.f32 %v556, %v570
        %v645 = vmul.f32 %v556, %v574
        %v646 = vmul.f32 %v556, %v578
        %v647 = vmul.f32 %v556, %v582
        %v648 = vmul.f32 %v556, %v586
        %v649 = vmul.f32 %v556, %v590
        %v650 = vmul.f32 %v556, %v594
        %v651 = vmul.f32 %v561, %v566
        %v652 = vmul.f32 %v561, %v570
        %v653 = vmul.f32 %v561, %v574
        %v654 = vmul.f32 %v561, %v578
        %v655 = vmul.f32 %v561, %v582
        %v656 = vmul.f32 %v561, %v586
        %v657 = vmul.f32 %v561, %v590
        %v658 = vmul.f32 %v561, %v594
        %659 = vset.pattern.permute.xlu0 1
        %660 = vperm.xlu0 %659, %v515
        %v661 = vpop.permute.xlu0 %660
        %663 = vset.pattern.permute.xlu0 1
        %664 = vperm.xlu0 %663, %v516
        %v665 = vpop.permute.xlu0 %664
        %667 = vset.pattern.permute.xlu0 1
        %668 = vperm.xlu0 %667, %v517
        %v669 = vpop.permute.xlu0 %668
        %671 = vset.pattern.permute.xlu0 1
        %672 = vperm.xlu0 %671, %v518
        %v673 = vpop.permute.xlu0 %672
        %675 = vset.pattern.permute.xlu0 1
        %676 = vperm.xlu0 %675, %v519
        %v677 = vpop.permute.xlu0 %676
        %679 = vset.pattern.permute.xlu0 1
        %680 = vperm.xlu0 %679, %v520
        %v681 = vpop.permute.xlu0 %680
        %683 = vset.pattern.permute.xlu0 1
        %684 = vperm.xlu0 %683, %v521
        %v685 = vpop.permute.xlu0 %684
        %687 = vset.pattern.permute.xlu0 1
        %688 = vperm.xlu0 %687, %v522
        %v689 = vpop.permute.xlu0 %688
        %v691 = vlaneseq
        %v692 = vshrl.u32 %v691, 7
        %v693 = vsub.s32 4, %v692
        %v694 = vrot.slane %v403, %v693
        %v695 = vlaneseq
        %v696 = vshrl.u32 %v695, 7
        %v697 = vsub.s32 4, %v696
        %v698 = vrot.slane %v404, %v697
        %v699 = vlaneseq
        %v700 = vshrl.u32 %v699, 7
        %v701 = vsub.s32 4, %v700
        %v702 = vrot.slane %v405, %v701
        %v703 = vlaneseq
        %v704 = vshrl.u32 %v703, 7
        %v705 = vsub.s32 4, %v704
        %v706 = vrot.slane %v406, %v705
        %v707 = vlaneseq
        %v708 = vshrl.u32 %v707, 7
        %v709 = vsub.s32 4, %v708
        %v710 = vrot.slane %v407, %v709
        %v711 = vlaneseq
        %v712 = vshrl.u32 %v711, 7
        %v713 = vsub.s32 4, %v712
        %v714 = vrot.slane %v408, %v713
        %v715 = vlaneseq
        %v716 = vshrl.u32 %v715, 7
        %v717 = vsub.s32 4, %v716
        %v718 = vrot.slane %v409, %v717
        %v719 = vlaneseq
        %v720 = vshrl.u32 %v719, 7
        %v721 = vsub.s32 4, %v720
        %v722 = vrot.slane %v410, %v721
        %v723 = vmul.f32 %v661, %v694
        %v724 = vmul.f32 %v661, %v698
        %v725 = vmul.f32 %v661, %v702
        %v726 = vmul.f32 %v661, %v706
        %v727 = vmul.f32 %v661, %v710
        %v728 = vmul.f32 %v661, %v714
        %v729 = vmul.f32 %v661, %v718
        %v730 = vmul.f32 %v661, %v722
        %v731 = vmul.f32 %v665, %v694
        %v732 = vmul.f32 %v665, %v698
        %v733 = vmul.f32 %v665, %v702
        %v734 = vmul.f32 %v665, %v706
        %v735 = vmul.f32 %v665, %v710
        %v736 = vmul.f32 %v665, %v714
        %v737 = vmul.f32 %v665, %v718
        %v738 = vmul.f32 %v665, %v722
        %v739 = vmul.f32 %v669, %v694
        %v740 = vmul.f32 %v669, %v698
        %v741 = vmul.f32 %v669, %v702
        %v742 = vmul.f32 %v669, %v706
        %v743 = vmul.f32 %v669, %v710
        %v744 = vmul.f32 %v669, %v714
        %v745 = vmul.f32 %v669, %v718
        %v746 = vmul.f32 %v669, %v722
        %v747 = vmul.f32 %v673, %v694
        %v748 = vmul.f32 %v673, %v698
        %v749 = vmul.f32 %v673, %v702
        %v750 = vmul.f32 %v673, %v706
        %v751 = vmul.f32 %v673, %v710
        %v752 = vmul.f32 %v673, %v714
        %v753 = vmul.f32 %v673, %v718
        %v754 = vmul.f32 %v673, %v722
        %v755 = vmul.f32 %v677, %v694
        %v756 = vmul.f32 %v677, %v698
        %v757 = vmul.f32 %v677, %v702
        %v758 = vmul.f32 %v677, %v706
        %v759 = vmul.f32 %v677, %v710
        %v760 = vmul.f32 %v677, %v714
        %v761 = vmul.f32 %v677, %v718
        %v762 = vmul.f32 %v677, %v722
        %v763 = vmul.f32 %v681, %v694
        %v764 = vmul.f32 %v681, %v698
        %v765 = vmul.f32 %v681, %v702
        %v766 = vmul.f32 %v681, %v706
        %v767 = vmul.f32 %v681, %v710
        %v768 = vmul.f32 %v681, %v714
        %v769 = vmul.f32 %v681, %v718
        %v770 = vmul.f32 %v681, %v722
        %v771 = vmul.f32 %v685, %v694
        %v772 = vmul.f32 %v685, %v698
        %v773 = vmul.f32 %v685, %v702
        %v774 = vmul.f32 %v685, %v706
        %v775 = vmul.f32 %v685, %v710
        %v776 = vmul.f32 %v685, %v714
        %v777 = vmul.f32 %v685, %v718
        %v778 = vmul.f32 %v685, %v722
        %v779 = vmul.f32 %v689, %v694
        %v780 = vmul.f32 %v689, %v698
        %v781 = vmul.f32 %v689, %v702
        %v782 = vmul.f32 %v689, %v706
        %v783 = vmul.f32 %v689, %v710
        %v784 = vmul.f32 %v689, %v714
        %v785 = vmul.f32 %v689, %v718
        %v786 = vmul.f32 %v689, %v722
        %v787 = vadd.f32 %v595, %v723
        %v788 = vadd.f32 %v596, %v724
        %v789 = vadd.f32 %v597, %v725
        %v790 = vadd.f32 %v598, %v726
        %v791 = vadd.f32 %v599, %v727
        %v792 = vadd.f32 %v600, %v728
        %v793 = vadd.f32 %v601, %v729
        %v794 = vadd.f32 %v602, %v730
        %v795 = vadd.f32 %v603, %v731
        %v796 = vadd.f32 %v604, %v732
        %v797 = vadd.f32 %v605, %v733
        %v798 = vadd.f32 %v606, %v734
        %v799 = vadd.f32 %v607, %v735
        %v800 = vadd.f32 %v608, %v736
        %v801 = vadd.f32 %v609, %v737
        %v802 = vadd.f32 %v610, %v738
        %v803 = vadd.f32 %v611, %v739
        %v804 = vadd.f32 %v612, %v740
        %v805 = vadd.f32 %v613, %v741
        %v806 = vadd.f32 %v614, %v742
        %v807 = vadd.f32 %v615, %v743
        %v808 = vadd.f32 %v616, %v744
        %v809 = vadd.f32 %v617, %v745
        %v810 = vadd.f32 %v618, %v746
        %v811 = vadd.f32 %v619, %v747
        %v812 = vadd.f32 %v620, %v748
        %v813 = vadd.f32 %v621, %v749
        %v814 = vadd.f32 %v622, %v750
        %v815 = vadd.f32 %v623, %v751
        %v816 = vadd.f32 %v624, %v752
        %v817 = vadd.f32 %v625, %v753
        %v818 = vadd.f32 %v626, %v754
        %v819 = vadd.f32 %v627, %v755
        %v820 = vadd.f32 %v628, %v756
        %v821 = vadd.f32 %v629, %v757
        %v822 = vadd.f32 %v630, %v758
        %v823 = vadd.f32 %v631, %v759
        %v824 = vadd.f32 %v632, %v760
        %v825 = vadd.f32 %v633, %v761
        %v826 = vadd.f32 %v634, %v762
        %v827 = vadd.f32 %v635, %v763
        %v828 = vadd.f32 %v636, %v764
        %v829 = vadd.f32 %v637, %v765
        %v830 = vadd.f32 %v638, %v766
        %v831 = vadd.f32 %v639, %v767
        %v832 = vadd.f32 %v640, %v768
        %v833 = vadd.f32 %v641, %v769
        %v834 = vadd.f32 %v642, %v770
        %v835 = vadd.f32 %v643, %v771
        %v836 = vadd.f32 %v644, %v772
        %v837 = vadd.f32 %v645, %v773
        %v838 = vadd.f32 %v646, %v774
        %v839 = vadd.f32 %v647, %v775
        %v840 = vadd.f32 %v648, %v776
        %v841 = vadd.f32 %v649, %v777
        %v842 = vadd.f32 %v650, %v778
        %v843 = vadd.f32 %v651, %v779
        %v844 = vadd.f32 %v652, %v780
        %v845 = vadd.f32 %v653, %v781
        %v846 = vadd.f32 %v654, %v782
        %v847 = vadd.f32 %v655, %v783
        %v848 = vadd.f32 %v656, %v784
        %v849 = vadd.f32 %v657, %v785
        %v850 = vadd.f32 %v658, %v786
        %851 = vset.pattern.permute.xlu0 2
        %852 = vperm.xlu0 %851, %v515
        %v853 = vpop.permute.xlu0 %852
        %855 = vset.pattern.permute.xlu0 2
        %856 = vperm.xlu0 %855, %v516
        %v857 = vpop.permute.xlu0 %856
        %859 = vset.pattern.permute.xlu0 2
        %860 = vperm.xlu0 %859, %v517
        %v861 = vpop.permute.xlu0 %860
        %863 = vset.pattern.permute.xlu0 2
        %864 = vperm.xlu0 %863, %v518
        %v865 = vpop.permute.xlu0 %864
        %867 = vset.pattern.permute.xlu0 2
        %868 = vperm.xlu0 %867, %v519
        %v869 = vpop.permute.xlu0 %868
        %871 = vset.pattern.permute.xlu0 2
        %872 = vperm.xlu0 %871, %v520
        %v873 = vpop.permute.xlu0 %872
        %875 = vset.pattern.permute.xlu0 2
        %876 = vperm.xlu0 %875, %v521
        %v877 = vpop.permute.xlu0 %876
        %879 = vset.pattern.permute.xlu0 2
        %880 = vperm.xlu0 %879, %v522
        %v881 = vpop.permute.xlu0 %880
        %v883 = vlaneseq
        %v884 = vshrl.u32 %v883, 7
        %v885 = vsub.s32 0, %v884
        %v886 = vrot.slane %v507, %v885
        %v887 = vlaneseq
        %v888 = vshrl.u32 %v887, 7
        %v889 = vsub.s32 0, %v888
        %v890 = vrot.slane %v508, %v889
        %v891 = vlaneseq
        %v892 = vshrl.u32 %v891, 7
        %v893 = vsub.s32 0, %v892
        %v894 = vrot.slane %v509, %v893
        %v895 = vlaneseq
        %v896 = vshrl.u32 %v895, 7
        %v897 = vsub.s32 0, %v896
        %v898 = vrot.slane %v510, %v897
        %v899 = vlaneseq
        %v900 = vshrl.u32 %v899, 7
        %v901 = vsub.s32 0, %v900
        %v902 = vrot.slane %v511, %v901
        %v903 = vlaneseq
        %v904 = vshrl.u32 %v903, 7
        %v905 = vsub.s32 0, %v904
        %v906 = vrot.slane %v512, %v905
        %v907 = vlaneseq
        %v908 = vshrl.u32 %v907, 7
        %v909 = vsub.s32 0, %v908
        %v910 = vrot.slane %v513, %v909
        %v911 = vlaneseq
        %v912 = vshrl.u32 %v911, 7
        %v913 = vsub.s32 0, %v912
        %v914 = vrot.slane %v514, %v913
        %v915 = vmul.f32 %v853, %v886
        %v916 = vmul.f32 %v853, %v890
        %v917 = vmul.f32 %v853, %v894
        %v918 = vmul.f32 %v853, %v898
        %v919 = vmul.f32 %v853, %v902
        %v920 = vmul.f32 %v853, %v906
        %v921 = vmul.f32 %v853, %v910
        %v922 = vmul.f32 %v853, %v914
        %v923 = vmul.f32 %v857, %v886
        %v924 = vmul.f32 %v857, %v890
        %v925 = vmul.f32 %v857, %v894
        %v926 = vmul.f32 %v857, %v898
        %v927 = vmul.f32 %v857, %v902
        %v928 = vmul.f32 %v857, %v906
        %v929 = vmul.f32 %v857, %v910
        %v930 = vmul.f32 %v857, %v914
        %v931 = vmul.f32 %v861, %v886
        %v932 = vmul.f32 %v861, %v890
        %v933 = vmul.f32 %v861, %v894
        %v934 = vmul.f32 %v861, %v898
        %v935 = vmul.f32 %v861, %v902
        %v936 = vmul.f32 %v861, %v906
        %v937 = vmul.f32 %v861, %v910
        %v938 = vmul.f32 %v861, %v914
        %v939 = vmul.f32 %v865, %v886
        %v940 = vmul.f32 %v865, %v890
        %v941 = vmul.f32 %v865, %v894
        %v942 = vmul.f32 %v865, %v898
        %v943 = vmul.f32 %v865, %v902
        %v944 = vmul.f32 %v865, %v906
        %v945 = vmul.f32 %v865, %v910
        %v946 = vmul.f32 %v865, %v914
        %v947 = vmul.f32 %v869, %v886
        %v948 = vmul.f32 %v869, %v890
        %v949 = vmul.f32 %v869, %v894
        %v950 = vmul.f32 %v869, %v898
        %v951 = vmul.f32 %v869, %v902
        %v952 = vmul.f32 %v869, %v906
        %v953 = vmul.f32 %v869, %v910
        %v954 = vmul.f32 %v869, %v914
        %v955 = vmul.f32 %v873, %v886
        %v956 = vmul.f32 %v873, %v890
        %v957 = vmul.f32 %v873, %v894
        %v958 = vmul.f32 %v873, %v898
        %v959 = vmul.f32 %v873, %v902
        %v960 = vmul.f32 %v873, %v906
        %v961 = vmul.f32 %v873, %v910
        %v962 = vmul.f32 %v873, %v914
        %v963 = vmul.f32 %v877, %v886
        %v964 = vmul.f32 %v877, %v890
        %v965 = vmul.f32 %v877, %v894
        %v966 = vmul.f32 %v877, %v898
        %v967 = vmul.f32 %v877, %v902
        %v968 = vmul.f32 %v877, %v906
        %v969 = vmul.f32 %v877, %v910
        %v970 = vmul.f32 %v877, %v914
        %v971 = vmul.f32 %v881, %v886
        %v972 = vmul.f32 %v881, %v890
        %v973 = vmul.f32 %v881, %v894
        %v974 = vmul.f32 %v881, %v898
        %v975 = vmul.f32 %v881, %v902
        %v976 = vmul.f32 %v881, %v906
        %v977 = vmul.f32 %v881, %v910
        %v978 = vmul.f32 %v881, %v914
        %v979 = vadd.f32 %v787, %v915
        %v980 = vadd.f32 %v788, %v916
        %v981 = vadd.f32 %v789, %v917
        %v982 = vadd.f32 %v790, %v918
        %v983 = vadd.f32 %v791, %v919
        %v984 = vadd.f32 %v792, %v920
        %v985 = vadd.f32 %v793, %v921
        %v986 = vadd.f32 %v794, %v922
        %v987 = vadd.f32 %v795, %v923
        %v988 = vadd.f32 %v796, %v924
        %v989 = vadd.f32 %v797, %v925
        %v990 = vadd.f32 %v798, %v926
        %v991 = vadd.f32 %v799, %v927
        %v992 = vadd.f32 %v800, %v928
        %v993 = vadd.f32 %v801, %v929
        %v994 = vadd.f32 %v802, %v930
        %v995 = vadd.f32 %v803, %v931
        %v996 = vadd.f32 %v804, %v932
        %v997 = vadd.f32 %v805, %v933
        %v998 = vadd.f32 %v806, %v934
        %v999 = vadd.f32 %v807, %v935
        %v1000 = vadd.f32 %v808, %v936
        %v1001 = vadd.f32 %v809, %v937
        %v1002 = vadd.f32 %v810, %v938
        %v1003 = vadd.f32 %v811, %v939
        %v1004 = vadd.f32 %v812, %v940
        %v1005 = vadd.f32 %v813, %v941
        %v1006 = vadd.f32 %v814, %v942
        %v1007 = vadd.f32 %v815, %v943
        %v1008 = vadd.f32 %v816, %v944
        %v1009 = vadd.f32 %v817, %v945
        %v1010 = vadd.f32 %v818, %v946
        %v1011 = vadd.f32 %v819, %v947
        %v1012 = vadd.f32 %v820, %v948
        %v1013 = vadd.f32 %v821, %v949
        %v1014 = vadd.f32 %v822, %v950
        %v1015 = vadd.f32 %v823, %v951
        %v1016 = vadd.f32 %v824, %v952
        %v1017 = vadd.f32 %v825, %v953
        %v1018 = vadd.f32 %v826, %v954
        %v1019 = vadd.f32 %v827, %v955
        %v1020 = vadd.f32 %v828, %v956
        %v1021 = vadd.f32 %v829, %v957
        %v1022 = vadd.f32 %v830, %v958
        %v1023 = vadd.f32 %v831, %v959
        %v1024 = vadd.f32 %v832, %v960
        %v1025 = vadd.f32 %v833, %v961
        %v1026 = vadd.f32 %v834, %v962
        %v1027 = vadd.f32 %v835, %v963
        %v1028 = vadd.f32 %v836, %v964
        %v1029 = vadd.f32 %v837, %v965
        %v1030 = vadd.f32 %v838, %v966
        %v1031 = vadd.f32 %v839, %v967
        %v1032 = vadd.f32 %v840, %v968
        %v1033 = vadd.f32 %v841, %v969
        %v1034 = vadd.f32 %v842, %v970
        %v1035 = vadd.f32 %v843, %v971
        %v1036 = vadd.f32 %v844, %v972
        %v1037 = vadd.f32 %v845, %v973
        %v1038 = vadd.f32 %v846, %v974
        %v1039 = vadd.f32 %v847, %v975
        %v1040 = vadd.f32 %v848, %v976
        %v1041 = vadd.f32 %v849, %v977
        %v1042 = vadd.f32 %v850, %v978
        %1043 = vset.pattern.permute.xlu0 3
        %1044 = vperm.xlu0 %1043, %v515
        %v1045 = vpop.permute.xlu0 %1044
        %1047 = vset.pattern.permute.xlu0 3
        %1048 = vperm.xlu0 %1047, %v516
        %v1049 = vpop.permute.xlu0 %1048
        %1051 = vset.pattern.permute.xlu0 3
        %1052 = vperm.xlu0 %1051, %v517
        %v1053 = vpop.permute.xlu0 %1052
        %1055 = vset.pattern.permute.xlu0 3
        %1056 = vperm.xlu0 %1055, %v518
        %v1057 = vpop.permute.xlu0 %1056
        %1059 = vset.pattern.permute.xlu0 3
        %1060 = vperm.xlu0 %1059, %v519
        %v1061 = vpop.permute.xlu0 %1060
        %1063 = vset.pattern.permute.xlu0 3
        %1064 = vperm.xlu0 %1063, %v520
        %v1065 = vpop.permute.xlu0 %1064
        %1067 = vset.pattern.permute.xlu0 3
        %1068 = vperm.xlu0 %1067, %v521
        %v1069 = vpop.permute.xlu0 %1068
        %1071 = vset.pattern.permute.xlu0 3
        %1072 = vperm.xlu0 %1071, %v522
        %v1073 = vpop.permute.xlu0 %1072
        %v1075 = vadd.f32 %v979, %v1045
        %v1076 = vadd.f32 %v980, %v1045
        %v1077 = vadd.f32 %v981, %v1045
        %v1078 = vadd.f32 %v982, %v1045
        %v1079 = vadd.f32 %v983, %v1045
        %v1080 = vadd.f32 %v984, %v1045
        %v1081 = vadd.f32 %v985, %v1045
        %v1082 = vadd.f32 %v986, %v1045
        %v1083 = vadd.f32 %v987, %v1049
        %v1084 = vadd.f32 %v988, %v1049
        %v1085 = vadd.f32 %v989, %v1049
        %v1086 = vadd.f32 %v990, %v1049
        %v1087 = vadd.f32 %v991, %v1049
        %v1088 = vadd.f32 %v992, %v1049
        %v1089 = vadd.f32 %v993, %v1049
        %v1090 = vadd.f32 %v994, %v1049
        %v1091 = vadd.f32 %v995, %v1053
        %v1092 = vadd.f32 %v996, %v1053
        %v1093 = vadd.f32 %v997, %v1053
        %v1094 = vadd.f32 %v998, %v1053
        %v1095 = vadd.f32 %v999, %v1053
        %v1096 = vadd.f32 %v1000, %v1053
        %v1097 = vadd.f32 %v1001, %v1053
        %v1098 = vadd.f32 %v1002, %v1053
        %v1099 = vadd.f32 %v1003, %v1057
        %v1100 = vadd.f32 %v1004, %v1057
        %v1101 = vadd.f32 %v1005, %v1057
        %v1102 = vadd.f32 %v1006, %v1057
        %v1103 = vadd.f32 %v1007, %v1057
        %v1104 = vadd.f32 %v1008, %v1057
        %v1105 = vadd.f32 %v1009, %v1057
        %v1106 = vadd.f32 %v1010, %v1057
        %v1107 = vadd.f32 %v1011, %v1061
        %v1108 = vadd.f32 %v1012, %v1061
        %v1109 = vadd.f32 %v1013, %v1061
        %v1110 = vadd.f32 %v1014, %v1061
        %v1111 = vadd.f32 %v1015, %v1061
        %v1112 = vadd.f32 %v1016, %v1061
        %v1113 = vadd.f32 %v1017, %v1061
        %v1114 = vadd.f32 %v1018, %v1061
        %v1115 = vadd.f32 %v1019, %v1065
        %v1116 = vadd.f32 %v1020, %v1065
        %v1117 = vadd.f32 %v1021, %v1065
        %v1118 = vadd.f32 %v1022, %v1065
        %v1119 = vadd.f32 %v1023, %v1065
        %v1120 = vadd.f32 %v1024, %v1065
        %v1121 = vadd.f32 %v1025, %v1065
        %v1122 = vadd.f32 %v1026, %v1065
        %v1123 = vadd.f32 %v1027, %v1069
        %v1124 = vadd.f32 %v1028, %v1069
        %v1125 = vadd.f32 %v1029, %v1069
        %v1126 = vadd.f32 %v1030, %v1069
        %v1127 = vadd.f32 %v1031, %v1069
        %v1128 = vadd.f32 %v1032, %v1069
        %v1129 = vadd.f32 %v1033, %v1069
        %v1130 = vadd.f32 %v1034, %v1069
        %v1131 = vadd.f32 %v1035, %v1073
        %v1132 = vadd.f32 %v1036, %v1073
        %v1133 = vadd.f32 %v1037, %v1073
        %v1134 = vadd.f32 %v1038, %v1073
        %v1135 = vadd.f32 %v1039, %v1073
        %v1136 = vadd.f32 %v1040, %v1073
        %v1137 = vadd.f32 %v1041, %v1073
        %v1138 = vadd.f32 %v1042, %v1073
        %v1139 = vmax.f32 %v1075, 0.0
        %v1140 = vmax.f32 %v1076, 0.0
        %v1141 = vmax.f32 %v1077, 0.0
        %v1142 = vmax.f32 %v1078, 0.0
        %v1143 = vmax.f32 %v1079, 0.0
        %v1144 = vmax.f32 %v1080, 0.0
        %v1145 = vmax.f32 %v1081, 0.0
        %v1146 = vmax.f32 %v1082, 0.0
        %v1147 = vmax.f32 %v1083, 0.0
        %v1148 = vmax.f32 %v1084, 0.0
        %v1149 = vmax.f32 %v1085, 0.0
        %v1150 = vmax.f32 %v1086, 0.0
        %v1151 = vmax.f32 %v1087, 0.0
        %v1152 = vmax.f32 %v1088, 0.0
        %v1153 = vmax.f32 %v1089, 0.0
        %v1154 = vmax.f32 %v1090, 0.0
        %v1155 = vmax.f32 %v1091, 0.0
        %v1156 = vmax.f32 %v1092, 0.0
        %v1157 = vmax.f32 %v1093, 0.0
        %v1158 = vmax.f32 %v1094, 0.0
        %v1159 = vmax.f32 %v1095, 0.0
        %v1160 = vmax.f32 %v1096, 0.0
        %v1161 = vmax.f32 %v1097, 0.0
        %v1162 = vmax.f32 %v1098, 0.0
        %v1163 = vmax.f32 %v1099, 0.0
        %v1164 = vmax.f32 %v1100, 0.0
        %v1165 = vmax.f32 %v1101, 0.0
        %v1166 = vmax.f32 %v1102, 0.0
        %v1167 = vmax.f32 %v1103, 0.0
        %v1168 = vmax.f32 %v1104, 0.0
        %v1169 = vmax.f32 %v1105, 0.0
        %v1170 = vmax.f32 %v1106, 0.0
        %v1171 = vmax.f32 %v1107, 0.0
        %v1172 = vmax.f32 %v1108, 0.0
        %v1173 = vmax.f32 %v1109, 0.0
        %v1174 = vmax.f32 %v1110, 0.0
        %v1175 = vmax.f32 %v1111, 0.0
        %v1176 = vmax.f32 %v1112, 0.0
        %v1177 = vmax.f32 %v1113, 0.0
        %v1178 = vmax.f32 %v1114, 0.0
        %v1179 = vmax.f32 %v1115, 0.0
        %v1180 = vmax.f32 %v1116, 0.0
        %v1181 = vmax.f32 %v1117, 0.0
        %v1182 = vmax.f32 %v1118, 0.0
        %v1183 = vmax.f32 %v1119, 0.0
        %v1184 = vmax.f32 %v1120, 0.0
        %v1185 = vmax.f32 %v1121, 0.0
        %v1186 = vmax.f32 %v1122, 0.0
        %v1187 = vmax.f32 %v1123, 0.0
        %v1188 = vmax.f32 %v1124, 0.0
        %v1189 = vmax.f32 %v1125, 0.0
        %v1190 = vmax.f32 %v1126, 0.0
        %v1191 = vmax.f32 %v1127, 0.0
        %v1192 = vmax.f32 %v1128, 0.0
        %v1193 = vmax.f32 %v1129, 0.0
        %v1194 = vmax.f32 %v1130, 0.0
        %v1195 = vmax.f32 %v1131, 0.0
        %v1196 = vmax.f32 %v1132, 0.0
        %v1197 = vmax.f32 %v1133, 0.0
        %v1198 = vmax.f32 %v1134, 0.0
        %v1199 = vmax.f32 %v1135, 0.0
        %v1200 = vmax.f32 %v1136, 0.0
        %v1201 = vmax.f32 %v1137, 0.0
        %v1202 = vmax.f32 %v1138, 0.0
        %v1203 = vld [vmem:[%s2] sm:$0xf]
        %v1204 = vld [vmem:[%s2 + $0x4] sm:$0xf]
        %v1205 = vld [vmem:[%s2 + $0x8] sm:$0xf]
        %v1206 = vld [vmem:[%s2 + $0xc] sm:$0xf]
        %v1207 = vld [vmem:[%s2 + $0x10] sm:$0xf]
        %v1208 = vld [vmem:[%s2 + $0x14] sm:$0xf]
        %v1209 = vld [vmem:[%s2 + $0x18] sm:$0xf]
        %v1210 = vld [vmem:[%s2 + $0x1c] sm:$0xf]
        %v1211 = vpack.c.bf16 %v1147, %v1139
        %v1212 = vpack.c.bf16 %v1148, %v1140
        %v1213 = vpack.c.bf16 %v1149, %v1141
        %v1214 = vpack.c.bf16 %v1150, %v1142
        %v1215 = vpack.c.bf16 %v1151, %v1143
        %v1216 = vpack.c.bf16 %v1152, %v1144
        %v1217 = vpack.c.bf16 %v1153, %v1145
        %v1218 = vpack.c.bf16 %v1154, %v1146
        %v1219 = vpack.c.bf16 %v1163, %v1155
        %v1220 = vpack.c.bf16 %v1164, %v1156
        %v1221 = vpack.c.bf16 %v1165, %v1157
        %v1222 = vpack.c.bf16 %v1166, %v1158
        %v1223 = vpack.c.bf16 %v1167, %v1159
        %v1224 = vpack.c.bf16 %v1168, %v1160
        %v1225 = vpack.c.bf16 %v1169, %v1161
        %v1226 = vpack.c.bf16 %v1170, %v1162
        %v1227 = vpack.c.bf16 %v1179, %v1171
        %v1228 = vpack.c.bf16 %v1180, %v1172
        %v1229 = vpack.c.bf16 %v1181, %v1173
        %v1230 = vpack.c.bf16 %v1182, %v1174
        %v1231 = vpack.c.bf16 %v1183, %v1175
        %v1232 = vpack.c.bf16 %v1184, %v1176
        %v1233 = vpack.c.bf16 %v1185, %v1177
        %v1234 = vpack.c.bf16 %v1186, %v1178
        %v1235 = vpack.c.bf16 %v1195, %v1187
        %v1236 = vpack.c.bf16 %v1196, %v1188
        %v1237 = vpack.c.bf16 %v1197, %v1189
        %v1238 = vpack.c.bf16 %v1198, %v1190
        %v1239 = vpack.c.bf16 %v1199, %v1191
        %v1240 = vpack.c.bf16 %v1200, %v1192
        %v1241 = vpack.c.bf16 %v1201, %v1193
        %v1242 = vpack.c.bf16 %v1202, %v1194
        %1243 = vset.pattern.permute.xlu0 4
        %1244 = vperm.xlu0 %1243, %v515
        %v1245 = vpop.permute.xlu0 %1244
        %1247 = vset.pattern.permute.xlu0 4
        %1248 = vperm.xlu0 %1247, %v516
        %v1249 = vpop.permute.xlu0 %1248
        %1251 = vset.pattern.permute.xlu0 4
        %1252 = vperm.xlu0 %1251, %v517
        %v1253 = vpop.permute.xlu0 %1252
        %1255 = vset.pattern.permute.xlu0 4
        %1256 = vperm.xlu0 %1255, %v518
        %v1257 = vpop.permute.xlu0 %1256
        %1259 = vset.pattern.permute.xlu0 4
        %1260 = vperm.xlu0 %1259, %v519
        %v1261 = vpop.permute.xlu0 %1260
        %1263 = vset.pattern.permute.xlu0 4
        %1264 = vperm.xlu0 %1263, %v520
        %v1265 = vpop.permute.xlu0 %1264
        %1267 = vset.pattern.permute.xlu0 4
        %1268 = vperm.xlu0 %1267, %v521
        %v1269 = vpop.permute.xlu0 %1268
        %1271 = vset.pattern.permute.xlu0 4
        %1272 = vperm.xlu0 %1271, %v522
        %v1273 = vpop.permute.xlu0 %1272
        %v1283 = vunpack.c.l.b16 %v1203
        %v1284 = vunpack.c.l.b16 %v1204
        %v1285 = vunpack.c.l.b16 %v1205
        %v1286 = vunpack.c.l.b16 %v1206
        %v1287 = vunpack.c.l.b16 %v1207
        %v1288 = vunpack.c.l.b16 %v1208
        %v1289 = vunpack.c.l.b16 %v1209
        %v1290 = vunpack.c.l.b16 %v1210
        %v1291 = vpack.c.b16 %v1284, %v1283
        %v1292 = vpack.c.b16 %v1286, %v1285
        %v1293 = vpack.c.b16 %v1288, %v1287
        %v1294 = vpack.c.b16 %v1290, %v1289
        %vm1295 = vcmask 523264
        %v1297 = vsel %vm1295, %v1291, 0
        %v1300 = vsel %vm1295, %v1292, 0
        %v1303 = vsel %vm1295, %v1293, 0
        %v1306 = vsel %vm1295, %v1294, 0
        %1308 = vmatprep.subr.bf16.mxu0 %v1212
        %1309 = vmatpush1.bf16.msra.mxu0 %v1211
        %1310 = vmatprep.subr.bf16.mxu0 %v1220
        %1311 = vmatpush1.bf16.msra.mxu0 %v1219
        %1312 = vmatprep.subr.bf16.mxu0 %v1228
        %1313 = vmatpush1.bf16.msra.mxu0 %v1227
        %1314 = vmatprep.subr.bf16.mxu0 %v1236
        %1315 = vmatpush1.bf16.msra.mxu0 %v1235
        %1316 = vmatprep.subr.bf16.mxu0 0
        %1317 = vmatpush1.bf16.msra.mxu0 0
        %1318 = vmatprep.subr.bf16.mxu0 0
        %1319 = vmatpush1.bf16.msra.mxu0 0
        %1320 = vmatprep.subr.bf16.mxu0 0
        %1321 = vmatpush1.bf16.msra.mxu0 0
        %1322 = vmatprep.subr.bf16.mxu0 0
        %1323 = vmatpush1.bf16.msra.mxu0 0
        %1324 = vmatprep.subr.bf16.mxu0 0
        %1325 = vmatpush1.bf16.msra.mxu0 0
        %1326 = vmatprep.subr.bf16.mxu0 0
        %1327 = vmatpush1.bf16.msra.mxu0 0
        %1328 = vmatprep.subr.bf16.mxu0 0
        %1329 = vmatpush1.bf16.msra.mxu0 0
        %1330 = vmatprep.subr.bf16.mxu0 0
        %1331 = vmatpush1.bf16.msra.mxu0 0
        %1332 = vmatprep.subr.bf16.mxu0 0
        %1333 = vmatpush1.bf16.msra.mxu0 0
        %1334 = vmatprep.subr.bf16.mxu0 0
        %1335 = vmatpush1.bf16.msra.mxu0 0
        %1336 = vmatprep.subr.bf16.mxu0 0
        %1337 = vmatpush1.bf16.msra.mxu0 0
        %1338 = vmatprep.subr.bf16.mxu0 0
        %1339 = vmatpush1.bf16.msra.mxu0 0
        %1340 = vmatprep.mubr.bf16.mxu0 0
        %1341 = vmatmul.mubr.bf16.gmra.mrb[0].mxu0 %v1297
        %v1342 = vpop.f32.mrb[0].mxu0
        %v1343 = vadd.f32 %v1245, %v1342
        %v1344 = vpop.f32.mrb[0].mxu0
        %v1345 = vadd.f32 %v1245, %v1344
        %v1346 = vpop.f32.mrb[0].mxu0
        %v1347 = vadd.f32 %v1249, %v1346
        %v1348 = vpop.f32.mrb[0].mxu0
        %v1349 = vadd.f32 %v1249, %v1348
        %1350 = vmatprep.mubr.bf16.mxu0 0
        %1351 = vmatmul.mubr.bf16.gmra.mrb[0].mxu0 %v1300
        %v1352 = vpop.f32.mrb[0].mxu0
        %v1353 = vadd.f32 %v1253, %v1352
        %v1354 = vpop.f32.mrb[0].mxu0
        %v1355 = vadd.f32 %v1253, %v1354
        %v1356 = vpop.f32.mrb[0].mxu0
        %v1357 = vadd.f32 %v1257, %v1356
        %v1358 = vpop.f32.mrb[0].mxu0
        %v1359 = vadd.f32 %v1257, %v1358
        %1360 = vmatprep.mubr.bf16.mxu0 0
        %1361 = vmatmul.mubr.bf16.gmra.mrb[0].mxu0 %v1303
        %v1362 = vpop.f32.mrb[0].mxu0
        %v1363 = vadd.f32 %v1261, %v1362
        %v1364 = vpop.f32.mrb[0].mxu0
        %v1365 = vadd.f32 %v1261, %v1364
        %v1366 = vpop.f32.mrb[0].mxu0
        %v1367 = vadd.f32 %v1265, %v1366
        %v1368 = vpop.f32.mrb[0].mxu0
        %v1369 = vadd.f32 %v1265, %v1368
        %1370 = vmatprep.mubr.bf16.mxu0 0
        %1371 = vmatmul.mubr.bf16.gmra.mrb[0].mxu0 %v1306
        %v1372 = vpop.f32.mrb[0].mxu0
        %v1373 = vadd.f32 %v1269, %v1372
        %v1374 = vpop.f32.mrb[0].mxu0
        %v1375 = vadd.f32 %v1269, %v1374
        %v1376 = vpop.f32.mrb[0].mxu0
        %v1377 = vadd.f32 %v1273, %v1376
        %v1378 = vpop.f32.mrb[0].mxu0
        %v1379 = vadd.f32 %v1273, %v1378
        %1380 = vdwg.mxu0
        %1381 = vmatprep.subr.bf16.mxu0 %v1214
        %1382 = vmatpush1.bf16.msra.mxu0 %v1213
        %1383 = vmatprep.subr.bf16.mxu0 %v1222
        %1384 = vmatpush1.bf16.msra.mxu0 %v1221
        %1385 = vmatprep.subr.bf16.mxu0 %v1230
        %1386 = vmatpush1.bf16.msra.mxu0 %v1229
        %1387 = vmatprep.subr.bf16.mxu0 %v1238
        %1388 = vmatpush1.bf16.msra.mxu0 %v1237
        %1389 = vmatprep.subr.bf16.mxu0 0
        %1390 = vmatpush1.bf16.msra.mxu0 0
        %1391 = vmatprep.subr.bf16.mxu0 0
        %1392 = vmatpush1.bf16.msra.mxu0 0
        %1393 = vmatprep.subr.bf16.mxu0 0
        %1394 = vmatpush1.bf16.msra.mxu0 0
        %1395 = vmatprep.subr.bf16.mxu0 0
        %1396 = vmatpush1.bf16.msra.mxu0 0
        %1397 = vmatprep.subr.bf16.mxu0 0
        %1398 = vmatpush1.bf16.msra.mxu0 0
        %1399 = vmatprep.subr.bf16.mxu0 0
        %1400 = vmatpush1.bf16.msra.mxu0 0
        %1401 = vmatprep.subr.bf16.mxu0 0
        %1402 = vmatpush1.bf16.msra.mxu0 0
        %1403 = vmatprep.subr.bf16.mxu0 0
        %1404 = vmatpush1.bf16.msra.mxu0 0
        %1405 = vmatprep.subr.bf16.mxu0 0
        %1406 = vmatpush1.bf16.msra.mxu0 0
        %1407 = vmatprep.subr.bf16.mxu0 0
        %1408 = vmatpush1.bf16.msra.mxu0 0
        %1409 = vmatprep.subr.bf16.mxu0 0
        %1410 = vmatpush1.bf16.msra.mxu0 0
        %1411 = vmatprep.subr.bf16.mxu0 0
        %1412 = vmatpush1.bf16.msra.mxu0 0
        %1413 = vmatprep.mubr.bf16.mxu0 0
        %1414 = vmatmul.mubr.bf16.gmra.mrb[0].mxu0 %v1297
        %v1415 = vpop.f32.mrb[0].mxu0
        %v1416 = vadd.f32 %v1245, %v1415
        %v1417 = vpop.f32.mrb[0].mxu0
        %v1418 = vadd.f32 %v1245, %v1417
        %v1419 = vpop.f32.mrb[0].mxu0
        %v1420 = vadd.f32 %v1249, %v1419
        %v1421 = vpop.f32.mrb[0].mxu0
        %v1422 = vadd.f32 %v1249, %v1421
        %1423 = vmatprep.mubr.bf16.mxu0 0
        %1424 = vmatmul.mubr.bf16.gmra.mrb[0].mxu0 %v1300
        %v1425 = vpop.f32.mrb[0].mxu0
        %v1426 = vadd.f32 %v1253, %v1425
        %v1427 = vpop.f32.mrb[0].mxu0
        %v1428 = vadd.f32 %v1253, %v1427
        %v1429 = vpop.f32.mrb[0].mxu0
        %v1430 = vadd.f32 %v1257, %v1429
        %v1431 = vpop.f32.mrb[0].mxu0
        %v1432 = vadd.f32 %v1257, %v1431
        %1433 = vmatprep.mubr.bf16.mxu0 0
        %1434 = vmatmul.mubr.bf16.gmra.mrb[0].mxu0 %v1303
        %v1435 = vpop.f32.mrb[0].mxu0
        %v1436 = vadd.f32 %v1261, %v1435
        %v1437 = vpop.f32.mrb[0].mxu0
        %v1438 = vadd.f32 %v1261, %v1437
        %v1439 = vpop.f32.mrb[0].mxu0
        %v1440 = vadd.f32 %v1265, %v1439
        %v1441 = vpop.f32.mrb[0].mxu0
        %v1442 = vadd.f32 %v1265, %v1441
        %1443 = vmatprep.mubr.bf16.mxu0 0
        %1444 = vmatmul.mubr.bf16.gmra.mrb[0].mxu0 %v1306
        %v1445 = vpop.f32.mrb[0].mxu0
        %v1446 = vadd.f32 %v1269, %v1445
        %v1447 = vpop.f32.mrb[0].mxu0
        %v1448 = vadd.f32 %v1269, %v1447
        %v1449 = vpop.f32.mrb[0].mxu0
        %v1450 = vadd.f32 %v1273, %v1449
        %v1451 = vpop.f32.mrb[0].mxu0
        %v1452 = vadd.f32 %v1273, %v1451
        %1453 = vdwg.mxu0
        %1454 = vmatprep.subr.bf16.mxu0 %v1216
        %1455 = vmatpush1.bf16.msra.mxu0 %v1215
        %1456 = vmatprep.subr.bf16.mxu0 %v1224
        %1457 = vmatpush1.bf16.msra.mxu0 %v1223
        %1458 = vmatprep.subr.bf16.mxu0 %v1232
        %1459 = vmatpush1.bf16.msra.mxu0 %v1231
        %1460 = vmatprep.subr.bf16.mxu0 %v1240
        %1461 = vmatpush1.bf16.msra.mxu0 %v1239
        %1462 = vmatprep.subr.bf16.mxu0 0
        %1463 = vmatpush1.bf16.msra.mxu0 0
        %1464 = vmatprep.subr.bf16.mxu0 0
        %1465 = vmatpush1.bf16.msra.mxu0 0
        %1466 = vmatprep.subr.bf16.mxu0 0
        %1467 = vmatpush1.bf16.msra.mxu0 0
        %1468 = vmatprep.subr.bf16.mxu0 0
        %1469 = vmatpush1.bf16.msra.mxu0 0
        %1470 = vmatprep.subr.bf16.mxu0 0
        %1471 = vmatpush1.bf16.msra.mxu0 0
        %1472 = vmatprep.subr.bf16.mxu0 0
        %1473 = vmatpush1.bf16.msra.mxu0 0
        %1474 = vmatprep.subr.bf16.mxu0 0
        %1475 = vmatpush1.bf16.msra.mxu0 0
        %1476 = vmatprep.subr.bf16.mxu0 0
        %1477 = vmatpush1.bf16.msra.mxu0 0
        %1478 = vmatprep.subr.bf16.mxu0 0
        %1479 = vmatpush1.bf16.msra.mxu0 0
        %1480 = vmatprep.subr.bf16.mxu0 0
        %1481 = vmatpush1.bf16.msra.mxu0 0
        %1482 = vmatprep.subr.bf16.mxu0 0
        %1483 = vmatpush1.bf16.msra.mxu0 0
        %1484 = vmatprep.subr.bf16.mxu0 0
        %1485 = vmatpush1.bf16.msra.mxu0 0
        %1486 = vmatprep.mubr.bf16.mxu0 0
        %1487 = vmatmul.mubr.bf16.gmra.mrb[0].mxu0 %v1297
        %v1488 = vpop.f32.mrb[0].mxu0
        %v1489 = vadd.f32 %v1245, %v1488
        %v1490 = vpop.f32.mrb[0].mxu0
        %v1491 = vadd.f32 %v1245, %v1490
        %v1492 = vpop.f32.mrb[0].mxu0
        %v1493 = vadd.f32 %v1249, %v1492
        %v1494 = vpop.f32.mrb[0].mxu0
        %v1495 = vadd.f32 %v1249, %v1494
        %1496 = vmatprep.mubr.bf16.mxu0 0
        %1497 = vmatmul.mubr.bf16.gmra.mrb[0].mxu0 %v1300
        %v1498 = vpop.f32.mrb[0].mxu0
        %v1499 = vadd.f32 %v1253, %v1498
        %v1500 = vpop.f32.mrb[0].mxu0
        %v1501 = vadd.f32 %v1253, %v1500
        %v1502 = vpop.f32.mrb[0].mxu0
        %v1503 = vadd.f32 %v1257, %v1502
        %v1504 = vpop.f32.mrb[0].mxu0
        %v1505 = vadd.f32 %v1257, %v1504
        %1506 = vmatprep.mubr.bf16.mxu0 0
        %1507 = vmatmul.mubr.bf16.gmra.mrb[0].mxu0 %v1303
        %v1508 = vpop.f32.mrb[0].mxu0
        %v1509 = vadd.f32 %v1261, %v1508
        %v1510 = vpop.f32.mrb[0].mxu0
        %v1511 = vadd.f32 %v1261, %v1510
        %v1512 = vpop.f32.mrb[0].mxu0
        %v1513 = vadd.f32 %v1265, %v1512
        %v1514 = vpop.f32.mrb[0].mxu0
        %v1515 = vadd.f32 %v1265, %v1514
        %1516 = vmatprep.mubr.bf16.mxu0 0
        %1517 = vmatmul.mubr.bf16.gmra.mrb[0].mxu0 %v1306
        %v1518 = vpop.f32.mrb[0].mxu0
        %v1519 = vadd.f32 %v1269, %v1518
        %v1520 = vpop.f32.mrb[0].mxu0
        %v1521 = vadd.f32 %v1269, %v1520
        %v1522 = vpop.f32.mrb[0].mxu0
        %v1523 = vadd.f32 %v1273, %v1522
        %v1524 = vpop.f32.mrb[0].mxu0
        %v1525 = vadd.f32 %v1273, %v1524
        %1526 = vdwg.mxu0
        %1527 = vmatprep.subr.bf16.mxu0 %v1218
        %1528 = vmatpush1.bf16.msra.mxu0 %v1217
        %1529 = vmatprep.subr.bf16.mxu0 %v1226
        %1530 = vmatpush1.bf16.msra.mxu0 %v1225
        %1531 = vmatprep.subr.bf16.mxu0 %v1234
        %1532 = vmatpush1.bf16.msra.mxu0 %v1233
        %1533 = vmatprep.subr.bf16.mxu0 %v1242
        %1534 = vmatpush1.bf16.msra.mxu0 %v1241
        %1535 = vmatprep.subr.bf16.mxu0 0
        %1536 = vmatpush1.bf16.msra.mxu0 0
        %1537 = vmatprep.subr.bf16.mxu0 0
        %1538 = vmatpush1.bf16.msra.mxu0 0
        %1539 = vmatprep.subr.bf16.mxu0 0
        %1540 = vmatpush1.bf16.msra.mxu0 0
        %1541 = vmatprep.subr.bf16.mxu0 0
        %1542 = vmatpush1.bf16.msra.mxu0 0
        %1543 = vmatprep.subr.bf16.mxu0 0
        %1544 = vmatpush1.bf16.msra.mxu0 0
        %1545 = vmatprep.subr.bf16.mxu0 0
        %1546 = vmatpush1.bf16.msra.mxu0 0
        %1547 = vmatprep.subr.bf16.mxu0 0
        %1548 = vmatpush1.bf16.msra.mxu0 0
        %1549 = vmatprep.subr.bf16.mxu0 0
        %1550 = vmatpush1.bf16.msra.mxu0 0
        %1551 = vmatprep.subr.bf16.mxu0 0
        %1552 = vmatpush1.bf16.msra.mxu0 0
        %1553 = vmatprep.subr.bf16.mxu0 0
        %1554 = vmatpush1.bf16.msra.mxu0 0
        %1555 = vmatprep.subr.bf16.mxu0 0
        %1556 = vmatpush1.bf16.msra.mxu0 0
        %1557 = vmatprep.subr.bf16.mxu0 0
        %1558 = vmatpush1.bf16.msra.mxu0 0
        %1559 = vmatprep.mubr.bf16.mxu0 0
        %1560 = vmatmul.mubr.bf16.gmra.mrb[0].mxu0 %v1297
        %v1561 = vpop.f32.mrb[0].mxu0
        %v1562 = vadd.f32 %v1245, %v1561
        %v1563 = vpop.f32.mrb[0].mxu0
        %v1564 = vadd.f32 %v1245, %v1563
        %v1565 = vpop.f32.mrb[0].mxu0
        %v1566 = vadd.f32 %v1249, %v1565
        %v1567 = vpop.f32.mrb[0].mxu0
        %v1568 = vadd.f32 %v1249, %v1567
        %1569 = vmatprep.mubr.bf16.mxu0 0
        %1570 = vmatmul.mubr.bf16.gmra.mrb[0].mxu0 %v1300
        %v1571 = vpop.f32.mrb[0].mxu0
        %v1572 = vadd.f32 %v1253, %v1571
        %v1573 = vpop.f32.mrb[0].mxu0
        %v1574 = vadd.f32 %v1253, %v1573
        %v1575 = vpop.f32.mrb[0].mxu0
        %v1576 = vadd.f32 %v1257, %v1575
        %v1577 = vpop.f32.mrb[0].mxu0
        %v1578 = vadd.f32 %v1257, %v1577
        %1579 = vmatprep.mubr.bf16.mxu0 0
        %1580 = vmatmul.mubr.bf16.gmra.mrb[0].mxu0 %v1303
        %v1581 = vpop.f32.mrb[0].mxu0
        %v1582 = vadd.f32 %v1261, %v1581
        %v1583 = vpop.f32.mrb[0].mxu0
        %v1584 = vadd.f32 %v1261, %v1583
        %v1585 = vpop.f32.mrb[0].mxu0
        %v1586 = vadd.f32 %v1265, %v1585
        %v1587 = vpop.f32.mrb[0].mxu0
        %v1588 = vadd.f32 %v1265, %v1587
        %1589 = vmatprep.mubr.bf16.mxu0 0
        %1590 = vmatmul.mubr.bf16.gmra.mrb[0].mxu0 %v1306
        %v1591 = vpop.f32.mrb[0].mxu0
        %v1592 = vadd.f32 %v1269, %v1591
        %v1593 = vpop.f32.mrb[0].mxu0
        %v1594 = vadd.f32 %v1269, %v1593
        %v1595 = vpop.f32.mrb[0].mxu0
        %v1596 = vadd.f32 %v1273, %v1595
        %v1597 = vpop.f32.mrb[0].mxu0
        %v1598 = vadd.f32 %v1273, %v1597
        %1599 = vdwg.mxu0
        %v1600 = vmax.f32 %v1343, 0.0
        %v1601 = vmax.f32 %v1345, 0.0
        %v1602 = vmax.f32 %v1416, 0.0
        %v1603 = vmax.f32 %v1418, 0.0
        %v1604 = vmax.f32 %v1489, 0.0
        %v1605 = vmax.f32 %v1491, 0.0
        %v1606 = vmax.f32 %v1562, 0.0
        %v1607 = vmax.f32 %v1564, 0.0
        %v1608 = vmax.f32 %v1347, 0.0
        %v1609 = vmax.f32 %v1349, 0.0
        %v1610 = vmax.f32 %v1420, 0.0
        %v1611 = vmax.f32 %v1422, 0.0
        %v1612 = vmax.f32 %v1493, 0.0
        %v1613 = vmax.f32 %v1495, 0.0
        %v1614 = vmax.f32 %v1566, 0.0
        %v1615 = vmax.f32 %v1568, 0.0
        %v1616 = vmax.f32 %v1353, 0.0
        %v1617 = vmax.f32 %v1355, 0.0
        %v1618 = vmax.f32 %v1426, 0.0
        %v1619 = vmax.f32 %v1428, 0.0
        %v1620 = vmax.f32 %v1499, 0.0
        %v1621 = vmax.f32 %v1501, 0.0
        %v1622 = vmax.f32 %v1572, 0.0
        %v1623 = vmax.f32 %v1574, 0.0
        %v1624 = vmax.f32 %v1357, 0.0
        %v1625 = vmax.f32 %v1359, 0.0
        %v1626 = vmax.f32 %v1430, 0.0
        %v1627 = vmax.f32 %v1432, 0.0
        %v1628 = vmax.f32 %v1503, 0.0
        %v1629 = vmax.f32 %v1505, 0.0
        %v1630 = vmax.f32 %v1576, 0.0
        %v1631 = vmax.f32 %v1578, 0.0
        %v1632 = vmax.f32 %v1363, 0.0
        %v1633 = vmax.f32 %v1365, 0.0
        %v1634 = vmax.f32 %v1436, 0.0
        %v1635 = vmax.f32 %v1438, 0.0
        %v1636 = vmax.f32 %v1509, 0.0
        %v1637 = vmax.f32 %v1511, 0.0
        %v1638 = vmax.f32 %v1582, 0.0
        %v1639 = vmax.f32 %v1584, 0.0
        %v1640 = vmax.f32 %v1367, 0.0
        %v1641 = vmax.f32 %v1369, 0.0
        %v1642 = vmax.f32 %v1440, 0.0
        %v1643 = vmax.f32 %v1442, 0.0
        %v1644 = vmax.f32 %v1513, 0.0
        %v1645 = vmax.f32 %v1515, 0.0
        %v1646 = vmax.f32 %v1586, 0.0
        %v1647 = vmax.f32 %v1588, 0.0
        %v1648 = vmax.f32 %v1373, 0.0
        %v1649 = vmax.f32 %v1375, 0.0
        %v1650 = vmax.f32 %v1446, 0.0
        %v1651 = vmax.f32 %v1448, 0.0
        %v1652 = vmax.f32 %v1519, 0.0
        %v1653 = vmax.f32 %v1521, 0.0
        %v1654 = vmax.f32 %v1592, 0.0
        %v1655 = vmax.f32 %v1594, 0.0
        %v1656 = vmax.f32 %v1377, 0.0
        %v1657 = vmax.f32 %v1379, 0.0
        %v1658 = vmax.f32 %v1450, 0.0
        %v1659 = vmax.f32 %v1452, 0.0
        %v1660 = vmax.f32 %v1523, 0.0
        %v1661 = vmax.f32 %v1525, 0.0
        %v1662 = vmax.f32 %v1596, 0.0
        %v1663 = vmax.f32 %v1598, 0.0
        %v1664 = vmax.f32 %v1600, %v1601
        %1665 = vmax.xlane.f32.xlu0 %v1664
        %v1666 = vpop.xlane.xlu0 %1665
        %v1667 = vmax.f32 %v1608, %v1609
        %1668 = vmax.xlane.f32.xlu0 %v1667
        %v1669 = vpop.xlane.xlu0 %1668
        %v1670 = vmax.f32 %v1616, %v1617
        %1671 = vmax.xlane.f32.xlu0 %v1670
        %v1672 = vpop.xlane.xlu0 %1671
        %v1673 = vmax.f32 %v1624, %v1625
        %1674 = vmax.xlane.f32.xlu0 %v1673
        %v1675 = vpop.xlane.xlu0 %1674
        %v1676 = vmax.f32 %v1632, %v1633
        %1677 = vmax.xlane.f32.xlu0 %v1676
        %v1678 = vpop.xlane.xlu0 %1677
        %v1679 = vmax.f32 %v1640, %v1641
        %1680 = vmax.xlane.f32.xlu0 %v1679
        %v1681 = vpop.xlane.xlu0 %1680
        %v1682 = vmax.f32 %v1648, %v1649
        %1683 = vmax.xlane.f32.xlu0 %v1682
        %v1684 = vpop.xlane.xlu0 %1683
        %v1685 = vmax.f32 %v1656, %v1657
        %1686 = vmax.xlane.f32.xlu0 %v1685
        %v1687 = vpop.xlane.xlu0 %1686
        %1688 = vxpose.xlu0.b32.start [1/16] %v1666, 128
        %1689 = vxpose.xlu0.b32.cont [2/16] %v1669, 128
        %1690 = vxpose.xlu0.b32.cont [3/16] %v1672, 128
        %1691 = vxpose.xlu0.b32.cont [4/16] %v1675, 128
        %1692 = vxpose.xlu0.b32.cont [5/16] %v1678, 128
        %1693 = vxpose.xlu0.b32.cont [6/16] %v1681, 128
        %1694 = vxpose.xlu0.b32.cont [7/16] %v1684, 128
        %1695 = vxpose.xlu0.b32.cont [8/16] %v1687, 128
        %1696 = vxpose.xlu0.b32.cont [9/16] 0.0, 128
        %1697 = vxpose.xlu0.b32.cont [10/16] 0.0, 128
        %1698 = vxpose.xlu0.b32.cont [11/16] 0.0, 128
        %1699 = vxpose.xlu0.b32.cont [12/16] 0.0, 128
        %1700 = vxpose.xlu0.b32.cont [13/16] 0.0, 128
        %1701 = vxpose.xlu0.b32.cont [14/16] 0.0, 128
        %1702 = vxpose.xlu0.b32.cont [15/16] 0.0, 128
        %1703 = vxpose.xlu0.b32.end [16/16] 0.0, 128
        %v1704 = vpop.trf.xlu0
        %v1705 = vpop.trf.xlu0
        %v1706 = vpop.trf.xlu0
        %v1707 = vpop.trf.xlu0
        %v1708 = vpop.trf.xlu0
        %v1709 = vpop.trf.xlu0
        %v1710 = vpop.trf.xlu0
        %v1711 = vpop.trf.xlu0
        %v1712 = vpop.trf.xlu0
        %v1713 = vpop.trf.xlu0
        %v1714 = vpop.trf.xlu0
        %v1715 = vpop.trf.xlu0
        %v1716 = vpop.trf.xlu0
        %v1717 = vpop.trf.xlu0
        %v1718 = vpop.trf.xlu0
        %v1719 = vpop.trf.xlu0
        %v1720 = vmax.f32 %v1602, %v1603
        %1721 = vmax.xlane.f32.xlu0 %v1720
        %v1722 = vpop.xlane.xlu0 %1721
        %v1723 = vmax.f32 %v1610, %v1611
        %1724 = vmax.xlane.f32.xlu0 %v1723
        %v1725 = vpop.xlane.xlu0 %1724
        %v1726 = vmax.f32 %v1618, %v1619
        %1727 = vmax.xlane.f32.xlu0 %v1726
        %v1728 = vpop.xlane.xlu0 %1727
        %v1729 = vmax.f32 %v1626, %v1627
        %1730 = vmax.xlane.f32.xlu0 %v1729
        %v1731 = vpop.xlane.xlu0 %1730
        %v1732 = vmax.f32 %v1634, %v1635
        %1733 = vmax.xlane.f32.xlu0 %v1732
        %v1734 = vpop.xlane.xlu0 %1733
        %v1735 = vmax.f32 %v1642, %v1643
        %1736 = vmax.xlane.f32.xlu0 %v1735
        %v1737 = vpop.xlane.xlu0 %1736
        %v1738 = vmax.f32 %v1650, %v1651
        %1739 = vmax.xlane.f32.xlu0 %v1738
        %v1740 = vpop.xlane.xlu0 %1739
        %v1741 = vmax.f32 %v1658, %v1659
        %1742 = vmax.xlane.f32.xlu0 %v1741
        %v1743 = vpop.xlane.xlu0 %1742
        %1744 = vxpose.xlu0.b32.start [1/16] %v1722, 128
        %1745 = vxpose.xlu0.b32.cont [2/16] %v1725, 128
        %1746 = vxpose.xlu0.b32.cont [3/16] %v1728, 128
        %1747 = vxpose.xlu0.b32.cont [4/16] %v1731, 128
        %1748 = vxpose.xlu0.b32.cont [5/16] %v1734, 128
        %1749 = vxpose.xlu0.b32.cont [6/16] %v1737, 128
        %1750 = vxpose.xlu0.b32.cont [7/16] %v1740, 128
        %1751 = vxpose.xlu0.b32.cont [8/16] %v1743, 128
        %1752 = vxpose.xlu0.b32.cont [9/16] 0.0, 128
        %1753 = vxpose.xlu0.b32.cont [10/16] 0.0, 128
        %1754 = vxpose.xlu0.b32.cont [11/16] 0.0, 128
        %1755 = vxpose.xlu0.b32.cont [12/16] 0.0, 128
        %1756 = vxpose.xlu0.b32.cont [13/16] 0.0, 128
        %1757 = vxpose.xlu0.b32.cont [14/16] 0.0, 128
        %1758 = vxpose.xlu0.b32.cont [15/16] 0.0, 128
        %1759 = vxpose.xlu0.b32.end [16/16] 0.0, 128
        %v1760 = vpop.trf.xlu0
        %v1761 = vpop.trf.xlu0
        %v1762 = vpop.trf.xlu0
        %v1763 = vpop.trf.xlu0
        %v1764 = vpop.trf.xlu0
        %v1765 = vpop.trf.xlu0
        %v1766 = vpop.trf.xlu0
        %v1767 = vpop.trf.xlu0
        %v1768 = vpop.trf.xlu0
        %v1769 = vpop.trf.xlu0
        %v1770 = vpop.trf.xlu0
        %v1771 = vpop.trf.xlu0
        %v1772 = vpop.trf.xlu0
        %v1773 = vpop.trf.xlu0
        %v1774 = vpop.trf.xlu0
        %v1775 = vpop.trf.xlu0
        %v1776 = vmax.f32 %v1604, %v1605
        %1777 = vmax.xlane.f32.xlu0 %v1776
        %v1778 = vpop.xlane.xlu0 %1777
        %v1779 = vmax.f32 %v1612, %v1613
        %1780 = vmax.xlane.f32.xlu0 %v1779
        %v1781 = vpop.xlane.xlu0 %1780
        %v1782 = vmax.f32 %v1620, %v1621
        %1783 = vmax.xlane.f32.xlu0 %v1782
        %v1784 = vpop.xlane.xlu0 %1783
        %v1785 = vmax.f32 %v1628, %v1629
        %1786 = vmax.xlane.f32.xlu0 %v1785
        %v1787 = vpop.xlane.xlu0 %1786
        %v1788 = vmax.f32 %v1636, %v1637
        %1789 = vmax.xlane.f32.xlu0 %v1788
        %v1790 = vpop.xlane.xlu0 %1789
        %v1791 = vmax.f32 %v1644, %v1645
        %1792 = vmax.xlane.f32.xlu0 %v1791
        %v1793 = vpop.xlane.xlu0 %1792
        %v1794 = vmax.f32 %v1652, %v1653
        %1795 = vmax.xlane.f32.xlu0 %v1794
        %v1796 = vpop.xlane.xlu0 %1795
        %v1797 = vmax.f32 %v1660, %v1661
        %1798 = vmax.xlane.f32.xlu0 %v1797
        %v1799 = vpop.xlane.xlu0 %1798
        %1800 = vxpose.xlu0.b32.start [1/16] %v1778, 128
        %1801 = vxpose.xlu0.b32.cont [2/16] %v1781, 128
        %1802 = vxpose.xlu0.b32.cont [3/16] %v1784, 128
        %1803 = vxpose.xlu0.b32.cont [4/16] %v1787, 128
        %1804 = vxpose.xlu0.b32.cont [5/16] %v1790, 128
        %1805 = vxpose.xlu0.b32.cont [6/16] %v1793, 128
        %1806 = vxpose.xlu0.b32.cont [7/16] %v1796, 128
        %1807 = vxpose.xlu0.b32.cont [8/16] %v1799, 128
        %1808 = vxpose.xlu0.b32.cont [9/16] 0.0, 128
        %1809 = vxpose.xlu0.b32.cont [10/16] 0.0, 128
        %1810 = vxpose.xlu0.b32.cont [11/16] 0.0, 128
        %1811 = vxpose.xlu0.b32.cont [12/16] 0.0, 128
        %1812 = vxpose.xlu0.b32.cont [13/16] 0.0, 128
        %1813 = vxpose.xlu0.b32.cont [14/16] 0.0, 128
        %1814 = vxpose.xlu0.b32.cont [15/16] 0.0, 128
        %1815 = vxpose.xlu0.b32.end [16/16] 0.0, 128
        %v1816 = vpop.trf.xlu0
        %v1817 = vpop.trf.xlu0
        %v1818 = vpop.trf.xlu0
        %v1819 = vpop.trf.xlu0
        %v1820 = vpop.trf.xlu0
        %v1821 = vpop.trf.xlu0
        %v1822 = vpop.trf.xlu0
        %v1823 = vpop.trf.xlu0
        %v1824 = vpop.trf.xlu0
        %v1825 = vpop.trf.xlu0
        %v1826 = vpop.trf.xlu0
        %v1827 = vpop.trf.xlu0
        %v1828 = vpop.trf.xlu0
        %v1829 = vpop.trf.xlu0
        %v1830 = vpop.trf.xlu0
        %v1831 = vpop.trf.xlu0
        %v1832 = vmax.f32 %v1606, %v1607
        %1833 = vmax.xlane.f32.xlu0 %v1832
        %v1834 = vpop.xlane.xlu0 %1833
        %v1835 = vmax.f32 %v1614, %v1615
        %1836 = vmax.xlane.f32.xlu0 %v1835
        %v1837 = vpop.xlane.xlu0 %1836
        %v1838 = vmax.f32 %v1622, %v1623
        %1839 = vmax.xlane.f32.xlu0 %v1838
        %v1840 = vpop.xlane.xlu0 %1839
        %v1841 = vmax.f32 %v1630, %v1631
        %1842 = vmax.xlane.f32.xlu0 %v1841
        %v1843 = vpop.xlane.xlu0 %1842
        %v1844 = vmax.f32 %v1638, %v1639
        %1845 = vmax.xlane.f32.xlu0 %v1844
        %v1846 = vpop.xlane.xlu0 %1845
        %v1847 = vmax.f32 %v1646, %v1647
        %1848 = vmax.xlane.f32.xlu0 %v1847
        %v1849 = vpop.xlane.xlu0 %1848
        %v1850 = vmax.f32 %v1654, %v1655
        %1851 = vmax.xlane.f32.xlu0 %v1850
        %v1852 = vpop.xlane.xlu0 %1851
        %v1853 = vmax.f32 %v1662, %v1663
        %1854 = vmax.xlane.f32.xlu0 %v1853
        %v1855 = vpop.xlane.xlu0 %1854
        %1856 = vxpose.xlu0.b32.start [1/16] %v1834, 128
        %1857 = vxpose.xlu0.b32.cont [2/16] %v1837, 128
        %1858 = vxpose.xlu0.b32.cont [3/16] %v1840, 128
        %1859 = vxpose.xlu0.b32.cont [4/16] %v1843, 128
        %1860 = vxpose.xlu0.b32.cont [5/16] %v1846, 128
        %1861 = vxpose.xlu0.b32.cont [6/16] %v1849, 128
        %1862 = vxpose.xlu0.b32.cont [7/16] %v1852, 128
        %1863 = vxpose.xlu0.b32.cont [8/16] %v1855, 128
        %1864 = vxpose.xlu0.b32.cont [9/16] 0.0, 128
        %1865 = vxpose.xlu0.b32.cont [10/16] 0.0, 128
        %1866 = vxpose.xlu0.b32.cont [11/16] 0.0, 128
        %1867 = vxpose.xlu0.b32.cont [12/16] 0.0, 128
        %1868 = vxpose.xlu0.b32.cont [13/16] 0.0, 128
        %1869 = vxpose.xlu0.b32.cont [14/16] 0.0, 128
        %1870 = vxpose.xlu0.b32.cont [15/16] 0.0, 128
        %1871 = vxpose.xlu0.b32.end [16/16] 0.0, 128
        %v1872 = vpop.trf.xlu0
        %v1873 = vpop.trf.xlu0
        %v1874 = vpop.trf.xlu0
        %v1875 = vpop.trf.xlu0
        %v1876 = vpop.trf.xlu0
        %v1877 = vpop.trf.xlu0
        %v1878 = vpop.trf.xlu0
        %v1879 = vpop.trf.xlu0
        %v1880 = vpop.trf.xlu0
        %v1881 = vpop.trf.xlu0
        %v1882 = vpop.trf.xlu0
        %v1883 = vpop.trf.xlu0
        %v1884 = vpop.trf.xlu0
        %v1885 = vpop.trf.xlu0
        %v1886 = vpop.trf.xlu0
        %v1887 = vpop.trf.xlu0
        %v1889 = vrot.slane %v1760, 7
        %v1892 = vrot.slane %v1816, 6
        %v1895 = vrot.slane %v1872, 5
        %vm1897 = vcmask 1040384
        %v1898 = vsel %vm1897, %v1704, %v1889
        %vm1899 = vcmask 1041408
        %v1900 = vsel %vm1899, %v1898, %v1892
        %vm1901 = vcmask 1042432
        %v1902 = vsel %vm1901, %v1900, %v1895
        %v1905 = vunpack.c.l.s4 1966171168
        %v1906 = vunpack.c.0.s8 %v1905
        %v1907 = vlaneseq
        %v1908 = vshrl.u32 %v1907, 7
        %v1909 = vsub.s32 %v1906, %v1908
        %v1910 = vrot.slane %v1902, %v1909
        %v1911 = vcombine.high %v1910, %v1910
        %v1913 = vunpack.c.l.s4 1966171168
        %v1914 = vunpack.c.0.s8 %v1913
        %v1915 = vlaneseq
        %v1916 = vshrl.u32 %v1915, 7
        %v1917 = vsub.s32 %v1914, %v1916
        %v1918 = vrot.slane %v1910, %v1917
        %v1920 = vunpack.c.l.s4 1966171168
        %v1921 = vunpack.c.0.s8 %v1920
        %v1922 = vlaneseq
        %v1923 = vshrl.u32 %v1922, 7
        %v1924 = vsub.s32 %v1921, %v1923
        %v1925 = vrot.slane %v1911, %v1924
        %v1926 = vcombine.high %v1918, %v1918
        %v1927 = vcombine.high %v1925, %v1925
        %vm1932 = vcmask 516096
        %1933 = vst.msk [vmem:[%s386] sm:$0x1] %vm1932, %v1918
        %1934 = vst.msk [vmem:[%s386 + $0x1] sm:$0x1] %vm1932, %v1925
        %1935 = vst.msk [vmem:[%s386 + $0x2] sm:$0x1] %vm1932, %v1926
        %1936 = vst.msk [vmem:[%s386 + $0x3] sm:$0x1] %vm1932, %v1927
        %v1937 = vld [vmem:[%s4] sm:$0xff]
        %v1938 = vld [vmem:[%s4 + $0x8] sm:$0xff]
        %v1939 = vld [vmem:[%s4 + $0x10] sm:$0xff]
        %v1940 = vld [vmem:[%s4 + $0x18] sm:$0xff]
        %v1941 = vld [vmem:[%s4 + $0x20] sm:$0xff]
        %v1942 = vld [vmem:[%s4 + $0x28] sm:$0xff]
        %v1943 = vld [vmem:[%s4 + $0x30] sm:$0xff]
        %v1944 = vld [vmem:[%s4 + $0x38] sm:$0xff]
        %v1945 = vld [vmem:[%s4 + $0x40] sm:$0x1]
        %v1946 = vlaneseq
        %v1947 = vshrl.u32 %v1946, 7
        %v1948 = vsub.s32 0, %v1947
        %v1949 = vrot.slane %v1945, %v1948
        %v1950 = vsel %vm1295, %v1902, 0
        %1952 = vmatprep.subr.mxu0 0.0
        %1953 = vmatpush1.msra.mxu0 %v1937
        %1954 = vmatprep.subr.mxu0 0.0
        %1955 = vmatpush1.msra.mxu0 %v1938
        %1956 = vmatprep.subr.mxu0 0.0
        %1957 = vmatpush1.msra.mxu0 %v1939
        %1958 = vmatprep.subr.mxu0 0.0
        %1959 = vmatpush1.msra.mxu0 %v1940
        %1960 = vmatprep.subr.mxu0 0.0
        %1961 = vmatpush1.msra.mxu0 %v1941
        %1962 = vmatprep.subr.mxu0 0.0
        %1963 = vmatpush1.msra.mxu0 %v1942
        %1964 = vmatprep.subr.mxu0 0.0
        %1965 = vmatpush1.msra.mxu0 %v1943
        %1966 = vmatprep.subr.mxu0 0.0
        %1967 = vmatpush1.msra.mxu0 %v1944
        %1968 = vmatprep.subr.mxu0 0.0
        %1969 = vmatpush1.msra.mxu0 0.0
        %1970 = vmatprep.subr.mxu0 0.0
        %1971 = vmatpush1.msra.mxu0 0.0
        %1972 = vmatprep.subr.mxu0 0.0
        %1973 = vmatpush1.msra.mxu0 0.0
        %1974 = vmatprep.subr.mxu0 0.0
        %1975 = vmatpush1.msra.mxu0 0.0
        %1976 = vmatprep.subr.mxu0 0.0
        %1977 = vmatpush1.msra.mxu0 0.0
        %1978 = vmatprep.subr.mxu0 0.0
        %1979 = vmatpush1.msra.mxu0 0.0
        %1980 = vmatprep.subr.mxu0 0.0
        %1981 = vmatpush1.msra.mxu0 0.0
        %1982 = vmatprep.subr.mxu0 0.0
        %1983 = vmatpush1.msra.mxu0 0.0
        %1984 = vmatprep.subr.mxu0 0.0
        %1985 = vmatpush1.msra.mxu0 0.0
        %1986 = vmatprep.subr.mxu0 0.0
        %1987 = vmatpush1.msra.mxu0 0.0
        %1988 = vmatprep.subr.mxu0 0.0
        %1989 = vmatpush1.msra.mxu0 0.0
        %1990 = vmatprep.subr.mxu0 0.0
        %1991 = vmatpush1.msra.mxu0 0.0
        %1992 = vmatprep.subr.mxu0 0.0
        %1993 = vmatpush1.msra.mxu0 0.0
        %1994 = vmatprep.subr.mxu0 0.0
        %1995 = vmatpush1.msra.mxu0 0.0
        %1996 = vmatprep.subr.mxu0 0.0
        %1997 = vmatpush1.msra.mxu0 0.0
        %1998 = vmatprep.subr.mxu0 0.0
        %1999 = vmatpush1.msra.mxu0 0.0
        %2000 = vmatprep.subr.mxu0 0.0
        %2001 = vmatpush1.msra.mxu0 0.0
        %2002 = vmatprep.subr.mxu0 0.0
        %2003 = vmatpush1.msra.mxu0 0.0
        %2004 = vmatprep.subr.mxu0 0.0
        %2005 = vmatpush1.msra.mxu0 0.0
        %2006 = vmatprep.subr.mxu0 0.0
        %2007 = vmatpush1.msra.mxu0 0.0
        %2008 = vmatprep.subr.mxu0 0.0
        %2009 = vmatpush1.msra.mxu0 0.0
        %2010 = vmatprep.subr.mxu0 0.0
        %2011 = vmatpush1.msra.mxu0 0.0
        %2012 = vmatprep.subr.mxu0 0.0
        %2013 = vmatpush1.msra.mxu0 0.0
        %2014 = vmatprep.subr.mxu0 0.0
        %2015 = vmatpush1.msra.mxu0 0.0
        %2016 = vmatprep.mubr.f32.mxu0 0.0
        %2017 = vmatmul.mubr.f32.gmra.mrb[0].mxu0 %v1950
        %v2018 = vpop.f32.mrb[0].mxu0
        %v2019 = vadd.f32 %v1949, %v2018
        %v2020 = vpop.f32.mrb[0].mxu0
        %2021 = vdwg.mxu0
        %v2022 = vmax.f32 %v2019, 0.0
        %v2023 = vld [vmem:[%s5] sm:$0xff]
        %v2024 = vld [vmem:[%s5 + $0x8] sm:$0xff]
        %v2025 = vld [vmem:[%s5 + $0x10] sm:$0xff]
        %v2026 = vld [vmem:[%s5 + $0x18] sm:$0xff]
        %v2027 = vld [vmem:[%s5 + $0x20] sm:$0xff]
        %v2028 = vld [vmem:[%s5 + $0x28] sm:$0xff]
        %v2029 = vld [vmem:[%s5 + $0x30] sm:$0xff]
        %v2030 = vld [vmem:[%s5 + $0x38] sm:$0xff]
        %v2031 = vld [vmem:[%s5 + $0x40] sm:$0xff]
        %v2032 = vld [vmem:[%s5 + $0x48] sm:$0xff]
        %v2033 = vld [vmem:[%s5 + $0x50] sm:$0xff]
        %v2034 = vld [vmem:[%s5 + $0x58] sm:$0xff]
        %v2035 = vld [vmem:[%s5 + $0x60] sm:$0xff]
        %v2036 = vld [vmem:[%s5 + $0x68] sm:$0xff]
        %v2037 = vld [vmem:[%s5 + $0x70] sm:$0xff]
        %v2038 = vld [vmem:[%s5 + $0x78] sm:$0xff]
        %s2039 = scalar_lea.vmem %s5, 128
        %v2040 = vld [vmem:[%s2039] ss:$8 sm:$0xf]
        %v2042 = vlaneseq
        %v2043 = vshrl.u32 %v2042, 7
        %v2044 = vsub.s32 0, %v2043
        %v2045 = vrot.slane %v2040, %v2044
        %v2046 = vlaneseq
        %v2047 = vshrl.u32 %v2046, 7
        %v2048 = vsub.s32 1, %v2047
        %v2049 = vrot.slane %v2040, %v2048
        %v2050 = vlaneseq
        %v2051 = vshrl.u32 %v2050, 7
        %v2052 = vsub.s32 2, %v2051
        %v2053 = vrot.slane %v2040, %v2052
        %v2054 = vlaneseq
        %v2055 = vshrl.u32 %v2054, 7
        %v2056 = vsub.s32 3, %v2055
        %v2057 = vrot.slane %v2040, %v2056
        %vm2062 = vcmask 261120
        %v2064 = vsel %vm2062, %v2022, 0
        %2066 = vmatprep.subr.mxu0 %v2024
        %2067 = vmatpush1.msra.mxu0 %v2023
        %2068 = vmatprep.subr.mxu0 %v2028
        %2069 = vmatpush1.msra.mxu0 %v2027
        %2070 = vmatprep.subr.mxu0 %v2032
        %2071 = vmatpush1.msra.mxu0 %v2031
        %2072 = vmatprep.subr.mxu0 %v2036
        %2073 = vmatpush1.msra.mxu0 %v2035
        %2074 = vmatprep.subr.mxu0 0.0
        %2075 = vmatpush1.msra.mxu0 0.0
        %2076 = vmatprep.subr.mxu0 0.0
        %2077 = vmatpush1.msra.mxu0 0.0
        %2078 = vmatprep.subr.mxu0 0.0
        %2079 = vmatpush1.msra.mxu0 0.0
        %2080 = vmatprep.subr.mxu0 0.0
        %2081 = vmatpush1.msra.mxu0 0.0
        %2082 = vmatprep.subr.mxu0 0.0
        %2083 = vmatpush1.msra.mxu0 0.0
        %2084 = vmatprep.subr.mxu0 0.0
        %2085 = vmatpush1.msra.mxu0 0.0
        %2086 = vmatprep.subr.mxu0 0.0
        %2087 = vmatpush1.msra.mxu0 0.0
        %2088 = vmatprep.subr.mxu0 0.0
        %2089 = vmatpush1.msra.mxu0 0.0
        %2090 = vmatprep.subr.mxu0 0.0
        %2091 = vmatpush1.msra.mxu0 0.0
        %2092 = vmatprep.subr.mxu0 0.0
        %2093 = vmatpush1.msra.mxu0 0.0
        %2094 = vmatprep.subr.mxu0 0.0
        %2095 = vmatpush1.msra.mxu0 0.0
        %2096 = vmatprep.subr.mxu0 0.0
        %2097 = vmatpush1.msra.mxu0 0.0
        %2098 = vmatprep.subr.mxu0 0.0
        %2099 = vmatpush1.msra.mxu0 0.0
        %2100 = vmatprep.subr.mxu0 0.0
        %2101 = vmatpush1.msra.mxu0 0.0
        %2102 = vmatprep.subr.mxu0 0.0
        %2103 = vmatpush1.msra.mxu0 0.0
        %2104 = vmatprep.subr.mxu0 0.0
        %2105 = vmatpush1.msra.mxu0 0.0
        %2106 = vmatprep.subr.mxu0 0.0
        %2107 = vmatpush1.msra.mxu0 0.0
        %2108 = vmatprep.subr.mxu0 0.0
        %2109 = vmatpush1.msra.mxu0 0.0
        %2110 = vmatprep.subr.mxu0 0.0
        %2111 = vmatpush1.msra.mxu0 0.0
        %2112 = vmatprep.subr.mxu0 0.0
        %2113 = vmatpush1.msra.mxu0 0.0
        %2114 = vmatprep.subr.mxu0 0.0
        %2115 = vmatpush1.msra.mxu0 0.0
        %2116 = vmatprep.subr.mxu0 0.0
        %2117 = vmatpush1.msra.mxu0 0.0
        %2118 = vmatprep.subr.mxu0 0.0
        %2119 = vmatpush1.msra.mxu0 0.0
        %2120 = vmatprep.subr.mxu0 0.0
        %2121 = vmatpush1.msra.mxu0 0.0
        %2122 = vmatprep.subr.mxu0 0.0
        %2123 = vmatpush1.msra.mxu0 0.0
        %2124 = vmatprep.subr.mxu0 0.0
        %2125 = vmatpush1.msra.mxu0 0.0
        %2126 = vmatprep.subr.mxu0 0.0
        %2127 = vmatpush1.msra.mxu0 0.0
        %2128 = vmatprep.subr.mxu0 0.0
        %2129 = vmatpush1.msra.mxu0 0.0
        %2130 = vmatprep.mubr.f32.mxu0 0.0
        %2131 = vmatmul.mubr.f32.gmra.mrb[0].mxu0 %v2064
        %v2132 = vpop.f32.mrb[0].mxu0
        %v2133 = vadd.f32 %v2045, %v2132
        %v2134 = vpop.f32.mrb[0].mxu0
        %v2135 = vadd.f32 %v2049, %v2134
        %2136 = vdwg.mxu0
        %2137 = vmatprep.subr.mxu0 %v2026
        %2138 = vmatpush1.msra.mxu0 %v2025
        %2139 = vmatprep.subr.mxu0 %v2030
        %2140 = vmatpush1.msra.mxu0 %v2029
        %2141 = vmatprep.subr.mxu0 %v2034
        %2142 = vmatpush1.msra.mxu0 %v2033
        %2143 = vmatprep.subr.mxu0 %v2038
        %2144 = vmatpush1.msra.mxu0 %v2037
        %2145 = vmatprep.subr.mxu0 0.0
        %2146 = vmatpush1.msra.mxu0 0.0
        %2147 = vmatprep.subr.mxu0 0.0
        %2148 = vmatpush1.msra.mxu0 0.0
        %2149 = vmatprep.subr.mxu0 0.0
        %2150 = vmatpush1.msra.mxu0 0.0
        %2151 = vmatprep.subr.mxu0 0.0
        %2152 = vmatpush1.msra.mxu0 0.0
        %2153 = vmatprep.subr.mxu0 0.0
        %2154 = vmatpush1.msra.mxu0 0.0
        %2155 = vmatprep.subr.mxu0 0.0
        %2156 = vmatpush1.msra.mxu0 0.0
        %2157 = vmatprep.subr.mxu0 0.0
        %2158 = vmatpush1.msra.mxu0 0.0
        %2159 = vmatprep.subr.mxu0 0.0
        %2160 = vmatpush1.msra.mxu0 0.0
        %2161 = vmatprep.subr.mxu0 0.0
        %2162 = vmatpush1.msra.mxu0 0.0
        %2163 = vmatprep.subr.mxu0 0.0
        %2164 = vmatpush1.msra.mxu0 0.0
        %2165 = vmatprep.subr.mxu0 0.0
        %2166 = vmatpush1.msra.mxu0 0.0
        %2167 = vmatprep.subr.mxu0 0.0
        %2168 = vmatpush1.msra.mxu0 0.0
        %2169 = vmatprep.subr.mxu0 0.0
        %2170 = vmatpush1.msra.mxu0 0.0
        %2171 = vmatprep.subr.mxu0 0.0
        %2172 = vmatpush1.msra.mxu0 0.0
        %2173 = vmatprep.subr.mxu0 0.0
        %2174 = vmatpush1.msra.mxu0 0.0
        %2175 = vmatprep.subr.mxu0 0.0
        %2176 = vmatpush1.msra.mxu0 0.0
        %2177 = vmatprep.subr.mxu0 0.0
        %2178 = vmatpush1.msra.mxu0 0.0
        %2179 = vmatprep.subr.mxu0 0.0
        %2180 = vmatpush1.msra.mxu0 0.0
        %2181 = vmatprep.subr.mxu0 0.0
        %2182 = vmatpush1.msra.mxu0 0.0
        %2183 = vmatprep.subr.mxu0 0.0
        %2184 = vmatpush1.msra.mxu0 0.0
        %2185 = vmatprep.subr.mxu0 0.0
        %2186 = vmatpush1.msra.mxu0 0.0
        %2187 = vmatprep.subr.mxu0 0.0
        %2188 = vmatpush1.msra.mxu0 0.0
        %2189 = vmatprep.subr.mxu0 0.0
        %2190 = vmatpush1.msra.mxu0 0.0
        %2191 = vmatprep.subr.mxu0 0.0
        %2192 = vmatpush1.msra.mxu0 0.0
        %2193 = vmatprep.subr.mxu0 0.0
        %2194 = vmatpush1.msra.mxu0 0.0
        %2195 = vmatprep.subr.mxu0 0.0
        %2196 = vmatpush1.msra.mxu0 0.0
        %2197 = vmatprep.subr.mxu0 0.0
        %2198 = vmatpush1.msra.mxu0 0.0
        %2199 = vmatprep.subr.mxu0 0.0
        %2200 = vmatpush1.msra.mxu0 0.0
        %2201 = vmatprep.mubr.f32.mxu0 0.0
        %2202 = vmatmul.mubr.f32.gmra.mrb[0].mxu0 %v2064
        %v2203 = vpop.f32.mrb[0].mxu0
        %v2204 = vadd.f32 %v2053, %v2203
        %v2205 = vpop.f32.mrb[0].mxu0
        %v2206 = vadd.f32 %v2057, %v2205
        %2207 = vdwg.mxu0
        %v2208 = vmax.f32 %v2133, 0.0
        %v2209 = vmax.f32 %v2135, 0.0
        %v2210 = vmax.f32 %v2204, 0.0
        %v2211 = vmax.f32 %v2206, 0.0
        %v2214 = vunpack.c.l.s4 1966171168
        %v2215 = vunpack.c.0.s8 %v2214
        %v2216 = vlaneseq
        %v2217 = vshrl.u32 %v2216, 7
        %v2218 = vsub.s32 %v2215, %v2217
        %v2219 = vrot.slane %v2208, %v2218
        %v2220 = vcombine.high %v2219, %v2219
        %v2222 = vunpack.c.l.s4 1966171168
        %v2223 = vunpack.c.0.s8 %v2222
        %v2224 = vlaneseq
        %v2225 = vshrl.u32 %v2224, 7
        %v2226 = vsub.s32 %v2223, %v2225
        %v2227 = vrot.slane %v2219, %v2226
        %v2229 = vunpack.c.l.s4 1966171168
        %v2230 = vunpack.c.0.s8 %v2229
        %v2231 = vlaneseq
        %v2232 = vshrl.u32 %v2231, 7
        %v2233 = vsub.s32 %v2230, %v2232
        %v2234 = vrot.slane %v2220, %v2233
        %v2235 = vcombine.high %v2227, %v2227
        %v2236 = vcombine.high %v2234, %v2234
        %v2243 = vunpack.c.l.s4 1966171168
        %v2244 = vunpack.c.0.s8 %v2243
        %v2245 = vlaneseq
        %v2246 = vshrl.u32 %v2245, 7
        %v2247 = vsub.s32 %v2244, %v2246
        %v2248 = vrot.slane %v2209, %v2247
        %v2249 = vcombine.high %v2248, %v2248
        %v2251 = vunpack.c.l.s4 1966171168
        %v2252 = vunpack.c.0.s8 %v2251
        %v2253 = vlaneseq
        %v2254 = vshrl.u32 %v2253, 7
        %v2255 = vsub.s32 %v2252, %v2254
        %v2256 = vrot.slane %v2248, %v2255
        %v2258 = vunpack.c.l.s4 1966171168
        %v2259 = vunpack.c.0.s8 %v2258
        %v2260 = vlaneseq
        %v2261 = vshrl.u32 %v2260, 7
        %v2262 = vsub.s32 %v2259, %v2261
        %v2263 = vrot.slane %v2249, %v2262
        %v2264 = vcombine.high %v2256, %v2256
        %v2265 = vcombine.high %v2263, %v2263
        %v2268 = vunpack.c.l.s4 1966171168
        %v2269 = vunpack.c.0.s8 %v2268
        %v2270 = vlaneseq
        %v2271 = vshrl.u32 %v2270, 7
        %v2272 = vsub.s32 %v2269, %v2271
        %v2273 = vrot.slane %v2210, %v2272
        %v2274 = vcombine.high %v2273, %v2273
        %v2276 = vunpack.c.l.s4 1966171168
        %v2277 = vunpack.c.0.s8 %v2276
        %v2278 = vlaneseq
        %v2279 = vshrl.u32 %v2278, 7
        %v2280 = vsub.s32 %v2277, %v2279
        %v2281 = vrot.slane %v2273, %v2280
        %v2283 = vunpack.c.l.s4 1966171168
        %v2284 = vunpack.c.0.s8 %v2283
        %v2285 = vlaneseq
        %v2286 = vshrl.u32 %v2285, 7
        %v2287 = vsub.s32 %v2284, %v2286
        %v2288 = vrot.slane %v2274, %v2287
        %v2289 = vcombine.high %v2281, %v2281
        %v2290 = vcombine.high %v2288, %v2288
        %v2297 = vunpack.c.l.s4 1966171168
        %v2298 = vunpack.c.0.s8 %v2297
        %v2299 = vlaneseq
        %v2300 = vshrl.u32 %v2299, 7
        %v2301 = vsub.s32 %v2298, %v2300
        %v2302 = vrot.slane %v2211, %v2301
        %v2303 = vcombine.high %v2302, %v2302
        %v2305 = vunpack.c.l.s4 1966171168
        %v2306 = vunpack.c.0.s8 %v2305
        %v2307 = vlaneseq
        %v2308 = vshrl.u32 %v2307, 7
        %v2309 = vsub.s32 %v2306, %v2308
        %v2310 = vrot.slane %v2302, %v2309
        %v2312 = vunpack.c.l.s4 1966171168
        %v2313 = vunpack.c.0.s8 %v2312
        %v2314 = vlaneseq
        %v2315 = vshrl.u32 %v2314, 7
        %v2316 = vsub.s32 %v2313, %v2315
        %v2317 = vrot.slane %v2303, %v2316
        %v2318 = vcombine.high %v2310, %v2310
        %v2319 = vcombine.high %v2317, %v2317
        %v2320 = vlaneseq
        %v2321 = vshrl.u32 %v2320, 7
        %v2322 = vsub.s32 0, %v2321
        %v2323 = vrot.slane %v2227, %v2322
        %v2324 = vlaneseq
        %v2325 = vshrl.u32 %v2324, 7
        %v2326 = vsub.s32 0, %v2325
        %v2327 = vrot.slane %v2234, %v2326
        %v2328 = vlaneseq
        %v2329 = vshrl.u32 %v2328, 7
        %v2330 = vsub.s32 0, %v2329
        %v2331 = vrot.slane %v2235, %v2330
        %v2332 = vlaneseq
        %v2333 = vshrl.u32 %v2332, 7
        %v2334 = vsub.s32 0, %v2333
        %v2335 = vrot.slane %v2236, %v2334
        %2336 = vrot.lane.b32.xlu0 %v2323, 96
        %v2337 = vpop.permute.xlu0 %2336
        %2338 = vrot.lane.b32.xlu0 %v2327, 96
        %v2339 = vpop.permute.xlu0 %2338
        %2340 = vrot.lane.b32.xlu0 %v2331, 96
        %v2341 = vpop.permute.xlu0 %2340
        %2342 = vrot.lane.b32.xlu0 %v2335, 96
        %v2343 = vpop.permute.xlu0 %2342
        %2348 = vrot.lane.b32.xlu0 %v2323, 64
        %v2349 = vpop.permute.xlu0 %2348
        %2350 = vrot.lane.b32.xlu0 %v2327, 64
        %v2351 = vpop.permute.xlu0 %2350
        %2352 = vrot.lane.b32.xlu0 %v2331, 64
        %v2353 = vpop.permute.xlu0 %2352
        %2354 = vrot.lane.b32.xlu0 %v2335, 64
        %v2355 = vpop.permute.xlu0 %2354
        %2360 = vrot.lane.b32.xlu0 %v2323, 32
        %v2361 = vpop.permute.xlu0 %2360
        %2362 = vrot.lane.b32.xlu0 %v2327, 32
        %v2363 = vpop.permute.xlu0 %2362
        %2364 = vrot.lane.b32.xlu0 %v2331, 32
        %v2365 = vpop.permute.xlu0 %2364
        %2366 = vrot.lane.b32.xlu0 %v2335, 32
        %v2367 = vpop.permute.xlu0 %2366
        %v2372 = vlaneseq
        %v2373 = vshrl.u32 %v2372, 7
        %v2374 = vsub.s32 0, %v2373
        %v2375 = vrot.slane %v2256, %v2374
        %v2376 = vlaneseq
        %v2377 = vshrl.u32 %v2376, 7
        %v2378 = vsub.s32 0, %v2377
        %v2379 = vrot.slane %v2263, %v2378
        %v2380 = vlaneseq
        %v2381 = vshrl.u32 %v2380, 7
        %v2382 = vsub.s32 0, %v2381
        %v2383 = vrot.slane %v2264, %v2382
        %v2384 = vlaneseq
        %v2385 = vshrl.u32 %v2384, 7
        %v2386 = vsub.s32 0, %v2385
        %v2387 = vrot.slane %v2265, %v2386
        %2392 = vrot.lane.b32.xlu0 %v2375, 96
        %v2393 = vpop.permute.xlu0 %2392
        %2394 = vrot.lane.b32.xlu0 %v2379, 96
        %v2395 = vpop.permute.xlu0 %2394
        %2396 = vrot.lane.b32.xlu0 %v2383, 96
        %v2397 = vpop.permute.xlu0 %2396
        %2398 = vrot.lane.b32.xlu0 %v2387, 96
        %v2399 = vpop.permute.xlu0 %2398
        %2404 = vrot.lane.b32.xlu0 %v2375, 64
        %v2405 = vpop.permute.xlu0 %2404
        %2406 = vrot.lane.b32.xlu0 %v2379, 64
        %v2407 = vpop.permute.xlu0 %2406
        %2408 = vrot.lane.b32.xlu0 %v2383, 64
        %v2409 = vpop.permute.xlu0 %2408
        %2410 = vrot.lane.b32.xlu0 %v2387, 64
        %v2411 = vpop.permute.xlu0 %2410
        %2416 = vrot.lane.b32.xlu0 %v2375, 32
        %v2417 = vpop.permute.xlu0 %2416
        %2418 = vrot.lane.b32.xlu0 %v2379, 32
        %v2419 = vpop.permute.xlu0 %2418
        %2420 = vrot.lane.b32.xlu0 %v2383, 32
        %v2421 = vpop.permute.xlu0 %2420
        %2422 = vrot.lane.b32.xlu0 %v2387, 32
        %v2423 = vpop.permute.xlu0 %2422
        %v2428 = vlaneseq
        %v2429 = vshrl.u32 %v2428, 7
        %v2430 = vsub.s32 0, %v2429
        %v2431 = vrot.slane %v2281, %v2430
        %v2432 = vlaneseq
        %v2433 = vshrl.u32 %v2432, 7
        %v2434 = vsub.s32 0, %v2433
        %v2435 = vrot.slane %v2288, %v2434
        %v2436 = vlaneseq
        %v2437 = vshrl.u32 %v2436, 7
        %v2438 = vsub.s32 0, %v2437
        %v2439 = vrot.slane %v2289, %v2438
        %v2440 = vlaneseq
        %v2441 = vshrl.u32 %v2440, 7
        %v2442 = vsub.s32 0, %v2441
        %v2443 = vrot.slane %v2290, %v2442
        %2444 = vrot.lane.b32.xlu0 %v2431, 96
        %v2445 = vpop.permute.xlu0 %2444
        %2446 = vrot.lane.b32.xlu0 %v2435, 96
        %v2447 = vpop.permute.xlu0 %2446
        %2448 = vrot.lane.b32.xlu0 %v2439, 96
        %v2449 = vpop.permute.xlu0 %2448
        %2450 = vrot.lane.b32.xlu0 %v2443, 96
        %v2451 = vpop.permute.xlu0 %2450
        %2456 = vrot.lane.b32.xlu0 %v2431, 64
        %v2457 = vpop.permute.xlu0 %2456
        %2458 = vrot.lane.b32.xlu0 %v2435, 64
        %v2459 = vpop.permute.xlu0 %2458
        %2460 = vrot.lane.b32.xlu0 %v2439, 64
        %v2461 = vpop.permute.xlu0 %2460
        %2462 = vrot.lane.b32.xlu0 %v2443, 64
        %v2463 = vpop.permute.xlu0 %2462
        %2468 = vrot.lane.b32.xlu0 %v2431, 32
        %v2469 = vpop.permute.xlu0 %2468
        %2470 = vrot.lane.b32.xlu0 %v2435, 32
        %v2471 = vpop.permute.xlu0 %2470
        %2472 = vrot.lane.b32.xlu0 %v2439, 32
        %v2473 = vpop.permute.xlu0 %2472
        %2474 = vrot.lane.b32.xlu0 %v2443, 32
        %v2475 = vpop.permute.xlu0 %2474
        %v2480 = vlaneseq
        %v2481 = vshrl.u32 %v2480, 7
        %v2482 = vsub.s32 0, %v2481
        %v2483 = vrot.slane %v2310, %v2482
        %v2484 = vlaneseq
        %v2485 = vshrl.u32 %v2484, 7
        %v2486 = vsub.s32 0, %v2485
        %v2487 = vrot.slane %v2317, %v2486
        %v2488 = vlaneseq
        %v2489 = vshrl.u32 %v2488, 7
        %v2490 = vsub.s32 0, %v2489
        %v2491 = vrot.slane %v2318, %v2490
        %v2492 = vlaneseq
        %v2493 = vshrl.u32 %v2492, 7
        %v2494 = vsub.s32 0, %v2493
        %v2495 = vrot.slane %v2319, %v2494
        %2500 = vrot.lane.b32.xlu0 %v2483, 96
        %v2501 = vpop.permute.xlu0 %2500
        %2502 = vrot.lane.b32.xlu0 %v2487, 96
        %v2503 = vpop.permute.xlu0 %2502
        %2504 = vrot.lane.b32.xlu0 %v2491, 96
        %v2505 = vpop.permute.xlu0 %2504
        %2506 = vrot.lane.b32.xlu0 %v2495, 96
        %v2507 = vpop.permute.xlu0 %2506
        %2512 = vrot.lane.b32.xlu0 %v2483, 64
        %v2513 = vpop.permute.xlu0 %2512
        %2514 = vrot.lane.b32.xlu0 %v2487, 64
        %v2515 = vpop.permute.xlu0 %2514
        %2516 = vrot.lane.b32.xlu0 %v2491, 64
        %v2517 = vpop.permute.xlu0 %2516
        %2518 = vrot.lane.b32.xlu0 %v2495, 64
        %v2519 = vpop.permute.xlu0 %2518
        %2524 = vrot.lane.b32.xlu0 %v2483, 32
        %v2525 = vpop.permute.xlu0 %2524
        %2526 = vrot.lane.b32.xlu0 %v2487, 32
        %v2527 = vpop.permute.xlu0 %2526
        %2528 = vrot.lane.b32.xlu0 %v2491, 32
        %v2529 = vpop.permute.xlu0 %2528
        %2530 = vrot.lane.b32.xlu0 %v2495, 32
        %v2531 = vpop.permute.xlu0 %2530
        %v2536 = vsel %vm1897, %v2227, %v2337
        %v2537 = vsel %vm1897, %v2234, %v2339
        %v2538 = vsel %vm1897, %v2235, %v2341
        %v2539 = vsel %vm1897, %v2236, %v2343
        %v2540 = vsel %vm1899, %v2536, %v2349
        %v2541 = vsel %vm1899, %v2537, %v2351
        %v2542 = vsel %vm1899, %v2538, %v2353
        %v2543 = vsel %vm1899, %v2539, %v2355
        %v2544 = vsel %vm1901, %v2540, %v2361
        %v2545 = vsel %vm1901, %v2541, %v2363
        %v2546 = vsel %vm1901, %v2542, %v2365
        %v2547 = vsel %vm1901, %v2543, %v2367
        %vm2548 = vcmask 1043456
        %v2549 = vsel %vm2548, %v2544, %v2375
        %v2550 = vsel %vm2548, %v2545, %v2379
        %v2551 = vsel %vm2548, %v2546, %v2383
        %v2552 = vsel %vm2548, %v2547, %v2387
        %vm2553 = vcmask 1044480
        %v2554 = vsel %vm2553, %v2549, %v2393
        %v2555 = vsel %vm2553, %v2550, %v2395
        %v2556 = vsel %vm2553, %v2551, %v2397
        %v2557 = vsel %vm2553, %v2552, %v2399
        %vm2558 = vcmask 1045504
        %v2559 = vsel %vm2558, %v2554, %v2405
        %v2560 = vsel %vm2558, %v2555, %v2407
        %v2561 = vsel %vm2558, %v2556, %v2409
        %v2562 = vsel %vm2558, %v2557, %v2411
        %vm2563 = vcmask 1046528
        %v2564 = vsel %vm2563, %v2559, %v2417
        %v2565 = vsel %vm2563, %v2560, %v2419
        %v2566 = vsel %vm2563, %v2561, %v2421
        %v2567 = vsel %vm2563, %v2562, %v2423
        %v2568 = vsel %vm1897, %v2281, %v2445
        %v2569 = vsel %vm1897, %v2288, %v2447
        %v2570 = vsel %vm1897, %v2289, %v2449
        %v2571 = vsel %vm1897, %v2290, %v2451
        %v2572 = vsel %vm1899, %v2568, %v2457
        %v2573 = vsel %vm1899, %v2569, %v2459
        %v2574 = vsel %vm1899, %v2570, %v2461
        %v2575 = vsel %vm1899, %v2571, %v2463
        %v2576 = vsel %vm1901, %v2572, %v2469
        %v2577 = vsel %vm1901, %v2573, %v2471
        %v2578 = vsel %vm1901, %v2574, %v2473
        %v2579 = vsel %vm1901, %v2575, %v2475
        %v2580 = vsel %vm2548, %v2576, %v2483
        %v2581 = vsel %vm2548, %v2577, %v2487
        %v2582 = vsel %vm2548, %v2578, %v2491
        %v2583 = vsel %vm2548, %v2579, %v2495
        %v2584 = vsel %vm2553, %v2580, %v2501
        %v2585 = vsel %vm2553, %v2581, %v2503
        %v2586 = vsel %vm2553, %v2582, %v2505
        %v2587 = vsel %vm2553, %v2583, %v2507
        %v2588 = vsel %vm2558, %v2584, %v2513
        %v2589 = vsel %vm2558, %v2585, %v2515
        %v2590 = vsel %vm2558, %v2586, %v2517
        %v2591 = vsel %vm2558, %v2587, %v2519
        %v2592 = vsel %vm2563, %v2588, %v2525
        %v2593 = vsel %vm2563, %v2589, %v2527
        %v2594 = vsel %vm2563, %v2590, %v2529
        %v2595 = vsel %vm2563, %v2591, %v2531
        %v2596 = vld [vmem:[%s7] sm:$0xff]
        %v2597 = vld [vmem:[%s7 + $0x8] sm:$0xff]
        %v2598 = vld [vmem:[%s7 + $0x10] sm:$0xff]
        %v2599 = vld [vmem:[%s7 + $0x18] sm:$0xff]
        %v2600 = vld [vmem:[%s7 + $0x20] sm:$0x1]
        %v2601 = vlaneseq
        %v2602 = vshrl.u32 %v2601, 7
        %v2603 = vsub.s32 0, %v2602
        %v2604 = vrot.slane %v2600, %v2603
        %v2606 = vsel %vm2062, %v2564, 0
        %v2609 = vsel %vm2062, %v2592, 0
        %v2612 = vsel %vm2062, %v2565, 0
        %v2615 = vsel %vm2062, %v2593, 0
        %v2618 = vsel %vm2062, %v2566, 0
        %v2621 = vsel %vm2062, %v2594, 0
        %v2624 = vsel %vm2062, %v2567, 0
        %v2627 = vsel %vm2062, %v2595, 0
        %2629 = vmatprep.subr.mxu0 0.0
        %2630 = vmatpush1.msra.mxu0 %v2596
        %2631 = vmatprep.subr.mxu0 0.0
        %2632 = vmatpush1.msra.mxu0 %v2597
        %2633 = vmatprep.subr.mxu0 0.0
        %2634 = vmatpush1.msra.mxu0 %v2598
        %2635 = vmatprep.subr.mxu0 0.0
        %2636 = vmatpush1.msra.mxu0 %v2599
        %2637 = vmatprep.subr.mxu0 0.0
        %2638 = vmatpush1.msra.mxu0 0.0
        %2639 = vmatprep.subr.mxu0 0.0
        %2640 = vmatpush1.msra.mxu0 0.0
        %2641 = vmatprep.subr.mxu0 0.0
        %2642 = vmatpush1.msra.mxu0 0.0
        %2643 = vmatprep.subr.mxu0 0.0
        %2644 = vmatpush1.msra.mxu0 0.0
        %2645 = vmatprep.subr.mxu0 0.0
        %2646 = vmatpush1.msra.mxu0 0.0
        %2647 = vmatprep.subr.mxu0 0.0
        %2648 = vmatpush1.msra.mxu0 0.0
        %2649 = vmatprep.subr.mxu0 0.0
        %2650 = vmatpush1.msra.mxu0 0.0
        %2651 = vmatprep.subr.mxu0 0.0
        %2652 = vmatpush1.msra.mxu0 0.0
        %2653 = vmatprep.subr.mxu0 0.0
        %2654 = vmatpush1.msra.mxu0 0.0
        %2655 = vmatprep.subr.mxu0 0.0
        %2656 = vmatpush1.msra.mxu0 0.0
        %2657 = vmatprep.subr.mxu0 0.0
        %2658 = vmatpush1.msra.mxu0 0.0
        %2659 = vmatprep.subr.mxu0 0.0
        %2660 = vmatpush1.msra.mxu0 0.0
        %2661 = vmatprep.subr.mxu0 0.0
        %2662 = vmatpush1.msra.mxu0 0.0
        %2663 = vmatprep.subr.mxu0 0.0
        %2664 = vmatpush1.msra.mxu0 0.0
        %2665 = vmatprep.subr.mxu0 0.0
        %2666 = vmatpush1.msra.mxu0 0.0
        %2667 = vmatprep.subr.mxu0 0.0
        %2668 = vmatpush1.msra.mxu0 0.0
        %2669 = vmatprep.subr.mxu0 0.0
        %2670 = vmatpush1.msra.mxu0 0.0
        %2671 = vmatprep.subr.mxu0 0.0
        %2672 = vmatpush1.msra.mxu0 0.0
        %2673 = vmatprep.subr.mxu0 0.0
        %2674 = vmatpush1.msra.mxu0 0.0
        %2675 = vmatprep.subr.mxu0 0.0
        %2676 = vmatpush1.msra.mxu0 0.0
        %2677 = vmatprep.subr.mxu0 0.0
        %2678 = vmatpush1.msra.mxu0 0.0
        %2679 = vmatprep.subr.mxu0 0.0
        %2680 = vmatpush1.msra.mxu0 0.0
        %2681 = vmatprep.subr.mxu0 0.0
        %2682 = vmatpush1.msra.mxu0 0.0
        %2683 = vmatprep.subr.mxu0 0.0
        %2684 = vmatpush1.msra.mxu0 0.0
        %2685 = vmatprep.subr.mxu0 0.0
        %2686 = vmatpush1.msra.mxu0 0.0
        %2687 = vmatprep.subr.mxu0 0.0
        %2688 = vmatpush1.msra.mxu0 0.0
        %2689 = vmatprep.subr.mxu0 0.0
        %2690 = vmatpush1.msra.mxu0 0.0
        %2691 = vmatprep.subr.mxu0 0.0
        %2692 = vmatpush1.msra.mxu0 0.0
        %2693 = vmatprep.mubr.f32.mxu0 0.0
        %2694 = vmatmul.mubr.f32.gmra.mrb[0].mxu0 %v2606
        %v2695 = vpop.f32.mrb[0].mxu0
        %v2696 = vadd.f32 %v2604, %v2695
        %v2697 = vpop.f32.mrb[0].mxu0
        %2698 = vmatprep.mubr.f32.mxu0 0.0
        %2699 = vmatmul.mubr.f32.gmra.mrb[0].mxu0 %v2609
        %v2700 = vpop.f32.mrb[0].mxu0
        %v2701 = vadd.f32 %v2604, %v2700
        %v2702 = vpop.f32.mrb[0].mxu0
        %2703 = vmatprep.mubr.f32.mxu0 0.0
        %2704 = vmatmul.mubr.f32.gmra.mrb[0].mxu0 %v2612
        %v2705 = vpop.f32.mrb[0].mxu0
        %v2706 = vadd.f32 %v2604, %v2705
        %v2707 = vpop.f32.mrb[0].mxu0
        %2708 = vmatprep.mubr.f32.mxu0 0.0
        %2709 = vmatmul.mubr.f32.gmra.mrb[0].mxu0 %v2615
        %v2710 = vpop.f32.mrb[0].mxu0
        %v2711 = vadd.f32 %v2604, %v2710
        %v2712 = vpop.f32.mrb[0].mxu0
        %2713 = vmatprep.mubr.f32.mxu0 0.0
        %2714 = vmatmul.mubr.f32.gmra.mrb[0].mxu0 %v2618
        %v2715 = vpop.f32.mrb[0].mxu0
        %v2716 = vadd.f32 %v2604, %v2715
        %v2717 = vpop.f32.mrb[0].mxu0
        %2718 = vmatprep.mubr.f32.mxu0 0.0
        %2719 = vmatmul.mubr.f32.gmra.mrb[0].mxu0 %v2621
        %v2720 = vpop.f32.mrb[0].mxu0
        %v2721 = vadd.f32 %v2604, %v2720
        %v2722 = vpop.f32.mrb[0].mxu0
        %2723 = vmatprep.mubr.f32.mxu0 0.0
        %2724 = vmatmul.mubr.f32.gmra.mrb[0].mxu0 %v2624
        %v2725 = vpop.f32.mrb[0].mxu0
        %v2726 = vadd.f32 %v2604, %v2725
        %v2727 = vpop.f32.mrb[0].mxu0
        %2728 = vmatprep.mubr.f32.mxu0 0.0
        %2729 = vmatmul.mubr.f32.gmra.mrb[0].mxu0 %v2627
        %v2730 = vpop.f32.mrb[0].mxu0
        %v2731 = vadd.f32 %v2604, %v2730
        %v2732 = vpop.f32.mrb[0].mxu0
        %2733 = vdwg.mxu0
        %vm2734 = vcmask 23552
        %2735 = vst.msk [vmem:[%s398] sm:$0xff] %vm2734, %v2696
        %2736 = vst.msk [vmem:[%s398 + $0x8] sm:$0xff] %vm2734, %v2701
        %2737 = vst.msk [vmem:[%s398 + $0x10] sm:$0xff] %vm2734, %v2706
        %2738 = vst.msk [vmem:[%s398 + $0x18] sm:$0xff] %vm2734, %v2711
        %2739 = vst.msk [vmem:[%s398 + $0x20] sm:$0xff] %vm2734, %v2716
        %2740 = vst.msk [vmem:[%s398 + $0x28] sm:$0xff] %vm2734, %v2721
        %2741 = vst.msk [vmem:[%s398 + $0x30] sm:$0xff] %vm2734, %v2726
        %2742 = vst.msk [vmem:[%s398 + $0x38] sm:$0xff] %vm2734, %v2731
        %v2743 = vld [vmem:[%s6] sm:$0xff]
        %v2744 = vld [vmem:[%s6 + $0x8] sm:$0xff]
        %v2745 = vld [vmem:[%s6 + $0x10] sm:$0xff]
        %v2746 = vld [vmem:[%s6 + $0x18] sm:$0xff]
        %2747 = vmatprep.subr.mxu0 0.0
        %2748 = vmatpush1.msra.mxu0 %v2743
        %2749 = vmatprep.subr.mxu0 0.0
        %2750 = vmatpush1.msra.mxu0 %v2744
        %2751 = vmatprep.subr.mxu0 0.0
        %2752 = vmatpush1.msra.mxu0 %v2745
        %2753 = vmatprep.subr.mxu0 0.0
        %2754 = vmatpush1.msra.mxu0 %v2746
        %2755 = vmatprep.subr.mxu0 0.0
        %2756 = vmatpush1.msra.mxu0 0.0
        %2757 = vmatprep.subr.mxu0 0.0
        %2758 = vmatpush1.msra.mxu0 0.0
        %2759 = vmatprep.subr.mxu0 0.0
        %2760 = vmatpush1.msra.mxu0 0.0
        %2761 = vmatprep.subr.mxu0 0.0
        %2762 = vmatpush1.msra.mxu0 0.0
        %2763 = vmatprep.subr.mxu0 0.0
        %2764 = vmatpush1.msra.mxu0 0.0
        %2765 = vmatprep.subr.mxu0 0.0
        %2766 = vmatpush1.msra.mxu0 0.0
        %2767 = vmatprep.subr.mxu0 0.0
        %2768 = vmatpush1.msra.mxu0 0.0
        %2769 = vmatprep.subr.mxu0 0.0
        %2770 = vmatpush1.msra.mxu0 0.0
        %2771 = vmatprep.subr.mxu0 0.0
        %2772 = vmatpush1.msra.mxu0 0.0
        %2773 = vmatprep.subr.mxu0 0.0
        %2774 = vmatpush1.msra.mxu0 0.0
        %2775 = vmatprep.subr.mxu0 0.0
        %2776 = vmatpush1.msra.mxu0 0.0
        %2777 = vmatprep.subr.mxu0 0.0
        %2778 = vmatpush1.msra.mxu0 0.0
        %2779 = vmatprep.subr.mxu0 0.0
        %2780 = vmatpush1.msra.mxu0 0.0
        %2781 = vmatprep.subr.mxu0 0.0
        %2782 = vmatpush1.msra.mxu0 0.0
        %2783 = vmatprep.subr.mxu0 0.0
        %2784 = vmatpush1.msra.mxu0 0.0
        %2785 = vmatprep.subr.mxu0 0.0
        %2786 = vmatpush1.msra.mxu0 0.0
        %2787 = vmatprep.subr.mxu0 0.0
        %2788 = vmatpush1.msra.mxu0 0.0
        %2789 = vmatprep.subr.mxu0 0.0
        %2790 = vmatpush1.msra.mxu0 0.0
        %2791 = vmatprep.subr.mxu0 0.0
        %2792 = vmatpush1.msra.mxu0 0.0
        %2793 = vmatprep.subr.mxu0 0.0
        %2794 = vmatpush1.msra.mxu0 0.0
        %2795 = vmatprep.subr.mxu0 0.0
        %2796 = vmatpush1.msra.mxu0 0.0
        %2797 = vmatprep.subr.mxu0 0.0
        %2798 = vmatpush1.msra.mxu0 0.0
        %2799 = vmatprep.subr.mxu0 0.0
        %2800 = vmatpush1.msra.mxu0 0.0
        %2801 = vmatprep.subr.mxu0 0.0
        %2802 = vmatpush1.msra.mxu0 0.0
        %2803 = vmatprep.subr.mxu0 0.0
        %2804 = vmatpush1.msra.mxu0 0.0
        %2805 = vmatprep.subr.mxu0 0.0
        %2806 = vmatpush1.msra.mxu0 0.0
        %2807 = vmatprep.subr.mxu0 0.0
        %2808 = vmatpush1.msra.mxu0 0.0
        %2809 = vmatprep.subr.mxu0 0.0
        %2810 = vmatpush1.msra.mxu0 0.0
        %2811 = vmatprep.mubr.f32.mxu0 0.0
        %2812 = vmatmul.mubr.f32.gmra.mrb[0].mxu0 %v2606
        %v2813 = vpop.f32.mrb[0].mxu0
        %v2814 = vadd.f32 0.0, %v2813
        %v2815 = vpop.f32.mrb[0].mxu0
        %2816 = vmatprep.mubr.f32.mxu0 0.0
        %2817 = vmatmul.mubr.f32.gmra.mrb[0].mxu0 %v2609
        %v2818 = vpop.f32.mrb[0].mxu0
        %v2819 = vadd.f32 0.0, %v2818
        %v2820 = vpop.f32.mrb[0].mxu0
        %2821 = vmatprep.mubr.f32.mxu0 0.0
        %2822 = vmatmul.mubr.f32.gmra.mrb[0].mxu0 %v2612
        %v2823 = vpop.f32.mrb[0].mxu0
        %v2824 = vadd.f32 0.0, %v2823
        %v2825 = vpop.f32.mrb[0].mxu0
        %2826 = vmatprep.mubr.f32.mxu0 0.0
        %2827 = vmatmul.mubr.f32.gmra.mrb[0].mxu0 %v2615
        %v2828 = vpop.f32.mrb[0].mxu0
        %v2829 = vadd.f32 0.0, %v2828
        %v2830 = vpop.f32.mrb[0].mxu0
        %2831 = vmatprep.mubr.f32.mxu0 0.0
        %2832 = vmatmul.mubr.f32.gmra.mrb[0].mxu0 %v2618
        %v2833 = vpop.f32.mrb[0].mxu0
        %v2834 = vadd.f32 0.0, %v2833
        %v2835 = vpop.f32.mrb[0].mxu0
        %2836 = vmatprep.mubr.f32.mxu0 0.0
        %2837 = vmatmul.mubr.f32.gmra.mrb[0].mxu0 %v2621
        %v2838 = vpop.f32.mrb[0].mxu0
        %v2839 = vadd.f32 0.0, %v2838
        %v2840 = vpop.f32.mrb[0].mxu0
        %2841 = vmatprep.mubr.f32.mxu0 0.0
        %2842 = vmatmul.mubr.f32.gmra.mrb[0].mxu0 %v2624
        %v2843 = vpop.f32.mrb[0].mxu0
        %v2844 = vadd.f32 0.0, %v2843
        %v2845 = vpop.f32.mrb[0].mxu0
        %2846 = vmatprep.mubr.f32.mxu0 0.0
        %2847 = vmatmul.mubr.f32.gmra.mrb[0].mxu0 %v2627
        %v2848 = vpop.f32.mrb[0].mxu0
        %v2849 = vadd.f32 0.0, %v2848
        %v2850 = vpop.f32.mrb[0].mxu0
        %2851 = vdwg.mxu0
        %2854 = vrot.lane.b32.xlu0 %v2814, 96
        %v2855 = vpop.permute.xlu0 %2854
        %2856 = vrot.lane.b32.xlu0 %v2819, 96
        %v2857 = vpop.permute.xlu0 %2856
        %vm2858 = vcmask 130048
        %v2859 = vsel %vm2858, %v2814, 0
        %v2861 = vsel %vm2858, %v2819, 0
        %v2863 = vsel %vm2858, %v2855, 0
        %v2865 = vsel %vm2858, %v2857, 0
        %2867 = vmatprep.subr.mxu0 0.0
        %2868 = vmatpush1.xpose.msra.mxu0 %v2863
        %2869 = vmatprep.subr.mxu0 0.0
        %2870 = vmatpush1.xpose.msra.mxu0 %v2865
        %2871 = vmatprep.subr.mxu0 0.0
        %2872 = vmatpush1.xpose.msra.mxu0 0.0
        %2873 = vmatprep.subr.mxu0 0.0
        %2874 = vmatpush1.xpose.msra.mxu0 0.0
        %2875 = vmatprep.subr.mxu0 0.0
        %2876 = vmatpush1.xpose.msra.mxu0 0.0
        %2877 = vmatprep.subr.mxu0 0.0
        %2878 = vmatpush1.xpose.msra.mxu0 0.0
        %2879 = vmatprep.subr.mxu0 0.0
        %2880 = vmatpush1.xpose.msra.mxu0 0.0
        %2881 = vmatprep.subr.mxu0 0.0
        %2882 = vmatpush1.xpose.msra.mxu0 0.0
        %2883 = vmatprep.subr.mxu0 0.0
        %2884 = vmatpush1.xpose.msra.mxu0 0.0
        %2885 = vmatprep.subr.mxu0 0.0
        %2886 = vmatpush1.xpose.msra.mxu0 0.0
        %2887 = vmatprep.subr.mxu0 0.0
        %2888 = vmatpush1.xpose.msra.mxu0 0.0
        %2889 = vmatprep.subr.mxu0 0.0
        %2890 = vmatpush1.xpose.msra.mxu0 0.0
        %2891 = vmatprep.subr.mxu0 0.0
        %2892 = vmatpush1.xpose.msra.mxu0 0.0
        %2893 = vmatprep.subr.mxu0 0.0
        %2894 = vmatpush1.xpose.msra.mxu0 0.0
        %2895 = vmatprep.subr.mxu0 0.0
        %2896 = vmatpush1.xpose.msra.mxu0 0.0
        %2897 = vmatprep.subr.mxu0 0.0
        %2898 = vmatpush1.xpose.msra.mxu0 0.0
        %2899 = vmatprep.subr.mxu0 0.0
        %2900 = vmatpush1.xpose.msra.mxu0 0.0
        %2901 = vmatprep.subr.mxu0 0.0
        %2902 = vmatpush1.xpose.msra.mxu0 0.0
        %2903 = vmatprep.subr.mxu0 0.0
        %2904 = vmatpush1.xpose.msra.mxu0 0.0
        %2905 = vmatprep.subr.mxu0 0.0
        %2906 = vmatpush1.xpose.msra.mxu0 0.0
        %2907 = vmatprep.subr.mxu0 0.0
        %2908 = vmatpush1.xpose.msra.mxu0 0.0
        %2909 = vmatprep.subr.mxu0 0.0
        %2910 = vmatpush1.xpose.msra.mxu0 0.0
        %2911 = vmatprep.subr.mxu0 0.0
        %2912 = vmatpush1.xpose.msra.mxu0 0.0
        %2913 = vmatprep.subr.mxu0 0.0
        %2914 = vmatpush1.xpose.msra.mxu0 0.0
        %2915 = vmatprep.subr.mxu0 0.0
        %2916 = vmatpush1.xpose.msra.mxu0 0.0
        %2917 = vmatprep.subr.mxu0 0.0
        %2918 = vmatpush1.xpose.msra.mxu0 0.0
        %2919 = vmatprep.subr.mxu0 0.0
        %2920 = vmatpush1.xpose.msra.mxu0 0.0
        %2921 = vmatprep.subr.mxu0 0.0
        %2922 = vmatpush1.xpose.msra.mxu0 0.0
        %2923 = vmatprep.subr.mxu0 0.0
        %2924 = vmatpush1.xpose.msra.mxu0 0.0
        %2925 = vmatprep.subr.mxu0 0.0
        %2926 = vmatpush1.xpose.msra.mxu0 0.0
        %2927 = vmatprep.subr.mxu0 0.0
        %2928 = vmatpush1.xpose.msra.mxu0 0.0
        %2929 = vmatprep.subr.mxu0 0.0
        %2930 = vmatpush1.xpose.msra.mxu0 0.0
        %2931 = vmatprep.mubr.f32.mxu0 0.0
        %2932 = vmatmul.mubr.f32.gmra.mrb[0].mxu0 %v2859
        %v2933 = vpop.f32.mrb[0].mxu0
        %v2934 = vadd.f32 0.0, %v2933
        %v2935 = vpop.f32.mrb[0].mxu0
        %2936 = vmatprep.mubr.f32.mxu0 0.0
        %2937 = vmatmul.mubr.f32.gmra.mrb[0].mxu0 %v2861
        %v2938 = vpop.f32.mrb[0].mxu0
        %v2939 = vadd.f32 0.0, %v2938
        %v2940 = vpop.f32.mrb[0].mxu0
        %2941 = vdwg.mxu0
        %2944 = vrot.lane.b32.xlu0 %v2824, 96
        %v2945 = vpop.permute.xlu0 %2944
        %2946 = vrot.lane.b32.xlu0 %v2829, 96
        %v2947 = vpop.permute.xlu0 %2946
        %v2948 = vsel %vm2858, %v2824, 0
        %v2950 = vsel %vm2858, %v2829, 0
        %v2952 = vsel %vm2858, %v2945, 0
        %v2954 = vsel %vm2858, %v2947, 0
        %2956 = vmatprep.subr.mxu0 0.0
        %2957 = vmatpush1.xpose.msra.mxu0 %v2952
        %2958 = vmatprep.subr.mxu0 0.0
        %2959 = vmatpush1.xpose.msra.mxu0 %v2954
        %2960 = vmatprep.subr.mxu0 0.0
        %2961 = vmatpush1.xpose.msra.mxu0 0.0
        %2962 = vmatprep.subr.mxu0 0.0
        %2963 = vmatpush1.xpose.msra.mxu0 0.0
        %2964 = vmatprep.subr.mxu0 0.0
        %2965 = vmatpush1.xpose.msra.mxu0 0.0
        %2966 = vmatprep.subr.mxu0 0.0
        %2967 = vmatpush1.xpose.msra.mxu0 0.0
        %2968 = vmatprep.subr.mxu0 0.0
        %2969 = vmatpush1.xpose.msra.mxu0 0.0
        %2970 = vmatprep.subr.mxu0 0.0
        %2971 = vmatpush1.xpose.msra.mxu0 0.0
        %2972 = vmatprep.subr.mxu0 0.0
        %2973 = vmatpush1.xpose.msra.mxu0 0.0
        %2974 = vmatprep.subr.mxu0 0.0
        %2975 = vmatpush1.xpose.msra.mxu0 0.0
        %2976 = vmatprep.subr.mxu0 0.0
        %2977 = vmatpush1.xpose.msra.mxu0 0.0
        %2978 = vmatprep.subr.mxu0 0.0
        %2979 = vmatpush1.xpose.msra.mxu0 0.0
        %2980 = vmatprep.subr.mxu0 0.0
        %2981 = vmatpush1.xpose.msra.mxu0 0.0
        %2982 = vmatprep.subr.mxu0 0.0
        %2983 = vmatpush1.xpose.msra.mxu0 0.0
        %2984 = vmatprep.subr.mxu0 0.0
        %2985 = vmatpush1.xpose.msra.mxu0 0.0
        %2986 = vmatprep.subr.mxu0 0.0
        %2987 = vmatpush1.xpose.msra.mxu0 0.0
        %2988 = vmatprep.subr.mxu0 0.0
        %2989 = vmatpush1.xpose.msra.mxu0 0.0
        %2990 = vmatprep.subr.mxu0 0.0
        %2991 = vmatpush1.xpose.msra.mxu0 0.0
        %2992 = vmatprep.subr.mxu0 0.0
        %2993 = vmatpush1.xpose.msra.mxu0 0.0
        %2994 = vmatprep.subr.mxu0 0.0
        %2995 = vmatpush1.xpose.msra.mxu0 0.0
        %2996 = vmatprep.subr.mxu0 0.0
        %2997 = vmatpush1.xpose.msra.mxu0 0.0
        %2998 = vmatprep.subr.mxu0 0.0
        %2999 = vmatpush1.xpose.msra.mxu0 0.0
        %3000 = vmatprep.subr.mxu0 0.0
        %3001 = vmatpush1.xpose.msra.mxu0 0.0
        %3002 = vmatprep.subr.mxu0 0.0
        %3003 = vmatpush1.xpose.msra.mxu0 0.0
        %3004 = vmatprep.subr.mxu0 0.0
        %3005 = vmatpush1.xpose.msra.mxu0 0.0
        %3006 = vmatprep.subr.mxu0 0.0
        %3007 = vmatpush1.xpose.msra.mxu0 0.0
        %3008 = vmatprep.subr.mxu0 0.0
        %3009 = vmatpush1.xpose.msra.mxu0 0.0
        %3010 = vmatprep.subr.mxu0 0.0
        %3011 = vmatpush1.xpose.msra.mxu0 0.0
        %3012 = vmatprep.subr.mxu0 0.0
        %3013 = vmatpush1.xpose.msra.mxu0 0.0
        %3014 = vmatprep.subr.mxu0 0.0
        %3015 = vmatpush1.xpose.msra.mxu0 0.0
        %3016 = vmatprep.subr.mxu0 0.0
        %3017 = vmatpush1.xpose.msra.mxu0 0.0
        %3018 = vmatprep.subr.mxu0 0.0
        %3019 = vmatpush1.xpose.msra.mxu0 0.0
        %3020 = vmatprep.mubr.f32.mxu0 0.0
        %3021 = vmatmul.mubr.f32.gmra.mrb[0].mxu0 %v2948
        %v3022 = vpop.f32.mrb[0].mxu0
        %v3023 = vadd.f32 0.0, %v3022
        %v3024 = vpop.f32.mrb[0].mxu0
        %3025 = vmatprep.mubr.f32.mxu0 0.0
        %3026 = vmatmul.mubr.f32.gmra.mrb[0].mxu0 %v2950
        %v3027 = vpop.f32.mrb[0].mxu0
        %v3028 = vadd.f32 0.0, %v3027
        %v3029 = vpop.f32.mrb[0].mxu0
        %3030 = vdwg.mxu0
        %3033 = vrot.lane.b32.xlu0 %v2834, 96
        %v3034 = vpop.permute.xlu0 %3033
        %3035 = vrot.lane.b32.xlu0 %v2839, 96
        %v3036 = vpop.permute.xlu0 %3035
        %v3037 = vsel %vm2858, %v2834, 0
        %v3039 = vsel %vm2858, %v2839, 0
        %v3041 = vsel %vm2858, %v3034, 0
        %v3043 = vsel %vm2858, %v3036, 0
        %3045 = vmatprep.subr.mxu0 0.0
        %3046 = vmatpush1.xpose.msra.mxu0 %v3041
        %3047 = vmatprep.subr.mxu0 0.0
        %3048 = vmatpush1.xpose.msra.mxu0 %v3043
        %3049 = vmatprep.subr.mxu0 0.0
        %3050 = vmatpush1.xpose.msra.mxu0 0.0
        %3051 = vmatprep.subr.mxu0 0.0
        %3052 = vmatpush1.xpose.msra.mxu0 0.0
        %3053 = vmatprep.subr.mxu0 0.0
        %3054 = vmatpush1.xpose.msra.mxu0 0.0
        %3055 = vmatprep.subr.mxu0 0.0
        %3056 = vmatpush1.xpose.msra.mxu0 0.0
        %3057 = vmatprep.subr.mxu0 0.0
        %3058 = vmatpush1.xpose.msra.mxu0 0.0
        %3059 = vmatprep.subr.mxu0 0.0
        %3060 = vmatpush1.xpose.msra.mxu0 0.0
        %3061 = vmatprep.subr.mxu0 0.0
        %3062 = vmatpush1.xpose.msra.mxu0 0.0
        %3063 = vmatprep.subr.mxu0 0.0
        %3064 = vmatpush1.xpose.msra.mxu0 0.0
        %3065 = vmatprep.subr.mxu0 0.0
        %3066 = vmatpush1.xpose.msra.mxu0 0.0
        %3067 = vmatprep.subr.mxu0 0.0
        %3068 = vmatpush1.xpose.msra.mxu0 0.0
        %3069 = vmatprep.subr.mxu0 0.0
        %3070 = vmatpush1.xpose.msra.mxu0 0.0
        %3071 = vmatprep.subr.mxu0 0.0
        %3072 = vmatpush1.xpose.msra.mxu0 0.0
        %3073 = vmatprep.subr.mxu0 0.0
        %3074 = vmatpush1.xpose.msra.mxu0 0.0
        %3075 = vmatprep.subr.mxu0 0.0
        %3076 = vmatpush1.xpose.msra.mxu0 0.0
        %3077 = vmatprep.subr.mxu0 0.0
        %3078 = vmatpush1.xpose.msra.mxu0 0.0
        %3079 = vmatprep.subr.mxu0 0.0
        %3080 = vmatpush1.xpose.msra.mxu0 0.0
        %3081 = vmatprep.subr.mxu0 0.0
        %3082 = vmatpush1.xpose.msra.mxu0 0.0
        %3083 = vmatprep.subr.mxu0 0.0
        %3084 = vmatpush1.xpose.msra.mxu0 0.0
        %3085 = vmatprep.subr.mxu0 0.0
        %3086 = vmatpush1.xpose.msra.mxu0 0.0
        %3087 = vmatprep.subr.mxu0 0.0
        %3088 = vmatpush1.xpose.msra.mxu0 0.0
        %3089 = vmatprep.subr.mxu0 0.0
        %3090 = vmatpush1.xpose.msra.mxu0 0.0
        %3091 = vmatprep.subr.mxu0 0.0
        %3092 = vmatpush1.xpose.msra.mxu0 0.0
        %3093 = vmatprep.subr.mxu0 0.0
        %3094 = vmatpush1.xpose.msra.mxu0 0.0
        %3095 = vmatprep.subr.mxu0 0.0
        %3096 = vmatpush1.xpose.msra.mxu0 0.0
        %3097 = vmatprep.subr.mxu0 0.0
        %3098 = vmatpush1.xpose.msra.mxu0 0.0
        %3099 = vmatprep.subr.mxu0 0.0
        %3100 = vmatpush1.xpose.msra.mxu0 0.0
        %3101 = vmatprep.subr.mxu0 0.0
        %3102 = vmatpush1.xpose.msra.mxu0 0.0
        %3103 = vmatprep.subr.mxu0 0.0
        %3104 = vmatpush1.xpose.msra.mxu0 0.0
        %3105 = vmatprep.subr.mxu0 0.0
        %3106 = vmatpush1.xpose.msra.mxu0 0.0
        %3107 = vmatprep.subr.mxu0 0.0
        %3108 = vmatpush1.xpose.msra.mxu0 0.0
        %3109 = vmatprep.mubr.f32.mxu0 0.0
        %3110 = vmatmul.mubr.f32.gmra.mrb[0].mxu0 %v3037
        %v3111 = vpop.f32.mrb[0].mxu0
        %v3112 = vadd.f32 0.0, %v3111
        %v3113 = vpop.f32.mrb[0].mxu0
        %3114 = vmatprep.mubr.f32.mxu0 0.0
        %3115 = vmatmul.mubr.f32.gmra.mrb[0].mxu0 %v3039
        %v3116 = vpop.f32.mrb[0].mxu0
        %v3117 = vadd.f32 0.0, %v3116
        %v3118 = vpop.f32.mrb[0].mxu0
        %3119 = vdwg.mxu0
        %3122 = vrot.lane.b32.xlu0 %v2844, 96
        %v3123 = vpop.permute.xlu0 %3122
        %3124 = vrot.lane.b32.xlu0 %v2849, 96
        %v3125 = vpop.permute.xlu0 %3124
        %v3126 = vsel %vm2858, %v2844, 0
        %v3128 = vsel %vm2858, %v2849, 0
        %v3130 = vsel %vm2858, %v3123, 0
        %v3132 = vsel %vm2858, %v3125, 0
        %3134 = vmatprep.subr.mxu0 0.0
        %3135 = vmatpush1.xpose.msra.mxu0 %v3130
        %3136 = vmatprep.subr.mxu0 0.0
        %3137 = vmatpush1.xpose.msra.mxu0 %v3132
        %3138 = vmatprep.subr.mxu0 0.0
        %3139 = vmatpush1.xpose.msra.mxu0 0.0
        %3140 = vmatprep.subr.mxu0 0.0
        %3141 = vmatpush1.xpose.msra.mxu0 0.0
        %3142 = vmatprep.subr.mxu0 0.0
        %3143 = vmatpush1.xpose.msra.mxu0 0.0
        %3144 = vmatprep.subr.mxu0 0.0
        %3145 = vmatpush1.xpose.msra.mxu0 0.0
        %3146 = vmatprep.subr.mxu0 0.0
        %3147 = vmatpush1.xpose.msra.mxu0 0.0
        %3148 = vmatprep.subr.mxu0 0.0
        %3149 = vmatpush1.xpose.msra.mxu0 0.0
        %3150 = vmatprep.subr.mxu0 0.0
        %3151 = vmatpush1.xpose.msra.mxu0 0.0
        %3152 = vmatprep.subr.mxu0 0.0
        %3153 = vmatpush1.xpose.msra.mxu0 0.0
        %3154 = vmatprep.subr.mxu0 0.0
        %3155 = vmatpush1.xpose.msra.mxu0 0.0
        %3156 = vmatprep.subr.mxu0 0.0
        %3157 = vmatpush1.xpose.msra.mxu0 0.0
        %3158 = vmatprep.subr.mxu0 0.0
        %3159 = vmatpush1.xpose.msra.mxu0 0.0
        %3160 = vmatprep.subr.mxu0 0.0
        %3161 = vmatpush1.xpose.msra.mxu0 0.0
        %3162 = vmatprep.subr.mxu0 0.0
        %3163 = vmatpush1.xpose.msra.mxu0 0.0
        %3164 = vmatprep.subr.mxu0 0.0
        %3165 = vmatpush1.xpose.msra.mxu0 0.0
        %3166 = vmatprep.subr.mxu0 0.0
        %3167 = vmatpush1.xpose.msra.mxu0 0.0
        %3168 = vmatprep.subr.mxu0 0.0
        %3169 = vmatpush1.xpose.msra.mxu0 0.0
        %3170 = vmatprep.subr.mxu0 0.0
        %3171 = vmatpush1.xpose.msra.mxu0 0.0
        %3172 = vmatprep.subr.mxu0 0.0
        %3173 = vmatpush1.xpose.msra.mxu0 0.0
        %3174 = vmatprep.subr.mxu0 0.0
        %3175 = vmatpush1.xpose.msra.mxu0 0.0
        %3176 = vmatprep.subr.mxu0 0.0
        %3177 = vmatpush1.xpose.msra.mxu0 0.0
        %3178 = vmatprep.subr.mxu0 0.0
        %3179 = vmatpush1.xpose.msra.mxu0 0.0
        %3180 = vmatprep.subr.mxu0 0.0
        %3181 = vmatpush1.xpose.msra.mxu0 0.0
        %3182 = vmatprep.subr.mxu0 0.0
        %3183 = vmatpush1.xpose.msra.mxu0 0.0
        %3184 = vmatprep.subr.mxu0 0.0
        %3185 = vmatpush1.xpose.msra.mxu0 0.0
        %3186 = vmatprep.subr.mxu0 0.0
        %3187 = vmatpush1.xpose.msra.mxu0 0.0
        %3188 = vmatprep.subr.mxu0 0.0
        %3189 = vmatpush1.xpose.msra.mxu0 0.0
        %3190 = vmatprep.subr.mxu0 0.0
        %3191 = vmatpush1.xpose.msra.mxu0 0.0
        %3192 = vmatprep.subr.mxu0 0.0
        %3193 = vmatpush1.xpose.msra.mxu0 0.0
        %3194 = vmatprep.subr.mxu0 0.0
        %3195 = vmatpush1.xpose.msra.mxu0 0.0
        %3196 = vmatprep.subr.mxu0 0.0
        %3197 = vmatpush1.xpose.msra.mxu0 0.0
        %3198 = vmatprep.mubr.f32.mxu0 0.0
        %3199 = vmatmul.mubr.f32.gmra.mrb[0].mxu0 %v3126
        %v3200 = vpop.f32.mrb[0].mxu0
        %v3201 = vadd.f32 0.0, %v3200
        %v3202 = vpop.f32.mrb[0].mxu0
        %3203 = vmatprep.mubr.f32.mxu0 0.0
        %3204 = vmatmul.mubr.f32.gmra.mrb[0].mxu0 %v3128
        %v3205 = vpop.f32.mrb[0].mxu0
        %v3206 = vadd.f32 0.0, %v3205
        %v3207 = vpop.f32.mrb[0].mxu0
        %3208 = vdwg.mxu0
        %v3209 = vmul.f32 %v2934, 0.25
        %v3210 = vmul.f32 %v2939, 0.25
        %v3211 = vmul.f32 %v3023, 0.25
        %v3212 = vmul.f32 %v3028, 0.25
        %v3213 = vmul.f32 %v3112, 0.25
        %v3214 = vmul.f32 %v3117, 0.25
        %v3215 = vmul.f32 %v3201, 0.25
        %v3216 = vmul.f32 %v3206, 0.25
        %v3217 = vsel %vm2858, %v3209, -inf
        %3218 = vmax.xlane.f32.xlu0 %v3217
        %v3219 = vpop.xlane.xlu0 %3218
        %v3220 = vsel %vm2858, %v3210, -inf
        %3221 = vmax.xlane.f32.xlu0 %v3220
        %v3222 = vpop.xlane.xlu0 %3221
        %v3223 = vsel %vm2858, %v3211, -inf
        %3224 = vmax.xlane.f32.xlu0 %v3223
        %v3225 = vpop.xlane.xlu0 %3224
        %v3226 = vsel %vm2858, %v3212, -inf
        %3227 = vmax.xlane.f32.xlu0 %v3226
        %v3228 = vpop.xlane.xlu0 %3227
        %v3229 = vsel %vm2858, %v3213, -inf
        %3230 = vmax.xlane.f32.xlu0 %v3229
        %v3231 = vpop.xlane.xlu0 %3230
        %v3232 = vsel %vm2858, %v3214, -inf
        %3233 = vmax.xlane.f32.xlu0 %v3232
        %v3234 = vpop.xlane.xlu0 %3233
        %v3235 = vsel %vm2858, %v3215, -inf
        %3236 = vmax.xlane.f32.xlu0 %v3235
        %v3237 = vpop.xlane.xlu0 %3236
        %v3238 = vsel %vm2858, %v3216, -inf
        %3239 = vmax.xlane.f32.xlu0 %v3238
        %v3240 = vpop.xlane.xlu0 %3239
        %v3241 = vsub.f32 %v3209, %v3219
        %v3242 = vsub.f32 %v3210, %v3222
        %v3243 = vsub.f32 %v3211, %v3225
        %v3244 = vsub.f32 %v3212, %v3228
        %v3245 = vsub.f32 %v3213, %v3231
        %v3246 = vsub.f32 %v3214, %v3234
        %v3247 = vsub.f32 %v3215, %v3237
        %v3248 = vsub.f32 %v3216, %v3240
        %v3249 = vmul.f32 %v3241, 1.442695
        %v3250 = vpow.pop %v3249
        %v3251 = vmul.f32 %v3242, 1.442695
        %v3252 = vpow.pop %v3251
        %v3253 = vmul.f32 %v3243, 1.442695
        %v3254 = vpow.pop %v3253
        %v3255 = vmul.f32 %v3244, 1.442695
        %v3256 = vpow.pop %v3255
        %v3257 = vmul.f32 %v3245, 1.442695
        %v3258 = vpow.pop %v3257
        %v3259 = vmul.f32 %v3246, 1.442695
        %v3260 = vpow.pop %v3259
        %v3261 = vmul.f32 %v3247, 1.442695
        %v3262 = vpow.pop %v3261
        %v3263 = vmul.f32 %v3248, 1.442695
        %v3264 = vpow.pop %v3263
        %v3265 = vsel %vm2858, %v3250, 0.0
        %3266 = vadd.xlane.f32.xlu0 %v3265
        %v3267 = vpop.xlane.xlu0 %3266
        %v3268 = vsel %vm2858, %v3252, 0.0
        %3269 = vadd.xlane.f32.xlu0 %v3268
        %v3270 = vpop.xlane.xlu0 %3269
        %v3271 = vsel %vm2858, %v3254, 0.0
        %3272 = vadd.xlane.f32.xlu0 %v3271
        %v3273 = vpop.xlane.xlu0 %3272
        %v3274 = vsel %vm2858, %v3256, 0.0
        %3275 = vadd.xlane.f32.xlu0 %v3274
        %v3276 = vpop.xlane.xlu0 %3275
        %v3277 = vsel %vm2858, %v3258, 0.0
        %3278 = vadd.xlane.f32.xlu0 %v3277
        %v3279 = vpop.xlane.xlu0 %3278
        %v3280 = vsel %vm2858, %v3260, 0.0
        %3281 = vadd.xlane.f32.xlu0 %v3280
        %v3282 = vpop.xlane.xlu0 %3281
        %v3283 = vsel %vm2858, %v3262, 0.0
        %3284 = vadd.xlane.f32.xlu0 %v3283
        %v3285 = vpop.xlane.xlu0 %3284
        %v3286 = vsel %vm2858, %v3264, 0.0
        %3287 = vadd.xlane.f32.xlu0 %v3286
        %v3288 = vpop.xlane.xlu0 %3287
        %v3289 = vrcp.pop %v3267
        %v3290 = vmul.f32 %v3250, %v3289
        %v3291 = vrcp.pop %v3270
        %v3292 = vmul.f32 %v3252, %v3291
        %v3293 = vrcp.pop %v3273
        %v3294 = vmul.f32 %v3254, %v3293
        %v3295 = vrcp.pop %v3276
        %v3296 = vmul.f32 %v3256, %v3295
        %v3297 = vrcp.pop %v3279
        %v3298 = vmul.f32 %v3258, %v3297
        %v3299 = vrcp.pop %v3282
        %v3300 = vmul.f32 %v3260, %v3299
        %v3301 = vrcp.pop %v3285
        %v3302 = vmul.f32 %v3262, %v3301
        %v3303 = vrcp.pop %v3288
        %v3304 = vmul.f32 %v3264, %v3303
        %3305 = vrot.lane.b32.xlu0 %v2814, 64
        %v3306 = vpop.permute.xlu0 %3305
        %3307 = vrot.lane.b32.xlu0 %v2819, 64
        %v3308 = vpop.permute.xlu0 %3307
        %v3312 = vsel %vm2858, %v3290, 0
        %v3315 = vsel %vm2858, %v3292, 0
        %3317 = vmatprep.subr.mxu0 0.0
        %3318 = vmatpush1.msra.mxu0 %v3306
        %3319 = vmatprep.subr.mxu0 0.0
        %3320 = vmatpush1.msra.mxu0 %v3308
        %3321 = vmatprep.subr.mxu0 0.0
        %3322 = vmatpush1.msra.mxu0 0.0
        %3323 = vmatprep.subr.mxu0 0.0
        %3324 = vmatpush1.msra.mxu0 0.0
        %3325 = vmatprep.subr.mxu0 0.0
        %3326 = vmatpush1.msra.mxu0 0.0
        %3327 = vmatprep.subr.mxu0 0.0
        %3328 = vmatpush1.msra.mxu0 0.0
        %3329 = vmatprep.subr.mxu0 0.0
        %3330 = vmatpush1.msra.mxu0 0.0
        %3331 = vmatprep.subr.mxu0 0.0
        %3332 = vmatpush1.msra.mxu0 0.0
        %3333 = vmatprep.subr.mxu0 0.0
        %3334 = vmatpush1.msra.mxu0 0.0
        %3335 = vmatprep.subr.mxu0 0.0
        %3336 = vmatpush1.msra.mxu0 0.0
        %3337 = vmatprep.subr.mxu0 0.0
        %3338 = vmatpush1.msra.mxu0 0.0
        %3339 = vmatprep.subr.mxu0 0.0
        %3340 = vmatpush1.msra.mxu0 0.0
        %3341 = vmatprep.subr.mxu0 0.0
        %3342 = vmatpush1.msra.mxu0 0.0
        %3343 = vmatprep.subr.mxu0 0.0
        %3344 = vmatpush1.msra.mxu0 0.0
        %3345 = vmatprep.subr.mxu0 0.0
        %3346 = vmatpush1.msra.mxu0 0.0
        %3347 = vmatprep.subr.mxu0 0.0
        %3348 = vmatpush1.msra.mxu0 0.0
        %3349 = vmatprep.subr.mxu0 0.0
        %3350 = vmatpush1.msra.mxu0 0.0
        %3351 = vmatprep.subr.mxu0 0.0
        %3352 = vmatpush1.msra.mxu0 0.0
        %3353 = vmatprep.subr.mxu0 0.0
        %3354 = vmatpush1.msra.mxu0 0.0
        %3355 = vmatprep.subr.mxu0 0.0
        %3356 = vmatpush1.msra.mxu0 0.0
        %3357 = vmatprep.subr.mxu0 0.0
        %3358 = vmatpush1.msra.mxu0 0.0
        %3359 = vmatprep.subr.mxu0 0.0
        %3360 = vmatpush1.msra.mxu0 0.0
        %3361 = vmatprep.subr.mxu0 0.0
        %3362 = vmatpush1.msra.mxu0 0.0
        %3363 = vmatprep.subr.mxu0 0.0
        %3364 = vmatpush1.msra.mxu0 0.0
        %3365 = vmatprep.subr.mxu0 0.0
        %3366 = vmatpush1.msra.mxu0 0.0
        %3367 = vmatprep.subr.mxu0 0.0
        %3368 = vmatpush1.msra.mxu0 0.0
        %3369 = vmatprep.subr.mxu0 0.0
        %3370 = vmatpush1.msra.mxu0 0.0
        %3371 = vmatprep.subr.mxu0 0.0
        %3372 = vmatpush1.msra.mxu0 0.0
        %3373 = vmatprep.subr.mxu0 0.0
        %3374 = vmatpush1.msra.mxu0 0.0
        %3375 = vmatprep.subr.mxu0 0.0
        %3376 = vmatpush1.msra.mxu0 0.0
        %3377 = vmatprep.subr.mxu0 0.0
        %3378 = vmatpush1.msra.mxu0 0.0
        %3379 = vmatprep.subr.mxu0 0.0
        %3380 = vmatpush1.msra.mxu0 0.0
        %3381 = vmatprep.mubr.f32.mxu0 0.0
        %3382 = vmatmul.mubr.f32.gmra.mrb[0].mxu0 %v3312
        %v3383 = vpop.f32.mrb[0].mxu0
        %v3384 = vadd.f32 0.0, %v3383
        %v3385 = vpop.f32.mrb[0].mxu0
        %3386 = vmatprep.mubr.f32.mxu0 0.0
        %3387 = vmatmul.mubr.f32.gmra.mrb[0].mxu0 %v3315
        %v3388 = vpop.f32.mrb[0].mxu0
        %v3389 = vadd.f32 0.0, %v3388
        %v3390 = vpop.f32.mrb[0].mxu0
        %3391 = vdwg.mxu0
        %3392 = vrot.lane.b32.xlu0 %v2824, 64
        %v3393 = vpop.permute.xlu0 %3392
        %3394 = vrot.lane.b32.xlu0 %v2829, 64
        %v3395 = vpop.permute.xlu0 %3394
        %v3399 = vsel %vm2858, %v3294, 0
        %v3402 = vsel %vm2858, %v3296, 0
        %3404 = vmatprep.subr.mxu0 0.0
        %3405 = vmatpush1.msra.mxu0 %v3393
        %3406 = vmatprep.subr.mxu0 0.0
        %3407 = vmatpush1.msra.mxu0 %v3395
        %3408 = vmatprep.subr.mxu0 0.0
        %3409 = vmatpush1.msra.mxu0 0.0
        %3410 = vmatprep.subr.mxu0 0.0
        %3411 = vmatpush1.msra.mxu0 0.0
        %3412 = vmatprep.subr.mxu0 0.0
        %3413 = vmatpush1.msra.mxu0 0.0
        %3414 = vmatprep.subr.mxu0 0.0
        %3415 = vmatpush1.msra.mxu0 0.0
        %3416 = vmatprep.subr.mxu0 0.0
        %3417 = vmatpush1.msra.mxu0 0.0
        %3418 = vmatprep.subr.mxu0 0.0
        %3419 = vmatpush1.msra.mxu0 0.0
        %3420 = vmatprep.subr.mxu0 0.0
        %3421 = vmatpush1.msra.mxu0 0.0
        %3422 = vmatprep.subr.mxu0 0.0
        %3423 = vmatpush1.msra.mxu0 0.0
        %3424 = vmatprep.subr.mxu0 0.0
        %3425 = vmatpush1.msra.mxu0 0.0
        %3426 = vmatprep.subr.mxu0 0.0
        %3427 = vmatpush1.msra.mxu0 0.0
        %3428 = vmatprep.subr.mxu0 0.0
        %3429 = vmatpush1.msra.mxu0 0.0
        %3430 = vmatprep.subr.mxu0 0.0
        %3431 = vmatpush1.msra.mxu0 0.0
        %3432 = vmatprep.subr.mxu0 0.0
        %3433 = vmatpush1.msra.mxu0 0.0
        %3434 = vmatprep.subr.mxu0 0.0
        %3435 = vmatpush1.msra.mxu0 0.0
        %3436 = vmatprep.subr.mxu0 0.0
        %3437 = vmatpush1.msra.mxu0 0.0
        %3438 = vmatprep.subr.mxu0 0.0
        %3439 = vmatpush1.msra.mxu0 0.0
        %3440 = vmatprep.subr.mxu0 0.0
        %3441 = vmatpush1.msra.mxu0 0.0
        %3442 = vmatprep.subr.mxu0 0.0
        %3443 = vmatpush1.msra.mxu0 0.0
        %3444 = vmatprep.subr.mxu0 0.0
        %3445 = vmatpush1.msra.mxu0 0.0
        %3446 = vmatprep.subr.mxu0 0.0
        %3447 = vmatpush1.msra.mxu0 0.0
        %3448 = vmatprep.subr.mxu0 0.0
        %3449 = vmatpush1.msra.mxu0 0.0
        %3450 = vmatprep.subr.mxu0 0.0
        %3451 = vmatpush1.msra.mxu0 0.0
        %3452 = vmatprep.subr.mxu0 0.0
        %3453 = vmatpush1.msra.mxu0 0.0
        %3454 = vmatprep.subr.mxu0 0.0
        %3455 = vmatpush1.msra.mxu0 0.0
        %3456 = vmatprep.subr.mxu0 0.0
        %3457 = vmatpush1.msra.mxu0 0.0
        %3458 = vmatprep.subr.mxu0 0.0
        %3459 = vmatpush1.msra.mxu0 0.0
        %3460 = vmatprep.subr.mxu0 0.0
        %3461 = vmatpush1.msra.mxu0 0.0
        %3462 = vmatprep.subr.mxu0 0.0
        %3463 = vmatpush1.msra.mxu0 0.0
        %3464 = vmatprep.subr.mxu0 0.0
        %3465 = vmatpush1.msra.mxu0 0.0
        %3466 = vmatprep.subr.mxu0 0.0
        %3467 = vmatpush1.msra.mxu0 0.0
        %3468 = vmatprep.mubr.f32.mxu0 0.0
        %3469 = vmatmul.mubr.f32.gmra.mrb[0].mxu0 %v3399
        %v3470 = vpop.f32.mrb[0].mxu0
        %v3471 = vadd.f32 0.0, %v3470
        %v3472 = vpop.f32.mrb[0].mxu0
        %3473 = vmatprep.mubr.f32.mxu0 0.0
        %3474 = vmatmul.mubr.f32.gmra.mrb[0].mxu0 %v3402
        %v3475 = vpop.f32.mrb[0].mxu0
        %v3476 = vadd.f32 0.0, %v3475
        %v3477 = vpop.f32.mrb[0].mxu0
        %3478 = vdwg.mxu0
        %3479 = vrot.lane.b32.xlu0 %v2834, 64
        %v3480 = vpop.permute.xlu0 %3479
        %3481 = vrot.lane.b32.xlu0 %v2839, 64
        %v3482 = vpop.permute.xlu0 %3481
        %v3486 = vsel %vm2858, %v3298, 0
        %v3489 = vsel %vm2858, %v3300, 0
        %3491 = vmatprep.subr.mxu0 0.0
        %3492 = vmatpush1.msra.mxu0 %v3480
        %3493 = vmatprep.subr.mxu0 0.0
        %3494 = vmatpush1.msra.mxu0 %v3482
        %3495 = vmatprep.subr.mxu0 0.0
        %3496 = vmatpush1.msra.mxu0 0.0
        %3497 = vmatprep.subr.mxu0 0.0
        %3498 = vmatpush1.msra.mxu0 0.0
        %3499 = vmatprep.subr.mxu0 0.0
        %3500 = vmatpush1.msra.mxu0 0.0
        %3501 = vmatprep.subr.mxu0 0.0
        %3502 = vmatpush1.msra.mxu0 0.0
        %3503 = vmatprep.subr.mxu0 0.0
        %3504 = vmatpush1.msra.mxu0 0.0
        %3505 = vmatprep.subr.mxu0 0.0
        %3506 = vmatpush1.msra.mxu0 0.0
        %3507 = vmatprep.subr.mxu0 0.0
        %3508 = vmatpush1.msra.mxu0 0.0
        %3509 = vmatprep.subr.mxu0 0.0
        %3510 = vmatpush1.msra.mxu0 0.0
        %3511 = vmatprep.subr.mxu0 0.0
        %3512 = vmatpush1.msra.mxu0 0.0
        %3513 = vmatprep.subr.mxu0 0.0
        %3514 = vmatpush1.msra.mxu0 0.0
        %3515 = vmatprep.subr.mxu0 0.0
        %3516 = vmatpush1.msra.mxu0 0.0
        %3517 = vmatprep.subr.mxu0 0.0
        %3518 = vmatpush1.msra.mxu0 0.0
        %3519 = vmatprep.subr.mxu0 0.0
        %3520 = vmatpush1.msra.mxu0 0.0
        %3521 = vmatprep.subr.mxu0 0.0
        %3522 = vmatpush1.msra.mxu0 0.0
        %3523 = vmatprep.subr.mxu0 0.0
        %3524 = vmatpush1.msra.mxu0 0.0
        %3525 = vmatprep.subr.mxu0 0.0
        %3526 = vmatpush1.msra.mxu0 0.0
        %3527 = vmatprep.subr.mxu0 0.0
        %3528 = vmatpush1.msra.mxu0 0.0
        %3529 = vmatprep.subr.mxu0 0.0
        %3530 = vmatpush1.msra.mxu0 0.0
        %3531 = vmatprep.subr.mxu0 0.0
        %3532 = vmatpush1.msra.mxu0 0.0
        %3533 = vmatprep.subr.mxu0 0.0
        %3534 = vmatpush1.msra.mxu0 0.0
        %3535 = vmatprep.subr.mxu0 0.0
        %3536 = vmatpush1.msra.mxu0 0.0
        %3537 = vmatprep.subr.mxu0 0.0
        %3538 = vmatpush1.msra.mxu0 0.0
        %3539 = vmatprep.subr.mxu0 0.0
        %3540 = vmatpush1.msra.mxu0 0.0
        %3541 = vmatprep.subr.mxu0 0.0
        %3542 = vmatpush1.msra.mxu0 0.0
        %3543 = vmatprep.subr.mxu0 0.0
        %3544 = vmatpush1.msra.mxu0 0.0
        %3545 = vmatprep.subr.mxu0 0.0
        %3546 = vmatpush1.msra.mxu0 0.0
        %3547 = vmatprep.subr.mxu0 0.0
        %3548 = vmatpush1.msra.mxu0 0.0
        %3549 = vmatprep.subr.mxu0 0.0
        %3550 = vmatpush1.msra.mxu0 0.0
        %3551 = vmatprep.subr.mxu0 0.0
        %3552 = vmatpush1.msra.mxu0 0.0
        %3553 = vmatprep.subr.mxu0 0.0
        %3554 = vmatpush1.msra.mxu0 0.0
        %3555 = vmatprep.mubr.f32.mxu0 0.0
        %3556 = vmatmul.mubr.f32.gmra.mrb[0].mxu0 %v3486
        %v3557 = vpop.f32.mrb[0].mxu0
        %v3558 = vadd.f32 0.0, %v3557
        %v3559 = vpop.f32.mrb[0].mxu0
        %3560 = vmatprep.mubr.f32.mxu0 0.0
        %3561 = vmatmul.mubr.f32.gmra.mrb[0].mxu0 %v3489
        %v3562 = vpop.f32.mrb[0].mxu0
        %v3563 = vadd.f32 0.0, %v3562
        %v3564 = vpop.f32.mrb[0].mxu0
        %3565 = vdwg.mxu0
        %3566 = vrot.lane.b32.xlu0 %v2844, 64
        %v3567 = vpop.permute.xlu0 %3566
        %3568 = vrot.lane.b32.xlu0 %v2849, 64
        %v3569 = vpop.permute.xlu0 %3568
        %v3573 = vsel %vm2858, %v3302, 0
        %v3576 = vsel %vm2858, %v3304, 0
        %3578 = vmatprep.subr.mxu0 0.0
        %3579 = vmatpush1.msra.mxu0 %v3567
        %3580 = vmatprep.subr.mxu0 0.0
        %3581 = vmatpush1.msra.mxu0 %v3569
        %3582 = vmatprep.subr.mxu0 0.0
        %3583 = vmatpush1.msra.mxu0 0.0
        %3584 = vmatprep.subr.mxu0 0.0
        %3585 = vmatpush1.msra.mxu0 0.0
        %3586 = vmatprep.subr.mxu0 0.0
        %3587 = vmatpush1.msra.mxu0 0.0
        %3588 = vmatprep.subr.mxu0 0.0
        %3589 = vmatpush1.msra.mxu0 0.0
        %3590 = vmatprep.subr.mxu0 0.0
        %3591 = vmatpush1.msra.mxu0 0.0
        %3592 = vmatprep.subr.mxu0 0.0
        %3593 = vmatpush1.msra.mxu0 0.0
        %3594 = vmatprep.subr.mxu0 0.0
        %3595 = vmatpush1.msra.mxu0 0.0
        %3596 = vmatprep.subr.mxu0 0.0
        %3597 = vmatpush1.msra.mxu0 0.0
        %3598 = vmatprep.subr.mxu0 0.0
        %3599 = vmatpush1.msra.mxu0 0.0
        %3600 = vmatprep.subr.mxu0 0.0
        %3601 = vmatpush1.msra.mxu0 0.0
        %3602 = vmatprep.subr.mxu0 0.0
        %3603 = vmatpush1.msra.mxu0 0.0
        %3604 = vmatprep.subr.mxu0 0.0
        %3605 = vmatpush1.msra.mxu0 0.0
        %3606 = vmatprep.subr.mxu0 0.0
        %3607 = vmatpush1.msra.mxu0 0.0
        %3608 = vmatprep.subr.mxu0 0.0
        %3609 = vmatpush1.msra.mxu0 0.0
        %3610 = vmatprep.subr.mxu0 0.0
        %3611 = vmatpush1.msra.mxu0 0.0
        %3612 = vmatprep.subr.mxu0 0.0
        %3613 = vmatpush1.msra.mxu0 0.0
        %3614 = vmatprep.subr.mxu0 0.0
        %3615 = vmatpush1.msra.mxu0 0.0
        %3616 = vmatprep.subr.mxu0 0.0
        %3617 = vmatpush1.msra.mxu0 0.0
        %3618 = vmatprep.subr.mxu0 0.0
        %3619 = vmatpush1.msra.mxu0 0.0
        %3620 = vmatprep.subr.mxu0 0.0
        %3621 = vmatpush1.msra.mxu0 0.0
        %3622 = vmatprep.subr.mxu0 0.0
        %3623 = vmatpush1.msra.mxu0 0.0
        %3624 = vmatprep.subr.mxu0 0.0
        %3625 = vmatpush1.msra.mxu0 0.0
        %3626 = vmatprep.subr.mxu0 0.0
        %3627 = vmatpush1.msra.mxu0 0.0
        %3628 = vmatprep.subr.mxu0 0.0
        %3629 = vmatpush1.msra.mxu0 0.0
        %3630 = vmatprep.subr.mxu0 0.0
        %3631 = vmatpush1.msra.mxu0 0.0
        %3632 = vmatprep.subr.mxu0 0.0
        %3633 = vmatpush1.msra.mxu0 0.0
        %3634 = vmatprep.subr.mxu0 0.0
        %3635 = vmatpush1.msra.mxu0 0.0
        %3636 = vmatprep.subr.mxu0 0.0
        %3637 = vmatpush1.msra.mxu0 0.0
        %3638 = vmatprep.subr.mxu0 0.0
        %3639 = vmatpush1.msra.mxu0 0.0
        %3640 = vmatprep.subr.mxu0 0.0
        %3641 = vmatpush1.msra.mxu0 0.0
        %3642 = vmatprep.mubr.f32.mxu0 0.0
        %3643 = vmatmul.mubr.f32.gmra.mrb[0].mxu0 %v3573
        %v3644 = vpop.f32.mrb[0].mxu0
        %v3645 = vadd.f32 0.0, %v3644
        %v3646 = vpop.f32.mrb[0].mxu0
        %3647 = vmatprep.mubr.f32.mxu0 0.0
        %3648 = vmatmul.mubr.f32.gmra.mrb[0].mxu0 %v3576
        %v3649 = vpop.f32.mrb[0].mxu0
        %v3650 = vadd.f32 0.0, %v3649
        %v3651 = vpop.f32.mrb[0].mxu0
        %3652 = vdwg.mxu0
        %3653 = vrot.lane.b32.xlu0 %v2814, 112
        %v3654 = vpop.permute.xlu0 %3653
        %3655 = vrot.lane.b32.xlu0 %v2819, 112
        %v3656 = vpop.permute.xlu0 %3655
        %3657 = vrot.lane.b32.xlu0 %v2814, 80
        %v3658 = vpop.permute.xlu0 %3657
        %3659 = vrot.lane.b32.xlu0 %v2819, 80
        %v3660 = vpop.permute.xlu0 %3659
        %v3661 = vsel %vm2858, %v3654, 0
        %v3663 = vsel %vm2858, %v3656, 0
        %v3665 = vsel %vm2858, %v3658, 0
        %v3667 = vsel %vm2858, %v3660, 0
        %3669 = vmatprep.subr.mxu0 0.0
        %3670 = vmatpush1.xpose.msra.mxu0 %v3665
        %3671 = vmatprep.subr.mxu0 0.0
        %3672 = vmatpush1.xpose.msra.mxu0 %v3667
        %3673 = vmatprep.subr.mxu0 0.0
        %3674 = vmatpush1.xpose.msra.mxu0 0.0
        %3675 = vmatprep.subr.mxu0 0.0
        %3676 = vmatpush1.xpose.msra.mxu0 0.0
        %3677 = vmatprep.subr.mxu0 0.0
        %3678 = vmatpush1.xpose.msra.mxu0 0.0
        %3679 = vmatprep.subr.mxu0 0.0
        %3680 = vmatpush1.xpose.msra.mxu0 0.0
        %3681 = vmatprep.subr.mxu0 0.0
        %3682 = vmatpush1.xpose.msra.mxu0 0.0
        %3683 = vmatprep.subr.mxu0 0.0
        %3684 = vmatpush1.xpose.msra.mxu0 0.0
        %3685 = vmatprep.subr.mxu0 0.0
        %3686 = vmatpush1.xpose.msra.mxu0 0.0
        %3687 = vmatprep.subr.mxu0 0.0
        %3688 = vmatpush1.xpose.msra.mxu0 0.0
        %3689 = vmatprep.subr.mxu0 0.0
        %3690 = vmatpush1.xpose.msra.mxu0 0.0
        %3691 = vmatprep.subr.mxu0 0.0
        %3692 = vmatpush1.xpose.msra.mxu0 0.0
        %3693 = vmatprep.subr.mxu0 0.0
        %3694 = vmatpush1.xpose.msra.mxu0 0.0
        %3695 = vmatprep.subr.mxu0 0.0
        %3696 = vmatpush1.xpose.msra.mxu0 0.0
        %3697 = vmatprep.subr.mxu0 0.0
        %3698 = vmatpush1.xpose.msra.mxu0 0.0
        %3699 = vmatprep.subr.mxu0 0.0
        %3700 = vmatpush1.xpose.msra.mxu0 0.0
        %3701 = vmatprep.subr.mxu0 0.0
        %3702 = vmatpush1.xpose.msra.mxu0 0.0
        %3703 = vmatprep.subr.mxu0 0.0
        %3704 = vmatpush1.xpose.msra.mxu0 0.0
        %3705 = vmatprep.subr.mxu0 0.0
        %3706 = vmatpush1.xpose.msra.mxu0 0.0
        %3707 = vmatprep.subr.mxu0 0.0
        %3708 = vmatpush1.xpose.msra.mxu0 0.0
        %3709 = vmatprep.subr.mxu0 0.0
        %3710 = vmatpush1.xpose.msra.mxu0 0.0
        %3711 = vmatprep.subr.mxu0 0.0
        %3712 = vmatpush1.xpose.msra.mxu0 0.0
        %3713 = vmatprep.subr.mxu0 0.0
        %3714 = vmatpush1.xpose.msra.mxu0 0.0
        %3715 = vmatprep.subr.mxu0 0.0
        %3716 = vmatpush1.xpose.msra.mxu0 0.0
        %3717 = vmatprep.subr.mxu0 0.0
        %3718 = vmatpush1.xpose.msra.mxu0 0.0
        %3719 = vmatprep.subr.mxu0 0.0
        %3720 = vmatpush1.xpose.msra.mxu0 0.0
        %3721 = vmatprep.subr.mxu0 0.0
        %3722 = vmatpush1.xpose.msra.mxu0 0.0
        %3723 = vmatprep.subr.mxu0 0.0
        %3724 = vmatpush1.xpose.msra.mxu0 0.0
        %3725 = vmatprep.subr.mxu0 0.0
        %3726 = vmatpush1.xpose.msra.mxu0 0.0
        %3727 = vmatprep.subr.mxu0 0.0
        %3728 = vmatpush1.xpose.msra.mxu0 0.0
        %3729 = vmatprep.subr.mxu0 0.0
        %3730 = vmatpush1.xpose.msra.mxu0 0.0
        %3731 = vmatprep.subr.mxu0 0.0
        %3732 = vmatpush1.xpose.msra.mxu0 0.0
        %3733 = vmatprep.mubr.f32.mxu0 0.0
        %3734 = vmatmul.mubr.f32.gmra.mrb[0].mxu0 %v3661
        %v3735 = vpop.f32.mrb[0].mxu0
        %v3736 = vadd.f32 0.0, %v3735
        %v3737 = vpop.f32.mrb[0].mxu0
        %3738 = vmatprep.mubr.f32.mxu0 0.0
        %3739 = vmatmul.mubr.f32.gmra.mrb[0].mxu0 %v3663
        %v3740 = vpop.f32.mrb[0].mxu0
        %v3741 = vadd.f32 0.0, %v3740
        %v3742 = vpop.f32.mrb[0].mxu0
        %3743 = vdwg.mxu0
        %3744 = vrot.lane.b32.xlu0 %v2824, 112
        %v3745 = vpop.permute.xlu0 %3744
        %3746 = vrot.lane.b32.xlu0 %v2829, 112
        %v3747 = vpop.permute.xlu0 %3746
        %3748 = vrot.lane.b32.xlu0 %v2824, 80
        %v3749 = vpop.permute.xlu0 %3748
        %3750 = vrot.lane.b32.xlu0 %v2829, 80
        %v3751 = vpop.permute.xlu0 %3750
        %v3752 = vsel %vm2858, %v3745, 0
        %v3754 = vsel %vm2858, %v3747, 0
        %v3756 = vsel %vm2858, %v3749, 0
        %v3758 = vsel %vm2858, %v3751, 0
        %3760 = vmatprep.subr.mxu0 0.0
        %3761 = vmatpush1.xpose.msra.mxu0 %v3756
        %3762 = vmatprep.subr.mxu0 0.0
        %3763 = vmatpush1.xpose.msra.mxu0 %v3758
        %3764 = vmatprep.subr.mxu0 0.0
        %3765 = vmatpush1.xpose.msra.mxu0 0.0
        %3766 = vmatprep.subr.mxu0 0.0
        %3767 = vmatpush1.xpose.msra.mxu0 0.0
        %3768 = vmatprep.subr.mxu0 0.0
        %3769 = vmatpush1.xpose.msra.mxu0 0.0
        %3770 = vmatprep.subr.mxu0 0.0
        %3771 = vmatpush1.xpose.msra.mxu0 0.0
        %3772 = vmatprep.subr.mxu0 0.0
        %3773 = vmatpush1.xpose.msra.mxu0 0.0
        %3774 = vmatprep.subr.mxu0 0.0
        %3775 = vmatpush1.xpose.msra.mxu0 0.0
        %3776 = vmatprep.subr.mxu0 0.0
        %3777 = vmatpush1.xpose.msra.mxu0 0.0
        %3778 = vmatprep.subr.mxu0 0.0
        %3779 = vmatpush1.xpose.msra.mxu0 0.0
        %3780 = vmatprep.subr.mxu0 0.0
        %3781 = vmatpush1.xpose.msra.mxu0 0.0
        %3782 = vmatprep.subr.mxu0 0.0
        %3783 = vmatpush1.xpose.msra.mxu0 0.0
        %3784 = vmatprep.subr.mxu0 0.0
        %3785 = vmatpush1.xpose.msra.mxu0 0.0
        %3786 = vmatprep.subr.mxu0 0.0
        %3787 = vmatpush1.xpose.msra.mxu0 0.0
        %3788 = vmatprep.subr.mxu0 0.0
        %3789 = vmatpush1.xpose.msra.mxu0 0.0
        %3790 = vmatprep.subr.mxu0 0.0
        %3791 = vmatpush1.xpose.msra.mxu0 0.0
        %3792 = vmatprep.subr.mxu0 0.0
        %3793 = vmatpush1.xpose.msra.mxu0 0.0
        %3794 = vmatprep.subr.mxu0 0.0
        %3795 = vmatpush1.xpose.msra.mxu0 0.0
        %3796 = vmatprep.subr.mxu0 0.0
        %3797 = vmatpush1.xpose.msra.mxu0 0.0
        %3798 = vmatprep.subr.mxu0 0.0
        %3799 = vmatpush1.xpose.msra.mxu0 0.0
        %3800 = vmatprep.subr.mxu0 0.0
        %3801 = vmatpush1.xpose.msra.mxu0 0.0
        %3802 = vmatprep.subr.mxu0 0.0
        %3803 = vmatpush1.xpose.msra.mxu0 0.0
        %3804 = vmatprep.subr.mxu0 0.0
        %3805 = vmatpush1.xpose.msra.mxu0 0.0
        %3806 = vmatprep.subr.mxu0 0.0
        %3807 = vmatpush1.xpose.msra.mxu0 0.0
        %3808 = vmatprep.subr.mxu0 0.0
        %3809 = vmatpush1.xpose.msra.mxu0 0.0
        %3810 = vmatprep.subr.mxu0 0.0
        %3811 = vmatpush1.xpose.msra.mxu0 0.0
        %3812 = vmatprep.subr.mxu0 0.0
        %3813 = vmatpush1.xpose.msra.mxu0 0.0
        %3814 = vmatprep.subr.mxu0 0.0
        %3815 = vmatpush1.xpose.msra.mxu0 0.0
        %3816 = vmatprep.subr.mxu0 0.0
        %3817 = vmatpush1.xpose.msra.mxu0 0.0
        %3818 = vmatprep.subr.mxu0 0.0
        %3819 = vmatpush1.xpose.msra.mxu0 0.0
        %3820 = vmatprep.subr.mxu0 0.0
        %3821 = vmatpush1.xpose.msra.mxu0 0.0
        %3822 = vmatprep.subr.mxu0 0.0
        %3823 = vmatpush1.xpose.msra.mxu0 0.0
        %3824 = vmatprep.mubr.f32.mxu0 0.0
        %3825 = vmatmul.mubr.f32.gmra.mrb[0].mxu0 %v3752
        %v3826 = vpop.f32.mrb[0].mxu0
        %v3827 = vadd.f32 0.0, %v3826
        %v3828 = vpop.f32.mrb[0].mxu0
        %3829 = vmatprep.mubr.f32.mxu0 0.0
        %3830 = vmatmul.mubr.f32.gmra.mrb[0].mxu0 %v3754
        %v3831 = vpop.f32.mrb[0].mxu0
        %v3832 = vadd.f32 0.0, %v3831
        %v3833 = vpop.f32.mrb[0].mxu0
        %3834 = vdwg.mxu0
        %3835 = vrot.lane.b32.xlu0 %v2834, 112
        %v3836 = vpop.permute.xlu0 %3835
        %3837 = vrot.lane.b32.xlu0 %v2839, 112
        %v3838 = vpop.permute.xlu0 %3837
        %3839 = vrot.lane.b32.xlu0 %v2834, 80
        %v3840 = vpop.permute.xlu0 %3839
        %3841 = vrot.lane.b32.xlu0 %v2839, 80
        %v3842 = vpop.permute.xlu0 %3841
        %v3843 = vsel %vm2858, %v3836, 0
        %v3845 = vsel %vm2858, %v3838, 0
        %v3847 = vsel %vm2858, %v3840, 0
        %v3849 = vsel %vm2858, %v3842, 0
        %3851 = vmatprep.subr.mxu0 0.0
        %3852 = vmatpush1.xpose.msra.mxu0 %v3847
        %3853 = vmatprep.subr.mxu0 0.0
        %3854 = vmatpush1.xpose.msra.mxu0 %v3849
        %3855 = vmatprep.subr.mxu0 0.0
        %3856 = vmatpush1.xpose.msra.mxu0 0.0
        %3857 = vmatprep.subr.mxu0 0.0
        %3858 = vmatpush1.xpose.msra.mxu0 0.0
        %3859 = vmatprep.subr.mxu0 0.0
        %3860 = vmatpush1.xpose.msra.mxu0 0.0
        %3861 = vmatprep.subr.mxu0 0.0
        %3862 = vmatpush1.xpose.msra.mxu0 0.0
        %3863 = vmatprep.subr.mxu0 0.0
        %3864 = vmatpush1.xpose.msra.mxu0 0.0
        %3865 = vmatprep.subr.mxu0 0.0
        %3866 = vmatpush1.xpose.msra.mxu0 0.0
        %3867 = vmatprep.subr.mxu0 0.0
        %3868 = vmatpush1.xpose.msra.mxu0 0.0
        %3869 = vmatprep.subr.mxu0 0.0
        %3870 = vmatpush1.xpose.msra.mxu0 0.0
        %3871 = vmatprep.subr.mxu0 0.0
        %3872 = vmatpush1.xpose.msra.mxu0 0.0
        %3873 = vmatprep.subr.mxu0 0.0
        %3874 = vmatpush1.xpose.msra.mxu0 0.0
        %3875 = vmatprep.subr.mxu0 0.0
        %3876 = vmatpush1.xpose.msra.mxu0 0.0
        %3877 = vmatprep.subr.mxu0 0.0
        %3878 = vmatpush1.xpose.msra.mxu0 0.0
        %3879 = vmatprep.subr.mxu0 0.0
        %3880 = vmatpush1.xpose.msra.mxu0 0.0
        %3881 = vmatprep.subr.mxu0 0.0
        %3882 = vmatpush1.xpose.msra.mxu0 0.0
        %3883 = vmatprep.subr.mxu0 0.0
        %3884 = vmatpush1.xpose.msra.mxu0 0.0
        %3885 = vmatprep.subr.mxu0 0.0
        %3886 = vmatpush1.xpose.msra.mxu0 0.0
        %3887 = vmatprep.subr.mxu0 0.0
        %3888 = vmatpush1.xpose.msra.mxu0 0.0
        %3889 = vmatprep.subr.mxu0 0.0
        %3890 = vmatpush1.xpose.msra.mxu0 0.0
        %3891 = vmatprep.subr.mxu0 0.0
        %3892 = vmatpush1.xpose.msra.mxu0 0.0
        %3893 = vmatprep.subr.mxu0 0.0
        %3894 = vmatpush1.xpose.msra.mxu0 0.0
        %3895 = vmatprep.subr.mxu0 0.0
        %3896 = vmatpush1.xpose.msra.mxu0 0.0
        %3897 = vmatprep.subr.mxu0 0.0
        %3898 = vmatpush1.xpose.msra.mxu0 0.0
        %3899 = vmatprep.subr.mxu0 0.0
        %3900 = vmatpush1.xpose.msra.mxu0 0.0
        %3901 = vmatprep.subr.mxu0 0.0
        %3902 = vmatpush1.xpose.msra.mxu0 0.0
        %3903 = vmatprep.subr.mxu0 0.0
        %3904 = vmatpush1.xpose.msra.mxu0 0.0
        %3905 = vmatprep.subr.mxu0 0.0
        %3906 = vmatpush1.xpose.msra.mxu0 0.0
        %3907 = vmatprep.subr.mxu0 0.0
        %3908 = vmatpush1.xpose.msra.mxu0 0.0
        %3909 = vmatprep.subr.mxu0 0.0
        %3910 = vmatpush1.xpose.msra.mxu0 0.0
        %3911 = vmatprep.subr.mxu0 0.0
        %3912 = vmatpush1.xpose.msra.mxu0 0.0
        %3913 = vmatprep.subr.mxu0 0.0
        %3914 = vmatpush1.xpose.msra.mxu0 0.0
        %3915 = vmatprep.mubr.f32.mxu0 0.0
        %3916 = vmatmul.mubr.f32.gmra.mrb[0].mxu0 %v3843
        %v3917 = vpop.f32.mrb[0].mxu0
        %v3918 = vadd.f32 0.0, %v3917
        %v3919 = vpop.f32.mrb[0].mxu0
        %3920 = vmatprep.mubr.f32.mxu0 0.0
        %3921 = vmatmul.mubr.f32.gmra.mrb[0].mxu0 %v3845
        %v3922 = vpop.f32.mrb[0].mxu0
        %v3923 = vadd.f32 0.0, %v3922
        %v3924 = vpop.f32.mrb[0].mxu0
        %3925 = vdwg.mxu0
        %3926 = vrot.lane.b32.xlu0 %v2844, 112
        %v3927 = vpop.permute.xlu0 %3926
        %3928 = vrot.lane.b32.xlu0 %v2849, 112
        %v3929 = vpop.permute.xlu0 %3928
        %3930 = vrot.lane.b32.xlu0 %v2844, 80
        %v3931 = vpop.permute.xlu0 %3930
        %3932 = vrot.lane.b32.xlu0 %v2849, 80
        %v3933 = vpop.permute.xlu0 %3932
        %v3934 = vsel %vm2858, %v3927, 0
        %v3936 = vsel %vm2858, %v3929, 0
        %v3938 = vsel %vm2858, %v3931, 0
        %v3940 = vsel %vm2858, %v3933, 0
        %3942 = vmatprep.subr.mxu0 0.0
        %3943 = vmatpush1.xpose.msra.mxu0 %v3938
        %3944 = vmatprep.subr.mxu0 0.0
        %3945 = vmatpush1.xpose.msra.mxu0 %v3940
        %3946 = vmatprep.subr.mxu0 0.0
        %3947 = vmatpush1.xpose.msra.mxu0 0.0
        %3948 = vmatprep.subr.mxu0 0.0
        %3949 = vmatpush1.xpose.msra.mxu0 0.0
        %3950 = vmatprep.subr.mxu0 0.0
        %3951 = vmatpush1.xpose.msra.mxu0 0.0
        %3952 = vmatprep.subr.mxu0 0.0
        %3953 = vmatpush1.xpose.msra.mxu0 0.0
        %3954 = vmatprep.subr.mxu0 0.0
        %3955 = vmatpush1.xpose.msra.mxu0 0.0
        %3956 = vmatprep.subr.mxu0 0.0
        %3957 = vmatpush1.xpose.msra.mxu0 0.0
        %3958 = vmatprep.subr.mxu0 0.0
        %3959 = vmatpush1.xpose.msra.mxu0 0.0
        %3960 = vmatprep.subr.mxu0 0.0
        %3961 = vmatpush1.xpose.msra.mxu0 0.0
        %3962 = vmatprep.subr.mxu0 0.0
        %3963 = vmatpush1.xpose.msra.mxu0 0.0
        %3964 = vmatprep.subr.mxu0 0.0
        %3965 = vmatpush1.xpose.msra.mxu0 0.0
        %3966 = vmatprep.subr.mxu0 0.0
        %3967 = vmatpush1.xpose.msra.mxu0 0.0
        %3968 = vmatprep.subr.mxu0 0.0
        %3969 = vmatpush1.xpose.msra.mxu0 0.0
        %3970 = vmatprep.subr.mxu0 0.0
        %3971 = vmatpush1.xpose.msra.mxu0 0.0
        %3972 = vmatprep.subr.mxu0 0.0
        %3973 = vmatpush1.xpose.msra.mxu0 0.0
        %3974 = vmatprep.subr.mxu0 0.0
        %3975 = vmatpush1.xpose.msra.mxu0 0.0
        %3976 = vmatprep.subr.mxu0 0.0
        %3977 = vmatpush1.xpose.msra.mxu0 0.0
        %3978 = vmatprep.subr.mxu0 0.0
        %3979 = vmatpush1.xpose.msra.mxu0 0.0
        %3980 = vmatprep.subr.mxu0 0.0
        %3981 = vmatpush1.xpose.msra.mxu0 0.0
        %3982 = vmatprep.subr.mxu0 0.0
        %3983 = vmatpush1.xpose.msra.mxu0 0.0
        %3984 = vmatprep.subr.mxu0 0.0
        %3985 = vmatpush1.xpose.msra.mxu0 0.0
        %3986 = vmatprep.subr.mxu0 0.0
        %3987 = vmatpush1.xpose.msra.mxu0 0.0
        %3988 = vmatprep.subr.mxu0 0.0
        %3989 = vmatpush1.xpose.msra.mxu0 0.0
        %3990 = vmatprep.subr.mxu0 0.0
        %3991 = vmatpush1.xpose.msra.mxu0 0.0
        %3992 = vmatprep.subr.mxu0 0.0
        %3993 = vmatpush1.xpose.msra.mxu0 0.0
        %3994 = vmatprep.subr.mxu0 0.0
        %3995 = vmatpush1.xpose.msra.mxu0 0.0
        %3996 = vmatprep.subr.mxu0 0.0
        %3997 = vmatpush1.xpose.msra.mxu0 0.0
        %3998 = vmatprep.subr.mxu0 0.0
        %3999 = vmatpush1.xpose.msra.mxu0 0.0
        %4000 = vmatprep.subr.mxu0 0.0
        %4001 = vmatpush1.xpose.msra.mxu0 0.0
        %4002 = vmatprep.subr.mxu0 0.0
        %4003 = vmatpush1.xpose.msra.mxu0 0.0
        %4004 = vmatprep.subr.mxu0 0.0
        %4005 = vmatpush1.xpose.msra.mxu0 0.0
        %4006 = vmatprep.mubr.f32.mxu0 0.0
        %4007 = vmatmul.mubr.f32.gmra.mrb[0].mxu0 %v3934
        %v4008 = vpop.f32.mrb[0].mxu0
        %v4009 = vadd.f32 0.0, %v4008
        %v4010 = vpop.f32.mrb[0].mxu0
        %4011 = vmatprep.mubr.f32.mxu0 0.0
        %4012 = vmatmul.mubr.f32.gmra.mrb[0].mxu0 %v3936
        %v4013 = vpop.f32.mrb[0].mxu0
        %v4014 = vadd.f32 0.0, %v4013
        %v4015 = vpop.f32.mrb[0].mxu0
        %4016 = vdwg.mxu0
        %v4017 = vmul.f32 %v3736, 0.25
        %v4018 = vmul.f32 %v3741, 0.25
        %v4019 = vmul.f32 %v3827, 0.25
        %v4020 = vmul.f32 %v3832, 0.25
        %v4021 = vmul.f32 %v3918, 0.25
        %v4022 = vmul.f32 %v3923, 0.25
        %v4023 = vmul.f32 %v4009, 0.25
        %v4024 = vmul.f32 %v4014, 0.25
        %v4025 = vsel %vm2858, %v4017, -inf
        %4026 = vmax.xlane.f32.xlu0 %v4025
        %v4027 = vpop.xlane.xlu0 %4026
        %v4028 = vsel %vm2858, %v4018, -inf
        %4029 = vmax.xlane.f32.xlu0 %v4028
        %v4030 = vpop.xlane.xlu0 %4029
        %v4031 = vsel %vm2858, %v4019, -inf
        %4032 = vmax.xlane.f32.xlu0 %v4031
        %v4033 = vpop.xlane.xlu0 %4032
        %v4034 = vsel %vm2858, %v4020, -inf
        %4035 = vmax.xlane.f32.xlu0 %v4034
        %v4036 = vpop.xlane.xlu0 %4035
        %v4037 = vsel %vm2858, %v4021, -inf
        %4038 = vmax.xlane.f32.xlu0 %v4037
        %v4039 = vpop.xlane.xlu0 %4038
        %v4040 = vsel %vm2858, %v4022, -inf
        %4041 = vmax.xlane.f32.xlu0 %v4040
        %v4042 = vpop.xlane.xlu0 %4041
        %v4043 = vsel %vm2858, %v4023, -inf
        %4044 = vmax.xlane.f32.xlu0 %v4043
        %v4045 = vpop.xlane.xlu0 %4044
        %v4046 = vsel %vm2858, %v4024, -inf
        %4047 = vmax.xlane.f32.xlu0 %v4046
        %v4048 = vpop.xlane.xlu0 %4047
        %v4049 = vsub.f32 %v4017, %v4027
        %v4050 = vsub.f32 %v4018, %v4030
        %v4051 = vsub.f32 %v4019, %v4033
        %v4052 = vsub.f32 %v4020, %v4036
        %v4053 = vsub.f32 %v4021, %v4039
        %v4054 = vsub.f32 %v4022, %v4042
        %v4055 = vsub.f32 %v4023, %v4045
        %v4056 = vsub.f32 %v4024, %v4048
        %v4057 = vmul.f32 %v4049, 1.442695
        %v4058 = vpow.pop %v4057
        %v4059 = vmul.f32 %v4050, 1.442695
        %v4060 = vpow.pop %v4059
        %v4061 = vmul.f32 %v4051, 1.442695
        %v4062 = vpow.pop %v4061
        %v4063 = vmul.f32 %v4052, 1.442695
        %v4064 = vpow.pop %v4063
        %v4065 = vmul.f32 %v4053, 1.442695
        %v4066 = vpow.pop %v4065
        %v4067 = vmul.f32 %v4054, 1.442695
        %v4068 = vpow.pop %v4067
        %v4069 = vmul.f32 %v4055, 1.442695
        %v4070 = vpow.pop %v4069
        %v4071 = vmul.f32 %v4056, 1.442695
        %v4072 = vpow.pop %v4071
        %v4073 = vsel %vm2858, %v4058, 0.0
        %4074 = vadd.xlane.f32.xlu0 %v4073
        %v4075 = vpop.xlane.xlu0 %4074
        %v4076 = vsel %vm2858, %v4060, 0.0
        %4077 = vadd.xlane.f32.xlu0 %v4076
        %v4078 = vpop.xlane.xlu0 %4077
        %v4079 = vsel %vm2858, %v4062, 0.0
        %4080 = vadd.xlane.f32.xlu0 %v4079
        %v4081 = vpop.xlane.xlu0 %4080
        %v4082 = vsel %vm2858, %v4064, 0.0
        %4083 = vadd.xlane.f32.xlu0 %v4082
        %v4084 = vpop.xlane.xlu0 %4083
        %v4085 = vsel %vm2858, %v4066, 0.0
        %4086 = vadd.xlane.f32.xlu0 %v4085
        %v4087 = vpop.xlane.xlu0 %4086
        %v4088 = vsel %vm2858, %v4068, 0.0
        %4089 = vadd.xlane.f32.xlu0 %v4088
        %v4090 = vpop.xlane.xlu0 %4089
        %v4091 = vsel %vm2858, %v4070, 0.0
        %4092 = vadd.xlane.f32.xlu0 %v4091
        %v4093 = vpop.xlane.xlu0 %4092
        %v4094 = vsel %vm2858, %v4072, 0.0
        %4095 = vadd.xlane.f32.xlu0 %v4094
        %v4096 = vpop.xlane.xlu0 %4095
        %v4097 = vrcp.pop %v4075
        %v4098 = vmul.f32 %v4058, %v4097
        %v4099 = vrcp.pop %v4078
        %v4100 = vmul.f32 %v4060, %v4099
        %v4101 = vrcp.pop %v4081
        %v4102 = vmul.f32 %v4062, %v4101
        %v4103 = vrcp.pop %v4084
        %v4104 = vmul.f32 %v4064, %v4103
        %v4105 = vrcp.pop %v4087
        %v4106 = vmul.f32 %v4066, %v4105
        %v4107 = vrcp.pop %v4090
        %v4108 = vmul.f32 %v4068, %v4107
        %v4109 = vrcp.pop %v4093
        %v4110 = vmul.f32 %v4070, %v4109
        %v4111 = vrcp.pop %v4096
        %v4112 = vmul.f32 %v4072, %v4111
        %4113 = vrot.lane.b32.xlu0 %v2814, 48
        %v4114 = vpop.permute.xlu0 %4113
        %4115 = vrot.lane.b32.xlu0 %v2819, 48
        %v4116 = vpop.permute.xlu0 %4115
        %v4120 = vsel %vm2858, %v4098, 0
        %v4123 = vsel %vm2858, %v4100, 0
        %4125 = vmatprep.subr.mxu0 0.0
        %4126 = vmatpush1.msra.mxu0 %v4114
        %4127 = vmatprep.subr.mxu0 0.0
        %4128 = vmatpush1.msra.mxu0 %v4116
        %4129 = vmatprep.subr.mxu0 0.0
        %4130 = vmatpush1.msra.mxu0 0.0
        %4131 = vmatprep.subr.mxu0 0.0
        %4132 = vmatpush1.msra.mxu0 0.0
        %4133 = vmatprep.subr.mxu0 0.0
        %4134 = vmatpush1.msra.mxu0 0.0
        %4135 = vmatprep.subr.mxu0 0.0
        %4136 = vmatpush1.msra.mxu0 0.0
        %4137 = vmatprep.subr.mxu0 0.0
        %4138 = vmatpush1.msra.mxu0 0.0
        %4139 = vmatprep.subr.mxu0 0.0
        %4140 = vmatpush1.msra.mxu0 0.0
        %4141 = vmatprep.subr.mxu0 0.0
        %4142 = vmatpush1.msra.mxu0 0.0
        %4143 = vmatprep.subr.mxu0 0.0
        %4144 = vmatpush1.msra.mxu0 0.0
        %4145 = vmatprep.subr.mxu0 0.0
        %4146 = vmatpush1.msra.mxu0 0.0
        %4147 = vmatprep.subr.mxu0 0.0
        %4148 = vmatpush1.msra.mxu0 0.0
        %4149 = vmatprep.subr.mxu0 0.0
        %4150 = vmatpush1.msra.mxu0 0.0
        %4151 = vmatprep.subr.mxu0 0.0
        %4152 = vmatpush1.msra.mxu0 0.0
        %4153 = vmatprep.subr.mxu0 0.0
        %4154 = vmatpush1.msra.mxu0 0.0
        %4155 = vmatprep.subr.mxu0 0.0
        %4156 = vmatpush1.msra.mxu0 0.0
        %4157 = vmatprep.subr.mxu0 0.0
        %4158 = vmatpush1.msra.mxu0 0.0
        %4159 = vmatprep.subr.mxu0 0.0
        %4160 = vmatpush1.msra.mxu0 0.0
        %4161 = vmatprep.subr.mxu0 0.0
        %4162 = vmatpush1.msra.mxu0 0.0
        %4163 = vmatprep.subr.mxu0 0.0
        %4164 = vmatpush1.msra.mxu0 0.0
        %4165 = vmatprep.subr.mxu0 0.0
        %4166 = vmatpush1.msra.mxu0 0.0
        %4167 = vmatprep.subr.mxu0 0.0
        %4168 = vmatpush1.msra.mxu0 0.0
        %4169 = vmatprep.subr.mxu0 0.0
        %4170 = vmatpush1.msra.mxu0 0.0
        %4171 = vmatprep.subr.mxu0 0.0
        %4172 = vmatpush1.msra.mxu0 0.0
        %4173 = vmatprep.subr.mxu0 0.0
        %4174 = vmatpush1.msra.mxu0 0.0
        %4175 = vmatprep.subr.mxu0 0.0
        %4176 = vmatpush1.msra.mxu0 0.0
        %4177 = vmatprep.subr.mxu0 0.0
        %4178 = vmatpush1.msra.mxu0 0.0
        %4179 = vmatprep.subr.mxu0 0.0
        %4180 = vmatpush1.msra.mxu0 0.0
        %4181 = vmatprep.subr.mxu0 0.0
        %4182 = vmatpush1.msra.mxu0 0.0
        %4183 = vmatprep.subr.mxu0 0.0
        %4184 = vmatpush1.msra.mxu0 0.0
        %4185 = vmatprep.subr.mxu0 0.0
        %4186 = vmatpush1.msra.mxu0 0.0
        %4187 = vmatprep.subr.mxu0 0.0
        %4188 = vmatpush1.msra.mxu0 0.0
        %4189 = vmatprep.mubr.f32.mxu0 0.0
        %4190 = vmatmul.mubr.f32.gmra.mrb[0].mxu0 %v4120
        %v4191 = vpop.f32.mrb[0].mxu0
        %v4192 = vadd.f32 0.0, %v4191
        %v4193 = vpop.f32.mrb[0].mxu0
        %4194 = vmatprep.mubr.f32.mxu0 0.0
        %4195 = vmatmul.mubr.f32.gmra.mrb[0].mxu0 %v4123
        %v4196 = vpop.f32.mrb[0].mxu0
        %v4197 = vadd.f32 0.0, %v4196
        %v4198 = vpop.f32.mrb[0].mxu0
        %4199 = vdwg.mxu0
        %4200 = vrot.lane.b32.xlu0 %v2824, 48
        %v4201 = vpop.permute.xlu0 %4200
        %4202 = vrot.lane.b32.xlu0 %v2829, 48
        %v4203 = vpop.permute.xlu0 %4202
        %v4207 = vsel %vm2858, %v4102, 0
        %v4210 = vsel %vm2858, %v4104, 0
        %4212 = vmatprep.subr.mxu0 0.0
        %4213 = vmatpush1.msra.mxu0 %v4201
        %4214 = vmatprep.subr.mxu0 0.0
        %4215 = vmatpush1.msra.mxu0 %v4203
        %4216 = vmatprep.subr.mxu0 0.0
        %4217 = vmatpush1.msra.mxu0 0.0
        %4218 = vmatprep.subr.mxu0 0.0
        %4219 = vmatpush1.msra.mxu0 0.0
        %4220 = vmatprep.subr.mxu0 0.0
        %4221 = vmatpush1.msra.mxu0 0.0
        %4222 = vmatprep.subr.mxu0 0.0
        %4223 = vmatpush1.msra.mxu0 0.0
        %4224 = vmatprep.subr.mxu0 0.0
        %4225 = vmatpush1.msra.mxu0 0.0
        %4226 = vmatprep.subr.mxu0 0.0
        %4227 = vmatpush1.msra.mxu0 0.0
        %4228 = vmatprep.subr.mxu0 0.0
        %4229 = vmatpush1.msra.mxu0 0.0
        %4230 = vmatprep.subr.mxu0 0.0
        %4231 = vmatpush1.msra.mxu0 0.0
        %4232 = vmatprep.subr.mxu0 0.0
        %4233 = vmatpush1.msra.mxu0 0.0
        %4234 = vmatprep.subr.mxu0 0.0
        %4235 = vmatpush1.msra.mxu0 0.0
        %4236 = vmatprep.subr.mxu0 0.0
        %4237 = vmatpush1.msra.mxu0 0.0
        %4238 = vmatprep.subr.mxu0 0.0
        %4239 = vmatpush1.msra.mxu0 0.0
        %4240 = vmatprep.subr.mxu0 0.0
        %4241 = vmatpush1.msra.mxu0 0.0
        %4242 = vmatprep.subr.mxu0 0.0
        %4243 = vmatpush1.msra.mxu0 0.0
        %4244 = vmatprep.subr.mxu0 0.0
        %4245 = vmatpush1.msra.mxu0 0.0
        %4246 = vmatprep.subr.mxu0 0.0
        %4247 = vmatpush1.msra.mxu0 0.0
        %4248 = vmatprep.subr.mxu0 0.0
        %4249 = vmatpush1.msra.mxu0 0.0
        %4250 = vmatprep.subr.mxu0 0.0
        %4251 = vmatpush1.msra.mxu0 0.0
        %4252 = vmatprep.subr.mxu0 0.0
        %4253 = vmatpush1.msra.mxu0 0.0
        %4254 = vmatprep.subr.mxu0 0.0
        %4255 = vmatpush1.msra.mxu0 0.0
        %4256 = vmatprep.subr.mxu0 0.0
        %4257 = vmatpush1.msra.mxu0 0.0
        %4258 = vmatprep.subr.mxu0 0.0
        %4259 = vmatpush1.msra.mxu0 0.0
        %4260 = vmatprep.subr.mxu0 0.0
        %4261 = vmatpush1.msra.mxu0 0.0
        %4262 = vmatprep.subr.mxu0 0.0
        %4263 = vmatpush1.msra.mxu0 0.0
        %4264 = vmatprep.subr.mxu0 0.0
        %4265 = vmatpush1.msra.mxu0 0.0
        %4266 = vmatprep.subr.mxu0 0.0
        %4267 = vmatpush1.msra.mxu0 0.0
        %4268 = vmatprep.subr.mxu0 0.0
        %4269 = vmatpush1.msra.mxu0 0.0
        %4270 = vmatprep.subr.mxu0 0.0
        %4271 = vmatpush1.msra.mxu0 0.0
        %4272 = vmatprep.subr.mxu0 0.0
        %4273 = vmatpush1.msra.mxu0 0.0
        %4274 = vmatprep.subr.mxu0 0.0
        %4275 = vmatpush1.msra.mxu0 0.0
        %4276 = vmatprep.mubr.f32.mxu0 0.0
        %4277 = vmatmul.mubr.f32.gmra.mrb[0].mxu0 %v4207
        %v4278 = vpop.f32.mrb[0].mxu0
        %v4279 = vadd.f32 0.0, %v4278
        %v4280 = vpop.f32.mrb[0].mxu0
        %4281 = vmatprep.mubr.f32.mxu0 0.0
        %4282 = vmatmul.mubr.f32.gmra.mrb[0].mxu0 %v4210
        %v4283 = vpop.f32.mrb[0].mxu0
        %v4284 = vadd.f32 0.0, %v4283
        %v4285 = vpop.f32.mrb[0].mxu0
        %4286 = vdwg.mxu0
        %4287 = vrot.lane.b32.xlu0 %v2834, 48
        %v4288 = vpop.permute.xlu0 %4287
        %4289 = vrot.lane.b32.xlu0 %v2839, 48
        %v4290 = vpop.permute.xlu0 %4289
        %v4294 = vsel %vm2858, %v4106, 0
        %v4297 = vsel %vm2858, %v4108, 0
        %4299 = vmatprep.subr.mxu0 0.0
        %4300 = vmatpush1.msra.mxu0 %v4288
        %4301 = vmatprep.subr.mxu0 0.0
        %4302 = vmatpush1.msra.mxu0 %v4290
        %4303 = vmatprep.subr.mxu0 0.0
        %4304 = vmatpush1.msra.mxu0 0.0
        %4305 = vmatprep.subr.mxu0 0.0
        %4306 = vmatpush1.msra.mxu0 0.0
        %4307 = vmatprep.subr.mxu0 0.0
        %4308 = vmatpush1.msra.mxu0 0.0
        %4309 = vmatprep.subr.mxu0 0.0
        %4310 = vmatpush1.msra.mxu0 0.0
        %4311 = vmatprep.subr.mxu0 0.0
        %4312 = vmatpush1.msra.mxu0 0.0
        %4313 = vmatprep.subr.mxu0 0.0
        %4314 = vmatpush1.msra.mxu0 0.0
        %4315 = vmatprep.subr.mxu0 0.0
        %4316 = vmatpush1.msra.mxu0 0.0
        %4317 = vmatprep.subr.mxu0 0.0
        %4318 = vmatpush1.msra.mxu0 0.0
        %4319 = vmatprep.subr.mxu0 0.0
        %4320 = vmatpush1.msra.mxu0 0.0
        %4321 = vmatprep.subr.mxu0 0.0
        %4322 = vmatpush1.msra.mxu0 0.0
        %4323 = vmatprep.subr.mxu0 0.0
        %4324 = vmatpush1.msra.mxu0 0.0
        %4325 = vmatprep.subr.mxu0 0.0
        %4326 = vmatpush1.msra.mxu0 0.0
        %4327 = vmatprep.subr.mxu0 0.0
        %4328 = vmatpush1.msra.mxu0 0.0
        %4329 = vmatprep.subr.mxu0 0.0
        %4330 = vmatpush1.msra.mxu0 0.0
        %4331 = vmatprep.subr.mxu0 0.0
        %4332 = vmatpush1.msra.mxu0 0.0
        %4333 = vmatprep.subr.mxu0 0.0
        %4334 = vmatpush1.msra.mxu0 0.0
        %4335 = vmatprep.subr.mxu0 0.0
        %4336 = vmatpush1.msra.mxu0 0.0
        %4337 = vmatprep.subr.mxu0 0.0
        %4338 = vmatpush1.msra.mxu0 0.0
        %4339 = vmatprep.subr.mxu0 0.0
        %4340 = vmatpush1.msra.mxu0 0.0
        %4341 = vmatprep.subr.mxu0 0.0
        %4342 = vmatpush1.msra.mxu0 0.0
        %4343 = vmatprep.subr.mxu0 0.0
        %4344 = vmatpush1.msra.mxu0 0.0
        %4345 = vmatprep.subr.mxu0 0.0
        %4346 = vmatpush1.msra.mxu0 0.0
        %4347 = vmatprep.subr.mxu0 0.0
        %4348 = vmatpush1.msra.mxu0 0.0
        %4349 = vmatprep.subr.mxu0 0.0
        %4350 = vmatpush1.msra.mxu0 0.0
        %4351 = vmatprep.subr.mxu0 0.0
        %4352 = vmatpush1.msra.mxu0 0.0
        %4353 = vmatprep.subr.mxu0 0.0
        %4354 = vmatpush1.msra.mxu0 0.0
        %4355 = vmatprep.subr.mxu0 0.0
        %4356 = vmatpush1.msra.mxu0 0.0
        %4357 = vmatprep.subr.mxu0 0.0
        %4358 = vmatpush1.msra.mxu0 0.0
        %4359 = vmatprep.subr.mxu0 0.0
        %4360 = vmatpush1.msra.mxu0 0.0
        %4361 = vmatprep.subr.mxu0 0.0
        %4362 = vmatpush1.msra.mxu0 0.0
        %4363 = vmatprep.mubr.f32.mxu0 0.0
        %4364 = vmatmul.mubr.f32.gmra.mrb[0].mxu0 %v4294
        %v4365 = vpop.f32.mrb[0].mxu0
        %v4366 = vadd.f32 0.0, %v4365
        %v4367 = vpop.f32.mrb[0].mxu0
        %4368 = vmatprep.mubr.f32.mxu0 0.0
        %4369 = vmatmul.mubr.f32.gmra.mrb[0].mxu0 %v4297
        %v4370 = vpop.f32.mrb[0].mxu0
        %v4371 = vadd.f32 0.0, %v4370
        %v4372 = vpop.f32.mrb[0].mxu0
        %4373 = vdwg.mxu0
        %4374 = vrot.lane.b32.xlu0 %v2844, 48
        %v4375 = vpop.permute.xlu0 %4374
        %4376 = vrot.lane.b32.xlu0 %v2849, 48
        %v4377 = vpop.permute.xlu0 %4376
        %v4381 = vsel %vm2858, %v4110, 0
        %v4384 = vsel %vm2858, %v4112, 0
        %4386 = vmatprep.subr.mxu0 0.0
        %4387 = vmatpush1.msra.mxu0 %v4375
        %4388 = vmatprep.subr.mxu0 0.0
        %4389 = vmatpush1.msra.mxu0 %v4377
        %4390 = vmatprep.subr.mxu0 0.0
        %4391 = vmatpush1.msra.mxu0 0.0
        %4392 = vmatprep.subr.mxu0 0.0
        %4393 = vmatpush1.msra.mxu0 0.0
        %4394 = vmatprep.subr.mxu0 0.0
        %4395 = vmatpush1.msra.mxu0 0.0
        %4396 = vmatprep.subr.mxu0 0.0
        %4397 = vmatpush1.msra.mxu0 0.0
        %4398 = vmatprep.subr.mxu0 0.0
        %4399 = vmatpush1.msra.mxu0 0.0
        %4400 = vmatprep.subr.mxu0 0.0
        %4401 = vmatpush1.msra.mxu0 0.0
        %4402 = vmatprep.subr.mxu0 0.0
        %4403 = vmatpush1.msra.mxu0 0.0
        %4404 = vmatprep.subr.mxu0 0.0
        %4405 = vmatpush1.msra.mxu0 0.0
        %4406 = vmatprep.subr.mxu0 0.0
        %4407 = vmatpush1.msra.mxu0 0.0
        %4408 = vmatprep.subr.mxu0 0.0
        %4409 = vmatpush1.msra.mxu0 0.0
        %4410 = vmatprep.subr.mxu0 0.0
        %4411 = vmatpush1.msra.mxu0 0.0
        %4412 = vmatprep.subr.mxu0 0.0
        %4413 = vmatpush1.msra.mxu0 0.0
        %4414 = vmatprep.subr.mxu0 0.0
        %4415 = vmatpush1.msra.mxu0 0.0
        %4416 = vmatprep.subr.mxu0 0.0
        %4417 = vmatpush1.msra.mxu0 0.0
        %4418 = vmatprep.subr.mxu0 0.0
        %4419 = vmatpush1.msra.mxu0 0.0
        %4420 = vmatprep.subr.mxu0 0.0
        %4421 = vmatpush1.msra.mxu0 0.0
        %4422 = vmatprep.subr.mxu0 0.0
        %4423 = vmatpush1.msra.mxu0 0.0
        %4424 = vmatprep.subr.mxu0 0.0
        %4425 = vmatpush1.msra.mxu0 0.0
        %4426 = vmatprep.subr.mxu0 0.0
        %4427 = vmatpush1.msra.mxu0 0.0
        %4428 = vmatprep.subr.mxu0 0.0
        %4429 = vmatpush1.msra.mxu0 0.0
        %4430 = vmatprep.subr.mxu0 0.0
        %4431 = vmatpush1.msra.mxu0 0.0
        %4432 = vmatprep.subr.mxu0 0.0
        %4433 = vmatpush1.msra.mxu0 0.0
        %4434 = vmatprep.subr.mxu0 0.0
        %4435 = vmatpush1.msra.mxu0 0.0
        %4436 = vmatprep.subr.mxu0 0.0
        %4437 = vmatpush1.msra.mxu0 0.0
        %4438 = vmatprep.subr.mxu0 0.0
        %4439 = vmatpush1.msra.mxu0 0.0
        %4440 = vmatprep.subr.mxu0 0.0
        %4441 = vmatpush1.msra.mxu0 0.0
        %4442 = vmatprep.subr.mxu0 0.0
        %4443 = vmatpush1.msra.mxu0 0.0
        %4444 = vmatprep.subr.mxu0 0.0
        %4445 = vmatpush1.msra.mxu0 0.0
        %4446 = vmatprep.subr.mxu0 0.0
        %4447 = vmatpush1.msra.mxu0 0.0
        %4448 = vmatprep.subr.mxu0 0.0
        %4449 = vmatpush1.msra.mxu0 0.0
        %4450 = vmatprep.mubr.f32.mxu0 0.0
        %4451 = vmatmul.mubr.f32.gmra.mrb[0].mxu0 %v4381
        %v4452 = vpop.f32.mrb[0].mxu0
        %v4453 = vadd.f32 0.0, %v4452
        %v4454 = vpop.f32.mrb[0].mxu0
        %4455 = vmatprep.mubr.f32.mxu0 0.0
        %4456 = vmatmul.mubr.f32.gmra.mrb[0].mxu0 %v4384
        %v4457 = vpop.f32.mrb[0].mxu0
        %v4458 = vadd.f32 0.0, %v4457
        %v4459 = vpop.f32.mrb[0].mxu0
        %4460 = vdwg.mxu0
        %4469 = vrot.lane.b32.xlu0 %v4192, 16
        %v4470 = vpop.permute.xlu0 %4469
        %4471 = vrot.lane.b32.xlu0 %v4197, 16
        %v4472 = vpop.permute.xlu0 %4471
        %4473 = vrot.lane.b32.xlu0 %v4279, 16
        %v4474 = vpop.permute.xlu0 %4473
        %4475 = vrot.lane.b32.xlu0 %v4284, 16
        %v4476 = vpop.permute.xlu0 %4475
        %4477 = vrot.lane.b32.xlu0 %v4366, 16
        %v4478 = vpop.permute.xlu0 %4477
        %4479 = vrot.lane.b32.xlu0 %v4371, 16
        %v4480 = vpop.permute.xlu0 %4479
        %4481 = vrot.lane.b32.xlu0 %v4453, 16
        %v4482 = vpop.permute.xlu0 %4481
        %4483 = vrot.lane.b32.xlu0 %v4458, 16
        %v4484 = vpop.permute.xlu0 %4483
        %v4493 = vsel %vm2858, %v3384, %v4470
        %v4494 = vsel %vm2858, %v3389, %v4472
        %v4495 = vsel %vm2858, %v3471, %v4474
        %v4496 = vsel %vm2858, %v3476, %v4476
        %v4497 = vsel %vm2858, %v3558, %v4478
        %v4498 = vsel %vm2858, %v3563, %v4480
        %v4499 = vsel %vm2858, %v3645, %v4482
        %v4500 = vsel %vm2858, %v3650, %v4484
        %v4501 = vmax.f32 %v4493, 0.0
        %v4502 = vmax.f32 %v4494, 0.0
        %v4503 = vmax.f32 %v4495, 0.0
        %v4504 = vmax.f32 %v4496, 0.0
        %v4505 = vmax.f32 %v4497, 0.0
        %v4506 = vmax.f32 %v4498, 0.0
        %v4507 = vmax.f32 %v4499, 0.0
        %v4508 = vmax.f32 %v4500, 0.0
        %s4509 = scalar_lea.vmem %s6, 32
        %v4510 = vld [vmem:[%s4509] sm:$0xff]
        %v4511 = vld [vmem:[%s4509 + $0x8] sm:$0xff]
        %v4512 = vld [vmem:[%s4509 + $0x10] sm:$0xff]
        %v4513 = vld [vmem:[%s4509 + $0x18] sm:$0xff]
        %v4515 = vsel %vm2062, %v4501, 0
        %v4518 = vsel %vm2062, %v4502, 0
        %v4521 = vsel %vm2062, %v4503, 0
        %v4524 = vsel %vm2062, %v4504, 0
        %v4527 = vsel %vm2062, %v4505, 0
        %v4530 = vsel %vm2062, %v4506, 0
        %v4533 = vsel %vm2062, %v4507, 0
        %v4536 = vsel %vm2062, %v4508, 0
        %4538 = vmatprep.subr.mxu0 0.0
        %4539 = vmatpush1.msra.mxu0 %v4510
        %4540 = vmatprep.subr.mxu0 0.0
        %4541 = vmatpush1.msra.mxu0 %v4511
        %4542 = vmatprep.subr.mxu0 0.0
        %4543 = vmatpush1.msra.mxu0 %v4512
        %4544 = vmatprep.subr.mxu0 0.0
        %4545 = vmatpush1.msra.mxu0 %v4513
        %4546 = vmatprep.subr.mxu0 0.0
        %4547 = vmatpush1.msra.mxu0 0.0
        %4548 = vmatprep.subr.mxu0 0.0
        %4549 = vmatpush1.msra.mxu0 0.0
        %4550 = vmatprep.subr.mxu0 0.0
        %4551 = vmatpush1.msra.mxu0 0.0
        %4552 = vmatprep.subr.mxu0 0.0
        %4553 = vmatpush1.msra.mxu0 0.0
        %4554 = vmatprep.subr.mxu0 0.0
        %4555 = vmatpush1.msra.mxu0 0.0
        %4556 = vmatprep.subr.mxu0 0.0
        %4557 = vmatpush1.msra.mxu0 0.0
        %4558 = vmatprep.subr.mxu0 0.0
        %4559 = vmatpush1.msra.mxu0 0.0
        %4560 = vmatprep.subr.mxu0 0.0
        %4561 = vmatpush1.msra.mxu0 0.0
        %4562 = vmatprep.subr.mxu0 0.0
        %4563 = vmatpush1.msra.mxu0 0.0
        %4564 = vmatprep.subr.mxu0 0.0
        %4565 = vmatpush1.msra.mxu0 0.0
        %4566 = vmatprep.subr.mxu0 0.0
        %4567 = vmatpush1.msra.mxu0 0.0
        %4568 = vmatprep.subr.mxu0 0.0
        %4569 = vmatpush1.msra.mxu0 0.0
        %4570 = vmatprep.subr.mxu0 0.0
        %4571 = vmatpush1.msra.mxu0 0.0
        %4572 = vmatprep.subr.mxu0 0.0
        %4573 = vmatpush1.msra.mxu0 0.0
        %4574 = vmatprep.subr.mxu0 0.0
        %4575 = vmatpush1.msra.mxu0 0.0
        %4576 = vmatprep.subr.mxu0 0.0
        %4577 = vmatpush1.msra.mxu0 0.0
        %4578 = vmatprep.subr.mxu0 0.0
        %4579 = vmatpush1.msra.mxu0 0.0
        %4580 = vmatprep.subr.mxu0 0.0
        %4581 = vmatpush1.msra.mxu0 0.0
        %4582 = vmatprep.subr.mxu0 0.0
        %4583 = vmatpush1.msra.mxu0 0.0
        %4584 = vmatprep.subr.mxu0 0.0
        %4585 = vmatpush1.msra.mxu0 0.0
        %4586 = vmatprep.subr.mxu0 0.0
        %4587 = vmatpush1.msra.mxu0 0.0
        %4588 = vmatprep.subr.mxu0 0.0
        %4589 = vmatpush1.msra.mxu0 0.0
        %4590 = vmatprep.subr.mxu0 0.0
        %4591 = vmatpush1.msra.mxu0 0.0
        %4592 = vmatprep.subr.mxu0 0.0
        %4593 = vmatpush1.msra.mxu0 0.0
        %4594 = vmatprep.subr.mxu0 0.0
        %4595 = vmatpush1.msra.mxu0 0.0
        %4596 = vmatprep.subr.mxu0 0.0
        %4597 = vmatpush1.msra.mxu0 0.0
        %4598 = vmatprep.subr.mxu0 0.0
        %4599 = vmatpush1.msra.mxu0 0.0
        %4600 = vmatprep.subr.mxu0 0.0
        %4601 = vmatpush1.msra.mxu0 0.0
        %4602 = vmatprep.mubr.f32.mxu0 0.0
        %4603 = vmatmul.mubr.f32.gmra.mrb[0].mxu0 %v4515
        %v4604 = vpop.f32.mrb[0].mxu0
        %v4605 = vadd.f32 0.0, %v4604
        %v4606 = vpop.f32.mrb[0].mxu0
        %4607 = vmatprep.mubr.f32.mxu0 0.0
        %4608 = vmatmul.mubr.f32.gmra.mrb[0].mxu0 %v4518
        %v4609 = vpop.f32.mrb[0].mxu0
        %v4610 = vadd.f32 0.0, %v4609
        %v4611 = vpop.f32.mrb[0].mxu0
        %4612 = vmatprep.mubr.f32.mxu0 0.0
        %4613 = vmatmul.mubr.f32.gmra.mrb[0].mxu0 %v4521
        %v4614 = vpop.f32.mrb[0].mxu0
        %v4615 = vadd.f32 0.0, %v4614
        %v4616 = vpop.f32.mrb[0].mxu0
        %4617 = vmatprep.mubr.f32.mxu0 0.0
        %4618 = vmatmul.mubr.f32.gmra.mrb[0].mxu0 %v4524
        %v4619 = vpop.f32.mrb[0].mxu0
        %v4620 = vadd.f32 0.0, %v4619
        %v4621 = vpop.f32.mrb[0].mxu0
        %4622 = vmatprep.mubr.f32.mxu0 0.0
        %4623 = vmatmul.mubr.f32.gmra.mrb[0].mxu0 %v4527
        %v4624 = vpop.f32.mrb[0].mxu0
        %v4625 = vadd.f32 0.0, %v4624
        %v4626 = vpop.f32.mrb[0].mxu0
        %4627 = vmatprep.mubr.f32.mxu0 0.0
        %4628 = vmatmul.mubr.f32.gmra.mrb[0].mxu0 %v4530
        %v4629 = vpop.f32.mrb[0].mxu0
        %v4630 = vadd.f32 0.0, %v4629
        %v4631 = vpop.f32.mrb[0].mxu0
        %4632 = vmatprep.mubr.f32.mxu0 0.0
        %4633 = vmatmul.mubr.f32.gmra.mrb[0].mxu0 %v4533
        %v4634 = vpop.f32.mrb[0].mxu0
        %v4635 = vadd.f32 0.0, %v4634
        %v4636 = vpop.f32.mrb[0].mxu0
        %4637 = vmatprep.mubr.f32.mxu0 0.0
        %4638 = vmatmul.mubr.f32.gmra.mrb[0].mxu0 %v4536
        %v4639 = vpop.f32.mrb[0].mxu0
        %v4640 = vadd.f32 0.0, %v4639
        %v4641 = vpop.f32.mrb[0].mxu0
        %4642 = vdwg.mxu0
        %4645 = vrot.lane.b32.xlu0 %v4605, 96
        %v4646 = vpop.permute.xlu0 %4645
        %4647 = vrot.lane.b32.xlu0 %v4610, 96
        %v4648 = vpop.permute.xlu0 %4647
        %v4649 = vsel %vm2858, %v4605, 0
        %v4651 = vsel %vm2858, %v4610, 0
        %v4653 = vsel %vm2858, %v4646, 0
        %v4655 = vsel %vm2858, %v4648, 0
        %4657 = vmatprep.subr.mxu0 0.0
        %4658 = vmatpush1.xpose.msra.mxu0 %v4653
        %4659 = vmatprep.subr.mxu0 0.0
        %4660 = vmatpush1.xpose.msra.mxu0 %v4655
        %4661 = vmatprep.subr.mxu0 0.0
        %4662 = vmatpush1.xpose.msra.mxu0 0.0
        %4663 = vmatprep.subr.mxu0 0.0
        %4664 = vmatpush1.xpose.msra.mxu0 0.0
        %4665 = vmatprep.subr.mxu0 0.0
        %4666 = vmatpush1.xpose.msra.mxu0 0.0
        %4667 = vmatprep.subr.mxu0 0.0
        %4668 = vmatpush1.xpose.msra.mxu0 0.0
        %4669 = vmatprep.subr.mxu0 0.0
        %4670 = vmatpush1.xpose.msra.mxu0 0.0
        %4671 = vmatprep.subr.mxu0 0.0
        %4672 = vmatpush1.xpose.msra.mxu0 0.0
        %4673 = vmatprep.subr.mxu0 0.0
        %4674 = vmatpush1.xpose.msra.mxu0 0.0
        %4675 = vmatprep.subr.mxu0 0.0
        %4676 = vmatpush1.xpose.msra.mxu0 0.0
        %4677 = vmatprep.subr.mxu0 0.0
        %4678 = vmatpush1.xpose.msra.mxu0 0.0
        %4679 = vmatprep.subr.mxu0 0.0
        %4680 = vmatpush1.xpose.msra.mxu0 0.0
        %4681 = vmatprep.subr.mxu0 0.0
        %4682 = vmatpush1.xpose.msra.mxu0 0.0
        %4683 = vmatprep.subr.mxu0 0.0
        %4684 = vmatpush1.xpose.msra.mxu0 0.0
        %4685 = vmatprep.subr.mxu0 0.0
        %4686 = vmatpush1.xpose.msra.mxu0 0.0
        %4687 = vmatprep.subr.mxu0 0.0
        %4688 = vmatpush1.xpose.msra.mxu0 0.0
        %4689 = vmatprep.subr.mxu0 0.0
        %4690 = vmatpush1.xpose.msra.mxu0 0.0
        %4691 = vmatprep.subr.mxu0 0.0
        %4692 = vmatpush1.xpose.msra.mxu0 0.0
        %4693 = vmatprep.subr.mxu0 0.0
        %4694 = vmatpush1.xpose.msra.mxu0 0.0
        %4695 = vmatprep.subr.mxu0 0.0
        %4696 = vmatpush1.xpose.msra.mxu0 0.0
        %4697 = vmatprep.subr.mxu0 0.0
        %4698 = vmatpush1.xpose.msra.mxu0 0.0
        %4699 = vmatprep.subr.mxu0 0.0
        %4700 = vmatpush1.xpose.msra.mxu0 0.0
        %4701 = vmatprep.subr.mxu0 0.0
        %4702 = vmatpush1.xpose.msra.mxu0 0.0
        %4703 = vmatprep.subr.mxu0 0.0
        %4704 = vmatpush1.xpose.msra.mxu0 0.0
        %4705 = vmatprep.subr.mxu0 0.0
        %4706 = vmatpush1.xpose.msra.mxu0 0.0
        %4707 = vmatprep.subr.mxu0 0.0
        %4708 = vmatpush1.xpose.msra.mxu0 0.0
        %4709 = vmatprep.subr.mxu0 0.0
        %4710 = vmatpush1.xpose.msra.mxu0 0.0
        %4711 = vmatprep.subr.mxu0 0.0
        %4712 = vmatpush1.xpose.msra.mxu0 0.0
        %4713 = vmatprep.subr.mxu0 0.0
        %4714 = vmatpush1.xpose.msra.mxu0 0.0
        %4715 = vmatprep.subr.mxu0 0.0
        %4716 = vmatpush1.xpose.msra.mxu0 0.0
        %4717 = vmatprep.subr.mxu0 0.0
        %4718 = vmatpush1.xpose.msra.mxu0 0.0
        %4719 = vmatprep.subr.mxu0 0.0
        %4720 = vmatpush1.xpose.msra.mxu0 0.0
        %4721 = vmatprep.mubr.f32.mxu0 0.0
        %4722 = vmatmul.mubr.f32.gmra.mrb[0].mxu0 %v4649
        %v4723 = vpop.f32.mrb[0].mxu0
        %v4724 = vadd.f32 0.0, %v4723
        %v4725 = vpop.f32.mrb[0].mxu0
        %4726 = vmatprep.mubr.f32.mxu0 0.0
        %4727 = vmatmul.mubr.f32.gmra.mrb[0].mxu0 %v4651
        %v4728 = vpop.f32.mrb[0].mxu0
        %v4729 = vadd.f32 0.0, %v4728
        %v4730 = vpop.f32.mrb[0].mxu0
        %4731 = vdwg.mxu0
        %4734 = vrot.lane.b32.xlu0 %v4615, 96
        %v4735 = vpop.permute.xlu0 %4734
        %4736 = vrot.lane.b32.xlu0 %v4620, 96
        %v4737 = vpop.permute.xlu0 %4736
        %v4738 = vsel %vm2858, %v4615, 0
        %v4740 = vsel %vm2858, %v4620, 0
        %v4742 = vsel %vm2858, %v4735, 0
        %v4744 = vsel %vm2858, %v4737, 0
        %4746 = vmatprep.subr.mxu0 0.0
        %4747 = vmatpush1.xpose.msra.mxu0 %v4742
        %4748 = vmatprep.subr.mxu0 0.0
        %4749 = vmatpush1.xpose.msra.mxu0 %v4744
        %4750 = vmatprep.subr.mxu0 0.0
        %4751 = vmatpush1.xpose.msra.mxu0 0.0
        %4752 = vmatprep.subr.mxu0 0.0
        %4753 = vmatpush1.xpose.msra.mxu0 0.0
        %4754 = vmatprep.subr.mxu0 0.0
        %4755 = vmatpush1.xpose.msra.mxu0 0.0
        %4756 = vmatprep.subr.mxu0 0.0
        %4757 = vmatpush1.xpose.msra.mxu0 0.0
        %4758 = vmatprep.subr.mxu0 0.0
        %4759 = vmatpush1.xpose.msra.mxu0 0.0
        %4760 = vmatprep.subr.mxu0 0.0
        %4761 = vmatpush1.xpose.msra.mxu0 0.0
        %4762 = vmatprep.subr.mxu0 0.0
        %4763 = vmatpush1.xpose.msra.mxu0 0.0
        %4764 = vmatprep.subr.mxu0 0.0
        %4765 = vmatpush1.xpose.msra.mxu0 0.0
        %4766 = vmatprep.subr.mxu0 0.0
        %4767 = vmatpush1.xpose.msra.mxu0 0.0
        %4768 = vmatprep.subr.mxu0 0.0
        %4769 = vmatpush1.xpose.msra.mxu0 0.0
        %4770 = vmatprep.subr.mxu0 0.0
        %4771 = vmatpush1.xpose.msra.mxu0 0.0
        %4772 = vmatprep.subr.mxu0 0.0
        %4773 = vmatpush1.xpose.msra.mxu0 0.0
        %4774 = vmatprep.subr.mxu0 0.0
        %4775 = vmatpush1.xpose.msra.mxu0 0.0
        %4776 = vmatprep.subr.mxu0 0.0
        %4777 = vmatpush1.xpose.msra.mxu0 0.0
        %4778 = vmatprep.subr.mxu0 0.0
        %4779 = vmatpush1.xpose.msra.mxu0 0.0
        %4780 = vmatprep.subr.mxu0 0.0
        %4781 = vmatpush1.xpose.msra.mxu0 0.0
        %4782 = vmatprep.subr.mxu0 0.0
        %4783 = vmatpush1.xpose.msra.mxu0 0.0
        %4784 = vmatprep.subr.mxu0 0.0
        %4785 = vmatpush1.xpose.msra.mxu0 0.0
        %4786 = vmatprep.subr.mxu0 0.0
        %4787 = vmatpush1.xpose.msra.mxu0 0.0
        %4788 = vmatprep.subr.mxu0 0.0
        %4789 = vmatpush1.xpose.msra.mxu0 0.0
        %4790 = vmatprep.subr.mxu0 0.0
        %4791 = vmatpush1.xpose.msra.mxu0 0.0
        %4792 = vmatprep.subr.mxu0 0.0
        %4793 = vmatpush1.xpose.msra.mxu0 0.0
        %4794 = vmatprep.subr.mxu0 0.0
        %4795 = vmatpush1.xpose.msra.mxu0 0.0
        %4796 = vmatprep.subr.mxu0 0.0
        %4797 = vmatpush1.xpose.msra.mxu0 0.0
        %4798 = vmatprep.subr.mxu0 0.0
        %4799 = vmatpush1.xpose.msra.mxu0 0.0
        %4800 = vmatprep.subr.mxu0 0.0
        %4801 = vmatpush1.xpose.msra.mxu0 0.0
        %4802 = vmatprep.subr.mxu0 0.0
        %4803 = vmatpush1.xpose.msra.mxu0 0.0
        %4804 = vmatprep.subr.mxu0 0.0
        %4805 = vmatpush1.xpose.msra.mxu0 0.0
        %4806 = vmatprep.subr.mxu0 0.0
        %4807 = vmatpush1.xpose.msra.mxu0 0.0
        %4808 = vmatprep.subr.mxu0 0.0
        %4809 = vmatpush1.xpose.msra.mxu0 0.0
        %4810 = vmatprep.mubr.f32.mxu0 0.0
        %4811 = vmatmul.mubr.f32.gmra.mrb[0].mxu0 %v4738
        %v4812 = vpop.f32.mrb[0].mxu0
        %v4813 = vadd.f32 0.0, %v4812
        %v4814 = vpop.f32.mrb[0].mxu0
        %4815 = vmatprep.mubr.f32.mxu0 0.0
        %4816 = vmatmul.mubr.f32.gmra.mrb[0].mxu0 %v4740
        %v4817 = vpop.f32.mrb[0].mxu0
        %v4818 = vadd.f32 0.0, %v4817
        %v4819 = vpop.f32.mrb[0].mxu0
        %4820 = vdwg.mxu0
        %4823 = vrot.lane.b32.xlu0 %v4625, 96
        %v4824 = vpop.permute.xlu0 %4823
        %4825 = vrot.lane.b32.xlu0 %v4630, 96
        %v4826 = vpop.permute.xlu0 %4825
        %v4827 = vsel %vm2858, %v4625, 0
        %v4829 = vsel %vm2858, %v4630, 0
        %v4831 = vsel %vm2858, %v4824, 0
        %v4833 = vsel %vm2858, %v4826, 0
        %4835 = vmatprep.subr.mxu0 0.0
        %4836 = vmatpush1.xpose.msra.mxu0 %v4831
        %4837 = vmatprep.subr.mxu0 0.0
        %4838 = vmatpush1.xpose.msra.mxu0 %v4833
        %4839 = vmatprep.subr.mxu0 0.0
        %4840 = vmatpush1.xpose.msra.mxu0 0.0
        %4841 = vmatprep.subr.mxu0 0.0
        %4842 = vmatpush1.xpose.msra.mxu0 0.0
        %4843 = vmatprep.subr.mxu0 0.0
        %4844 = vmatpush1.xpose.msra.mxu0 0.0
        %4845 = vmatprep.subr.mxu0 0.0
        %4846 = vmatpush1.xpose.msra.mxu0 0.0
        %4847 = vmatprep.subr.mxu0 0.0
        %4848 = vmatpush1.xpose.msra.mxu0 0.0
        %4849 = vmatprep.subr.mxu0 0.0
        %4850 = vmatpush1.xpose.msra.mxu0 0.0
        %4851 = vmatprep.subr.mxu0 0.0
        %4852 = vmatpush1.xpose.msra.mxu0 0.0
        %4853 = vmatprep.subr.mxu0 0.0
        %4854 = vmatpush1.xpose.msra.mxu0 0.0
        %4855 = vmatprep.subr.mxu0 0.0
        %4856 = vmatpush1.xpose.msra.mxu0 0.0
        %4857 = vmatprep.subr.mxu0 0.0
        %4858 = vmatpush1.xpose.msra.mxu0 0.0
        %4859 = vmatprep.subr.mxu0 0.0
        %4860 = vmatpush1.xpose.msra.mxu0 0.0
        %4861 = vmatprep.subr.mxu0 0.0
        %4862 = vmatpush1.xpose.msra.mxu0 0.0
        %4863 = vmatprep.subr.mxu0 0.0
        %4864 = vmatpush1.xpose.msra.mxu0 0.0
        %4865 = vmatprep.subr.mxu0 0.0
        %4866 = vmatpush1.xpose.msra.mxu0 0.0
        %4867 = vmatprep.subr.mxu0 0.0
        %4868 = vmatpush1.xpose.msra.mxu0 0.0
        %4869 = vmatprep.subr.mxu0 0.0
        %4870 = vmatpush1.xpose.msra.mxu0 0.0
        %4871 = vmatprep.subr.mxu0 0.0
        %4872 = vmatpush1.xpose.msra.mxu0 0.0
        %4873 = vmatprep.subr.mxu0 0.0
        %4874 = vmatpush1.xpose.msra.mxu0 0.0
        %4875 = vmatprep.subr.mxu0 0.0
        %4876 = vmatpush1.xpose.msra.mxu0 0.0
        %4877 = vmatprep.subr.mxu0 0.0
        %4878 = vmatpush1.xpose.msra.mxu0 0.0
        %4879 = vmatprep.subr.mxu0 0.0
        %4880 = vmatpush1.xpose.msra.mxu0 0.0
        %4881 = vmatprep.subr.mxu0 0.0
        %4882 = vmatpush1.xpose.msra.mxu0 0.0
        %4883 = vmatprep.subr.mxu0 0.0
        %4884 = vmatpush1.xpose.msra.mxu0 0.0
        %4885 = vmatprep.subr.mxu0 0.0
        %4886 = vmatpush1.xpose.msra.mxu0 0.0
        %4887 = vmatprep.subr.mxu0 0.0
        %4888 = vmatpush1.xpose.msra.mxu0 0.0
        %4889 = vmatprep.subr.mxu0 0.0
        %4890 = vmatpush1.xpose.msra.mxu0 0.0
        %4891 = vmatprep.subr.mxu0 0.0
        %4892 = vmatpush1.xpose.msra.mxu0 0.0
        %4893 = vmatprep.subr.mxu0 0.0
        %4894 = vmatpush1.xpose.msra.mxu0 0.0
        %4895 = vmatprep.subr.mxu0 0.0
        %4896 = vmatpush1.xpose.msra.mxu0 0.0
        %4897 = vmatprep.subr.mxu0 0.0
        %4898 = vmatpush1.xpose.msra.mxu0 0.0
        %4899 = vmatprep.mubr.f32.mxu0 0.0
        %4900 = vmatmul.mubr.f32.gmra.mrb[0].mxu0 %v4827
        %v4901 = vpop.f32.mrb[0].mxu0
        %v4902 = vadd.f32 0.0, %v4901
        %v4903 = vpop.f32.mrb[0].mxu0
        %4904 = vmatprep.mubr.f32.mxu0 0.0
        %4905 = vmatmul.mubr.f32.gmra.mrb[0].mxu0 %v4829
        %v4906 = vpop.f32.mrb[0].mxu0
        %v4907 = vadd.f32 0.0, %v4906
        %v4908 = vpop.f32.mrb[0].mxu0
        %4909 = vdwg.mxu0
        %4912 = vrot.lane.b32.xlu0 %v4635, 96
        %v4913 = vpop.permute.xlu0 %4912
        %4914 = vrot.lane.b32.xlu0 %v4640, 96
        %v4915 = vpop.permute.xlu0 %4914
        %v4916 = vsel %vm2858, %v4635, 0
        %v4918 = vsel %vm2858, %v4640, 0
        %v4920 = vsel %vm2858, %v4913, 0
        %v4922 = vsel %vm2858, %v4915, 0
        %4924 = vmatprep.subr.mxu0 0.0
        %4925 = vmatpush1.xpose.msra.mxu0 %v4920
        %4926 = vmatprep.subr.mxu0 0.0
        %4927 = vmatpush1.xpose.msra.mxu0 %v4922
        %4928 = vmatprep.subr.mxu0 0.0
        %4929 = vmatpush1.xpose.msra.mxu0 0.0
        %4930 = vmatprep.subr.mxu0 0.0
        %4931 = vmatpush1.xpose.msra.mxu0 0.0
        %4932 = vmatprep.subr.mxu0 0.0
        %4933 = vmatpush1.xpose.msra.mxu0 0.0
        %4934 = vmatprep.subr.mxu0 0.0
        %4935 = vmatpush1.xpose.msra.mxu0 0.0
        %4936 = vmatprep.subr.mxu0 0.0
        %4937 = vmatpush1.xpose.msra.mxu0 0.0
        %4938 = vmatprep.subr.mxu0 0.0
        %4939 = vmatpush1.xpose.msra.mxu0 0.0
        %4940 = vmatprep.subr.mxu0 0.0
        %4941 = vmatpush1.xpose.msra.mxu0 0.0
        %4942 = vmatprep.subr.mxu0 0.0
        %4943 = vmatpush1.xpose.msra.mxu0 0.0
        %4944 = vmatprep.subr.mxu0 0.0
        %4945 = vmatpush1.xpose.msra.mxu0 0.0
        %4946 = vmatprep.subr.mxu0 0.0
        %4947 = vmatpush1.xpose.msra.mxu0 0.0
        %4948 = vmatprep.subr.mxu0 0.0
        %4949 = vmatpush1.xpose.msra.mxu0 0.0
        %4950 = vmatprep.subr.mxu0 0.0
        %4951 = vmatpush1.xpose.msra.mxu0 0.0
        %4952 = vmatprep.subr.mxu0 0.0
        %4953 = vmatpush1.xpose.msra.mxu0 0.0
        %4954 = vmatprep.subr.mxu0 0.0
        %4955 = vmatpush1.xpose.msra.mxu0 0.0
        %4956 = vmatprep.subr.mxu0 0.0
        %4957 = vmatpush1.xpose.msra.mxu0 0.0
        %4958 = vmatprep.subr.mxu0 0.0
        %4959 = vmatpush1.xpose.msra.mxu0 0.0
        %4960 = vmatprep.subr.mxu0 0.0
        %4961 = vmatpush1.xpose.msra.mxu0 0.0
        %4962 = vmatprep.subr.mxu0 0.0
        %4963 = vmatpush1.xpose.msra.mxu0 0.0
        %4964 = vmatprep.subr.mxu0 0.0
        %4965 = vmatpush1.xpose.msra.mxu0 0.0
        %4966 = vmatprep.subr.mxu0 0.0
        %4967 = vmatpush1.xpose.msra.mxu0 0.0
        %4968 = vmatprep.subr.mxu0 0.0
        %4969 = vmatpush1.xpose.msra.mxu0 0.0
        %4970 = vmatprep.subr.mxu0 0.0
        %4971 = vmatpush1.xpose.msra.mxu0 0.0
        %4972 = vmatprep.subr.mxu0 0.0
        %4973 = vmatpush1.xpose.msra.mxu0 0.0
        %4974 = vmatprep.subr.mxu0 0.0
        %4975 = vmatpush1.xpose.msra.mxu0 0.0
        %4976 = vmatprep.subr.mxu0 0.0
        %4977 = vmatpush1.xpose.msra.mxu0 0.0
        %4978 = vmatprep.subr.mxu0 0.0
        %4979 = vmatpush1.xpose.msra.mxu0 0.0
        %4980 = vmatprep.subr.mxu0 0.0
        %4981 = vmatpush1.xpose.msra.mxu0 0.0
        %4982 = vmatprep.subr.mxu0 0.0
        %4983 = vmatpush1.xpose.msra.mxu0 0.0
        %4984 = vmatprep.subr.mxu0 0.0
        %4985 = vmatpush1.xpose.msra.mxu0 0.0
        %4986 = vmatprep.subr.mxu0 0.0
        %4987 = vmatpush1.xpose.msra.mxu0 0.0
        %4988 = vmatprep.mubr.f32.mxu0 0.0
        %4989 = vmatmul.mubr.f32.gmra.mrb[0].mxu0 %v4916
        %v4990 = vpop.f32.mrb[0].mxu0
        %v4991 = vadd.f32 0.0, %v4990
        %v4992 = vpop.f32.mrb[0].mxu0
        %4993 = vmatprep.mubr.f32.mxu0 0.0
        %4994 = vmatmul.mubr.f32.gmra.mrb[0].mxu0 %v4918
        %v4995 = vpop.f32.mrb[0].mxu0
        %v4996 = vadd.f32 0.0, %v4995
        %v4997 = vpop.f32.mrb[0].mxu0
        %4998 = vdwg.mxu0
        %v4999 = vmul.f32 %v4724, 0.25
        %v5000 = vmul.f32 %v4729, 0.25
        %v5001 = vmul.f32 %v4813, 0.25
        %v5002 = vmul.f32 %v4818, 0.25
        %v5003 = vmul.f32 %v4902, 0.25
        %v5004 = vmul.f32 %v4907, 0.25
        %v5005 = vmul.f32 %v4991, 0.25
        %v5006 = vmul.f32 %v4996, 0.25
        %v5007 = vsel %vm2858, %v4999, -inf
        %5008 = vmax.xlane.f32.xlu0 %v5007
        %v5009 = vpop.xlane.xlu0 %5008
        %v5010 = vsel %vm2858, %v5000, -inf
        %5011 = vmax.xlane.f32.xlu0 %v5010
        %v5012 = vpop.xlane.xlu0 %5011
        %v5013 = vsel %vm2858, %v5001, -inf
        %5014 = vmax.xlane.f32.xlu0 %v5013
        %v5015 = vpop.xlane.xlu0 %5014
        %v5016 = vsel %vm2858, %v5002, -inf
        %5017 = vmax.xlane.f32.xlu0 %v5016
        %v5018 = vpop.xlane.xlu0 %5017
        %v5019 = vsel %vm2858, %v5003, -inf
        %5020 = vmax.xlane.f32.xlu0 %v5019
        %v5021 = vpop.xlane.xlu0 %5020
        %v5022 = vsel %vm2858, %v5004, -inf
        %5023 = vmax.xlane.f32.xlu0 %v5022
        %v5024 = vpop.xlane.xlu0 %5023
        %v5025 = vsel %vm2858, %v5005, -inf
        %5026 = vmax.xlane.f32.xlu0 %v5025
        %v5027 = vpop.xlane.xlu0 %5026
        %v5028 = vsel %vm2858, %v5006, -inf
        %5029 = vmax.xlane.f32.xlu0 %v5028
        %v5030 = vpop.xlane.xlu0 %5029
        %v5031 = vsub.f32 %v4999, %v5009
        %v5032 = vsub.f32 %v5000, %v5012
        %v5033 = vsub.f32 %v5001, %v5015
        %v5034 = vsub.f32 %v5002, %v5018
        %v5035 = vsub.f32 %v5003, %v5021
        %v5036 = vsub.f32 %v5004, %v5024
        %v5037 = vsub.f32 %v5005, %v5027
        %v5038 = vsub.f32 %v5006, %v5030
        %v5039 = vmul.f32 %v5031, 1.442695
        %v5040 = vpow.pop %v5039
        %v5041 = vmul.f32 %v5032, 1.442695
        %v5042 = vpow.pop %v5041
        %v5043 = vmul.f32 %v5033, 1.442695
        %v5044 = vpow.pop %v5043
        %v5045 = vmul.f32 %v5034, 1.442695
        %v5046 = vpow.pop %v5045
        %v5047 = vmul.f32 %v5035, 1.442695
        %v5048 = vpow.pop %v5047
        %v5049 = vmul.f32 %v5036, 1.442695
        %v5050 = vpow.pop %v5049
        %v5051 = vmul.f32 %v5037, 1.442695
        %v5052 = vpow.pop %v5051
        %v5053 = vmul.f32 %v5038, 1.442695
        %v5054 = vpow.pop %v5053
        %v5055 = vsel %vm2858, %v5040, 0.0
        %5056 = vadd.xlane.f32.xlu0 %v5055
        %v5057 = vpop.xlane.xlu0 %5056
        %v5058 = vsel %vm2858, %v5042, 0.0
        %5059 = vadd.xlane.f32.xlu0 %v5058
        %v5060 = vpop.xlane.xlu0 %5059
        %v5061 = vsel %vm2858, %v5044, 0.0
        %5062 = vadd.xlane.f32.xlu0 %v5061
        %v5063 = vpop.xlane.xlu0 %5062
        %v5064 = vsel %vm2858, %v5046, 0.0
        %5065 = vadd.xlane.f32.xlu0 %v5064
        %v5066 = vpop.xlane.xlu0 %5065
        %v5067 = vsel %vm2858, %v5048, 0.0
        %5068 = vadd.xlane.f32.xlu0 %v5067
        %v5069 = vpop.xlane.xlu0 %5068
        %v5070 = vsel %vm2858, %v5050, 0.0
        %5071 = vadd.xlane.f32.xlu0 %v5070
        %v5072 = vpop.xlane.xlu0 %5071
        %v5073 = vsel %vm2858, %v5052, 0.0
        %5074 = vadd.xlane.f32.xlu0 %v5073
        %v5075 = vpop.xlane.xlu0 %5074
        %v5076 = vsel %vm2858, %v5054, 0.0
        %5077 = vadd.xlane.f32.xlu0 %v5076
        %v5078 = vpop.xlane.xlu0 %5077
        %v5079 = vrcp.pop %v5057
        %v5080 = vmul.f32 %v5040, %v5079
        %v5081 = vrcp.pop %v5060
        %v5082 = vmul.f32 %v5042, %v5081
        %v5083 = vrcp.pop %v5063
        %v5084 = vmul.f32 %v5044, %v5083
        %v5085 = vrcp.pop %v5066
        %v5086 = vmul.f32 %v5046, %v5085
        %v5087 = vrcp.pop %v5069
        %v5088 = vmul.f32 %v5048, %v5087
        %v5089 = vrcp.pop %v5072
        %v5090 = vmul.f32 %v5050, %v5089
        %v5091 = vrcp.pop %v5075
        %v5092 = vmul.f32 %v5052, %v5091
        %v5093 = vrcp.pop %v5078
        %v5094 = vmul.f32 %v5054, %v5093
        %5095 = vrot.lane.b32.xlu0 %v4605, 64
        %v5096 = vpop.permute.xlu0 %5095
        %5097 = vrot.lane.b32.xlu0 %v4610, 64
        %v5098 = vpop.permute.xlu0 %5097
        %v5102 = vsel %vm2858, %v5080, 0
        %v5105 = vsel %vm2858, %v5082, 0
        %5107 = vmatprep.subr.mxu0 0.0
        %5108 = vmatpush1.msra.mxu0 %v5096
        %5109 = vmatprep.subr.mxu0 0.0
        %5110 = vmatpush1.msra.mxu0 %v5098
        %5111 = vmatprep.subr.mxu0 0.0
        %5112 = vmatpush1.msra.mxu0 0.0
        %5113 = vmatprep.subr.mxu0 0.0
        %5114 = vmatpush1.msra.mxu0 0.0
        %5115 = vmatprep.subr.mxu0 0.0
        %5116 = vmatpush1.msra.mxu0 0.0
        %5117 = vmatprep.subr.mxu0 0.0
        %5118 = vmatpush1.msra.mxu0 0.0
        %5119 = vmatprep.subr.mxu0 0.0
        %5120 = vmatpush1.msra.mxu0 0.0
        %5121 = vmatprep.subr.mxu0 0.0
        %5122 = vmatpush1.msra.mxu0 0.0
        %5123 = vmatprep.subr.mxu0 0.0
        %5124 = vmatpush1.msra.mxu0 0.0
        %5125 = vmatprep.subr.mxu0 0.0
        %5126 = vmatpush1.msra.mxu0 0.0
        %5127 = vmatprep.subr.mxu0 0.0
        %5128 = vmatpush1.msra.mxu0 0.0
        %5129 = vmatprep.subr.mxu0 0.0
        %5130 = vmatpush1.msra.mxu0 0.0
        %5131 = vmatprep.subr.mxu0 0.0
        %5132 = vmatpush1.msra.mxu0 0.0
        %5133 = vmatprep.subr.mxu0 0.0
        %5134 = vmatpush1.msra.mxu0 0.0
        %5135 = vmatprep.subr.mxu0 0.0
        %5136 = vmatpush1.msra.mxu0 0.0
        %5137 = vmatprep.subr.mxu0 0.0
        %5138 = vmatpush1.msra.mxu0 0.0
        %5139 = vmatprep.subr.mxu0 0.0
        %5140 = vmatpush1.msra.mxu0 0.0
        %5141 = vmatprep.subr.mxu0 0.0
        %5142 = vmatpush1.msra.mxu0 0.0
        %5143 = vmatprep.subr.mxu0 0.0
        %5144 = vmatpush1.msra.mxu0 0.0
        %5145 = vmatprep.subr.mxu0 0.0
        %5146 = vmatpush1.msra.mxu0 0.0
        %5147 = vmatprep.subr.mxu0 0.0
        %5148 = vmatpush1.msra.mxu0 0.0
        %5149 = vmatprep.subr.mxu0 0.0
        %5150 = vmatpush1.msra.mxu0 0.0
        %5151 = vmatprep.subr.mxu0 0.0
        %5152 = vmatpush1.msra.mxu0 0.0
        %5153 = vmatprep.subr.mxu0 0.0
        %5154 = vmatpush1.msra.mxu0 0.0
        %5155 = vmatprep.subr.mxu0 0.0
        %5156 = vmatpush1.msra.mxu0 0.0
        %5157 = vmatprep.subr.mxu0 0.0
        %5158 = vmatpush1.msra.mxu0 0.0
        %5159 = vmatprep.subr.mxu0 0.0
        %5160 = vmatpush1.msra.mxu0 0.0
        %5161 = vmatprep.subr.mxu0 0.0
        %5162 = vmatpush1.msra.mxu0 0.0
        %5163 = vmatprep.subr.mxu0 0.0
        %5164 = vmatpush1.msra.mxu0 0.0
        %5165 = vmatprep.subr.mxu0 0.0
        %5166 = vmatpush1.msra.mxu0 0.0
        %5167 = vmatprep.subr.mxu0 0.0
        %5168 = vmatpush1.msra.mxu0 0.0
        %5169 = vmatprep.subr.mxu0 0.0
        %5170 = vmatpush1.msra.mxu0 0.0
        %5171 = vmatprep.mubr.f32.mxu0 0.0
        %5172 = vmatmul.mubr.f32.gmra.mrb[0].mxu0 %v5102
        %v5173 = vpop.f32.mrb[0].mxu0
        %v5174 = vadd.f32 0.0, %v5173
        %v5175 = vpop.f32.mrb[0].mxu0
        %5176 = vmatprep.mubr.f32.mxu0 0.0
        %5177 = vmatmul.mubr.f32.gmra.mrb[0].mxu0 %v5105
        %v5178 = vpop.f32.mrb[0].mxu0
        %v5179 = vadd.f32 0.0, %v5178
        %v5180 = vpop.f32.mrb[0].mxu0
        %5181 = vdwg.mxu0
        %5182 = vrot.lane.b32.xlu0 %v4615, 64
        %v5183 = vpop.permute.xlu0 %5182
        %5184 = vrot.lane.b32.xlu0 %v4620, 64
        %v5185 = vpop.permute.xlu0 %5184
        %v5189 = vsel %vm2858, %v5084, 0
        %v5192 = vsel %vm2858, %v5086, 0
        %5194 = vmatprep.subr.mxu0 0.0
        %5195 = vmatpush1.msra.mxu0 %v5183
        %5196 = vmatprep.subr.mxu0 0.0
        %5197 = vmatpush1.msra.mxu0 %v5185
        %5198 = vmatprep.subr.mxu0 0.0
        %5199 = vmatpush1.msra.mxu0 0.0
        %5200 = vmatprep.subr.mxu0 0.0
        %5201 = vmatpush1.msra.mxu0 0.0
        %5202 = vmatprep.subr.mxu0 0.0
        %5203 = vmatpush1.msra.mxu0 0.0
        %5204 = vmatprep.subr.mxu0 0.0
        %5205 = vmatpush1.msra.mxu0 0.0
        %5206 = vmatprep.subr.mxu0 0.0
        %5207 = vmatpush1.msra.mxu0 0.0
        %5208 = vmatprep.subr.mxu0 0.0
        %5209 = vmatpush1.msra.mxu0 0.0
        %5210 = vmatprep.subr.mxu0 0.0
        %5211 = vmatpush1.msra.mxu0 0.0
        %5212 = vmatprep.subr.mxu0 0.0
        %5213 = vmatpush1.msra.mxu0 0.0
        %5214 = vmatprep.subr.mxu0 0.0
        %5215 = vmatpush1.msra.mxu0 0.0
        %5216 = vmatprep.subr.mxu0 0.0
        %5217 = vmatpush1.msra.mxu0 0.0
        %5218 = vmatprep.subr.mxu0 0.0
        %5219 = vmatpush1.msra.mxu0 0.0
        %5220 = vmatprep.subr.mxu0 0.0
        %5221 = vmatpush1.msra.mxu0 0.0
        %5222 = vmatprep.subr.mxu0 0.0
        %5223 = vmatpush1.msra.mxu0 0.0
        %5224 = vmatprep.subr.mxu0 0.0
        %5225 = vmatpush1.msra.mxu0 0.0
        %5226 = vmatprep.subr.mxu0 0.0
        %5227 = vmatpush1.msra.mxu0 0.0
        %5228 = vmatprep.subr.mxu0 0.0
        %5229 = vmatpush1.msra.mxu0 0.0
        %5230 = vmatprep.subr.mxu0 0.0
        %5231 = vmatpush1.msra.mxu0 0.0
        %5232 = vmatprep.subr.mxu0 0.0
        %5233 = vmatpush1.msra.mxu0 0.0
        %5234 = vmatprep.subr.mxu0 0.0
        %5235 = vmatpush1.msra.mxu0 0.0
        %5236 = vmatprep.subr.mxu0 0.0
        %5237 = vmatpush1.msra.mxu0 0.0
        %5238 = vmatprep.subr.mxu0 0.0
        %5239 = vmatpush1.msra.mxu0 0.0
        %5240 = vmatprep.subr.mxu0 0.0
        %5241 = vmatpush1.msra.mxu0 0.0
        %5242 = vmatprep.subr.mxu0 0.0
        %5243 = vmatpush1.msra.mxu0 0.0
        %5244 = vmatprep.subr.mxu0 0.0
        %5245 = vmatpush1.msra.mxu0 0.0
        %5246 = vmatprep.subr.mxu0 0.0
        %5247 = vmatpush1.msra.mxu0 0.0
        %5248 = vmatprep.subr.mxu0 0.0
        %5249 = vmatpush1.msra.mxu0 0.0
        %5250 = vmatprep.subr.mxu0 0.0
        %5251 = vmatpush1.msra.mxu0 0.0
        %5252 = vmatprep.subr.mxu0 0.0
        %5253 = vmatpush1.msra.mxu0 0.0
        %5254 = vmatprep.subr.mxu0 0.0
        %5255 = vmatpush1.msra.mxu0 0.0
        %5256 = vmatprep.subr.mxu0 0.0
        %5257 = vmatpush1.msra.mxu0 0.0
        %5258 = vmatprep.mubr.f32.mxu0 0.0
        %5259 = vmatmul.mubr.f32.gmra.mrb[0].mxu0 %v5189
        %v5260 = vpop.f32.mrb[0].mxu0
        %v5261 = vadd.f32 0.0, %v5260
        %v5262 = vpop.f32.mrb[0].mxu0
        %5263 = vmatprep.mubr.f32.mxu0 0.0
        %5264 = vmatmul.mubr.f32.gmra.mrb[0].mxu0 %v5192
        %v5265 = vpop.f32.mrb[0].mxu0
        %v5266 = vadd.f32 0.0, %v5265
        %v5267 = vpop.f32.mrb[0].mxu0
        %5268 = vdwg.mxu0
        %5269 = vrot.lane.b32.xlu0 %v4625, 64
        %v5270 = vpop.permute.xlu0 %5269
        %5271 = vrot.lane.b32.xlu0 %v4630, 64
        %v5272 = vpop.permute.xlu0 %5271
        %v5276 = vsel %vm2858, %v5088, 0
        %v5279 = vsel %vm2858, %v5090, 0
        %5281 = vmatprep.subr.mxu0 0.0
        %5282 = vmatpush1.msra.mxu0 %v5270
        %5283 = vmatprep.subr.mxu0 0.0
        %5284 = vmatpush1.msra.mxu0 %v5272
        %5285 = vmatprep.subr.mxu0 0.0
        %5286 = vmatpush1.msra.mxu0 0.0
        %5287 = vmatprep.subr.mxu0 0.0
        %5288 = vmatpush1.msra.mxu0 0.0
        %5289 = vmatprep.subr.mxu0 0.0
        %5290 = vmatpush1.msra.mxu0 0.0
        %5291 = vmatprep.subr.mxu0 0.0
        %5292 = vmatpush1.msra.mxu0 0.0
        %5293 = vmatprep.subr.mxu0 0.0
        %5294 = vmatpush1.msra.mxu0 0.0
        %5295 = vmatprep.subr.mxu0 0.0
        %5296 = vmatpush1.msra.mxu0 0.0
        %5297 = vmatprep.subr.mxu0 0.0
        %5298 = vmatpush1.msra.mxu0 0.0
        %5299 = vmatprep.subr.mxu0 0.0
        %5300 = vmatpush1.msra.mxu0 0.0
        %5301 = vmatprep.subr.mxu0 0.0
        %5302 = vmatpush1.msra.mxu0 0.0
        %5303 = vmatprep.subr.mxu0 0.0
        %5304 = vmatpush1.msra.mxu0 0.0
        %5305 = vmatprep.subr.mxu0 0.0
        %5306 = vmatpush1.msra.mxu0 0.0
        %5307 = vmatprep.subr.mxu0 0.0
        %5308 = vmatpush1.msra.mxu0 0.0
        %5309 = vmatprep.subr.mxu0 0.0
        %5310 = vmatpush1.msra.mxu0 0.0
        %5311 = vmatprep.subr.mxu0 0.0
        %5312 = vmatpush1.msra.mxu0 0.0
        %5313 = vmatprep.subr.mxu0 0.0
        %5314 = vmatpush1.msra.mxu0 0.0
        %5315 = vmatprep.subr.mxu0 0.0
        %5316 = vmatpush1.msra.mxu0 0.0
        %5317 = vmatprep.subr.mxu0 0.0
        %5318 = vmatpush1.msra.mxu0 0.0
        %5319 = vmatprep.subr.mxu0 0.0
        %5320 = vmatpush1.msra.mxu0 0.0
        %5321 = vmatprep.subr.mxu0 0.0
        %5322 = vmatpush1.msra.mxu0 0.0
        %5323 = vmatprep.subr.mxu0 0.0
        %5324 = vmatpush1.msra.mxu0 0.0
        %5325 = vmatprep.subr.mxu0 0.0
        %5326 = vmatpush1.msra.mxu0 0.0
        %5327 = vmatprep.subr.mxu0 0.0
        %5328 = vmatpush1.msra.mxu0 0.0
        %5329 = vmatprep.subr.mxu0 0.0
        %5330 = vmatpush1.msra.mxu0 0.0
        %5331 = vmatprep.subr.mxu0 0.0
        %5332 = vmatpush1.msra.mxu0 0.0
        %5333 = vmatprep.subr.mxu0 0.0
        %5334 = vmatpush1.msra.mxu0 0.0
        %5335 = vmatprep.subr.mxu0 0.0
        %5336 = vmatpush1.msra.mxu0 0.0
        %5337 = vmatprep.subr.mxu0 0.0
        %5338 = vmatpush1.msra.mxu0 0.0
        %5339 = vmatprep.subr.mxu0 0.0
        %5340 = vmatpush1.msra.mxu0 0.0
        %5341 = vmatprep.subr.mxu0 0.0
        %5342 = vmatpush1.msra.mxu0 0.0
        %5343 = vmatprep.subr.mxu0 0.0
        %5344 = vmatpush1.msra.mxu0 0.0
        %5345 = vmatprep.mubr.f32.mxu0 0.0
        %5346 = vmatmul.mubr.f32.gmra.mrb[0].mxu0 %v5276
        %v5347 = vpop.f32.mrb[0].mxu0
        %v5348 = vadd.f32 0.0, %v5347
        %v5349 = vpop.f32.mrb[0].mxu0
        %5350 = vmatprep.mubr.f32.mxu0 0.0
        %5351 = vmatmul.mubr.f32.gmra.mrb[0].mxu0 %v5279
        %v5352 = vpop.f32.mrb[0].mxu0
        %v5353 = vadd.f32 0.0, %v5352
        %v5354 = vpop.f32.mrb[0].mxu0
        %5355 = vdwg.mxu0
        %5356 = vrot.lane.b32.xlu0 %v4635, 64
        %v5357 = vpop.permute.xlu0 %5356
        %5358 = vrot.lane.b32.xlu0 %v4640, 64
        %v5359 = vpop.permute.xlu0 %5358
        %v5363 = vsel %vm2858, %v5092, 0
        %v5366 = vsel %vm2858, %v5094, 0
        %5368 = vmatprep.subr.mxu0 0.0
        %5369 = vmatpush1.msra.mxu0 %v5357
        %5370 = vmatprep.subr.mxu0 0.0
        %5371 = vmatpush1.msra.mxu0 %v5359
        %5372 = vmatprep.subr.mxu0 0.0
        %5373 = vmatpush1.msra.mxu0 0.0
        %5374 = vmatprep.subr.mxu0 0.0
        %5375 = vmatpush1.msra.mxu0 0.0
        %5376 = vmatprep.subr.mxu0 0.0
        %5377 = vmatpush1.msra.mxu0 0.0
        %5378 = vmatprep.subr.mxu0 0.0
        %5379 = vmatpush1.msra.mxu0 0.0
        %5380 = vmatprep.subr.mxu0 0.0
        %5381 = vmatpush1.msra.mxu0 0.0
        %5382 = vmatprep.subr.mxu0 0.0
        %5383 = vmatpush1.msra.mxu0 0.0
        %5384 = vmatprep.subr.mxu0 0.0
        %5385 = vmatpush1.msra.mxu0 0.0
        %5386 = vmatprep.subr.mxu0 0.0
        %5387 = vmatpush1.msra.mxu0 0.0
        %5388 = vmatprep.subr.mxu0 0.0
        %5389 = vmatpush1.msra.mxu0 0.0
        %5390 = vmatprep.subr.mxu0 0.0
        %5391 = vmatpush1.msra.mxu0 0.0
        %5392 = vmatprep.subr.mxu0 0.0
        %5393 = vmatpush1.msra.mxu0 0.0
        %5394 = vmatprep.subr.mxu0 0.0
        %5395 = vmatpush1.msra.mxu0 0.0
        %5396 = vmatprep.subr.mxu0 0.0
        %5397 = vmatpush1.msra.mxu0 0.0
        %5398 = vmatprep.subr.mxu0 0.0
        %5399 = vmatpush1.msra.mxu0 0.0
        %5400 = vmatprep.subr.mxu0 0.0
        %5401 = vmatpush1.msra.mxu0 0.0
        %5402 = vmatprep.subr.mxu0 0.0
        %5403 = vmatpush1.msra.mxu0 0.0
        %5404 = vmatprep.subr.mxu0 0.0
        %5405 = vmatpush1.msra.mxu0 0.0
        %5406 = vmatprep.subr.mxu0 0.0
        %5407 = vmatpush1.msra.mxu0 0.0
        %5408 = vmatprep.subr.mxu0 0.0
        %5409 = vmatpush1.msra.mxu0 0.0
        %5410 = vmatprep.subr.mxu0 0.0
        %5411 = vmatpush1.msra.mxu0 0.0
        %5412 = vmatprep.subr.mxu0 0.0
        %5413 = vmatpush1.msra.mxu0 0.0
        %5414 = vmatprep.subr.mxu0 0.0
        %5415 = vmatpush1.msra.mxu0 0.0
        %5416 = vmatprep.subr.mxu0 0.0
        %5417 = vmatpush1.msra.mxu0 0.0
        %5418 = vmatprep.subr.mxu0 0.0
        %5419 = vmatpush1.msra.mxu0 0.0
        %5420 = vmatprep.subr.mxu0 0.0
        %5421 = vmatpush1.msra.mxu0 0.0
        %5422 = vmatprep.subr.mxu0 0.0
        %5423 = vmatpush1.msra.mxu0 0.0
        %5424 = vmatprep.subr.mxu0 0.0
        %5425 = vmatpush1.msra.mxu0 0.0
        %5426 = vmatprep.subr.mxu0 0.0
        %5427 = vmatpush1.msra.mxu0 0.0
        %5428 = vmatprep.subr.mxu0 0.0
        %5429 = vmatpush1.msra.mxu0 0.0
        %5430 = vmatprep.subr.mxu0 0.0
        %5431 = vmatpush1.msra.mxu0 0.0
        %5432 = vmatprep.mubr.f32.mxu0 0.0
        %5433 = vmatmul.mubr.f32.gmra.mrb[0].mxu0 %v5363
        %v5434 = vpop.f32.mrb[0].mxu0
        %v5435 = vadd.f32 0.0, %v5434
        %v5436 = vpop.f32.mrb[0].mxu0
        %5437 = vmatprep.mubr.f32.mxu0 0.0
        %5438 = vmatmul.mubr.f32.gmra.mrb[0].mxu0 %v5366
        %v5439 = vpop.f32.mrb[0].mxu0
        %v5440 = vadd.f32 0.0, %v5439
        %v5441 = vpop.f32.mrb[0].mxu0
        %5442 = vdwg.mxu0
        %5443 = vrot.lane.b32.xlu0 %v4605, 112
        %v5444 = vpop.permute.xlu0 %5443
        %5445 = vrot.lane.b32.xlu0 %v4610, 112
        %v5446 = vpop.permute.xlu0 %5445
        %5447 = vrot.lane.b32.xlu0 %v4605, 80
        %v5448 = vpop.permute.xlu0 %5447
        %5449 = vrot.lane.b32.xlu0 %v4610, 80
        %v5450 = vpop.permute.xlu0 %5449
        %v5451 = vsel %vm2858, %v5444, 0
        %v5453 = vsel %vm2858, %v5446, 0
        %v5455 = vsel %vm2858, %v5448, 0
        %v5457 = vsel %vm2858, %v5450, 0
        %5459 = vmatprep.subr.mxu0 0.0
        %5460 = vmatpush1.xpose.msra.mxu0 %v5455
        %5461 = vmatprep.subr.mxu0 0.0
        %5462 = vmatpush1.xpose.msra.mxu0 %v5457
        %5463 = vmatprep.subr.mxu0 0.0
        %5464 = vmatpush1.xpose.msra.mxu0 0.0
        %5465 = vmatprep.subr.mxu0 0.0
        %5466 = vmatpush1.xpose.msra.mxu0 0.0
        %5467 = vmatprep.subr.mxu0 0.0
        %5468 = vmatpush1.xpose.msra.mxu0 0.0
        %5469 = vmatprep.subr.mxu0 0.0
        %5470 = vmatpush1.xpose.msra.mxu0 0.0
        %5471 = vmatprep.subr.mxu0 0.0
        %5472 = vmatpush1.xpose.msra.mxu0 0.0
        %5473 = vmatprep.subr.mxu0 0.0
        %5474 = vmatpush1.xpose.msra.mxu0 0.0
        %5475 = vmatprep.subr.mxu0 0.0
        %5476 = vmatpush1.xpose.msra.mxu0 0.0
        %5477 = vmatprep.subr.mxu0 0.0
        %5478 = vmatpush1.xpose.msra.mxu0 0.0
        %5479 = vmatprep.subr.mxu0 0.0
        %5480 = vmatpush1.xpose.msra.mxu0 0.0
        %5481 = vmatprep.subr.mxu0 0.0
        %5482 = vmatpush1.xpose.msra.mxu0 0.0
        %5483 = vmatprep.subr.mxu0 0.0
        %5484 = vmatpush1.xpose.msra.mxu0 0.0
        %5485 = vmatprep.subr.mxu0 0.0
        %5486 = vmatpush1.xpose.msra.mxu0 0.0
        %5487 = vmatprep.subr.mxu0 0.0
        %5488 = vmatpush1.xpose.msra.mxu0 0.0
        %5489 = vmatprep.subr.mxu0 0.0
        %5490 = vmatpush1.xpose.msra.mxu0 0.0
        %5491 = vmatprep.subr.mxu0 0.0
        %5492 = vmatpush1.xpose.msra.mxu0 0.0
        %5493 = vmatprep.subr.mxu0 0.0
        %5494 = vmatpush1.xpose.msra.mxu0 0.0
        %5495 = vmatprep.subr.mxu0 0.0
        %5496 = vmatpush1.xpose.msra.mxu0 0.0
        %5497 = vmatprep.subr.mxu0 0.0
        %5498 = vmatpush1.xpose.msra.mxu0 0.0
        %5499 = vmatprep.subr.mxu0 0.0
        %5500 = vmatpush1.xpose.msra.mxu0 0.0
        %5501 = vmatprep.subr.mxu0 0.0
        %5502 = vmatpush1.xpose.msra.mxu0 0.0
        %5503 = vmatprep.subr.mxu0 0.0
        %5504 = vmatpush1.xpose.msra.mxu0 0.0
        %5505 = vmatprep.subr.mxu0 0.0
        %5506 = vmatpush1.xpose.msra.mxu0 0.0
        %5507 = vmatprep.subr.mxu0 0.0
        %5508 = vmatpush1.xpose.msra.mxu0 0.0
        %5509 = vmatprep.subr.mxu0 0.0
        %5510 = vmatpush1.xpose.msra.mxu0 0.0
        %5511 = vmatprep.subr.mxu0 0.0
        %5512 = vmatpush1.xpose.msra.mxu0 0.0
        %5513 = vmatprep.subr.mxu0 0.0
        %5514 = vmatpush1.xpose.msra.mxu0 0.0
        %5515 = vmatprep.subr.mxu0 0.0
        %5516 = vmatpush1.xpose.msra.mxu0 0.0
        %5517 = vmatprep.subr.mxu0 0.0
        %5518 = vmatpush1.xpose.msra.mxu0 0.0
        %5519 = vmatprep.subr.mxu0 0.0
        %5520 = vmatpush1.xpose.msra.mxu0 0.0
        %5521 = vmatprep.subr.mxu0 0.0
        %5522 = vmatpush1.xpose.msra.mxu0 0.0
        %5523 = vmatprep.mubr.f32.mxu0 0.0
        %5524 = vmatmul.mubr.f32.gmra.mrb[0].mxu0 %v5451
        %v5525 = vpop.f32.mrb[0].mxu0
        %v5526 = vadd.f32 0.0, %v5525
        %v5527 = vpop.f32.mrb[0].mxu0
        %5528 = vmatprep.mubr.f32.mxu0 0.0
        %5529 = vmatmul.mubr.f32.gmra.mrb[0].mxu0 %v5453
        %v5530 = vpop.f32.mrb[0].mxu0
        %v5531 = vadd.f32 0.0, %v5530
        %v5532 = vpop.f32.mrb[0].mxu0
        %5533 = vdwg.mxu0
        %5534 = vrot.lane.b32.xlu0 %v4615, 112
        %v5535 = vpop.permute.xlu0 %5534
        %5536 = vrot.lane.b32.xlu0 %v4620, 112
        %v5537 = vpop.permute.xlu0 %5536
        %5538 = vrot.lane.b32.xlu0 %v4615, 80
        %v5539 = vpop.permute.xlu0 %5538
        %5540 = vrot.lane.b32.xlu0 %v4620, 80
        %v5541 = vpop.permute.xlu0 %5540
        %v5542 = vsel %vm2858, %v5535, 0
        %v5544 = vsel %vm2858, %v5537, 0
        %v5546 = vsel %vm2858, %v5539, 0
        %v5548 = vsel %vm2858, %v5541, 0
        %5550 = vmatprep.subr.mxu0 0.0
        %5551 = vmatpush1.xpose.msra.mxu0 %v5546
        %5552 = vmatprep.subr.mxu0 0.0
        %5553 = vmatpush1.xpose.msra.mxu0 %v5548
        %5554 = vmatprep.subr.mxu0 0.0
        %5555 = vmatpush1.xpose.msra.mxu0 0.0
        %5556 = vmatprep.subr.mxu0 0.0
        %5557 = vmatpush1.xpose.msra.mxu0 0.0
        %5558 = vmatprep.subr.mxu0 0.0
        %5559 = vmatpush1.xpose.msra.mxu0 0.0
        %5560 = vmatprep.subr.mxu0 0.0
        %5561 = vmatpush1.xpose.msra.mxu0 0.0
        %5562 = vmatprep.subr.mxu0 0.0
        %5563 = vmatpush1.xpose.msra.mxu0 0.0
        %5564 = vmatprep.subr.mxu0 0.0
        %5565 = vmatpush1.xpose.msra.mxu0 0.0
        %5566 = vmatprep.subr.mxu0 0.0
        %5567 = vmatpush1.xpose.msra.mxu0 0.0
        %5568 = vmatprep.subr.mxu0 0.0
        %5569 = vmatpush1.xpose.msra.mxu0 0.0
        %5570 = vmatprep.subr.mxu0 0.0
        %5571 = vmatpush1.xpose.msra.mxu0 0.0
        %5572 = vmatprep.subr.mxu0 0.0
        %5573 = vmatpush1.xpose.msra.mxu0 0.0
        %5574 = vmatprep.subr.mxu0 0.0
        %5575 = vmatpush1.xpose.msra.mxu0 0.0
        %5576 = vmatprep.subr.mxu0 0.0
        %5577 = vmatpush1.xpose.msra.mxu0 0.0
        %5578 = vmatprep.subr.mxu0 0.0
        %5579 = vmatpush1.xpose.msra.mxu0 0.0
        %5580 = vmatprep.subr.mxu0 0.0
        %5581 = vmatpush1.xpose.msra.mxu0 0.0
        %5582 = vmatprep.subr.mxu0 0.0
        %5583 = vmatpush1.xpose.msra.mxu0 0.0
        %5584 = vmatprep.subr.mxu0 0.0
        %5585 = vmatpush1.xpose.msra.mxu0 0.0
        %5586 = vmatprep.subr.mxu0 0.0
        %5587 = vmatpush1.xpose.msra.mxu0 0.0
        %5588 = vmatprep.subr.mxu0 0.0
        %5589 = vmatpush1.xpose.msra.mxu0 0.0
        %5590 = vmatprep.subr.mxu0 0.0
        %5591 = vmatpush1.xpose.msra.mxu0 0.0
        %5592 = vmatprep.subr.mxu0 0.0
        %5593 = vmatpush1.xpose.msra.mxu0 0.0
        %5594 = vmatprep.subr.mxu0 0.0
        %5595 = vmatpush1.xpose.msra.mxu0 0.0
        %5596 = vmatprep.subr.mxu0 0.0
        %5597 = vmatpush1.xpose.msra.mxu0 0.0
        %5598 = vmatprep.subr.mxu0 0.0
        %5599 = vmatpush1.xpose.msra.mxu0 0.0
        %5600 = vmatprep.subr.mxu0 0.0
        %5601 = vmatpush1.xpose.msra.mxu0 0.0
        %5602 = vmatprep.subr.mxu0 0.0
        %5603 = vmatpush1.xpose.msra.mxu0 0.0
        %5604 = vmatprep.subr.mxu0 0.0
        %5605 = vmatpush1.xpose.msra.mxu0 0.0
        %5606 = vmatprep.subr.mxu0 0.0
        %5607 = vmatpush1.xpose.msra.mxu0 0.0
        %5608 = vmatprep.subr.mxu0 0.0
        %5609 = vmatpush1.xpose.msra.mxu0 0.0
        %5610 = vmatprep.subr.mxu0 0.0
        %5611 = vmatpush1.xpose.msra.mxu0 0.0
        %5612 = vmatprep.subr.mxu0 0.0
        %5613 = vmatpush1.xpose.msra.mxu0 0.0
        %5614 = vmatprep.mubr.f32.mxu0 0.0
        %5615 = vmatmul.mubr.f32.gmra.mrb[0].mxu0 %v5542
        %v5616 = vpop.f32.mrb[0].mxu0
        %v5617 = vadd.f32 0.0, %v5616
        %v5618 = vpop.f32.mrb[0].mxu0
        %5619 = vmatprep.mubr.f32.mxu0 0.0
        %5620 = vmatmul.mubr.f32.gmra.mrb[0].mxu0 %v5544
        %v5621 = vpop.f32.mrb[0].mxu0
        %v5622 = vadd.f32 0.0, %v5621
        %v5623 = vpop.f32.mrb[0].mxu0
        %5624 = vdwg.mxu0
        %5625 = vrot.lane.b32.xlu0 %v4625, 112
        %v5626 = vpop.permute.xlu0 %5625
        %5627 = vrot.lane.b32.xlu0 %v4630, 112
        %v5628 = vpop.permute.xlu0 %5627
        %5629 = vrot.lane.b32.xlu0 %v4625, 80
        %v5630 = vpop.permute.xlu0 %5629
        %5631 = vrot.lane.b32.xlu0 %v4630, 80
        %v5632 = vpop.permute.xlu0 %5631
        %v5633 = vsel %vm2858, %v5626, 0
        %v5635 = vsel %vm2858, %v5628, 0
        %v5637 = vsel %vm2858, %v5630, 0
        %v5639 = vsel %vm2858, %v5632, 0
        %5641 = vmatprep.subr.mxu0 0.0
        %5642 = vmatpush1.xpose.msra.mxu0 %v5637
        %5643 = vmatprep.subr.mxu0 0.0
        %5644 = vmatpush1.xpose.msra.mxu0 %v5639
        %5645 = vmatprep.subr.mxu0 0.0
        %5646 = vmatpush1.xpose.msra.mxu0 0.0
        %5647 = vmatprep.subr.mxu0 0.0
        %5648 = vmatpush1.xpose.msra.mxu0 0.0
        %5649 = vmatprep.subr.mxu0 0.0
        %5650 = vmatpush1.xpose.msra.mxu0 0.0
        %5651 = vmatprep.subr.mxu0 0.0
        %5652 = vmatpush1.xpose.msra.mxu0 0.0
        %5653 = vmatprep.subr.mxu0 0.0
        %5654 = vmatpush1.xpose.msra.mxu0 0.0
        %5655 = vmatprep.subr.mxu0 0.0
        %5656 = vmatpush1.xpose.msra.mxu0 0.0
        %5657 = vmatprep.subr.mxu0 0.0
        %5658 = vmatpush1.xpose.msra.mxu0 0.0
        %5659 = vmatprep.subr.mxu0 0.0
        %5660 = vmatpush1.xpose.msra.mxu0 0.0
        %5661 = vmatprep.subr.mxu0 0.0
        %5662 = vmatpush1.xpose.msra.mxu0 0.0
        %5663 = vmatprep.subr.mxu0 0.0
        %5664 = vmatpush1.xpose.msra.mxu0 0.0
        %5665 = vmatprep.subr.mxu0 0.0
        %5666 = vmatpush1.xpose.msra.mxu0 0.0
        %5667 = vmatprep.subr.mxu0 0.0
        %5668 = vmatpush1.xpose.msra.mxu0 0.0
        %5669 = vmatprep.subr.mxu0 0.0
        %5670 = vmatpush1.xpose.msra.mxu0 0.0
        %5671 = vmatprep.subr.mxu0 0.0
        %5672 = vmatpush1.xpose.msra.mxu0 0.0
        %5673 = vmatprep.subr.mxu0 0.0
        %5674 = vmatpush1.xpose.msra.mxu0 0.0
        %5675 = vmatprep.subr.mxu0 0.0
        %5676 = vmatpush1.xpose.msra.mxu0 0.0
        %5677 = vmatprep.subr.mxu0 0.0
        %5678 = vmatpush1.xpose.msra.mxu0 0.0
        %5679 = vmatprep.subr.mxu0 0.0
        %5680 = vmatpush1.xpose.msra.mxu0 0.0
        %5681 = vmatprep.subr.mxu0 0.0
        %5682 = vmatpush1.xpose.msra.mxu0 0.0
        %5683 = vmatprep.subr.mxu0 0.0
        %5684 = vmatpush1.xpose.msra.mxu0 0.0
        %5685 = vmatprep.subr.mxu0 0.0
        %5686 = vmatpush1.xpose.msra.mxu0 0.0
        %5687 = vmatprep.subr.mxu0 0.0
        %5688 = vmatpush1.xpose.msra.mxu0 0.0
        %5689 = vmatprep.subr.mxu0 0.0
        %5690 = vmatpush1.xpose.msra.mxu0 0.0
        %5691 = vmatprep.subr.mxu0 0.0
        %5692 = vmatpush1.xpose.msra.mxu0 0.0
        %5693 = vmatprep.subr.mxu0 0.0
        %5694 = vmatpush1.xpose.msra.mxu0 0.0
        %5695 = vmatprep.subr.mxu0 0.0
        %5696 = vmatpush1.xpose.msra.mxu0 0.0
        %5697 = vmatprep.subr.mxu0 0.0
        %5698 = vmatpush1.xpose.msra.mxu0 0.0
        %5699 = vmatprep.subr.mxu0 0.0
        %5700 = vmatpush1.xpose.msra.mxu0 0.0
        %5701 = vmatprep.subr.mxu0 0.0
        %5702 = vmatpush1.xpose.msra.mxu0 0.0
        %5703 = vmatprep.subr.mxu0 0.0
        %5704 = vmatpush1.xpose.msra.mxu0 0.0
        %5705 = vmatprep.mubr.f32.mxu0 0.0
        %5706 = vmatmul.mubr.f32.gmra.mrb[0].mxu0 %v5633
        %v5707 = vpop.f32.mrb[0].mxu0
        %v5708 = vadd.f32 0.0, %v5707
        %v5709 = vpop.f32.mrb[0].mxu0
        %5710 = vmatprep.mubr.f32.mxu0 0.0
        %5711 = vmatmul.mubr.f32.gmra.mrb[0].mxu0 %v5635
        %v5712 = vpop.f32.mrb[0].mxu0
        %v5713 = vadd.f32 0.0, %v5712
        %v5714 = vpop.f32.mrb[0].mxu0
        %5715 = vdwg.mxu0
        %5716 = vrot.lane.b32.xlu0 %v4635, 112
        %v5717 = vpop.permute.xlu0 %5716
        %5718 = vrot.lane.b32.xlu0 %v4640, 112
        %v5719 = vpop.permute.xlu0 %5718
        %5720 = vrot.lane.b32.xlu0 %v4635, 80
        %v5721 = vpop.permute.xlu0 %5720
        %5722 = vrot.lane.b32.xlu0 %v4640, 80
        %v5723 = vpop.permute.xlu0 %5722
        %v5724 = vsel %vm2858, %v5717, 0
        %v5726 = vsel %vm2858, %v5719, 0
        %v5728 = vsel %vm2858, %v5721, 0
        %v5730 = vsel %vm2858, %v5723, 0
        %5732 = vmatprep.subr.mxu0 0.0
        %5733 = vmatpush1.xpose.msra.mxu0 %v5728
        %5734 = vmatprep.subr.mxu0 0.0
        %5735 = vmatpush1.xpose.msra.mxu0 %v5730
        %5736 = vmatprep.subr.mxu0 0.0
        %5737 = vmatpush1.xpose.msra.mxu0 0.0
        %5738 = vmatprep.subr.mxu0 0.0
        %5739 = vmatpush1.xpose.msra.mxu0 0.0
        %5740 = vmatprep.subr.mxu0 0.0
        %5741 = vmatpush1.xpose.msra.mxu0 0.0
        %5742 = vmatprep.subr.mxu0 0.0
        %5743 = vmatpush1.xpose.msra.mxu0 0.0
        %5744 = vmatprep.subr.mxu0 0.0
        %5745 = vmatpush1.xpose.msra.mxu0 0.0
        %5746 = vmatprep.subr.mxu0 0.0
        %5747 = vmatpush1.xpose.msra.mxu0 0.0
        %5748 = vmatprep.subr.mxu0 0.0
        %5749 = vmatpush1.xpose.msra.mxu0 0.0
        %5750 = vmatprep.subr.mxu0 0.0
        %5751 = vmatpush1.xpose.msra.mxu0 0.0
        %5752 = vmatprep.subr.mxu0 0.0
        %5753 = vmatpush1.xpose.msra.mxu0 0.0
        %5754 = vmatprep.subr.mxu0 0.0
        %5755 = vmatpush1.xpose.msra.mxu0 0.0
        %5756 = vmatprep.subr.mxu0 0.0
        %5757 = vmatpush1.xpose.msra.mxu0 0.0
        %5758 = vmatprep.subr.mxu0 0.0
        %5759 = vmatpush1.xpose.msra.mxu0 0.0
        %5760 = vmatprep.subr.mxu0 0.0
        %5761 = vmatpush1.xpose.msra.mxu0 0.0
        %5762 = vmatprep.subr.mxu0 0.0
        %5763 = vmatpush1.xpose.msra.mxu0 0.0
        %5764 = vmatprep.subr.mxu0 0.0
        %5765 = vmatpush1.xpose.msra.mxu0 0.0
        %5766 = vmatprep.subr.mxu0 0.0
        %5767 = vmatpush1.xpose.msra.mxu0 0.0
        %5768 = vmatprep.subr.mxu0 0.0
        %5769 = vmatpush1.xpose.msra.mxu0 0.0
        %5770 = vmatprep.subr.mxu0 0.0
        %5771 = vmatpush1.xpose.msra.mxu0 0.0
        %5772 = vmatprep.subr.mxu0 0.0
        %5773 = vmatpush1.xpose.msra.mxu0 0.0
        %5774 = vmatprep.subr.mxu0 0.0
        %5775 = vmatpush1.xpose.msra.mxu0 0.0
        %5776 = vmatprep.subr.mxu0 0.0
        %5777 = vmatpush1.xpose.msra.mxu0 0.0
        %5778 = vmatprep.subr.mxu0 0.0
        %5779 = vmatpush1.xpose.msra.mxu0 0.0
        %5780 = vmatprep.subr.mxu0 0.0
        %5781 = vmatpush1.xpose.msra.mxu0 0.0
        %5782 = vmatprep.subr.mxu0 0.0
        %5783 = vmatpush1.xpose.msra.mxu0 0.0
        %5784 = vmatprep.subr.mxu0 0.0
        %5785 = vmatpush1.xpose.msra.mxu0 0.0
        %5786 = vmatprep.subr.mxu0 0.0
        %5787 = vmatpush1.xpose.msra.mxu0 0.0
        %5788 = vmatprep.subr.mxu0 0.0
        %5789 = vmatpush1.xpose.msra.mxu0 0.0
        %5790 = vmatprep.subr.mxu0 0.0
        %5791 = vmatpush1.xpose.msra.mxu0 0.0
        %5792 = vmatprep.subr.mxu0 0.0
        %5793 = vmatpush1.xpose.msra.mxu0 0.0
        %5794 = vmatprep.subr.mxu0 0.0
        %5795 = vmatpush1.xpose.msra.mxu0 0.0
        %5796 = vmatprep.mubr.f32.mxu0 0.0
        %5797 = vmatmul.mubr.f32.gmra.mrb[0].mxu0 %v5724
        %v5798 = vpop.f32.mrb[0].mxu0
        %v5799 = vadd.f32 0.0, %v5798
        %v5800 = vpop.f32.mrb[0].mxu0
        %5801 = vmatprep.mubr.f32.mxu0 0.0
        %5802 = vmatmul.mubr.f32.gmra.mrb[0].mxu0 %v5726
        %v5803 = vpop.f32.mrb[0].mxu0
        %v5804 = vadd.f32 0.0, %v5803
        %v5805 = vpop.f32.mrb[0].mxu0
        %5806 = vdwg.mxu0
        %v5807 = vmul.f32 %v5526, 0.25
        %v5808 = vmul.f32 %v5531, 0.25
        %v5809 = vmul.f32 %v5617, 0.25
        %v5810 = vmul.f32 %v5622, 0.25
        %v5811 = vmul.f32 %v5708, 0.25
        %v5812 = vmul.f32 %v5713, 0.25
        %v5813 = vmul.f32 %v5799, 0.25
        %v5814 = vmul.f32 %v5804, 0.25
        %v5815 = vsel %vm2858, %v5807, -inf
        %5816 = vmax.xlane.f32.xlu0 %v5815
        %v5817 = vpop.xlane.xlu0 %5816
        %v5818 = vsel %vm2858, %v5808, -inf
        %5819 = vmax.xlane.f32.xlu0 %v5818
        %v5820 = vpop.xlane.xlu0 %5819
        %v5821 = vsel %vm2858, %v5809, -inf
        %5822 = vmax.xlane.f32.xlu0 %v5821
        %v5823 = vpop.xlane.xlu0 %5822
        %v5824 = vsel %vm2858, %v5810, -inf
        %5825 = vmax.xlane.f32.xlu0 %v5824
        %v5826 = vpop.xlane.xlu0 %5825
        %v5827 = vsel %vm2858, %v5811, -inf
        %5828 = vmax.xlane.f32.xlu0 %v5827
        %v5829 = vpop.xlane.xlu0 %5828
        %v5830 = vsel %vm2858, %v5812, -inf
        %5831 = vmax.xlane.f32.xlu0 %v5830
        %v5832 = vpop.xlane.xlu0 %5831
        %v5833 = vsel %vm2858, %v5813, -inf
        %5834 = vmax.xlane.f32.xlu0 %v5833
        %v5835 = vpop.xlane.xlu0 %5834
        %v5836 = vsel %vm2858, %v5814, -inf
        %5837 = vmax.xlane.f32.xlu0 %v5836
        %v5838 = vpop.xlane.xlu0 %5837
        %v5839 = vsub.f32 %v5807, %v5817
        %v5840 = vsub.f32 %v5808, %v5820
        %v5841 = vsub.f32 %v5809, %v5823
        %v5842 = vsub.f32 %v5810, %v5826
        %v5843 = vsub.f32 %v5811, %v5829
        %v5844 = vsub.f32 %v5812, %v5832
        %v5845 = vsub.f32 %v5813, %v5835
        %v5846 = vsub.f32 %v5814, %v5838
        %v5847 = vmul.f32 %v5839, 1.442695
        %v5848 = vpow.pop %v5847
        %v5849 = vmul.f32 %v5840, 1.442695
        %v5850 = vpow.pop %v5849
        %v5851 = vmul.f32 %v5841, 1.442695
        %v5852 = vpow.pop %v5851
        %v5853 = vmul.f32 %v5842, 1.442695
        %v5854 = vpow.pop %v5853
        %v5855 = vmul.f32 %v5843, 1.442695
        %v5856 = vpow.pop %v5855
        %v5857 = vmul.f32 %v5844, 1.442695
        %v5858 = vpow.pop %v5857
        %v5859 = vmul.f32 %v5845, 1.442695
        %v5860 = vpow.pop %v5859
        %v5861 = vmul.f32 %v5846, 1.442695
        %v5862 = vpow.pop %v5861
        %v5863 = vsel %vm2858, %v5848, 0.0
        %5864 = vadd.xlane.f32.xlu0 %v5863
        %v5865 = vpop.xlane.xlu0 %5864
        %v5866 = vsel %vm2858, %v5850, 0.0
        %5867 = vadd.xlane.f32.xlu0 %v5866
        %v5868 = vpop.xlane.xlu0 %5867
        %v5869 = vsel %vm2858, %v5852, 0.0
        %5870 = vadd.xlane.f32.xlu0 %v5869
        %v5871 = vpop.xlane.xlu0 %5870
        %v5872 = vsel %vm2858, %v5854, 0.0
        %5873 = vadd.xlane.f32.xlu0 %v5872
        %v5874 = vpop.xlane.xlu0 %5873
        %v5875 = vsel %vm2858, %v5856, 0.0
        %5876 = vadd.xlane.f32.xlu0 %v5875
        %v5877 = vpop.xlane.xlu0 %5876
        %v5878 = vsel %vm2858, %v5858, 0.0
        %5879 = vadd.xlane.f32.xlu0 %v5878
        %v5880 = vpop.xlane.xlu0 %5879
        %v5881 = vsel %vm2858, %v5860, 0.0
        %5882 = vadd.xlane.f32.xlu0 %v5881
        %v5883 = vpop.xlane.xlu0 %5882
        %v5884 = vsel %vm2858, %v5862, 0.0
        %5885 = vadd.xlane.f32.xlu0 %v5884
        %v5886 = vpop.xlane.xlu0 %5885
        %v5887 = vrcp.pop %v5865
        %v5888 = vmul.f32 %v5848, %v5887
        %v5889 = vrcp.pop %v5868
        %v5890 = vmul.f32 %v5850, %v5889
        %v5891 = vrcp.pop %v5871
        %v5892 = vmul.f32 %v5852, %v5891
        %v5893 = vrcp.pop %v5874
        %v5894 = vmul.f32 %v5854, %v5893
        %v5895 = vrcp.pop %v5877
        %v5896 = vmul.f32 %v5856, %v5895
        %v5897 = vrcp.pop %v5880
        %v5898 = vmul.f32 %v5858, %v5897
        %v5899 = vrcp.pop %v5883
        %v5900 = vmul.f32 %v5860, %v5899
        %v5901 = vrcp.pop %v5886
        %v5902 = vmul.f32 %v5862, %v5901
        %5903 = vrot.lane.b32.xlu0 %v4605, 48
        %v5904 = vpop.permute.xlu0 %5903
        %5905 = vrot.lane.b32.xlu0 %v4610, 48
        %v5906 = vpop.permute.xlu0 %5905
        %v5910 = vsel %vm2858, %v5888, 0
        %v5913 = vsel %vm2858, %v5890, 0
        %5915 = vmatprep.subr.mxu0 0.0
        %5916 = vmatpush1.msra.mxu0 %v5904
        %5917 = vmatprep.subr.mxu0 0.0
        %5918 = vmatpush1.msra.mxu0 %v5906
        %5919 = vmatprep.subr.mxu0 0.0
        %5920 = vmatpush1.msra.mxu0 0.0
        %5921 = vmatprep.subr.mxu0 0.0
        %5922 = vmatpush1.msra.mxu0 0.0
        %5923 = vmatprep.subr.mxu0 0.0
        %5924 = vmatpush1.msra.mxu0 0.0
        %5925 = vmatprep.subr.mxu0 0.0
        %5926 = vmatpush1.msra.mxu0 0.0
        %5927 = vmatprep.subr.mxu0 0.0
        %5928 = vmatpush1.msra.mxu0 0.0
        %5929 = vmatprep.subr.mxu0 0.0
        %5930 = vmatpush1.msra.mxu0 0.0
        %5931 = vmatprep.subr.mxu0 0.0
        %5932 = vmatpush1.msra.mxu0 0.0
        %5933 = vmatprep.subr.mxu0 0.0
        %5934 = vmatpush1.msra.mxu0 0.0
        %5935 = vmatprep.subr.mxu0 0.0
        %5936 = vmatpush1.msra.mxu0 0.0
        %5937 = vmatprep.subr.mxu0 0.0
        %5938 = vmatpush1.msra.mxu0 0.0
        %5939 = vmatprep.subr.mxu0 0.0
        %5940 = vmatpush1.msra.mxu0 0.0
        %5941 = vmatprep.subr.mxu0 0.0
        %5942 = vmatpush1.msra.mxu0 0.0
        %5943 = vmatprep.subr.mxu0 0.0
        %5944 = vmatpush1.msra.mxu0 0.0
        %5945 = vmatprep.subr.mxu0 0.0
        %5946 = vmatpush1.msra.mxu0 0.0
        %5947 = vmatprep.subr.mxu0 0.0
        %5948 = vmatpush1.msra.mxu0 0.0
        %5949 = vmatprep.subr.mxu0 0.0
        %5950 = vmatpush1.msra.mxu0 0.0
        %5951 = vmatprep.subr.mxu0 0.0
        %5952 = vmatpush1.msra.mxu0 0.0
        %5953 = vmatprep.subr.mxu0 0.0
        %5954 = vmatpush1.msra.mxu0 0.0
        %5955 = vmatprep.subr.mxu0 0.0
        %5956 = vmatpush1.msra.mxu0 0.0
        %5957 = vmatprep.subr.mxu0 0.0
        %5958 = vmatpush1.msra.mxu0 0.0
        %5959 = vmatprep.subr.mxu0 0.0
        %5960 = vmatpush1.msra.mxu0 0.0
        %5961 = vmatprep.subr.mxu0 0.0
        %5962 = vmatpush1.msra.mxu0 0.0
        %5963 = vmatprep.subr.mxu0 0.0
        %5964 = vmatpush1.msra.mxu0 0.0
        %5965 = vmatprep.subr.mxu0 0.0
        %5966 = vmatpush1.msra.mxu0 0.0
        %5967 = vmatprep.subr.mxu0 0.0
        %5968 = vmatpush1.msra.mxu0 0.0
        %5969 = vmatprep.subr.mxu0 0.0
        %5970 = vmatpush1.msra.mxu0 0.0
        %5971 = vmatprep.subr.mxu0 0.0
        %5972 = vmatpush1.msra.mxu0 0.0
        %5973 = vmatprep.subr.mxu0 0.0
        %5974 = vmatpush1.msra.mxu0 0.0
        %5975 = vmatprep.subr.mxu0 0.0
        %5976 = vmatpush1.msra.mxu0 0.0
        %5977 = vmatprep.subr.mxu0 0.0
        %5978 = vmatpush1.msra.mxu0 0.0
        %5979 = vmatprep.mubr.f32.mxu0 0.0
        %5980 = vmatmul.mubr.f32.gmra.mrb[0].mxu0 %v5910
        %v5981 = vpop.f32.mrb[0].mxu0
        %v5982 = vadd.f32 0.0, %v5981
        %v5983 = vpop.f32.mrb[0].mxu0
        %5984 = vmatprep.mubr.f32.mxu0 0.0
        %5985 = vmatmul.mubr.f32.gmra.mrb[0].mxu0 %v5913
        %v5986 = vpop.f32.mrb[0].mxu0
        %v5987 = vadd.f32 0.0, %v5986
        %v5988 = vpop.f32.mrb[0].mxu0
        %5989 = vdwg.mxu0
        %5990 = vrot.lane.b32.xlu0 %v4615, 48
        %v5991 = vpop.permute.xlu0 %5990
        %5992 = vrot.lane.b32.xlu0 %v4620, 48
        %v5993 = vpop.permute.xlu0 %5992
        %v5997 = vsel %vm2858, %v5892, 0
        %v6000 = vsel %vm2858, %v5894, 0
        %6002 = vmatprep.subr.mxu0 0.0
        %6003 = vmatpush1.msra.mxu0 %v5991
        %6004 = vmatprep.subr.mxu0 0.0
        %6005 = vmatpush1.msra.mxu0 %v5993
        %6006 = vmatprep.subr.mxu0 0.0
        %6007 = vmatpush1.msra.mxu0 0.0
        %6008 = vmatprep.subr.mxu0 0.0
        %6009 = vmatpush1.msra.mxu0 0.0
        %6010 = vmatprep.subr.mxu0 0.0
        %6011 = vmatpush1.msra.mxu0 0.0
        %6012 = vmatprep.subr.mxu0 0.0
        %6013 = vmatpush1.msra.mxu0 0.0
        %6014 = vmatprep.subr.mxu0 0.0
        %6015 = vmatpush1.msra.mxu0 0.0
        %6016 = vmatprep.subr.mxu0 0.0
        %6017 = vmatpush1.msra.mxu0 0.0
        %6018 = vmatprep.subr.mxu0 0.0
        %6019 = vmatpush1.msra.mxu0 0.0
        %6020 = vmatprep.subr.mxu0 0.0
        %6021 = vmatpush1.msra.mxu0 0.0
        %6022 = vmatprep.subr.mxu0 0.0
        %6023 = vmatpush1.msra.mxu0 0.0
        %6024 = vmatprep.subr.mxu0 0.0
        %6025 = vmatpush1.msra.mxu0 0.0
        %6026 = vmatprep.subr.mxu0 0.0
        %6027 = vmatpush1.msra.mxu0 0.0
        %6028 = vmatprep.subr.mxu0 0.0
        %6029 = vmatpush1.msra.mxu0 0.0
        %6030 = vmatprep.subr.mxu0 0.0
        %6031 = vmatpush1.msra.mxu0 0.0
        %6032 = vmatprep.subr.mxu0 0.0
        %6033 = vmatpush1.msra.mxu0 0.0
        %6034 = vmatprep.subr.mxu0 0.0
        %6035 = vmatpush1.msra.mxu0 0.0
        %6036 = vmatprep.subr.mxu0 0.0
        %6037 = vmatpush1.msra.mxu0 0.0
        %6038 = vmatprep.subr.mxu0 0.0
        %6039 = vmatpush1.msra.mxu0 0.0
        %6040 = vmatprep.subr.mxu0 0.0
        %6041 = vmatpush1.msra.mxu0 0.0
        %6042 = vmatprep.subr.mxu0 0.0
        %6043 = vmatpush1.msra.mxu0 0.0
        %6044 = vmatprep.subr.mxu0 0.0
        %6045 = vmatpush1.msra.mxu0 0.0
        %6046 = vmatprep.subr.mxu0 0.0
        %6047 = vmatpush1.msra.mxu0 0.0
        %6048 = vmatprep.subr.mxu0 0.0
        %6049 = vmatpush1.msra.mxu0 0.0
        %6050 = vmatprep.subr.mxu0 0.0
        %6051 = vmatpush1.msra.mxu0 0.0
        %6052 = vmatprep.subr.mxu0 0.0
        %6053 = vmatpush1.msra.mxu0 0.0
        %6054 = vmatprep.subr.mxu0 0.0
        %6055 = vmatpush1.msra.mxu0 0.0
        %6056 = vmatprep.subr.mxu0 0.0
        %6057 = vmatpush1.msra.mxu0 0.0
        %6058 = vmatprep.subr.mxu0 0.0
        %6059 = vmatpush1.msra.mxu0 0.0
        %6060 = vmatprep.subr.mxu0 0.0
        %6061 = vmatpush1.msra.mxu0 0.0
        %6062 = vmatprep.subr.mxu0 0.0
        %6063 = vmatpush1.msra.mxu0 0.0
        %6064 = vmatprep.subr.mxu0 0.0
        %6065 = vmatpush1.msra.mxu0 0.0
        %6066 = vmatprep.mubr.f32.mxu0 0.0
        %6067 = vmatmul.mubr.f32.gmra.mrb[0].mxu0 %v5997
        %v6068 = vpop.f32.mrb[0].mxu0
        %v6069 = vadd.f32 0.0, %v6068
        %v6070 = vpop.f32.mrb[0].mxu0
        %6071 = vmatprep.mubr.f32.mxu0 0.0
        %6072 = vmatmul.mubr.f32.gmra.mrb[0].mxu0 %v6000
        %v6073 = vpop.f32.mrb[0].mxu0
        %v6074 = vadd.f32 0.0, %v6073
        %v6075 = vpop.f32.mrb[0].mxu0
        %6076 = vdwg.mxu0
        %6077 = vrot.lane.b32.xlu0 %v4625, 48
        %v6078 = vpop.permute.xlu0 %6077
        %6079 = vrot.lane.b32.xlu0 %v4630, 48
        %v6080 = vpop.permute.xlu0 %6079
        %v6084 = vsel %vm2858, %v5896, 0
        %v6087 = vsel %vm2858, %v5898, 0
        %6089 = vmatprep.subr.mxu0 0.0
        %6090 = vmatpush1.msra.mxu0 %v6078
        %6091 = vmatprep.subr.mxu0 0.0
        %6092 = vmatpush1.msra.mxu0 %v6080
        %6093 = vmatprep.subr.mxu0 0.0
        %6094 = vmatpush1.msra.mxu0 0.0
        %6095 = vmatprep.subr.mxu0 0.0
        %6096 = vmatpush1.msra.mxu0 0.0
        %6097 = vmatprep.subr.mxu0 0.0
        %6098 = vmatpush1.msra.mxu0 0.0
        %6099 = vmatprep.subr.mxu0 0.0
        %6100 = vmatpush1.msra.mxu0 0.0
        %6101 = vmatprep.subr.mxu0 0.0
        %6102 = vmatpush1.msra.mxu0 0.0
        %6103 = vmatprep.subr.mxu0 0.0
        %6104 = vmatpush1.msra.mxu0 0.0
        %6105 = vmatprep.subr.mxu0 0.0
        %6106 = vmatpush1.msra.mxu0 0.0
        %6107 = vmatprep.subr.mxu0 0.0
        %6108 = vmatpush1.msra.mxu0 0.0
        %6109 = vmatprep.subr.mxu0 0.0
        %6110 = vmatpush1.msra.mxu0 0.0
        %6111 = vmatprep.subr.mxu0 0.0
        %6112 = vmatpush1.msra.mxu0 0.0
        %6113 = vmatprep.subr.mxu0 0.0
        %6114 = vmatpush1.msra.mxu0 0.0
        %6115 = vmatprep.subr.mxu0 0.0
        %6116 = vmatpush1.msra.mxu0 0.0
        %6117 = vmatprep.subr.mxu0 0.0
        %6118 = vmatpush1.msra.mxu0 0.0
        %6119 = vmatprep.subr.mxu0 0.0
        %6120 = vmatpush1.msra.mxu0 0.0
        %6121 = vmatprep.subr.mxu0 0.0
        %6122 = vmatpush1.msra.mxu0 0.0
        %6123 = vmatprep.subr.mxu0 0.0
        %6124 = vmatpush1.msra.mxu0 0.0
        %6125 = vmatprep.subr.mxu0 0.0
        %6126 = vmatpush1.msra.mxu0 0.0
        %6127 = vmatprep.subr.mxu0 0.0
        %6128 = vmatpush1.msra.mxu0 0.0
        %6129 = vmatprep.subr.mxu0 0.0
        %6130 = vmatpush1.msra.mxu0 0.0
        %6131 = vmatprep.subr.mxu0 0.0
        %6132 = vmatpush1.msra.mxu0 0.0
        %6133 = vmatprep.subr.mxu0 0.0
        %6134 = vmatpush1.msra.mxu0 0.0
        %6135 = vmatprep.subr.mxu0 0.0
        %6136 = vmatpush1.msra.mxu0 0.0
        %6137 = vmatprep.subr.mxu0 0.0
        %6138 = vmatpush1.msra.mxu0 0.0
        %6139 = vmatprep.subr.mxu0 0.0
        %6140 = vmatpush1.msra.mxu0 0.0
        %6141 = vmatprep.subr.mxu0 0.0
        %6142 = vmatpush1.msra.mxu0 0.0
        %6143 = vmatprep.subr.mxu0 0.0
        %6144 = vmatpush1.msra.mxu0 0.0
        %6145 = vmatprep.subr.mxu0 0.0
        %6146 = vmatpush1.msra.mxu0 0.0
        %6147 = vmatprep.subr.mxu0 0.0
        %6148 = vmatpush1.msra.mxu0 0.0
        %6149 = vmatprep.subr.mxu0 0.0
        %6150 = vmatpush1.msra.mxu0 0.0
        %6151 = vmatprep.subr.mxu0 0.0
        %6152 = vmatpush1.msra.mxu0 0.0
        %6153 = vmatprep.mubr.f32.mxu0 0.0
        %6154 = vmatmul.mubr.f32.gmra.mrb[0].mxu0 %v6084
        %v6155 = vpop.f32.mrb[0].mxu0
        %v6156 = vadd.f32 0.0, %v6155
        %v6157 = vpop.f32.mrb[0].mxu0
        %6158 = vmatprep.mubr.f32.mxu0 0.0
        %6159 = vmatmul.mubr.f32.gmra.mrb[0].mxu0 %v6087
        %v6160 = vpop.f32.mrb[0].mxu0
        %v6161 = vadd.f32 0.0, %v6160
        %v6162 = vpop.f32.mrb[0].mxu0
        %6163 = vdwg.mxu0
        %6164 = vrot.lane.b32.xlu0 %v4635, 48
        %v6165 = vpop.permute.xlu0 %6164
        %6166 = vrot.lane.b32.xlu0 %v4640, 48
        %v6167 = vpop.permute.xlu0 %6166
        %v6171 = vsel %vm2858, %v5900, 0
        %v6174 = vsel %vm2858, %v5902, 0
        %6176 = vmatprep.subr.mxu0 0.0
        %6177 = vmatpush1.msra.mxu0 %v6165
        %6178 = vmatprep.subr.mxu0 0.0
        %6179 = vmatpush1.msra.mxu0 %v6167
        %6180 = vmatprep.subr.mxu0 0.0
        %6181 = vmatpush1.msra.mxu0 0.0
        %6182 = vmatprep.subr.mxu0 0.0
        %6183 = vmatpush1.msra.mxu0 0.0
        %6184 = vmatprep.subr.mxu0 0.0
        %6185 = vmatpush1.msra.mxu0 0.0
        %6186 = vmatprep.subr.mxu0 0.0
        %6187 = vmatpush1.msra.mxu0 0.0
        %6188 = vmatprep.subr.mxu0 0.0
        %6189 = vmatpush1.msra.mxu0 0.0
        %6190 = vmatprep.subr.mxu0 0.0
        %6191 = vmatpush1.msra.mxu0 0.0
        %6192 = vmatprep.subr.mxu0 0.0
        %6193 = vmatpush1.msra.mxu0 0.0
        %6194 = vmatprep.subr.mxu0 0.0
        %6195 = vmatpush1.msra.mxu0 0.0
        %6196 = vmatprep.subr.mxu0 0.0
        %6197 = vmatpush1.msra.mxu0 0.0
        %6198 = vmatprep.subr.mxu0 0.0
        %6199 = vmatpush1.msra.mxu0 0.0
        %6200 = vmatprep.subr.mxu0 0.0
        %6201 = vmatpush1.msra.mxu0 0.0
        %6202 = vmatprep.subr.mxu0 0.0
        %6203 = vmatpush1.msra.mxu0 0.0
        %6204 = vmatprep.subr.mxu0 0.0
        %6205 = vmatpush1.msra.mxu0 0.0
        %6206 = vmatprep.subr.mxu0 0.0
        %6207 = vmatpush1.msra.mxu0 0.0
        %6208 = vmatprep.subr.mxu0 0.0
        %6209 = vmatpush1.msra.mxu0 0.0
        %6210 = vmatprep.subr.mxu0 0.0
        %6211 = vmatpush1.msra.mxu0 0.0
        %6212 = vmatprep.subr.mxu0 0.0
        %6213 = vmatpush1.msra.mxu0 0.0
        %6214 = vmatprep.subr.mxu0 0.0
        %6215 = vmatpush1.msra.mxu0 0.0
        %6216 = vmatprep.subr.mxu0 0.0
        %6217 = vmatpush1.msra.mxu0 0.0
        %6218 = vmatprep.subr.mxu0 0.0
        %6219 = vmatpush1.msra.mxu0 0.0
        %6220 = vmatprep.subr.mxu0 0.0
        %6221 = vmatpush1.msra.mxu0 0.0
        %6222 = vmatprep.subr.mxu0 0.0
        %6223 = vmatpush1.msra.mxu0 0.0
        %6224 = vmatprep.subr.mxu0 0.0
        %6225 = vmatpush1.msra.mxu0 0.0
        %6226 = vmatprep.subr.mxu0 0.0
        %6227 = vmatpush1.msra.mxu0 0.0
        %6228 = vmatprep.subr.mxu0 0.0
        %6229 = vmatpush1.msra.mxu0 0.0
        %6230 = vmatprep.subr.mxu0 0.0
        %6231 = vmatpush1.msra.mxu0 0.0
        %6232 = vmatprep.subr.mxu0 0.0
        %6233 = vmatpush1.msra.mxu0 0.0
        %6234 = vmatprep.subr.mxu0 0.0
        %6235 = vmatpush1.msra.mxu0 0.0
        %6236 = vmatprep.subr.mxu0 0.0
        %6237 = vmatpush1.msra.mxu0 0.0
        %6238 = vmatprep.subr.mxu0 0.0
        %6239 = vmatpush1.msra.mxu0 0.0
        %6240 = vmatprep.mubr.f32.mxu0 0.0
        %6241 = vmatmul.mubr.f32.gmra.mrb[0].mxu0 %v6171
        %v6242 = vpop.f32.mrb[0].mxu0
        %v6243 = vadd.f32 0.0, %v6242
        %v6244 = vpop.f32.mrb[0].mxu0
        %6245 = vmatprep.mubr.f32.mxu0 0.0
        %6246 = vmatmul.mubr.f32.gmra.mrb[0].mxu0 %v6174
        %v6247 = vpop.f32.mrb[0].mxu0
        %v6248 = vadd.f32 0.0, %v6247
        %v6249 = vpop.f32.mrb[0].mxu0
        %6250 = vdwg.mxu0
        %6259 = vrot.lane.b32.xlu0 %v5982, 16
        %v6260 = vpop.permute.xlu0 %6259
        %6261 = vrot.lane.b32.xlu0 %v5987, 16
        %v6262 = vpop.permute.xlu0 %6261
        %6263 = vrot.lane.b32.xlu0 %v6069, 16
        %v6264 = vpop.permute.xlu0 %6263
        %6265 = vrot.lane.b32.xlu0 %v6074, 16
        %v6266 = vpop.permute.xlu0 %6265
        %6267 = vrot.lane.b32.xlu0 %v6156, 16
        %v6268 = vpop.permute.xlu0 %6267
        %6269 = vrot.lane.b32.xlu0 %v6161, 16
        %v6270 = vpop.permute.xlu0 %6269
        %6271 = vrot.lane.b32.xlu0 %v6243, 16
        %v6272 = vpop.permute.xlu0 %6271
        %6273 = vrot.lane.b32.xlu0 %v6248, 16
        %v6274 = vpop.permute.xlu0 %6273
        %v6283 = vsel %vm2858, %v5174, %v6260
        %v6284 = vsel %vm2858, %v5179, %v6262
        %v6285 = vsel %vm2858, %v5261, %v6264
        %v6286 = vsel %vm2858, %v5266, %v6266
        %v6287 = vsel %vm2858, %v5348, %v6268
        %v6288 = vsel %vm2858, %v5353, %v6270
        %v6289 = vsel %vm2858, %v5435, %v6272
        %v6290 = vsel %vm2858, %v5440, %v6274
        %v6291 = vmax.f32 %v6283, 0.0
        %v6292 = vmax.f32 %v6284, 0.0
        %v6293 = vmax.f32 %v6285, 0.0
        %v6294 = vmax.f32 %v6286, 0.0
        %v6295 = vmax.f32 %v6287, 0.0
        %v6296 = vmax.f32 %v6288, 0.0
        %v6297 = vmax.f32 %v6289, 0.0
        %v6298 = vmax.f32 %v6290, 0.0
        %v6300 = vsel %vm2062, %v6291, 0
        %v6303 = vsel %vm2062, %v6292, 0
        %6305 = vmatprep.subr.mxu0 0.0
        %6306 = vmatpush1.xpose.msra.mxu0 %v6300
        %6307 = vmatprep.subr.mxu0 0.0
        %6308 = vmatpush1.xpose.msra.mxu0 %v6303
        %6309 = vmatprep.subr.mxu0 0.0
        %6310 = vmatpush1.xpose.msra.mxu0 0.0
        %6311 = vmatprep.subr.mxu0 0.0
        %6312 = vmatpush1.xpose.msra.mxu0 0.0
        %6313 = vmatprep.subr.mxu0 0.0
        %6314 = vmatpush1.xpose.msra.mxu0 0.0
        %6315 = vmatprep.subr.mxu0 0.0
        %6316 = vmatpush1.xpose.msra.mxu0 0.0
        %6317 = vmatprep.subr.mxu0 0.0
        %6318 = vmatpush1.xpose.msra.mxu0 0.0
        %6319 = vmatprep.subr.mxu0 0.0
        %6320 = vmatpush1.xpose.msra.mxu0 0.0
        %6321 = vmatprep.subr.mxu0 0.0
        %6322 = vmatpush1.xpose.msra.mxu0 0.0
        %6323 = vmatprep.subr.mxu0 0.0
        %6324 = vmatpush1.xpose.msra.mxu0 0.0
        %6325 = vmatprep.subr.mxu0 0.0
        %6326 = vmatpush1.xpose.msra.mxu0 0.0
        %6327 = vmatprep.subr.mxu0 0.0
        %6328 = vmatpush1.xpose.msra.mxu0 0.0
        %6329 = vmatprep.subr.mxu0 0.0
        %6330 = vmatpush1.xpose.msra.mxu0 0.0
        %6331 = vmatprep.subr.mxu0 0.0
        %6332 = vmatpush1.xpose.msra.mxu0 0.0
        %6333 = vmatprep.subr.mxu0 0.0
        %6334 = vmatpush1.xpose.msra.mxu0 0.0
        %6335 = vmatprep.subr.mxu0 0.0
        %6336 = vmatpush1.xpose.msra.mxu0 0.0
        %6337 = vmatprep.subr.mxu0 0.0
        %6338 = vmatpush1.xpose.msra.mxu0 0.0
        %6339 = vmatprep.subr.mxu0 0.0
        %6340 = vmatpush1.xpose.msra.mxu0 0.0
        %6341 = vmatprep.subr.mxu0 0.0
        %6342 = vmatpush1.xpose.msra.mxu0 0.0
        %6343 = vmatprep.subr.mxu0 0.0
        %6344 = vmatpush1.xpose.msra.mxu0 0.0
        %6345 = vmatprep.subr.mxu0 0.0
        %6346 = vmatpush1.xpose.msra.mxu0 0.0
        %6347 = vmatprep.subr.mxu0 0.0
        %6348 = vmatpush1.xpose.msra.mxu0 0.0
        %6349 = vmatprep.subr.mxu0 0.0
        %6350 = vmatpush1.xpose.msra.mxu0 0.0
        %6351 = vmatprep.subr.mxu0 0.0
        %6352 = vmatpush1.xpose.msra.mxu0 0.0
        %6353 = vmatprep.subr.mxu0 0.0
        %6354 = vmatpush1.xpose.msra.mxu0 0.0
        %6355 = vmatprep.subr.mxu0 0.0
        %6356 = vmatpush1.xpose.msra.mxu0 0.0
        %6357 = vmatprep.subr.mxu0 0.0
        %6358 = vmatpush1.xpose.msra.mxu0 0.0
        %6359 = vmatprep.subr.mxu0 0.0
        %6360 = vmatpush1.xpose.msra.mxu0 0.0
        %6361 = vmatprep.subr.mxu0 0.0
        %6362 = vmatpush1.xpose.msra.mxu0 0.0
        %6363 = vmatprep.subr.mxu0 0.0
        %6364 = vmatpush1.xpose.msra.mxu0 0.0
        %6365 = vmatprep.subr.mxu0 0.0
        %6366 = vmatpush1.xpose.msra.mxu0 0.0
        %6367 = vmatprep.subr.mxu0 0.0
        %6368 = vmatpush1.xpose.msra.mxu0 0.0
        %6369 = vmatprep.mubr.f32.mxu0 0.0
        %6370 = vmatmul.mubr.f32.gmra.mrb[0].mxu0 %v6300
        %v6371 = vpop.f32.mrb[0].mxu0
        %v6372 = vadd.f32 0.0, %v6371
        %v6373 = vpop.f32.mrb[0].mxu0
        %6374 = vmatprep.mubr.f32.mxu0 0.0
        %6375 = vmatmul.mubr.f32.gmra.mrb[0].mxu0 %v6303
        %v6376 = vpop.f32.mrb[0].mxu0
        %v6377 = vadd.f32 0.0, %v6376
        %v6378 = vpop.f32.mrb[0].mxu0
        %6379 = vdwg.mxu0
        %v6381 = vsel %vm2062, %v6293, 0
        %v6384 = vsel %vm2062, %v6294, 0
        %6386 = vmatprep.subr.mxu0 0.0
        %6387 = vmatpush1.xpose.msra.mxu0 %v6381
        %6388 = vmatprep.subr.mxu0 0.0
        %6389 = vmatpush1.xpose.msra.mxu0 %v6384
        %6390 = vmatprep.subr.mxu0 0.0
        %6391 = vmatpush1.xpose.msra.mxu0 0.0
        %6392 = vmatprep.subr.mxu0 0.0
        %6393 = vmatpush1.xpose.msra.mxu0 0.0
        %6394 = vmatprep.subr.mxu0 0.0
        %6395 = vmatpush1.xpose.msra.mxu0 0.0
        %6396 = vmatprep.subr.mxu0 0.0
        %6397 = vmatpush1.xpose.msra.mxu0 0.0
        %6398 = vmatprep.subr.mxu0 0.0
        %6399 = vmatpush1.xpose.msra.mxu0 0.0
        %6400 = vmatprep.subr.mxu0 0.0
        %6401 = vmatpush1.xpose.msra.mxu0 0.0
        %6402 = vmatprep.subr.mxu0 0.0
        %6403 = vmatpush1.xpose.msra.mxu0 0.0
        %6404 = vmatprep.subr.mxu0 0.0
        %6405 = vmatpush1.xpose.msra.mxu0 0.0
        %6406 = vmatprep.subr.mxu0 0.0
        %6407 = vmatpush1.xpose.msra.mxu0 0.0
        %6408 = vmatprep.subr.mxu0 0.0
        %6409 = vmatpush1.xpose.msra.mxu0 0.0
        %6410 = vmatprep.subr.mxu0 0.0
        %6411 = vmatpush1.xpose.msra.mxu0 0.0
        %6412 = vmatprep.subr.mxu0 0.0
        %6413 = vmatpush1.xpose.msra.mxu0 0.0
        %6414 = vmatprep.subr.mxu0 0.0
        %6415 = vmatpush1.xpose.msra.mxu0 0.0
        %6416 = vmatprep.subr.mxu0 0.0
        %6417 = vmatpush1.xpose.msra.mxu0 0.0
        %6418 = vmatprep.subr.mxu0 0.0
        %6419 = vmatpush1.xpose.msra.mxu0 0.0
        %6420 = vmatprep.subr.mxu0 0.0
        %6421 = vmatpush1.xpose.msra.mxu0 0.0
        %6422 = vmatprep.subr.mxu0 0.0
        %6423 = vmatpush1.xpose.msra.mxu0 0.0
        %6424 = vmatprep.subr.mxu0 0.0
        %6425 = vmatpush1.xpose.msra.mxu0 0.0
        %6426 = vmatprep.subr.mxu0 0.0
        %6427 = vmatpush1.xpose.msra.mxu0 0.0
        %6428 = vmatprep.subr.mxu0 0.0
        %6429 = vmatpush1.xpose.msra.mxu0 0.0
        %6430 = vmatprep.subr.mxu0 0.0
        %6431 = vmatpush1.xpose.msra.mxu0 0.0
        %6432 = vmatprep.subr.mxu0 0.0
        %6433 = vmatpush1.xpose.msra.mxu0 0.0
        %6434 = vmatprep.subr.mxu0 0.0
        %6435 = vmatpush1.xpose.msra.mxu0 0.0
        %6436 = vmatprep.subr.mxu0 0.0
        %6437 = vmatpush1.xpose.msra.mxu0 0.0
        %6438 = vmatprep.subr.mxu0 0.0
        %6439 = vmatpush1.xpose.msra.mxu0 0.0
        %6440 = vmatprep.subr.mxu0 0.0
        %6441 = vmatpush1.xpose.msra.mxu0 0.0
        %6442 = vmatprep.subr.mxu0 0.0
        %6443 = vmatpush1.xpose.msra.mxu0 0.0
        %6444 = vmatprep.subr.mxu0 0.0
        %6445 = vmatpush1.xpose.msra.mxu0 0.0
        %6446 = vmatprep.subr.mxu0 0.0
        %6447 = vmatpush1.xpose.msra.mxu0 0.0
        %6448 = vmatprep.subr.mxu0 0.0
        %6449 = vmatpush1.xpose.msra.mxu0 0.0
        %6450 = vmatprep.mubr.f32.mxu0 0.0
        %6451 = vmatmul.mubr.f32.gmra.mrb[0].mxu0 %v6381
        %v6452 = vpop.f32.mrb[0].mxu0
        %v6453 = vadd.f32 0.0, %v6452
        %v6454 = vpop.f32.mrb[0].mxu0
        %6455 = vmatprep.mubr.f32.mxu0 0.0
        %6456 = vmatmul.mubr.f32.gmra.mrb[0].mxu0 %v6384
        %v6457 = vpop.f32.mrb[0].mxu0
        %v6458 = vadd.f32 0.0, %v6457
        %v6459 = vpop.f32.mrb[0].mxu0
        %6460 = vdwg.mxu0
        %v6462 = vsel %vm2062, %v6295, 0
        %v6465 = vsel %vm2062, %v6296, 0
        %6467 = vmatprep.subr.mxu0 0.0
        %6468 = vmatpush1.xpose.msra.mxu0 %v6462
        %6469 = vmatprep.subr.mxu0 0.0
        %6470 = vmatpush1.xpose.msra.mxu0 %v6465
        %6471 = vmatprep.subr.mxu0 0.0
        %6472 = vmatpush1.xpose.msra.mxu0 0.0
        %6473 = vmatprep.subr.mxu0 0.0
        %6474 = vmatpush1.xpose.msra.mxu0 0.0
        %6475 = vmatprep.subr.mxu0 0.0
        %6476 = vmatpush1.xpose.msra.mxu0 0.0
        %6477 = vmatprep.subr.mxu0 0.0
        %6478 = vmatpush1.xpose.msra.mxu0 0.0
        %6479 = vmatprep.subr.mxu0 0.0
        %6480 = vmatpush1.xpose.msra.mxu0 0.0
        %6481 = vmatprep.subr.mxu0 0.0
        %6482 = vmatpush1.xpose.msra.mxu0 0.0
        %6483 = vmatprep.subr.mxu0 0.0
        %6484 = vmatpush1.xpose.msra.mxu0 0.0
        %6485 = vmatprep.subr.mxu0 0.0
        %6486 = vmatpush1.xpose.msra.mxu0 0.0
        %6487 = vmatprep.subr.mxu0 0.0
        %6488 = vmatpush1.xpose.msra.mxu0 0.0
        %6489 = vmatprep.subr.mxu0 0.0
        %6490 = vmatpush1.xpose.msra.mxu0 0.0
        %6491 = vmatprep.subr.mxu0 0.0
        %6492 = vmatpush1.xpose.msra.mxu0 0.0
        %6493 = vmatprep.subr.mxu0 0.0
        %6494 = vmatpush1.xpose.msra.mxu0 0.0
        %6495 = vmatprep.subr.mxu0 0.0
        %6496 = vmatpush1.xpose.msra.mxu0 0.0
        %6497 = vmatprep.subr.mxu0 0.0
        %6498 = vmatpush1.xpose.msra.mxu0 0.0
        %6499 = vmatprep.subr.mxu0 0.0
        %6500 = vmatpush1.xpose.msra.mxu0 0.0
        %6501 = vmatprep.subr.mxu0 0.0
        %6502 = vmatpush1.xpose.msra.mxu0 0.0
        %6503 = vmatprep.subr.mxu0 0.0
        %6504 = vmatpush1.xpose.msra.mxu0 0.0
        %6505 = vmatprep.subr.mxu0 0.0
        %6506 = vmatpush1.xpose.msra.mxu0 0.0
        %6507 = vmatprep.subr.mxu0 0.0
        %6508 = vmatpush1.xpose.msra.mxu0 0.0
        %6509 = vmatprep.subr.mxu0 0.0
        %6510 = vmatpush1.xpose.msra.mxu0 0.0
        %6511 = vmatprep.subr.mxu0 0.0
        %6512 = vmatpush1.xpose.msra.mxu0 0.0
        %6513 = vmatprep.subr.mxu0 0.0
        %6514 = vmatpush1.xpose.msra.mxu0 0.0
        %6515 = vmatprep.subr.mxu0 0.0
        %6516 = vmatpush1.xpose.msra.mxu0 0.0
        %6517 = vmatprep.subr.mxu0 0.0
        %6518 = vmatpush1.xpose.msra.mxu0 0.0
        %6519 = vmatprep.subr.mxu0 0.0
        %6520 = vmatpush1.xpose.msra.mxu0 0.0
        %6521 = vmatprep.subr.mxu0 0.0
        %6522 = vmatpush1.xpose.msra.mxu0 0.0
        %6523 = vmatprep.subr.mxu0 0.0
        %6524 = vmatpush1.xpose.msra.mxu0 0.0
        %6525 = vmatprep.subr.mxu0 0.0
        %6526 = vmatpush1.xpose.msra.mxu0 0.0
        %6527 = vmatprep.subr.mxu0 0.0
        %6528 = vmatpush1.xpose.msra.mxu0 0.0
        %6529 = vmatprep.subr.mxu0 0.0
        %6530 = vmatpush1.xpose.msra.mxu0 0.0
        %6531 = vmatprep.mubr.f32.mxu0 0.0
        %6532 = vmatmul.mubr.f32.gmra.mrb[0].mxu0 %v6462
        %v6533 = vpop.f32.mrb[0].mxu0
        %v6534 = vadd.f32 0.0, %v6533
        %v6535 = vpop.f32.mrb[0].mxu0
        %6536 = vmatprep.mubr.f32.mxu0 0.0
        %6537 = vmatmul.mubr.f32.gmra.mrb[0].mxu0 %v6465
        %v6538 = vpop.f32.mrb[0].mxu0
        %v6539 = vadd.f32 0.0, %v6538
        %v6540 = vpop.f32.mrb[0].mxu0
        %6541 = vdwg.mxu0
        %v6543 = vsel %vm2062, %v6297, 0
        %v6546 = vsel %vm2062, %v6298, 0
        %6548 = vmatprep.subr.mxu0 0.0
        %6549 = vmatpush1.xpose.msra.mxu0 %v6543
        %6550 = vmatprep.subr.mxu0 0.0
        %6551 = vmatpush1.xpose.msra.mxu0 %v6546
        %6552 = vmatprep.subr.mxu0 0.0
        %6553 = vmatpush1.xpose.msra.mxu0 0.0
        %6554 = vmatprep.subr.mxu0 0.0
        %6555 = vmatpush1.xpose.msra.mxu0 0.0
        %6556 = vmatprep.subr.mxu0 0.0
        %6557 = vmatpush1.xpose.msra.mxu0 0.0
        %6558 = vmatprep.subr.mxu0 0.0
        %6559 = vmatpush1.xpose.msra.mxu0 0.0
        %6560 = vmatprep.subr.mxu0 0.0
        %6561 = vmatpush1.xpose.msra.mxu0 0.0
        %6562 = vmatprep.subr.mxu0 0.0
        %6563 = vmatpush1.xpose.msra.mxu0 0.0
        %6564 = vmatprep.subr.mxu0 0.0
        %6565 = vmatpush1.xpose.msra.mxu0 0.0
        %6566 = vmatprep.subr.mxu0 0.0
        %6567 = vmatpush1.xpose.msra.mxu0 0.0
        %6568 = vmatprep.subr.mxu0 0.0
        %6569 = vmatpush1.xpose.msra.mxu0 0.0
        %6570 = vmatprep.subr.mxu0 0.0
        %6571 = vmatpush1.xpose.msra.mxu0 0.0
        %6572 = vmatprep.subr.mxu0 0.0
        %6573 = vmatpush1.xpose.msra.mxu0 0.0
        %6574 = vmatprep.subr.mxu0 0.0
        %6575 = vmatpush1.xpose.msra.mxu0 0.0
        %6576 = vmatprep.subr.mxu0 0.0
        %6577 = vmatpush1.xpose.msra.mxu0 0.0
        %6578 = vmatprep.subr.mxu0 0.0
        %6579 = vmatpush1.xpose.msra.mxu0 0.0
        %6580 = vmatprep.subr.mxu0 0.0
        %6581 = vmatpush1.xpose.msra.mxu0 0.0
        %6582 = vmatprep.subr.mxu0 0.0
        %6583 = vmatpush1.xpose.msra.mxu0 0.0
        %6584 = vmatprep.subr.mxu0 0.0
        %6585 = vmatpush1.xpose.msra.mxu0 0.0
        %6586 = vmatprep.subr.mxu0 0.0
        %6587 = vmatpush1.xpose.msra.mxu0 0.0
        %6588 = vmatprep.subr.mxu0 0.0
        %6589 = vmatpush1.xpose.msra.mxu0 0.0
        %6590 = vmatprep.subr.mxu0 0.0
        %6591 = vmatpush1.xpose.msra.mxu0 0.0
        %6592 = vmatprep.subr.mxu0 0.0
        %6593 = vmatpush1.xpose.msra.mxu0 0.0
        %6594 = vmatprep.subr.mxu0 0.0
        %6595 = vmatpush1.xpose.msra.mxu0 0.0
        %6596 = vmatprep.subr.mxu0 0.0
        %6597 = vmatpush1.xpose.msra.mxu0 0.0
        %6598 = vmatprep.subr.mxu0 0.0
        %6599 = vmatpush1.xpose.msra.mxu0 0.0
        %6600 = vmatprep.subr.mxu0 0.0
        %6601 = vmatpush1.xpose.msra.mxu0 0.0
        %6602 = vmatprep.subr.mxu0 0.0
        %6603 = vmatpush1.xpose.msra.mxu0 0.0
        %6604 = vmatprep.subr.mxu0 0.0
        %6605 = vmatpush1.xpose.msra.mxu0 0.0
        %6606 = vmatprep.subr.mxu0 0.0
        %6607 = vmatpush1.xpose.msra.mxu0 0.0
        %6608 = vmatprep.subr.mxu0 0.0
        %6609 = vmatpush1.xpose.msra.mxu0 0.0
        %6610 = vmatprep.subr.mxu0 0.0
        %6611 = vmatpush1.xpose.msra.mxu0 0.0
        %6612 = vmatprep.mubr.f32.mxu0 0.0
        %6613 = vmatmul.mubr.f32.gmra.mrb[0].mxu0 %v6543
        %v6614 = vpop.f32.mrb[0].mxu0
        %v6615 = vadd.f32 0.0, %v6614
        %v6616 = vpop.f32.mrb[0].mxu0
        %6617 = vmatprep.mubr.f32.mxu0 0.0
        %6618 = vmatmul.mubr.f32.gmra.mrb[0].mxu0 %v6546
        %v6619 = vpop.f32.mrb[0].mxu0
        %v6620 = vadd.f32 0.0, %v6619
        %v6621 = vpop.f32.mrb[0].mxu0
        %6622 = vdwg.mxu0
        %v6623 = vmul.f32 %v6372, 0.17677669
        %v6624 = vmul.f32 %v6377, 0.17677669
        %v6625 = vmul.f32 %v6453, 0.17677669
        %v6626 = vmul.f32 %v6458, 0.17677669
        %v6627 = vmul.f32 %v6534, 0.17677669
        %v6628 = vmul.f32 %v6539, 0.17677669
        %v6629 = vmul.f32 %v6615, 0.17677669
        %v6630 = vmul.f32 %v6620, 0.17677669
        %v6631 = vmul.f32 %v2696, %v2696
        %v6632 = vmul.f32 %v2701, %v2701
        %v6633 = vmul.f32 %v2706, %v2706
        %v6634 = vmul.f32 %v2711, %v2711
        %v6635 = vmul.f32 %v2716, %v2716
        %v6636 = vmul.f32 %v2721, %v2721
        %v6637 = vmul.f32 %v2726, %v2726
        %v6638 = vmul.f32 %v2731, %v2731
        %v6639 = vsel %vm2734, %v6631, 0.0
        %6640 = vadd.xlane.f32.xlu0 %v6639
        %v6641 = vpop.xlane.xlu0 %6640
        %v6642 = vsel %vm2734, %v6632, 0.0
        %6643 = vadd.xlane.f32.xlu0 %v6642
        %v6644 = vpop.xlane.xlu0 %6643
        %v6645 = vsel %vm2734, %v6633, 0.0
        %6646 = vadd.xlane.f32.xlu0 %v6645
        %v6647 = vpop.xlane.xlu0 %6646
        %v6648 = vsel %vm2734, %v6634, 0.0
        %6649 = vadd.xlane.f32.xlu0 %v6648
        %v6650 = vpop.xlane.xlu0 %6649
        %v6651 = vsel %vm2734, %v6635, 0.0
        %6652 = vadd.xlane.f32.xlu0 %v6651
        %v6653 = vpop.xlane.xlu0 %6652
        %v6654 = vsel %vm2734, %v6636, 0.0
        %6655 = vadd.xlane.f32.xlu0 %v6654
        %v6656 = vpop.xlane.xlu0 %6655
        %v6657 = vsel %vm2734, %v6637, 0.0
        %6658 = vadd.xlane.f32.xlu0 %v6657
        %v6659 = vpop.xlane.xlu0 %6658
        %v6660 = vsel %vm2734, %v6638, 0.0
        %6661 = vadd.xlane.f32.xlu0 %v6660
        %v6662 = vpop.xlane.xlu0 %6661
        %v6664 = vsel %vm2734, %v2696, 0
        %v6667 = vsel %vm2734, %v2701, 0
        %6669 = vmatprep.subr.mxu0 0.0
        %6670 = vmatpush1.xpose.msra.mxu0 %v6664
        %6671 = vmatprep.subr.mxu0 0.0
        %6672 = vmatpush1.xpose.msra.mxu0 %v6667
        %6673 = vmatprep.subr.mxu0 0.0
        %6674 = vmatpush1.xpose.msra.mxu0 0.0
        %6675 = vmatprep.subr.mxu0 0.0
        %6676 = vmatpush1.xpose.msra.mxu0 0.0
        %6677 = vmatprep.subr.mxu0 0.0
        %6678 = vmatpush1.xpose.msra.mxu0 0.0
        %6679 = vmatprep.subr.mxu0 0.0
        %6680 = vmatpush1.xpose.msra.mxu0 0.0
        %6681 = vmatprep.subr.mxu0 0.0
        %6682 = vmatpush1.xpose.msra.mxu0 0.0
        %6683 = vmatprep.subr.mxu0 0.0
        %6684 = vmatpush1.xpose.msra.mxu0 0.0
        %6685 = vmatprep.subr.mxu0 0.0
        %6686 = vmatpush1.xpose.msra.mxu0 0.0
        %6687 = vmatprep.subr.mxu0 0.0
        %6688 = vmatpush1.xpose.msra.mxu0 0.0
        %6689 = vmatprep.subr.mxu0 0.0
        %6690 = vmatpush1.xpose.msra.mxu0 0.0
        %6691 = vmatprep.subr.mxu0 0.0
        %6692 = vmatpush1.xpose.msra.mxu0 0.0
        %6693 = vmatprep.subr.mxu0 0.0
        %6694 = vmatpush1.xpose.msra.mxu0 0.0
        %6695 = vmatprep.subr.mxu0 0.0
        %6696 = vmatpush1.xpose.msra.mxu0 0.0
        %6697 = vmatprep.subr.mxu0 0.0
        %6698 = vmatpush1.xpose.msra.mxu0 0.0
        %6699 = vmatprep.subr.mxu0 0.0
        %6700 = vmatpush1.xpose.msra.mxu0 0.0
        %6701 = vmatprep.subr.mxu0 0.0
        %6702 = vmatpush1.xpose.msra.mxu0 0.0
        %6703 = vmatprep.subr.mxu0 0.0
        %6704 = vmatpush1.xpose.msra.mxu0 0.0
        %6705 = vmatprep.subr.mxu0 0.0
        %6706 = vmatpush1.xpose.msra.mxu0 0.0
        %6707 = vmatprep.subr.mxu0 0.0
        %6708 = vmatpush1.xpose.msra.mxu0 0.0
        %6709 = vmatprep.subr.mxu0 0.0
        %6710 = vmatpush1.xpose.msra.mxu0 0.0
        %6711 = vmatprep.subr.mxu0 0.0
        %6712 = vmatpush1.xpose.msra.mxu0 0.0
        %6713 = vmatprep.subr.mxu0 0.0
        %6714 = vmatpush1.xpose.msra.mxu0 0.0
        %6715 = vmatprep.subr.mxu0 0.0
        %6716 = vmatpush1.xpose.msra.mxu0 0.0
        %6717 = vmatprep.subr.mxu0 0.0
        %6718 = vmatpush1.xpose.msra.mxu0 0.0
        %6719 = vmatprep.subr.mxu0 0.0
        %6720 = vmatpush1.xpose.msra.mxu0 0.0
        %6721 = vmatprep.subr.mxu0 0.0
        %6722 = vmatpush1.xpose.msra.mxu0 0.0
        %6723 = vmatprep.subr.mxu0 0.0
        %6724 = vmatpush1.xpose.msra.mxu0 0.0
        %6725 = vmatprep.subr.mxu0 0.0
        %6726 = vmatpush1.xpose.msra.mxu0 0.0
        %6727 = vmatprep.subr.mxu0 0.0
        %6728 = vmatpush1.xpose.msra.mxu0 0.0
        %6729 = vmatprep.subr.mxu0 0.0
        %6730 = vmatpush1.xpose.msra.mxu0 0.0
        %6731 = vmatprep.subr.mxu0 0.0
        %6732 = vmatpush1.xpose.msra.mxu0 0.0
        %6733 = vmatprep.mubr.f32.mxu0 0.0
        %6734 = vmatmul.mubr.f32.gmra.mrb[0].mxu0 %v6664
        %v6735 = vpop.f32.mrb[0].mxu0
        %v6736 = vadd.f32 0.0, %v6735
        %v6737 = vpop.f32.mrb[0].mxu0
        %6738 = vmatprep.mubr.f32.mxu0 0.0
        %6739 = vmatmul.mubr.f32.gmra.mrb[0].mxu0 %v6667
        %v6740 = vpop.f32.mrb[0].mxu0
        %v6741 = vadd.f32 0.0, %v6740
        %v6742 = vpop.f32.mrb[0].mxu0
        %6743 = vdwg.mxu0
        %v6745 = vsel %vm2734, %v2706, 0
        %v6748 = vsel %vm2734, %v2711, 0
        %6750 = vmatprep.subr.mxu0 0.0
        %6751 = vmatpush1.xpose.msra.mxu0 %v6745
        %6752 = vmatprep.subr.mxu0 0.0
        %6753 = vmatpush1.xpose.msra.mxu0 %v6748
        %6754 = vmatprep.subr.mxu0 0.0
        %6755 = vmatpush1.xpose.msra.mxu0 0.0
        %6756 = vmatprep.subr.mxu0 0.0
        %6757 = vmatpush1.xpose.msra.mxu0 0.0
        %6758 = vmatprep.subr.mxu0 0.0
        %6759 = vmatpush1.xpose.msra.mxu0 0.0
        %6760 = vmatprep.subr.mxu0 0.0
        %6761 = vmatpush1.xpose.msra.mxu0 0.0
        %6762 = vmatprep.subr.mxu0 0.0
        %6763 = vmatpush1.xpose.msra.mxu0 0.0
        %6764 = vmatprep.subr.mxu0 0.0
        %6765 = vmatpush1.xpose.msra.mxu0 0.0
        %6766 = vmatprep.subr.mxu0 0.0
        %6767 = vmatpush1.xpose.msra.mxu0 0.0
        %6768 = vmatprep.subr.mxu0 0.0
        %6769 = vmatpush1.xpose.msra.mxu0 0.0
        %6770 = vmatprep.subr.mxu0 0.0
        %6771 = vmatpush1.xpose.msra.mxu0 0.0
        %6772 = vmatprep.subr.mxu0 0.0
        %6773 = vmatpush1.xpose.msra.mxu0 0.0
        %6774 = vmatprep.subr.mxu0 0.0
        %6775 = vmatpush1.xpose.msra.mxu0 0.0
        %6776 = vmatprep.subr.mxu0 0.0
        %6777 = vmatpush1.xpose.msra.mxu0 0.0
        %6778 = vmatprep.subr.mxu0 0.0
        %6779 = vmatpush1.xpose.msra.mxu0 0.0
        %6780 = vmatprep.subr.mxu0 0.0
        %6781 = vmatpush1.xpose.msra.mxu0 0.0
        %6782 = vmatprep.subr.mxu0 0.0
        %6783 = vmatpush1.xpose.msra.mxu0 0.0
        %6784 = vmatprep.subr.mxu0 0.0
        %6785 = vmatpush1.xpose.msra.mxu0 0.0
        %6786 = vmatprep.subr.mxu0 0.0
        %6787 = vmatpush1.xpose.msra.mxu0 0.0
        %6788 = vmatprep.subr.mxu0 0.0
        %6789 = vmatpush1.xpose.msra.mxu0 0.0
        %6790 = vmatprep.subr.mxu0 0.0
        %6791 = vmatpush1.xpose.msra.mxu0 0.0
        %6792 = vmatprep.subr.mxu0 0.0
        %6793 = vmatpush1.xpose.msra.mxu0 0.0
        %6794 = vmatprep.subr.mxu0 0.0
        %6795 = vmatpush1.xpose.msra.mxu0 0.0
        %6796 = vmatprep.subr.mxu0 0.0
        %6797 = vmatpush1.xpose.msra.mxu0 0.0
        %6798 = vmatprep.subr.mxu0 0.0
        %6799 = vmatpush1.xpose.msra.mxu0 0.0
        %6800 = vmatprep.subr.mxu0 0.0
        %6801 = vmatpush1.xpose.msra.mxu0 0.0
        %6802 = vmatprep.subr.mxu0 0.0
        %6803 = vmatpush1.xpose.msra.mxu0 0.0
        %6804 = vmatprep.subr.mxu0 0.0
        %6805 = vmatpush1.xpose.msra.mxu0 0.0
        %6806 = vmatprep.subr.mxu0 0.0
        %6807 = vmatpush1.xpose.msra.mxu0 0.0
        %6808 = vmatprep.subr.mxu0 0.0
        %6809 = vmatpush1.xpose.msra.mxu0 0.0
        %6810 = vmatprep.subr.mxu0 0.0
        %6811 = vmatpush1.xpose.msra.mxu0 0.0
        %6812 = vmatprep.subr.mxu0 0.0
        %6813 = vmatpush1.xpose.msra.mxu0 0.0
        %6814 = vmatprep.mubr.f32.mxu0 0.0
        %6815 = vmatmul.mubr.f32.gmra.mrb[0].mxu0 %v6745
        %v6816 = vpop.f32.mrb[0].mxu0
        %v6817 = vadd.f32 0.0, %v6816
        %v6818 = vpop.f32.mrb[0].mxu0
        %6819 = vmatprep.mubr.f32.mxu0 0.0
        %6820 = vmatmul.mubr.f32.gmra.mrb[0].mxu0 %v6748
        %v6821 = vpop.f32.mrb[0].mxu0
        %v6822 = vadd.f32 0.0, %v6821
        %v6823 = vpop.f32.mrb[0].mxu0
        %6824 = vdwg.mxu0
        %v6826 = vsel %vm2734, %v2716, 0
        %v6829 = vsel %vm2734, %v2721, 0
        %6831 = vmatprep.subr.mxu0 0.0
        %6832 = vmatpush1.xpose.msra.mxu0 %v6826
        %6833 = vmatprep.subr.mxu0 0.0
        %6834 = vmatpush1.xpose.msra.mxu0 %v6829
        %6835 = vmatprep.subr.mxu0 0.0
        %6836 = vmatpush1.xpose.msra.mxu0 0.0
        %6837 = vmatprep.subr.mxu0 0.0
        %6838 = vmatpush1.xpose.msra.mxu0 0.0
        %6839 = vmatprep.subr.mxu0 0.0
        %6840 = vmatpush1.xpose.msra.mxu0 0.0
        %6841 = vmatprep.subr.mxu0 0.0
        %6842 = vmatpush1.xpose.msra.mxu0 0.0
        %6843 = vmatprep.subr.mxu0 0.0
        %6844 = vmatpush1.xpose.msra.mxu0 0.0
        %6845 = vmatprep.subr.mxu0 0.0
        %6846 = vmatpush1.xpose.msra.mxu0 0.0
        %6847 = vmatprep.subr.mxu0 0.0
        %6848 = vmatpush1.xpose.msra.mxu0 0.0
        %6849 = vmatprep.subr.mxu0 0.0
        %6850 = vmatpush1.xpose.msra.mxu0 0.0
        %6851 = vmatprep.subr.mxu0 0.0
        %6852 = vmatpush1.xpose.msra.mxu0 0.0
        %6853 = vmatprep.subr.mxu0 0.0
        %6854 = vmatpush1.xpose.msra.mxu0 0.0
        %6855 = vmatprep.subr.mxu0 0.0
        %6856 = vmatpush1.xpose.msra.mxu0 0.0
        %6857 = vmatprep.subr.mxu0 0.0
        %6858 = vmatpush1.xpose.msra.mxu0 0.0
        %6859 = vmatprep.subr.mxu0 0.0
        %6860 = vmatpush1.xpose.msra.mxu0 0.0
        %6861 = vmatprep.subr.mxu0 0.0
        %6862 = vmatpush1.xpose.msra.mxu0 0.0
        %6863 = vmatprep.subr.mxu0 0.0
        %6864 = vmatpush1.xpose.msra.mxu0 0.0
        %6865 = vmatprep.subr.mxu0 0.0
        %6866 = vmatpush1.xpose.msra.mxu0 0.0
        %6867 = vmatprep.subr.mxu0 0.0
        %6868 = vmatpush1.xpose.msra.mxu0 0.0
        %6869 = vmatprep.subr.mxu0 0.0
        %6870 = vmatpush1.xpose.msra.mxu0 0.0
        %6871 = vmatprep.subr.mxu0 0.0
        %6872 = vmatpush1.xpose.msra.mxu0 0.0
        %6873 = vmatprep.subr.mxu0 0.0
        %6874 = vmatpush1.xpose.msra.mxu0 0.0
        %6875 = vmatprep.subr.mxu0 0.0
        %6876 = vmatpush1.xpose.msra.mxu0 0.0
        %6877 = vmatprep.subr.mxu0 0.0
        %6878 = vmatpush1.xpose.msra.mxu0 0.0
        %6879 = vmatprep.subr.mxu0 0.0
        %6880 = vmatpush1.xpose.msra.mxu0 0.0
        %6881 = vmatprep.subr.mxu0 0.0
        %6882 = vmatpush1.xpose.msra.mxu0 0.0
        %6883 = vmatprep.subr.mxu0 0.0
        %6884 = vmatpush1.xpose.msra.mxu0 0.0
        %6885 = vmatprep.subr.mxu0 0.0
        %6886 = vmatpush1.xpose.msra.mxu0 0.0
        %6887 = vmatprep.subr.mxu0 0.0
        %6888 = vmatpush1.xpose.msra.mxu0 0.0
        %6889 = vmatprep.subr.mxu0 0.0
        %6890 = vmatpush1.xpose.msra.mxu0 0.0
        %6891 = vmatprep.subr.mxu0 0.0
        %6892 = vmatpush1.xpose.msra.mxu0 0.0
        %6893 = vmatprep.subr.mxu0 0.0
        %6894 = vmatpush1.xpose.msra.mxu0 0.0
        %6895 = vmatprep.mubr.f32.mxu0 0.0
        %6896 = vmatmul.mubr.f32.gmra.mrb[0].mxu0 %v6826
        %v6897 = vpop.f32.mrb[0].mxu0
        %v6898 = vadd.f32 0.0, %v6897
        %v6899 = vpop.f32.mrb[0].mxu0
        %6900 = vmatprep.mubr.f32.mxu0 0.0
        %6901 = vmatmul.mubr.f32.gmra.mrb[0].mxu0 %v6829
        %v6902 = vpop.f32.mrb[0].mxu0
        %v6903 = vadd.f32 0.0, %v6902
        %v6904 = vpop.f32.mrb[0].mxu0
        %6905 = vdwg.mxu0
        %v6907 = vsel %vm2734, %v2726, 0
        %v6910 = vsel %vm2734, %v2731, 0
        %6912 = vmatprep.subr.mxu0 0.0
        %6913 = vmatpush1.xpose.msra.mxu0 %v6907
        %6914 = vmatprep.subr.mxu0 0.0
        %6915 = vmatpush1.xpose.msra.mxu0 %v6910
        %6916 = vmatprep.subr.mxu0 0.0
        %6917 = vmatpush1.xpose.msra.mxu0 0.0
        %6918 = vmatprep.subr.mxu0 0.0
        %6919 = vmatpush1.xpose.msra.mxu0 0.0
        %6920 = vmatprep.subr.mxu0 0.0
        %6921 = vmatpush1.xpose.msra.mxu0 0.0
        %6922 = vmatprep.subr.mxu0 0.0
        %6923 = vmatpush1.xpose.msra.mxu0 0.0
        %6924 = vmatprep.subr.mxu0 0.0
        %6925 = vmatpush1.xpose.msra.mxu0 0.0
        %6926 = vmatprep.subr.mxu0 0.0
        %6927 = vmatpush1.xpose.msra.mxu0 0.0
        %6928 = vmatprep.subr.mxu0 0.0
        %6929 = vmatpush1.xpose.msra.mxu0 0.0
        %6930 = vmatprep.subr.mxu0 0.0
        %6931 = vmatpush1.xpose.msra.mxu0 0.0
        %6932 = vmatprep.subr.mxu0 0.0
        %6933 = vmatpush1.xpose.msra.mxu0 0.0
        %6934 = vmatprep.subr.mxu0 0.0
        %6935 = vmatpush1.xpose.msra.mxu0 0.0
        %6936 = vmatprep.subr.mxu0 0.0
        %6937 = vmatpush1.xpose.msra.mxu0 0.0
        %6938 = vmatprep.subr.mxu0 0.0
        %6939 = vmatpush1.xpose.msra.mxu0 0.0
        %6940 = vmatprep.subr.mxu0 0.0
        %6941 = vmatpush1.xpose.msra.mxu0 0.0
        %6942 = vmatprep.subr.mxu0 0.0
        %6943 = vmatpush1.xpose.msra.mxu0 0.0
        %6944 = vmatprep.subr.mxu0 0.0
        %6945 = vmatpush1.xpose.msra.mxu0 0.0
        %6946 = vmatprep.subr.mxu0 0.0
        %6947 = vmatpush1.xpose.msra.mxu0 0.0
        %6948 = vmatprep.subr.mxu0 0.0
        %6949 = vmatpush1.xpose.msra.mxu0 0.0
        %6950 = vmatprep.subr.mxu0 0.0
        %6951 = vmatpush1.xpose.msra.mxu0 0.0
        %6952 = vmatprep.subr.mxu0 0.0
        %6953 = vmatpush1.xpose.msra.mxu0 0.0
        %6954 = vmatprep.subr.mxu0 0.0
        %6955 = vmatpush1.xpose.msra.mxu0 0.0
        %6956 = vmatprep.subr.mxu0 0.0
        %6957 = vmatpush1.xpose.msra.mxu0 0.0
        %6958 = vmatprep.subr.mxu0 0.0
        %6959 = vmatpush1.xpose.msra.mxu0 0.0
        %6960 = vmatprep.subr.mxu0 0.0
        %6961 = vmatpush1.xpose.msra.mxu0 0.0
        %6962 = vmatprep.subr.mxu0 0.0
        %6963 = vmatpush1.xpose.msra.mxu0 0.0
        %6964 = vmatprep.subr.mxu0 0.0
        %6965 = vmatpush1.xpose.msra.mxu0 0.0
        %6966 = vmatprep.subr.mxu0 0.0
        %6967 = vmatpush1.xpose.msra.mxu0 0.0
        %6968 = vmatprep.subr.mxu0 0.0
        %6969 = vmatpush1.xpose.msra.mxu0 0.0
        %6970 = vmatprep.subr.mxu0 0.0
        %6971 = vmatpush1.xpose.msra.mxu0 0.0
        %6972 = vmatprep.subr.mxu0 0.0
        %6973 = vmatpush1.xpose.msra.mxu0 0.0
        %6974 = vmatprep.subr.mxu0 0.0
        %6975 = vmatpush1.xpose.msra.mxu0 0.0
        %6976 = vmatprep.mubr.f32.mxu0 0.0
        %6977 = vmatmul.mubr.f32.gmra.mrb[0].mxu0 %v6907
        %v6978 = vpop.f32.mrb[0].mxu0
        %v6979 = vadd.f32 0.0, %v6978
        %v6980 = vpop.f32.mrb[0].mxu0
        %6981 = vmatprep.mubr.f32.mxu0 0.0
        %6982 = vmatmul.mubr.f32.gmra.mrb[0].mxu0 %v6910
        %v6983 = vpop.f32.mrb[0].mxu0
        %v6984 = vadd.f32 0.0, %v6983
        %v6985 = vpop.f32.mrb[0].mxu0
        %6986 = vdwg.mxu0
        %6987 = vxpose.xlu0.b32.start [1/16] %v6641, 128
        %6988 = vxpose.xlu0.b32.cont [2/16] %v6644, 128
        %6989 = vxpose.xlu0.b32.cont [3/16] 0.0, 128
        %6990 = vxpose.xlu0.b32.cont [4/16] 0.0, 128
        %6991 = vxpose.xlu0.b32.cont [5/16] 0.0, 128
        %6992 = vxpose.xlu0.b32.cont [6/16] 0.0, 128
        %6993 = vxpose.xlu0.b32.cont [7/16] 0.0, 128
        %6994 = vxpose.xlu0.b32.cont [8/16] 0.0, 128
        %6995 = vxpose.xlu0.b32.cont [9/16] 0.0, 128
        %6996 = vxpose.xlu0.b32.cont [10/16] 0.0, 128
        %6997 = vxpose.xlu0.b32.cont [11/16] 0.0, 128
        %6998 = vxpose.xlu0.b32.cont [12/16] 0.0, 128
        %6999 = vxpose.xlu0.b32.cont [13/16] 0.0, 128
        %7000 = vxpose.xlu0.b32.cont [14/16] 0.0, 128
        %7001 = vxpose.xlu0.b32.cont [15/16] 0.0, 128
        %7002 = vxpose.xlu0.b32.end [16/16] 0.0, 128
        %v7003 = vpop.trf.xlu0
        %v7004 = vpop.trf.xlu0
        %v7005 = vpop.trf.xlu0
        %v7006 = vpop.trf.xlu0
        %v7007 = vpop.trf.xlu0
        %v7008 = vpop.trf.xlu0
        %v7009 = vpop.trf.xlu0
        %v7010 = vpop.trf.xlu0
        %v7011 = vpop.trf.xlu0
        %v7012 = vpop.trf.xlu0
        %v7013 = vpop.trf.xlu0
        %v7014 = vpop.trf.xlu0
        %v7015 = vpop.trf.xlu0
        %v7016 = vpop.trf.xlu0
        %v7017 = vpop.trf.xlu0
        %v7018 = vpop.trf.xlu0
        %7019 = vxpose.xlu0.b32.start [1/16] %v6647, 128
        %7020 = vxpose.xlu0.b32.cont [2/16] %v6650, 128
        %7021 = vxpose.xlu0.b32.cont [3/16] 0.0, 128
        %7022 = vxpose.xlu0.b32.cont [4/16] 0.0, 128
        %7023 = vxpose.xlu0.b32.cont [5/16] 0.0, 128
        %7024 = vxpose.xlu0.b32.cont [6/16] 0.0, 128
        %7025 = vxpose.xlu0.b32.cont [7/16] 0.0, 128
        %7026 = vxpose.xlu0.b32.cont [8/16] 0.0, 128
        %7027 = vxpose.xlu0.b32.cont [9/16] 0.0, 128
        %7028 = vxpose.xlu0.b32.cont [10/16] 0.0, 128
        %7029 = vxpose.xlu0.b32.cont [11/16] 0.0, 128
        %7030 = vxpose.xlu0.b32.cont [12/16] 0.0, 128
        %7031 = vxpose.xlu0.b32.cont [13/16] 0.0, 128
        %7032 = vxpose.xlu0.b32.cont [14/16] 0.0, 128
        %7033 = vxpose.xlu0.b32.cont [15/16] 0.0, 128
        %7034 = vxpose.xlu0.b32.end [16/16] 0.0, 128
        %v7035 = vpop.trf.xlu0
        %v7036 = vpop.trf.xlu0
        %v7037 = vpop.trf.xlu0
        %v7038 = vpop.trf.xlu0
        %v7039 = vpop.trf.xlu0
        %v7040 = vpop.trf.xlu0
        %v7041 = vpop.trf.xlu0
        %v7042 = vpop.trf.xlu0
        %v7043 = vpop.trf.xlu0
        %v7044 = vpop.trf.xlu0
        %v7045 = vpop.trf.xlu0
        %v7046 = vpop.trf.xlu0
        %v7047 = vpop.trf.xlu0
        %v7048 = vpop.trf.xlu0
        %v7049 = vpop.trf.xlu0
        %v7050 = vpop.trf.xlu0
        %7051 = vxpose.xlu0.b32.start [1/16] %v6653, 128
        %7052 = vxpose.xlu0.b32.cont [2/16] %v6656, 128
        %7053 = vxpose.xlu0.b32.cont [3/16] 0.0, 128
        %7054 = vxpose.xlu0.b32.cont [4/16] 0.0, 128
        %7055 = vxpose.xlu0.b32.cont [5/16] 0.0, 128
        %7056 = vxpose.xlu0.b32.cont [6/16] 0.0, 128
        %7057 = vxpose.xlu0.b32.cont [7/16] 0.0, 128
        %7058 = vxpose.xlu0.b32.cont [8/16] 0.0, 128
        %7059 = vxpose.xlu0.b32.cont [9/16] 0.0, 128
        %7060 = vxpose.xlu0.b32.cont [10/16] 0.0, 128
        %7061 = vxpose.xlu0.b32.cont [11/16] 0.0, 128
        %7062 = vxpose.xlu0.b32.cont [12/16] 0.0, 128
        %7063 = vxpose.xlu0.b32.cont [13/16] 0.0, 128
        %7064 = vxpose.xlu0.b32.cont [14/16] 0.0, 128
        %7065 = vxpose.xlu0.b32.cont [15/16] 0.0, 128
        %7066 = vxpose.xlu0.b32.end [16/16] 0.0, 128
        %v7067 = vpop.trf.xlu0
        %v7068 = vpop.trf.xlu0
        %v7069 = vpop.trf.xlu0
        %v7070 = vpop.trf.xlu0
        %v7071 = vpop.trf.xlu0
        %v7072 = vpop.trf.xlu0
        %v7073 = vpop.trf.xlu0
        %v7074 = vpop.trf.xlu0
        %v7075 = vpop.trf.xlu0
        %v7076 = vpop.trf.xlu0
        %v7077 = vpop.trf.xlu0
        %v7078 = vpop.trf.xlu0
        %v7079 = vpop.trf.xlu0
        %v7080 = vpop.trf.xlu0
        %v7081 = vpop.trf.xlu0
        %v7082 = vpop.trf.xlu0
        %7083 = vxpose.xlu0.b32.start [1/16] %v6659, 128
        %7084 = vxpose.xlu0.b32.cont [2/16] %v6662, 128
        %7085 = vxpose.xlu0.b32.cont [3/16] 0.0, 128
        %7086 = vxpose.xlu0.b32.cont [4/16] 0.0, 128
        %7087 = vxpose.xlu0.b32.cont [5/16] 0.0, 128
        %7088 = vxpose.xlu0.b32.cont [6/16] 0.0, 128
        %7089 = vxpose.xlu0.b32.cont [7/16] 0.0, 128
        %7090 = vxpose.xlu0.b32.cont [8/16] 0.0, 128
        %7091 = vxpose.xlu0.b32.cont [9/16] 0.0, 128
        %7092 = vxpose.xlu0.b32.cont [10/16] 0.0, 128
        %7093 = vxpose.xlu0.b32.cont [11/16] 0.0, 128
        %7094 = vxpose.xlu0.b32.cont [12/16] 0.0, 128
        %7095 = vxpose.xlu0.b32.cont [13/16] 0.0, 128
        %7096 = vxpose.xlu0.b32.cont [14/16] 0.0, 128
        %7097 = vxpose.xlu0.b32.cont [15/16] 0.0, 128
        %7098 = vxpose.xlu0.b32.end [16/16] 0.0, 128
        %v7099 = vpop.trf.xlu0
        %v7100 = vpop.trf.xlu0
        %v7101 = vpop.trf.xlu0
        %v7102 = vpop.trf.xlu0
        %v7103 = vpop.trf.xlu0
        %v7104 = vpop.trf.xlu0
        %v7105 = vpop.trf.xlu0
        %v7106 = vpop.trf.xlu0
        %v7107 = vpop.trf.xlu0
        %v7108 = vpop.trf.xlu0
        %v7109 = vpop.trf.xlu0
        %v7110 = vpop.trf.xlu0
        %v7111 = vpop.trf.xlu0
        %v7112 = vpop.trf.xlu0
        %v7113 = vpop.trf.xlu0
        %v7114 = vpop.trf.xlu0
        %v7115 = vlaneseq
        %v7116 = vshrl.u32 %v7115, 7
        %v7117 = vsub.s32 0, %v7116
        %v7118 = vrot.slane %v7003, %v7117
        %v7119 = vlaneseq
        %v7120 = vshrl.u32 %v7119, 7
        %v7121 = vsub.s32 0, %v7120
        %v7122 = vrot.slane %v7035, %v7121
        %v7123 = vlaneseq
        %v7124 = vshrl.u32 %v7123, 7
        %v7125 = vsub.s32 0, %v7124
        %v7126 = vrot.slane %v7067, %v7125
        %v7127 = vlaneseq
        %v7128 = vshrl.u32 %v7127, 7
        %v7129 = vsub.s32 0, %v7128
        %v7130 = vrot.slane %v7099, %v7129
        %v7131 = vadd.f32 %v6641, %v7118
        %v7132 = vadd.f32 %v6644, %v7118
        %v7133 = vadd.f32 %v6647, %v7122
        %v7134 = vadd.f32 %v6650, %v7122
        %v7135 = vadd.f32 %v6653, %v7126
        %v7136 = vadd.f32 %v6656, %v7126
        %v7137 = vadd.f32 %v6659, %v7130
        %v7138 = vadd.f32 %v6662, %v7130
        %v7139 = vmul.f32 %v6736, 2.0
        %v7140 = vmul.f32 %v6741, 2.0
        %v7141 = vmul.f32 %v6817, 2.0
        %v7142 = vmul.f32 %v6822, 2.0
        %v7143 = vmul.f32 %v6898, 2.0
        %v7144 = vmul.f32 %v6903, 2.0
        %v7145 = vmul.f32 %v6979, 2.0
        %v7146 = vmul.f32 %v6984, 2.0
        %v7147 = vsub.f32 %v7131, %v7139
        %v7148 = vsub.f32 %v7132, %v7140
        %v7149 = vsub.f32 %v7133, %v7141
        %v7150 = vsub.f32 %v7134, %v7142
        %v7151 = vsub.f32 %v7135, %v7143
        %v7152 = vsub.f32 %v7136, %v7144
        %v7153 = vsub.f32 %v7137, %v7145
        %v7154 = vsub.f32 %v7138, %v7146
        %v7155 = vsub.f32 %v6623, %v7147
        %v7156 = vsub.f32 %v6624, %v7148
        %v7157 = vsub.f32 %v6625, %v7149
        %v7158 = vsub.f32 %v6626, %v7150
        %v7159 = vsub.f32 %v6627, %v7151
        %v7160 = vsub.f32 %v6628, %v7152
        %v7161 = vsub.f32 %v6629, %v7153
        %v7162 = vsub.f32 %v6630, %v7154
        %v7163 = vsel %vm2858, %v7155, -inf
        %7164 = vmax.xlane.f32.xlu0 %v7163
        %v7165 = vpop.xlane.xlu0 %7164
        %v7166 = vsel %vm2858, %v7156, -inf
        %7167 = vmax.xlane.f32.xlu0 %v7166
        %v7168 = vpop.xlane.xlu0 %7167
        %v7169 = vsel %vm2858, %v7157, -inf
        %7170 = vmax.xlane.f32.xlu0 %v7169
        %v7171 = vpop.xlane.xlu0 %7170
        %v7172 = vsel %vm2858, %v7158, -inf
        %7173 = vmax.xlane.f32.xlu0 %v7172
        %v7174 = vpop.xlane.xlu0 %7173
        %v7175 = vsel %vm2858, %v7159, -inf
        %7176 = vmax.xlane.f32.xlu0 %v7175
        %v7177 = vpop.xlane.xlu0 %7176
        %v7178 = vsel %vm2858, %v7160, -inf
        %7179 = vmax.xlane.f32.xlu0 %v7178
        %v7180 = vpop.xlane.xlu0 %7179
        %v7181 = vsel %vm2858, %v7161, -inf
        %7182 = vmax.xlane.f32.xlu0 %v7181
        %v7183 = vpop.xlane.xlu0 %7182
        %v7184 = vsel %vm2858, %v7162, -inf
        %7185 = vmax.xlane.f32.xlu0 %v7184
        %v7186 = vpop.xlane.xlu0 %7185
        %v7187 = vmax.f32 %v7165, %v7168
        %v7188 = vrot.slane %v7187, 4
        %v7189 = vmax.f32 %v7187, %v7188
        %v7190 = vrot.slane %v7189, 2
        %v7191 = vmax.f32 %v7189, %v7190
        %v7192 = vrot.slane %v7191, 1
        %v7193 = vmax.f32 %v7191, %v7192
        %v7194 = vmax.f32 %v7171, %v7174
        %v7195 = vrot.slane %v7194, 4
        %v7196 = vmax.f32 %v7194, %v7195
        %v7197 = vrot.slane %v7196, 2
        %v7198 = vmax.f32 %v7196, %v7197
        %v7199 = vrot.slane %v7198, 1
        %v7200 = vmax.f32 %v7198, %v7199
        %v7201 = vmax.f32 %v7177, %v7180
        %v7202 = vrot.slane %v7201, 4
        %v7203 = vmax.f32 %v7201, %v7202
        %v7204 = vrot.slane %v7203, 2
        %v7205 = vmax.f32 %v7203, %v7204
        %v7206 = vrot.slane %v7205, 1
        %v7207 = vmax.f32 %v7205, %v7206
        %v7208 = vmax.f32 %v7183, %v7186
        %v7209 = vrot.slane %v7208, 4
        %v7210 = vmax.f32 %v7208, %v7209
        %v7211 = vrot.slane %v7210, 2
        %v7212 = vmax.f32 %v7210, %v7211
        %v7213 = vrot.slane %v7212, 1
        %v7214 = vmax.f32 %v7212, %v7213
        %v7215 = vsub.f32 %v7155, %v7193
        %v7216 = vsub.f32 %v7156, %v7193
        %v7217 = vsub.f32 %v7157, %v7200
        %v7218 = vsub.f32 %v7158, %v7200
        %v7219 = vsub.f32 %v7159, %v7207
        %v7220 = vsub.f32 %v7160, %v7207
        %v7221 = vsub.f32 %v7161, %v7214
        %v7222 = vsub.f32 %v7162, %v7214
        %v7223 = vmul.f32 %v7215, 5.0
        %v7224 = vmul.f32 %v7216, 5.0
        %v7225 = vmul.f32 %v7217, 5.0
        %v7226 = vmul.f32 %v7218, 5.0
        %v7227 = vmul.f32 %v7219, 5.0
        %v7228 = vmul.f32 %v7220, 5.0
        %v7229 = vmul.f32 %v7221, 5.0
        %v7230 = vmul.f32 %v7222, 5.0
        %v7231 = vmul.f32 %v7223, 1.442695
        %v7232 = vpow.pop %v7231
        %v7233 = vmul.f32 %v7224, 1.442695
        %v7234 = vpow.pop %v7233
        %v7235 = vmul.f32 %v7225, 1.442695
        %v7236 = vpow.pop %v7235
        %v7237 = vmul.f32 %v7226, 1.442695
        %v7238 = vpow.pop %v7237
        %v7239 = vmul.f32 %v7227, 1.442695
        %v7240 = vpow.pop %v7239
        %v7241 = vmul.f32 %v7228, 1.442695
        %v7242 = vpow.pop %v7241
        %v7243 = vmul.f32 %v7229, 1.442695
        %v7244 = vpow.pop %v7243
        %v7245 = vmul.f32 %v7230, 1.442695
        %v7246 = vpow.pop %v7245
        %v7247 = vsel %vm2858, %v7232, 0.0
        %7248 = vadd.xlane.f32.xlu0 %v7247
        %v7249 = vpop.xlane.xlu0 %7248
        %v7250 = vsel %vm2858, %v7234, 0.0
        %7251 = vadd.xlane.f32.xlu0 %v7250
        %v7252 = vpop.xlane.xlu0 %7251
        %v7253 = vsel %vm2858, %v7236, 0.0
        %7254 = vadd.xlane.f32.xlu0 %v7253
        %v7255 = vpop.xlane.xlu0 %7254
        %v7256 = vsel %vm2858, %v7238, 0.0
        %7257 = vadd.xlane.f32.xlu0 %v7256
        %v7258 = vpop.xlane.xlu0 %7257
        %v7259 = vsel %vm2858, %v7240, 0.0
        %7260 = vadd.xlane.f32.xlu0 %v7259
        %v7261 = vpop.xlane.xlu0 %7260
        %v7262 = vsel %vm2858, %v7242, 0.0
        %7263 = vadd.xlane.f32.xlu0 %v7262
        %v7264 = vpop.xlane.xlu0 %7263
        %v7265 = vsel %vm2858, %v7244, 0.0
        %7266 = vadd.xlane.f32.xlu0 %v7265
        %v7267 = vpop.xlane.xlu0 %7266
        %v7268 = vsel %vm2858, %v7246, 0.0
        %7269 = vadd.xlane.f32.xlu0 %v7268
        %v7270 = vpop.xlane.xlu0 %7269
        %v7271 = vadd.f32 %v7249, 1e-08
        %v7272 = vadd.f32 %v7252, 1e-08
        %v7273 = vadd.f32 %v7255, 1e-08
        %v7274 = vadd.f32 %v7258, 1e-08
        %v7275 = vadd.f32 %v7261, 1e-08
        %v7276 = vadd.f32 %v7264, 1e-08
        %v7277 = vadd.f32 %v7267, 1e-08
        %v7278 = vadd.f32 %v7270, 1e-08
        %v7279 = vrcp.pop %v7271
        %v7280 = vmul.f32 %v7232, %v7279
        %v7281 = vrcp.pop %v7272
        %v7282 = vmul.f32 %v7234, %v7281
        %v7283 = vrcp.pop %v7273
        %v7284 = vmul.f32 %v7236, %v7283
        %v7285 = vrcp.pop %v7274
        %v7286 = vmul.f32 %v7238, %v7285
        %v7287 = vrcp.pop %v7275
        %v7288 = vmul.f32 %v7240, %v7287
        %v7289 = vrcp.pop %v7276
        %v7290 = vmul.f32 %v7242, %v7289
        %v7291 = vrcp.pop %v7277
        %v7292 = vmul.f32 %v7244, %v7291
        %v7293 = vrcp.pop %v7278
        %v7294 = vmul.f32 %v7246, %v7293
        %v7295 = vsel %vm2858, %v7280, 0.0
        %v7296 = vsel %vm2858, %v7282, 0.0
        %v7297 = vadd.f32 %v7295, %v7296
        %v7298 = vrot.slane %v7297, 4
        %v7299 = vadd.f32 %v7297, %v7298
        %v7300 = vrot.slane %v7299, 2
        %v7301 = vadd.f32 %v7299, %v7300
        %v7302 = vrot.slane %v7301, 1
        %v7303 = vadd.f32 %v7301, %v7302
        %v7304 = vsel %vm2858, %v7284, 0.0
        %v7305 = vsel %vm2858, %v7286, 0.0
        %v7306 = vadd.f32 %v7304, %v7305
        %v7307 = vrot.slane %v7306, 4
        %v7308 = vadd.f32 %v7306, %v7307
        %v7309 = vrot.slane %v7308, 2
        %v7310 = vadd.f32 %v7308, %v7309
        %v7311 = vrot.slane %v7310, 1
        %v7312 = vadd.f32 %v7310, %v7311
        %v7313 = vsel %vm2858, %v7288, 0.0
        %v7314 = vsel %vm2858, %v7290, 0.0
        %v7315 = vadd.f32 %v7313, %v7314
        %v7316 = vrot.slane %v7315, 4
        %v7317 = vadd.f32 %v7315, %v7316
        %v7318 = vrot.slane %v7317, 2
        %v7319 = vadd.f32 %v7317, %v7318
        %v7320 = vrot.slane %v7319, 1
        %v7321 = vadd.f32 %v7319, %v7320
        %v7322 = vsel %vm2858, %v7292, 0.0
        %v7323 = vsel %vm2858, %v7294, 0.0
        %v7324 = vadd.f32 %v7322, %v7323
        %v7325 = vrot.slane %v7324, 4
        %v7326 = vadd.f32 %v7324, %v7325
        %v7327 = vrot.slane %v7326, 2
        %v7328 = vadd.f32 %v7326, %v7327
        %v7329 = vrot.slane %v7328, 1
        %v7330 = vadd.f32 %v7328, %v7329
        %v7331 = vadd.f32 %v7303, 1e-08
        %v7332 = vadd.f32 %v7312, 1e-08
        %v7333 = vadd.f32 %v7321, 1e-08
        %v7334 = vadd.f32 %v7330, 1e-08
        %v7335 = vrcp.pop %v7331
        %v7336 = vmul.f32 %v7280, %v7335
        %v7337 = vmul.f32 %v7282, %v7335
        %v7338 = vrcp.pop %v7332
        %v7339 = vmul.f32 %v7284, %v7338
        %v7340 = vmul.f32 %v7286, %v7338
        %v7341 = vrcp.pop %v7333
        %v7342 = vmul.f32 %v7288, %v7341
        %v7343 = vmul.f32 %v7290, %v7341
        %v7344 = vrcp.pop %v7334
        %v7345 = vmul.f32 %v7292, %v7344
        %v7346 = vmul.f32 %v7294, %v7344
        %v7347 = vsel %vm2858, %v7336, 0.0
        %7348 = vadd.xlane.f32.xlu0 %v7347
        %v7349 = vpop.xlane.xlu0 %7348
        %v7350 = vsel %vm2858, %v7337, 0.0
        %7351 = vadd.xlane.f32.xlu0 %v7350
        %v7352 = vpop.xlane.xlu0 %7351
        %v7353 = vsel %vm2858, %v7339, 0.0
        %7354 = vadd.xlane.f32.xlu0 %v7353
        %v7355 = vpop.xlane.xlu0 %7354
        %v7356 = vsel %vm2858, %v7340, 0.0
        %7357 = vadd.xlane.f32.xlu0 %v7356
        %v7358 = vpop.xlane.xlu0 %7357
        %v7359 = vsel %vm2858, %v7342, 0.0
        %7360 = vadd.xlane.f32.xlu0 %v7359
        %v7361 = vpop.xlane.xlu0 %7360
        %v7362 = vsel %vm2858, %v7343, 0.0
        %7363 = vadd.xlane.f32.xlu0 %v7362
        %v7364 = vpop.xlane.xlu0 %7363
        %v7365 = vsel %vm2858, %v7345, 0.0
        %7366 = vadd.xlane.f32.xlu0 %v7365
        %v7367 = vpop.xlane.xlu0 %7366
        %v7368 = vsel %vm2858, %v7346, 0.0
        %7369 = vadd.xlane.f32.xlu0 %v7368
        %v7370 = vpop.xlane.xlu0 %7369
        %v7371 = vadd.f32 %v7349, 1e-08
        %v7372 = vadd.f32 %v7352, 1e-08
        %v7373 = vadd.f32 %v7355, 1e-08
        %v7374 = vadd.f32 %v7358, 1e-08
        %v7375 = vadd.f32 %v7361, 1e-08
        %v7376 = vadd.f32 %v7364, 1e-08
        %v7377 = vadd.f32 %v7367, 1e-08
        %v7378 = vadd.f32 %v7370, 1e-08
        %v7379 = vrcp.pop %v7371
        %v7380 = vmul.f32 %v7336, %v7379
        %v7381 = vrcp.pop %v7372
        %v7382 = vmul.f32 %v7337, %v7381
        %v7383 = vrcp.pop %v7373
        %v7384 = vmul.f32 %v7339, %v7383
        %v7385 = vrcp.pop %v7374
        %v7386 = vmul.f32 %v7340, %v7385
        %v7387 = vrcp.pop %v7375
        %v7388 = vmul.f32 %v7342, %v7387
        %v7389 = vrcp.pop %v7376
        %v7390 = vmul.f32 %v7343, %v7389
        %v7391 = vrcp.pop %v7377
        %v7392 = vmul.f32 %v7345, %v7391
        %v7393 = vrcp.pop %v7378
        %v7394 = vmul.f32 %v7346, %v7393
        %v7395 = vsel %vm2858, %v7380, 0.0
        %v7396 = vsel %vm2858, %v7382, 0.0
        %v7397 = vadd.f32 %v7395, %v7396
        %v7398 = vrot.slane %v7397, 4
        %v7399 = vadd.f32 %v7397, %v7398
        %v7400 = vrot.slane %v7399, 2
        %v7401 = vadd.f32 %v7399, %v7400
        %v7402 = vrot.slane %v7401, 1
        %v7403 = vadd.f32 %v7401, %v7402
        %v7404 = vsel %vm2858, %v7384, 0.0
        %v7405 = vsel %vm2858, %v7386, 0.0
        %v7406 = vadd.f32 %v7404, %v7405
        %v7407 = vrot.slane %v7406, 4
        %v7408 = vadd.f32 %v7406, %v7407
        %v7409 = vrot.slane %v7408, 2
        %v7410 = vadd.f32 %v7408, %v7409
        %v7411 = vrot.slane %v7410, 1
        %v7412 = vadd.f32 %v7410, %v7411
        %v7413 = vsel %vm2858, %v7388, 0.0
        %v7414 = vsel %vm2858, %v7390, 0.0
        %v7415 = vadd.f32 %v7413, %v7414
        %v7416 = vrot.slane %v7415, 4
        %v7417 = vadd.f32 %v7415, %v7416
        %v7418 = vrot.slane %v7417, 2
        %v7419 = vadd.f32 %v7417, %v7418
        %v7420 = vrot.slane %v7419, 1
        %v7421 = vadd.f32 %v7419, %v7420
        %v7422 = vsel %vm2858, %v7392, 0.0
        %v7423 = vsel %vm2858, %v7394, 0.0
        %v7424 = vadd.f32 %v7422, %v7423
        %v7425 = vrot.slane %v7424, 4
        %v7426 = vadd.f32 %v7424, %v7425
        %v7427 = vrot.slane %v7426, 2
        %v7428 = vadd.f32 %v7426, %v7427
        %v7429 = vrot.slane %v7428, 1
        %v7430 = vadd.f32 %v7428, %v7429
        %v7431 = vadd.f32 %v7403, 1e-08
        %v7432 = vadd.f32 %v7412, 1e-08
        %v7433 = vadd.f32 %v7421, 1e-08
        %v7434 = vadd.f32 %v7430, 1e-08
        %v7435 = vrcp.pop %v7431
        %v7436 = vmul.f32 %v7380, %v7435
        %v7437 = vmul.f32 %v7382, %v7435
        %v7438 = vrcp.pop %v7432
        %v7439 = vmul.f32 %v7384, %v7438
        %v7440 = vmul.f32 %v7386, %v7438
        %v7441 = vrcp.pop %v7433
        %v7442 = vmul.f32 %v7388, %v7441
        %v7443 = vmul.f32 %v7390, %v7441
        %v7444 = vrcp.pop %v7434
        %v7445 = vmul.f32 %v7392, %v7444
        %v7446 = vmul.f32 %v7394, %v7444
        %v7447 = vsel %vm2858, %v7436, 0.0
        %7448 = vadd.xlane.f32.xlu0 %v7447
        %v7449 = vpop.xlane.xlu0 %7448
        %v7450 = vsel %vm2858, %v7437, 0.0
        %7451 = vadd.xlane.f32.xlu0 %v7450
        %v7452 = vpop.xlane.xlu0 %7451
        %v7453 = vsel %vm2858, %v7439, 0.0
        %7454 = vadd.xlane.f32.xlu0 %v7453
        %v7455 = vpop.xlane.xlu0 %7454
        %v7456 = vsel %vm2858, %v7440, 0.0
        %7457 = vadd.xlane.f32.xlu0 %v7456
        %v7458 = vpop.xlane.xlu0 %7457
        %v7459 = vsel %vm2858, %v7442, 0.0
        %7460 = vadd.xlane.f32.xlu0 %v7459
        %v7461 = vpop.xlane.xlu0 %7460
        %v7462 = vsel %vm2858, %v7443, 0.0
        %7463 = vadd.xlane.f32.xlu0 %v7462
        %v7464 = vpop.xlane.xlu0 %7463
        %v7465 = vsel %vm2858, %v7445, 0.0
        %7466 = vadd.xlane.f32.xlu0 %v7465
        %v7467 = vpop.xlane.xlu0 %7466
        %v7468 = vsel %vm2858, %v7446, 0.0
        %7469 = vadd.xlane.f32.xlu0 %v7468
        %v7470 = vpop.xlane.xlu0 %7469
        %v7471 = vadd.f32 %v7449, 1e-08
        %v7472 = vadd.f32 %v7452, 1e-08
        %v7473 = vadd.f32 %v7455, 1e-08
        %v7474 = vadd.f32 %v7458, 1e-08
        %v7475 = vadd.f32 %v7461, 1e-08
        %v7476 = vadd.f32 %v7464, 1e-08
        %v7477 = vadd.f32 %v7467, 1e-08
        %v7478 = vadd.f32 %v7470, 1e-08
        %v7479 = vrcp.pop %v7471
        %v7480 = vmul.f32 %v7436, %v7479
        %v7481 = vrcp.pop %v7472
        %v7482 = vmul.f32 %v7437, %v7481
        %v7483 = vrcp.pop %v7473
        %v7484 = vmul.f32 %v7439, %v7483
        %v7485 = vrcp.pop %v7474
        %v7486 = vmul.f32 %v7440, %v7485
        %v7487 = vrcp.pop %v7475
        %v7488 = vmul.f32 %v7442, %v7487
        %v7489 = vrcp.pop %v7476
        %v7490 = vmul.f32 %v7443, %v7489
        %v7491 = vrcp.pop %v7477
        %v7492 = vmul.f32 %v7445, %v7491
        %v7493 = vrcp.pop %v7478
        %v7494 = vmul.f32 %v7446, %v7493
        %v7495 = vsel %vm2858, %v7480, 0.0
        %v7496 = vsel %vm2858, %v7482, 0.0
        %v7497 = vadd.f32 %v7495, %v7496
        %v7498 = vrot.slane %v7497, 4
        %v7499 = vadd.f32 %v7497, %v7498
        %v7500 = vrot.slane %v7499, 2
        %v7501 = vadd.f32 %v7499, %v7500
        %v7502 = vrot.slane %v7501, 1
        %v7503 = vadd.f32 %v7501, %v7502
        %v7504 = vsel %vm2858, %v7484, 0.0
        %v7505 = vsel %vm2858, %v7486, 0.0
        %v7506 = vadd.f32 %v7504, %v7505
        %v7507 = vrot.slane %v7506, 4
        %v7508 = vadd.f32 %v7506, %v7507
        %v7509 = vrot.slane %v7508, 2
        %v7510 = vadd.f32 %v7508, %v7509
        %v7511 = vrot.slane %v7510, 1
        %v7512 = vadd.f32 %v7510, %v7511
        %v7513 = vsel %vm2858, %v7488, 0.0
        %v7514 = vsel %vm2858, %v7490, 0.0
        %v7515 = vadd.f32 %v7513, %v7514
        %v7516 = vrot.slane %v7515, 4
        %v7517 = vadd.f32 %v7515, %v7516
        %v7518 = vrot.slane %v7517, 2
        %v7519 = vadd.f32 %v7517, %v7518
        %v7520 = vrot.slane %v7519, 1
        %v7521 = vadd.f32 %v7519, %v7520
        %v7522 = vsel %vm2858, %v7492, 0.0
        %v7523 = vsel %vm2858, %v7494, 0.0
        %v7524 = vadd.f32 %v7522, %v7523
        %v7525 = vrot.slane %v7524, 4
        %v7526 = vadd.f32 %v7524, %v7525
        %v7527 = vrot.slane %v7526, 2
        %v7528 = vadd.f32 %v7526, %v7527
        %v7529 = vrot.slane %v7528, 1
        %v7530 = vadd.f32 %v7528, %v7529
        %v7531 = vadd.f32 %v7503, 1e-08
        %v7532 = vadd.f32 %v7512, 1e-08
        %v7533 = vadd.f32 %v7521, 1e-08
        %v7534 = vadd.f32 %v7530, 1e-08
        %v7535 = vrcp.pop %v7531
        %v7536 = vmul.f32 %v7480, %v7535
        %v7537 = vmul.f32 %v7482, %v7535
        %v7538 = vrcp.pop %v7532
        %v7539 = vmul.f32 %v7484, %v7538
        %v7540 = vmul.f32 %v7486, %v7538
        %v7541 = vrcp.pop %v7533
        %v7542 = vmul.f32 %v7488, %v7541
        %v7543 = vmul.f32 %v7490, %v7541
        %v7544 = vrcp.pop %v7534
        %v7545 = vmul.f32 %v7492, %v7544
        %v7546 = vmul.f32 %v7494, %v7544
        %v7547 = vsel %vm2858, %v7536, 0.0
        %7548 = vadd.xlane.f32.xlu0 %v7547
        %v7549 = vpop.xlane.xlu0 %7548
        %v7550 = vsel %vm2858, %v7537, 0.0
        %7551 = vadd.xlane.f32.xlu0 %v7550
        %v7552 = vpop.xlane.xlu0 %7551
        %v7553 = vsel %vm2858, %v7539, 0.0
        %7554 = vadd.xlane.f32.xlu0 %v7553
        %v7555 = vpop.xlane.xlu0 %7554
        %v7556 = vsel %vm2858, %v7540, 0.0
        %7557 = vadd.xlane.f32.xlu0 %v7556
        %v7558 = vpop.xlane.xlu0 %7557
        %v7559 = vsel %vm2858, %v7542, 0.0
        %7560 = vadd.xlane.f32.xlu0 %v7559
        %v7561 = vpop.xlane.xlu0 %7560
        %v7562 = vsel %vm2858, %v7543, 0.0
        %7563 = vadd.xlane.f32.xlu0 %v7562
        %v7564 = vpop.xlane.xlu0 %7563
        %v7565 = vsel %vm2858, %v7545, 0.0
        %7566 = vadd.xlane.f32.xlu0 %v7565
        %v7567 = vpop.xlane.xlu0 %7566
        %v7568 = vsel %vm2858, %v7546, 0.0
        %7569 = vadd.xlane.f32.xlu0 %v7568
        %v7570 = vpop.xlane.xlu0 %7569
        %v7571 = vadd.f32 %v7549, 1e-08
        %v7572 = vadd.f32 %v7552, 1e-08
        %v7573 = vadd.f32 %v7555, 1e-08
        %v7574 = vadd.f32 %v7558, 1e-08
        %v7575 = vadd.f32 %v7561, 1e-08
        %v7576 = vadd.f32 %v7564, 1e-08
        %v7577 = vadd.f32 %v7567, 1e-08
        %v7578 = vadd.f32 %v7570, 1e-08
        %v7579 = vrcp.pop %v7571
        %v7580 = vmul.f32 %v7536, %v7579
        %v7581 = vrcp.pop %v7572
        %v7582 = vmul.f32 %v7537, %v7581
        %v7583 = vrcp.pop %v7573
        %v7584 = vmul.f32 %v7539, %v7583
        %v7585 = vrcp.pop %v7574
        %v7586 = vmul.f32 %v7540, %v7585
        %v7587 = vrcp.pop %v7575
        %v7588 = vmul.f32 %v7542, %v7587
        %v7589 = vrcp.pop %v7576
        %v7590 = vmul.f32 %v7543, %v7589
        %v7591 = vrcp.pop %v7577
        %v7592 = vmul.f32 %v7545, %v7591
        %v7593 = vrcp.pop %v7578
        %v7594 = vmul.f32 %v7546, %v7593
        %v7595 = vsel %vm2858, %v7580, 0.0
        %v7596 = vsel %vm2858, %v7582, 0.0
        %v7597 = vadd.f32 %v7595, %v7596
        %v7598 = vrot.slane %v7597, 4
        %v7599 = vadd.f32 %v7597, %v7598
        %v7600 = vrot.slane %v7599, 2
        %v7601 = vadd.f32 %v7599, %v7600
        %v7602 = vrot.slane %v7601, 1
        %v7603 = vadd.f32 %v7601, %v7602
        %v7604 = vsel %vm2858, %v7584, 0.0
        %v7605 = vsel %vm2858, %v7586, 0.0
        %v7606 = vadd.f32 %v7604, %v7605
        %v7607 = vrot.slane %v7606, 4
        %v7608 = vadd.f32 %v7606, %v7607
        %v7609 = vrot.slane %v7608, 2
        %v7610 = vadd.f32 %v7608, %v7609
        %v7611 = vrot.slane %v7610, 1
        %v7612 = vadd.f32 %v7610, %v7611
        %v7613 = vsel %vm2858, %v7588, 0.0
        %v7614 = vsel %vm2858, %v7590, 0.0
        %v7615 = vadd.f32 %v7613, %v7614
        %v7616 = vrot.slane %v7615, 4
        %v7617 = vadd.f32 %v7615, %v7616
        %v7618 = vrot.slane %v7617, 2
        %v7619 = vadd.f32 %v7617, %v7618
        %v7620 = vrot.slane %v7619, 1
        %v7621 = vadd.f32 %v7619, %v7620
        %v7622 = vsel %vm2858, %v7592, 0.0
        %v7623 = vsel %vm2858, %v7594, 0.0
        %v7624 = vadd.f32 %v7622, %v7623
        %v7625 = vrot.slane %v7624, 4
        %v7626 = vadd.f32 %v7624, %v7625
        %v7627 = vrot.slane %v7626, 2
        %v7628 = vadd.f32 %v7626, %v7627
        %v7629 = vrot.slane %v7628, 1
        %v7630 = vadd.f32 %v7628, %v7629
        %v7631 = vadd.f32 %v7603, 1e-08
        %v7632 = vadd.f32 %v7612, 1e-08
        %v7633 = vadd.f32 %v7621, 1e-08
        %v7634 = vadd.f32 %v7630, 1e-08
        %v7635 = vrcp.pop %v7631
        %v7636 = vmul.f32 %v7580, %v7635
        %v7637 = vmul.f32 %v7582, %v7635
        %v7638 = vrcp.pop %v7632
        %v7639 = vmul.f32 %v7584, %v7638
        %v7640 = vmul.f32 %v7586, %v7638
        %v7641 = vrcp.pop %v7633
        %v7642 = vmul.f32 %v7588, %v7641
        %v7643 = vmul.f32 %v7590, %v7641
        %v7644 = vrcp.pop %v7634
        %v7645 = vmul.f32 %v7592, %v7644
        %v7646 = vmul.f32 %v7594, %v7644
        %v7647 = vsel %vm2858, %v7636, 0.0
        %7648 = vadd.xlane.f32.xlu0 %v7647
        %v7649 = vpop.xlane.xlu0 %7648
        %v7650 = vsel %vm2858, %v7637, 0.0
        %7651 = vadd.xlane.f32.xlu0 %v7650
        %v7652 = vpop.xlane.xlu0 %7651
        %v7653 = vsel %vm2858, %v7639, 0.0
        %7654 = vadd.xlane.f32.xlu0 %v7653
        %v7655 = vpop.xlane.xlu0 %7654
        %v7656 = vsel %vm2858, %v7640, 0.0
        %7657 = vadd.xlane.f32.xlu0 %v7656
        %v7658 = vpop.xlane.xlu0 %7657
        %v7659 = vsel %vm2858, %v7642, 0.0
        %7660 = vadd.xlane.f32.xlu0 %v7659
        %v7661 = vpop.xlane.xlu0 %7660
        %v7662 = vsel %vm2858, %v7643, 0.0
        %7663 = vadd.xlane.f32.xlu0 %v7662
        %v7664 = vpop.xlane.xlu0 %7663
        %v7665 = vsel %vm2858, %v7645, 0.0
        %7666 = vadd.xlane.f32.xlu0 %v7665
        %v7667 = vpop.xlane.xlu0 %7666
        %v7668 = vsel %vm2858, %v7646, 0.0
        %7669 = vadd.xlane.f32.xlu0 %v7668
        %v7670 = vpop.xlane.xlu0 %7669
        %v7671 = vadd.f32 %v7649, 1e-08
        %v7672 = vadd.f32 %v7652, 1e-08
        %v7673 = vadd.f32 %v7655, 1e-08
        %v7674 = vadd.f32 %v7658, 1e-08
        %v7675 = vadd.f32 %v7661, 1e-08
        %v7676 = vadd.f32 %v7664, 1e-08
        %v7677 = vadd.f32 %v7667, 1e-08
        %v7678 = vadd.f32 %v7670, 1e-08
        %v7679 = vrcp.pop %v7671
        %v7680 = vmul.f32 %v7636, %v7679
        %v7681 = vrcp.pop %v7672
        %v7682 = vmul.f32 %v7637, %v7681
        %v7683 = vrcp.pop %v7673
        %v7684 = vmul.f32 %v7639, %v7683
        %v7685 = vrcp.pop %v7674
        %v7686 = vmul.f32 %v7640, %v7685
        %v7687 = vrcp.pop %v7675
        %v7688 = vmul.f32 %v7642, %v7687
        %v7689 = vrcp.pop %v7676
        %v7690 = vmul.f32 %v7643, %v7689
        %v7691 = vrcp.pop %v7677
        %v7692 = vmul.f32 %v7645, %v7691
        %v7693 = vrcp.pop %v7678
        %v7694 = vmul.f32 %v7646, %v7693
        %v7695 = vsel %vm2858, %v7680, 0.0
        %v7696 = vsel %vm2858, %v7682, 0.0
        %v7697 = vadd.f32 %v7695, %v7696
        %v7698 = vrot.slane %v7697, 4
        %v7699 = vadd.f32 %v7697, %v7698
        %v7700 = vrot.slane %v7699, 2
        %v7701 = vadd.f32 %v7699, %v7700
        %v7702 = vrot.slane %v7701, 1
        %v7703 = vadd.f32 %v7701, %v7702
        %v7704 = vsel %vm2858, %v7684, 0.0
        %v7705 = vsel %vm2858, %v7686, 0.0
        %v7706 = vadd.f32 %v7704, %v7705
        %v7707 = vrot.slane %v7706, 4
        %v7708 = vadd.f32 %v7706, %v7707
        %v7709 = vrot.slane %v7708, 2
        %v7710 = vadd.f32 %v7708, %v7709
        %v7711 = vrot.slane %v7710, 1
        %v7712 = vadd.f32 %v7710, %v7711
        %v7713 = vsel %vm2858, %v7688, 0.0
        %v7714 = vsel %vm2858, %v7690, 0.0
        %v7715 = vadd.f32 %v7713, %v7714
        %v7716 = vrot.slane %v7715, 4
        %v7717 = vadd.f32 %v7715, %v7716
        %v7718 = vrot.slane %v7717, 2
        %v7719 = vadd.f32 %v7717, %v7718
        %v7720 = vrot.slane %v7719, 1
        %v7721 = vadd.f32 %v7719, %v7720
        %v7722 = vsel %vm2858, %v7692, 0.0
        %v7723 = vsel %vm2858, %v7694, 0.0
        %v7724 = vadd.f32 %v7722, %v7723
        %v7725 = vrot.slane %v7724, 4
        %v7726 = vadd.f32 %v7724, %v7725
        %v7727 = vrot.slane %v7726, 2
        %v7728 = vadd.f32 %v7726, %v7727
        %v7729 = vrot.slane %v7728, 1
        %v7730 = vadd.f32 %v7728, %v7729
        %v7731 = vadd.f32 %v7703, 1e-08
        %v7732 = vadd.f32 %v7712, 1e-08
        %v7733 = vadd.f32 %v7721, 1e-08
        %v7734 = vadd.f32 %v7730, 1e-08
        %v7735 = vrcp.pop %v7731
        %v7736 = vmul.f32 %v7680, %v7735
        %v7737 = vmul.f32 %v7682, %v7735
        %v7738 = vrcp.pop %v7732
        %v7739 = vmul.f32 %v7684, %v7738
        %v7740 = vmul.f32 %v7686, %v7738
        %v7741 = vrcp.pop %v7733
        %v7742 = vmul.f32 %v7688, %v7741
        %v7743 = vmul.f32 %v7690, %v7741
        %v7744 = vrcp.pop %v7734
        %v7745 = vmul.f32 %v7692, %v7744
        %v7746 = vmul.f32 %v7694, %v7744
        %7747 = vst.msk [vmem:[%s379] sm:$0xff] %vm2858, %v7736
        %7748 = vst.msk [vmem:[%s379 + $0x8] sm:$0xff] %vm2858, %v7737
        %7749 = vst.msk [vmem:[%s379 + $0x10] sm:$0xff] %vm2858, %v7739
        %7750 = vst.msk [vmem:[%s379 + $0x18] sm:$0xff] %vm2858, %v7740
        %7751 = vst.msk [vmem:[%s379 + $0x20] sm:$0xff] %vm2858, %v7742
        %7752 = vst.msk [vmem:[%s379 + $0x28] sm:$0xff] %vm2858, %v7743
        %7753 = vst.msk [vmem:[%s379 + $0x30] sm:$0xff] %vm2858, %v7745
        %7754 = vst.msk [vmem:[%s379 + $0x38] sm:$0xff] %vm2858, %v7746
        %s7755 = smul.u32 4, %s29
        %p7756 = scmp.lt.s32.totalorder %s7755, 7
        %s7757 = scalar_select %p7756, %s7755, 7
        %s7758 = smul.addr %s7757, 2
        %s7759 = smul.addr %s7758, 8
        %s7760 = scalar_lea.vmem %s8, %s7759
        %s7761 = sand.u32 %s236, 1
        %s7762 = scalar_lea.sflag [#allocation3], %s7761
        %s7763 = sand.u32 %s236, 1
        %s7764 = smul.addr %s7763, 64
        %s7765 = scalar_lea.vmem [#allocation5], %s7764
        %s7766 = sand.u32 %s262, 1
        %s7767 = scalar_lea.sflag [#allocation7], %s7766
        %s7768 = sand.u32 %s262, 1
        %s7769 = smul.addr %s7768, 4
        %s7770 = scalar_lea.vmem [#allocation6], %s7769
        // Predicated region
        $region57: #{_lambda_.1} parent=51 // pred_check
          %p7771 = pneg %p220
        $region58: #{_lambda_.1} parent=51 // pred_check_branch
          %7773 = sbr.rel (%p7771) target = $region60
        $region59: #{_lambda_.1} parent=51 // pred_region
          %s7774 = smul.u32 4, %s29
        $region60: #{_lambda_.1} parent=51 // pred_fallthru
          _
        // Predicated region
        $region61: #{_lambda_.1} parent=51 // pred_check
          %p7775 = pneg %p246
        $region62: #{_lambda_.1} parent=51 // pred_check_branch
          %7777 = sbr.rel (%p7775) target = $region64
        $region63: #{_lambda_.1} parent=51 // pred_region
          %s7778 = smul.u32 4, %s29
          %s7780 = ssub.s32 1024, 1024
          %7781 = vsyncadd %s7762, %s7780
          %s7782 = smul.addr %s7778, 2
          %s7783 = smul.addr %s7782, 128
          %s7784 = scalar_lea.hbm %s9, %s7783
          %s7785 = sshll.u32 %s7765, 4
          %s7786 = int_to_ptr.vmem [resolvable:$true] %s7785
          %7791 = dma.vmem_to_hbm [thread:$0]  %s7786, 1024, %s7784, %s7762, 128, 128, 8
        $region64: #{_lambda_.1} parent=51 // pred_fallthru
          _
        // Predicated region
        $region65: #{_lambda_.1} parent=51 // pred_check
          %p7792 = pneg %p272
        $region66: #{_lambda_.1} parent=51 // pred_check_branch
          %7794 = sbr.rel (%p7792) target = $region68
        $region67: #{_lambda_.1} parent=51 // pred_region
          %s7795 = smul.u32 4, %s29
          %s7797 = ssub.s32 64, 64
          %7798 = vsyncadd %s7767, %s7797
          %s7799 = smul.addr %s7795, 16
          %s7800 = scalar_lea.hbm %s10, %s7799
          %s7801 = sshll.u32 %s7770, 4
          %s7802 = int_to_ptr.vmem [resolvable:$true] %s7801
          %7807 = dma.vmem_to_hbm [thread:$0]  %s7802, 64, %s7800, %s7767, 16, 16, 1
        $region68: #{_lambda_.1} parent=51 // pred_fallthru
          _
      $region52: #{_lambda_.1} parent=5 // pred_fallthru
        _
      %p7808 = scmp.le.s32.totalorder 2, %s24
      // Predicated region
      $region69: #{_lambda_.1} parent=5 // pred_check
        %p7809 = pneg %p7808
      $region70: #{_lambda_.1} parent=5 // pred_check_branch
        %7811 = sbr.rel (%p7809) target = $region72
      $region71: #{_lambda_.1} parent=5 // pred_region
        %s7812 = ssub.s32 %s24, 2
        // Predicated region
        $region73: #{_lambda_.1} parent=71 // pred_check
          %p7813 = pneg %p226
        $region74: #{_lambda_.1} parent=71 // pred_check_branch
          %7815 = sbr.rel (%p7813) target = $region76
        $region75: #{_lambda_.1} parent=71 // pred_region
          %s7816 = smul.u32 4, %s30
          %p7817 = scmp.lt.s32.totalorder %s7816, 7
          %s7818 = scalar_select %p7817, %s7816, 7
          %s7819 = smul.addr %s7818, 2
          %s7820 = smul.addr %s7819, 8
          %s7821 = scalar_lea.vmem %s8, %s7820
        $region76: #{_lambda_.1} parent=71 // pred_fallthru
          _
        // Predicated region
        $region77: #{_lambda_.1} parent=71 // pred_check
          %p7822 = pneg %p252
        $region78: #{_lambda_.1} parent=71 // pred_check_branch
          %7824 = sbr.rel (%p7822) target = $region80
        $region79: #{_lambda_.1} parent=71 // pred_region
          %s7825 = sand.u32 %s237, 1
          %s7826 = scalar_lea.sflag [#allocation3], %s7825
          %s7827 = sand.u32 %s237, 1
          %s7828 = smul.addr %s7827, 64
          %s7829 = scalar_lea.vmem [#allocation5], %s7828
          %7830 = dma.done %s7826, 1024
        $region80: #{_lambda_.1} parent=71 // pred_fallthru
          _
        // Predicated region
        $region81: #{_lambda_.1} parent=71 // pred_check
          %p7831 = pneg %p278
        $region82: #{_lambda_.1} parent=71 // pred_check_branch
          %7833 = sbr.rel (%p7831) target = $region84
        $region83: #{_lambda_.1} parent=71 // pred_region
          %s7834 = sand.u32 %s263, 1
          %s7835 = scalar_lea.sflag [#allocation7], %s7834
          %s7836 = sand.u32 %s263, 1
          %s7837 = smul.addr %s7836, 4
          %s7838 = scalar_lea.vmem [#allocation6], %s7837
          %7839 = dma.done %s7835, 64
        $region84: #{_lambda_.1} parent=71 // pred_fallthru
          _
      $region72: #{_lambda_.1} parent=5 // pred_fallthru
        _
    $region6: #{_lambda_.1} parent=1 // loop_footer
      %s28 = sadd.s32 1, %s24
    $region7: #{_lambda_.1} parent=1 // loop_footer_branch
      %23 = sbr.rel target = $region3
    $region8: #{_lambda_.1} parent=1 // loop_exit
      _
    %7840 = vsyncpa [#allocation3], 1
    %s7841 = scalar_lea.sflag [#allocation3], 1
    %7842 = vsyncpa %s7841, 1
    %7843 = vsyncpa [#allocation7], 1
    %s7844 = scalar_lea.sflag [#allocation7], 1
    %7845 = vsyncpa %s7844, 1
    %7846 = vsyncpa [#allocation4], 1
    %s7847 = scalar_lea.sflag [#allocation4], 1
    %7848 = vsyncpa %s7847, 1

</llo_original>
